<compile_context>
chip_gen: v7x
topology: tpu7x:2x2x1
jax: 0.10.0
libtpu: 0.0.40
codegen_flags: <defaults>
</compile_context>

<pallas_src>
import functools

import numpy as np
import jax
import jax.numpy as jnp
from jax import lax
from jax.experimental import pallas as pl
from jax.experimental.pallas import tpu as pltpu


# ----------------------------------------------------------------------------
# Host-side constant builders
# ----------------------------------------------------------------------------

def _pool_output_sizes(D, H, W, pool_ratios):
    sizes = []
    for r in pool_ratios:
        do, ho, wo = int(round(D / r)), int(round(H / r)), int(round(W / r))
        # TODO(synk): adaptive_avg_pool3d with non-divisible output sizes
        # (uneven bins) is not supported by the pooling-matrix path.
        assert D % do == 0 and H % ho == 0 and W % wo == 0
        sizes.append((do, ho, wo))
    return sizes


def _round_up(v, m):
    return ((v + m - 1) // m) * m


def _build_constants(D, H, W, sizes, w_dw_list, C):
    """Builds (with per-scale rows padded up to a multiple of 8 sublanes):
         A     : (P_pad, N)      block-averaging matrix (adaptive_avg_pool3d)
         WDW   : (27, P_pad, C)  per-row *masked* depthwise 3x3x3 tap weights
         kmask : (1, P_pad)      additive softmax mask (-1e30 on padded rows)
         scale_meta  : per scale (row_offset, n_real, n_padded, (do,ho,wo))
         tap_offsets : per scale, [(tap_index, flat_shift)] for active taps
    """
    N = D * H * W
    scale_meta = []
    off = 0
    for (do, ho, wo) in sizes:
        n_r = do * ho * wo
        n_p = _round_up(n_r, 8)
        scale_meta.append((off, n_r, n_p, (do, ho, wo)))
        off += n_p
    P_pad = off

    # pooling matrix (zero rows on padding)
    A = np.zeros((P_pad, N), np.float32)
    for (roff, n_r, n_p, (do, ho, wo)) in scale_meta:
        sd, sh, sw = D // do, H // ho, W // wo
        inv = 1.0 / float(sd * sh * sw)
        for od in range(do):
            for oh in range(ho):
                for ow in range(wo):
                    blk = np.zeros((D, H, W), np.float32)
                    blk[od * sd:(od + 1) * sd,
                        oh * sh:(oh + 1) * sh,
                        ow * sw:(ow + 1) * sw] = inv
                    A[roff + (od * ho + oh) * wo + ow] = blk.reshape(N)

    # masked depthwise tap weights + per-scale active-tap shift table
    WDW = np.zeros((27, P_pad, C), np.float32)
    kmask = np.zeros((1, P_pad), np.float32)
    tap_offsets = []
    for (roff, n_r, n_p, (do, ho, wo)), w in zip(scale_meta, w_dw_list):
        w = np.asarray(w, np.float32)                       # (3, 3, 3, C)
        kmask[0, roff + n_r:roff + n_p] = -1e30
        taps = []
        t = 0
        for kz in range(3):
            for ky in range(3):
                for kx in range(3):
                    dz, dy, dx = kz - 1, ky - 1, kx - 1
                    flat_off = dz * ho * wo + dy * wo + dx
                    mask = np.zeros((n_r,), np.float32)
                    for z in range(do):
                        if not 0 <= z + dz < do:
                            continue
                        for y in range(ho):
                            if not 0 <= y + dy < ho:
                                continue
                            for xx in range(wo):
                                if 0 <= xx + dx < wo:
                                    mask[(z * ho + y) * wo + xx] = 1.0
                    if mask.any():
                        WDW[t, roff:roff + n_r, :] = (
                            mask[:, None] * w[kz, ky, kx][None, :])
                        taps.append((t, flat_off))
                    t += 1
        tap_offsets.append(taps)

    return A, WDW, kmask, scale_meta, tap_offsets, P_pad


# ----------------------------------------------------------------------------
# Fused Pallas kernel (one batch element per grid step; everything in VMEM)
# ----------------------------------------------------------------------------

def _pooling_attention_kernel(x_ref, A_ref, wdw_ref, kmask_ref, ln_g_ref,
                              ln_b_ref, wq_ref, wk_ref, wv_ref, wproj_ref,
                              bproj_ref, o_ref, pools_ref, *,
                              num_heads, eps, scale_meta, tap_offsets):
    f32, bf16 = jnp.float32, jnp.bfloat16
    N, C = x_ref.shape
    hd = C // num_heads

    x_bf = x_ref[...].astype(bf16)                                   # (N, C)

    # --- multi-scale adaptive avg pooling: one bf16 MXU matmul ---------------
    pooled = jnp.dot(A_ref[...], x_bf, preferred_element_type=f32)   # (Pp, C)

    # --- per-scale depthwise 3x3x3 conv residual: XLU rolls + f32 FMA --------
    # masked weights zero out out-of-bounds / wrapped taps, so rolling over the
    # padded per-scale length is exact.
    for (roff, _n_real, n_pad, _dims), taps in zip(scale_meta, tap_offsets):
        psl = pooled[roff:roff + n_pad, :]                           # aligned
        acc = psl                                                    # pool + conv
        for (t, off) in taps:                                        # active taps
            shift = (-off) % n_pad
            src = psl if shift == 0 else pltpu.roll(psl, shift, 0)
            acc = acc + src * wdw_ref[t, roff:roff + n_pad, :]
        pools_ref[roff:roff + n_pad, :] = acc

    pools = pools_ref[...]                                           # (Pp, C) f32

    # --- LayerNorm over channels (f32 VPU/EUP math) ---------------------------
    mu = jnp.mean(pools, axis=-1, keepdims=True)
    var = jnp.mean(jnp.square(pools - mu), axis=-1, keepdims=True)
    ln = (pools - mu) * lax.rsqrt(var + eps) * ln_g_ref[...] + ln_b_ref[...]
    ln_bf = ln.astype(bf16)

    # --- projections (bf16 MXU operands, f32 accumulate); Wq pre-scaled ------
    q = jnp.dot(x_bf, wq_ref[...], preferred_element_type=f32).astype(bf16)
    k = jnp.dot(ln_bf, wk_ref[...], preferred_element_type=f32).astype(bf16)
    v = jnp.dot(ln_bf, wv_ref[...], preferred_element_type=f32).astype(bf16)

    kmask = kmask_ref[...]                                           # (1, Pp)

    # --- multi-head attention; each head folded straight into Wproj ----------
    y = jnp.zeros((N, C), f32)
    for h in range(num_heads):
        sl = slice(h * hd, (h + 1) * hd)
        s = lax.dot_general(q[:, sl], k[:, sl], (((1,), (1,)), ((), ())),
                            preferred_element_type=f32) + kmask      # (N, Pp)
        s = s - jnp.max(s, axis=-1, keepdims=True)
        p = jnp.exp(s)
        denom = jnp.sum(p, axis=-1, keepdims=True)
        oh = jnp.dot(p.astype(bf16), v[:, sl], preferred_element_type=f32)
        oh = oh * pl.reciprocal(denom, approx=True)                  # (N, hd)
        y = y + jnp.dot(oh.astype(bf16), wproj_ref[pl.ds(h * hd, hd), :],
                        preferred_element_type=f32)                  # (N, C)

    o_ref[...] = (y + bproj_ref[...]).astype(o_ref.dtype)


# ----------------------------------------------------------------------------
# Wrapper
# ----------------------------------------------------------------------------

def pooling_attention_forward(x, params, *, D, H, W, num_heads, pool_ratios,
                              eps=1e-5):
    B, N, C = x.shape
    assert N == D * H * W and C % num_heads == 0
    hd = C // num_heads
    scale = float(hd) ** -0.5

    sizes = _pool_output_sizes(D, H, W, pool_ratios)
    (A_np, WDW_np, kmask_np, scale_meta, tap_offsets,
     P_pad) = _build_constants(D, H, W, sizes, params["w_dw"], C)

    A = jnp.asarray(A_np, jnp.bfloat16)          # MXU operand -> bf16
    WDW = jnp.asarray(WDW_np, jnp.float32)       # VPU FMA weights -> f32
    kmask = jnp.asarray(kmask_np, jnp.float32)

    wq = (params["wq"] * scale).astype(jnp.bfloat16)   # attention scale folded
    wk = params["wkv"][:, :C].astype(jnp.bfloat16)
    wv = params["wkv"][:, C:].astype(jnp.bfloat16)
    wproj = params["wproj"].astype(jnp.bfloat16)
    ln_g = params["ln_g"].reshape(1, C).astype(jnp.float32)
    ln_b = params["ln_b"].reshape(1, C).astype(jnp.float32)
    bproj = params["bproj"].reshape(1, C).astype(jnp.float32)

    kernel = functools.partial(
        _pooling_attention_kernel, num_heads=num_heads, eps=eps,
        scale_meta=tuple(scale_meta),
        tap_offsets=tuple(tuple(t) for t in tap_offsets))

    def full(shape):
        nd = len(shape)
        return pl.BlockSpec(shape, lambda b, _nd=nd: (0,) * _nd)

    # advisory cost estimate (kernel is compute bound; constants are tiny)
    flops_per_b = (
        2 * P_pad * N * C + 2 * 27 * P_pad * C + 2 * N * C * C
        + 4 * P_pad * C * C
        + num_heads * (4 * N * P_pad * hd + 2 * N * hd * C)
        + 12 * P_pad * C + 6 * num_heads * N * P_pad)
    transc_per_b = num_heads * N * (P_pad + 1) + P_pad
    const_bytes = (A.size * 2 + WDW.size * 4 + 4 * C * C * 2
                   + (P_pad + 3 * C) * 4)
    cost = pl.CostEstimate(flops=int(B * flops_per_b),
                           transcendentals=int(B * transc_per_b),
                           bytes_accessed=int(B * 2 * N * C * 4 + const_bytes))

    return pl.pallas_call(
        kernel,
        out_shape=jax.ShapeDtypeStruct((B, N, C), x.dtype),
        grid=(B,),
        in_specs=[
            pl.BlockSpec((None, N, C), lambda b: (b, 0, 0)),   # x (batch-sliced)
            full((P_pad, N)),                                  # pooling matrix
            full((27, P_pad, C)),                              # masked tap weights
            full((1, P_pad)),                                  # padded-key mask
            full((1, C)), full((1, C)),                        # LayerNorm gamma/beta
            full((C, C)), full((C, C)), full((C, C)),          # Wq(scaled), Wk, Wv
            full((C, C)),                                      # Wproj
            full((1, C)),                                      # proj bias
        ],
        out_specs=pl.BlockSpec((None, N, C), lambda b: (b, 0, 0)),
        scratch_shapes=[pltpu.VMEM((P_pad, C), jnp.float32)],  # pools scratch
        compiler_params=pltpu.CompilerParams(
            dimension_semantics=("parallel",),
            vmem_limit_bytes=32 * 1024 * 1024),
        cost_estimate=cost,
    )(x, A, WDW, kmask, ln_g, ln_b, wq, wk, wv, wproj, bproj)


# ----------------------------------------------------------------------------
# Pure-JAX reference (f32, HIGHEST precision) for correctness check
# ----------------------------------------------------------------------------

def _reference_forward(x, params, *, D, H, W, num_heads, pool_ratios, eps=1e-5):
    B, N, C = x.shape
    hd = C // num_heads
    scale = float(hd) ** -0.5
    prec = lax.Precision.HIGHEST

    q = jnp.einsum("bnc,cd->bnd", x, params["wq"], precision=prec)
    q = q.reshape(B, N, num_heads, hd).transpose(0, 2, 1, 3)        # (B,h,N,hd)

    x5 = x.reshape(B, D, H, W, C)
    pools = []
    for r, wdw in zip(pool_ratios, params["w_dw"]):
        do, ho, wo = int(round(D / r)), int(round(H / r)), int(round(W / r))
        sd, sh, sw = D // do, H // ho, W // wo
        p5 = x5.reshape(B, do, sd, ho, sh, wo, sw, C).mean(axis=(2, 4, 6))
        conv = lax.conv_general_dilated(
            p5, jnp.asarray(wdw).reshape(3, 3, 3, 1, C),
            window_strides=(1, 1, 1), padding=[(1, 1)] * 3,
            dimension_numbers=("NDHWC", "DHWIO", "NDHWC"),
            feature_group_count=C, precision=prec)
        p5 = p5 + conv
        pools.append(p5.reshape(B, do * ho * wo, C))
    pools = jnp.concatenate(pools, axis=1)                           # (B, P, C)

    mu = pools.mean(axis=-1, keepdims=True)
    var = ((pools - mu) ** 2).mean(axis=-1, keepdims=True)
    ln = (pools - mu) / jnp.sqrt(var + eps) * params["ln_g"] + params["ln_b"]

    kv = jnp.einsum("bpc,cd->bpd", ln, params["wkv"], precision=prec)
    Pn = kv.shape[1]
    kv = kv.reshape(B, Pn, 2, num_heads, hd).transpose(2, 0, 3, 1, 4)
    k, v = kv[0], kv[1]                                              # (B,h,P,hd)

    attn = jnp.einsum("bhnd,bhpd->bhnp", q, k, precision=prec) * scale
    attn = jax.nn.softmax(attn, axis=-1)
    o = jnp.einsum("bhnp,bhpd->bhnd", attn, v, precision=prec)
    o = o.transpose(0, 2, 1, 3).reshape(B, N, C)
    o = jnp.einsum("bnc,cd->bnd", o, params["wproj"], precision=prec)
    return o + params["bproj"].reshape(1, 1, C)


# ----------------------------------------------------------------------------
# Main
# ----------------------------------------------------------------------------

if __name__ == "__main__":
    B, C, num_heads = 2, 64, 2
    D = H = W = 6
    N = D * H * W                    # 216
    pool_ratios = [1, 2, 3, 6]       # pooled sizes 6^3 + 3^3 + 2^3 + 1^3 = 252

    key = jax.random.PRNGKey(0)
    ks = jax.random.split(key, 12)

    x = jax.random.normal(ks[0], (B, N, C), jnp.float32)
    params = {
        "wq":    0.1 * jax.random.normal(ks[1], (C, C), jnp.float32),
        "wkv":   0.1 * jax.random.normal(ks[2], (C, 2 * C), jnp.float32),
        "wproj": 0.1 * jax.random.normal(ks[3], (C, C), jnp.float32),
        "bproj": 0.05 * jax.random.normal(ks[4], (C,), jnp.float32),
        "ln_g":  1.0 + 0.1 * jax.random.normal(ks[5], (C,), jnp.float32),
        "ln_b":  0.05 * jax.random.normal(ks[6], (C,), jnp.float32),
        # one depthwise 3x3x3 conv weight per pooling scale (d_convs)
        "w_dw": [0.1 * jax.random.normal(ks[7 + i], (3, 3, 3, C), jnp.float32)
                 for i in range(len(pool_ratios))],
    }

    y = pooling_attention_forward(x, params, D=D, H=H, W=W,
                                  num_heads=num_heads, pool_ratios=pool_ratios)
    y = jax.block_until_ready(y)

    r = _reference_forward(x, params, D=D, H=H, W=W,
                           num_heads=num_heads, pool_ratios=pool_ratios)
    r = jax.block_until_ready(r)

    # bf16 MXU operands + approx reciprocal -> relaxed tolerance vs f32 ref
    assert bool(jnp.allclose(y, r, atol=5e-2, rtol=5e-2)), "output mismatch"
    assert float(jnp.mean(jnp.abs(y - r))) < 2e-2, "mean error too large"

    print("KERNEL_OK")
</pallas_src>

<mosaic_0001>
module attributes {stable_mosaic.version = 11 : i64} {
  func.func @_pooling_attention_kernel(%arg0: i32, %arg1: memref<1x216x64xf32, #tpu.memory_space<vmem>>, %arg2: memref<264x216xbf16, #tpu.memory_space<vmem>>, %arg3: memref<27x264x64xf32, #tpu.memory_space<vmem>>, %arg4: memref<1x264xf32, #tpu.memory_space<vmem>>, %arg5: memref<1x64xf32, #tpu.memory_space<vmem>>, %arg6: memref<1x64xf32, #tpu.memory_space<vmem>>, %arg7: memref<64x64xbf16, #tpu.memory_space<vmem>>, %arg8: memref<64x64xbf16, #tpu.memory_space<vmem>>, %arg9: memref<64x64xbf16, #tpu.memory_space<vmem>>, %arg10: memref<64x64xbf16, #tpu.memory_space<vmem>>, %arg11: memref<1x64xf32, #tpu.memory_space<vmem>>, %arg12: memref<1x216x64xf32, #tpu.memory_space<vmem>>, %arg13: memref<264x64xf32, #tpu.memory_space<vmem>>) attributes {dimension_semantics = [#tpu.dimension_semantics<parallel>], iteration_bounds = array<i64: 2>, scalar_prefetch = 0 : i64, scratch_operands = 1 : i64, tpu.core_type = #tpu.core_type<tc>, window_params = [{transform_indices = @transform_0, window_bounds = array<i64: 1, 216, 64>}, {pipeline_mode = #tpu.pipeline_mode<synchronous>, transform_indices = @transform_1, window_bounds = array<i64: 264, 216>}, {pipeline_mode = #tpu.pipeline_mode<synchronous>, transform_indices = @transform_2, window_bounds = array<i64: 27, 264, 64>}, {pipeline_mode = #tpu.pipeline_mode<synchronous>, transform_indices = @transform_3, window_bounds = array<i64: 1, 264>}, {pipeline_mode = #tpu.pipeline_mode<synchronous>, transform_indices = @transform_4, window_bounds = array<i64: 1, 64>}, {pipeline_mode = #tpu.pipeline_mode<synchronous>, transform_indices = @transform_5, window_bounds = array<i64: 1, 64>}, {pipeline_mode = #tpu.pipeline_mode<synchronous>, transform_indices = @transform_6, window_bounds = array<i64: 64, 64>}, {pipeline_mode = #tpu.pipeline_mode<synchronous>, transform_indices = @transform_7, window_bounds = array<i64: 64, 64>}, {pipeline_mode = #tpu.pipeline_mode<synchronous>, transform_indices = @transform_8, window_bounds = array<i64: 64, 64>}, {pipeline_mode = #tpu.pipeline_mode<synchronous>, transform_indices = @transform_9, window_bounds = array<i64: 64, 64>}, {pipeline_mode = #tpu.pipeline_mode<synchronous>, transform_indices = @transform_10, window_bounds = array<i64: 1, 64>}, {transform_indices = @transform_11, window_bounds = array<i64: 1, 216, 64>}]} {
    %c0 = arith.constant 0 : index
    %c0_0 = arith.constant 0 : index
    %c0_1 = arith.constant 0 : index
    %0 = vector.load %arg1[%c0, %c0_0, %c0_1] : memref<1x216x64xf32, #tpu.memory_space<vmem>>, vector<1x216x64xf32>
    %1 = vector.shape_cast %0 : vector<1x216x64xf32> to vector<216x64xf32>
    %2 = arith.truncf %1 : vector<216x64xf32> to vector<216x64xbf16>
    %c0_2 = arith.constant 0 : index
    %c0_3 = arith.constant 0 : index
    %3 = vector.load %arg2[%c0_2, %c0_3] : memref<264x216xbf16, #tpu.memory_space<vmem>>, vector<264x216xbf16>
    %cst = arith.constant dense<0.000000e+00> : vector<264x64xf32>
    %4 = tpu.matmul %3, %2, %cst {dimension_numbers = #tpu.dot_dimension_numbers<[1], [0], [0], [1], [0, 0, 1, 1], [], []>} : vector<264x216xbf16>, vector<216x64xbf16>, vector<264x64xf32> -> vector<264x64xf32>
    %5 = vector.extract_strided_slice %4 {offsets = [0, 0], sizes = [216, 64], strides = [1, 1]} : vector<264x64xf32> to vector<216x64xf32>
    %c43_i32 = arith.constant 43 : i32
    %6 = tpu.dynamic_rotate %5 by %c43_i32 dim 0 : vector<216x64xf32>, i32 -> vector<216x64xf32>
    %c0_4 = arith.constant 0 : index
    %c0_5 = arith.constant 0 : index
    %c0_6 = arith.constant 0 : index
    %7 = vector.load %arg3[%c0_4, %c0_5, %c0_6] : memref<27x264x64xf32, #tpu.memory_space<vmem>>, vector<1x216x64xf32>
    %8 = vector.shape_cast %7 : vector<1x216x64xf32> to vector<216x64xf32>
    %9 = arith.mulf %6, %8 : vector<216x64xf32>
    %10 = arith.addf %5, %9 : vector<216x64xf32>
    %c42_i32 = arith.constant 42 : i32
    %11 = tpu.dynamic_rotate %5 by %c42_i32 dim 0 : vector<216x64xf32>, i32 -> vector<216x64xf32>
    %c1 = arith.constant 1 : index
    %c0_7 = arith.constant 0 : index
    %c0_8 = arith.constant 0 : index
    %12 = vector.load %arg3[%c1, %c0_7, %c0_8] : memref<27x264x64xf32, #tpu.memory_space<vmem>>, vector<1x216x64xf32>
    %13 = vector.shape_cast %12 : vector<1x216x64xf32> to vector<216x64xf32>
    %14 = arith.mulf %11, %13 : vector<216x64xf32>
    %15 = arith.addf %10, %14 : vector<216x64xf32>
    %c41_i32 = arith.constant 41 : i32
    %16 = tpu.dynamic_rotate %5 by %c41_i32 dim 0 : vector<216x64xf32>, i32 -> vector<216x64xf32>
    %c2 = arith.constant 2 : index
    %c0_9 = arith.constant 0 : index
    %c0_10 = arith.constant 0 : index
    %17 = vector.load %arg3[%c2, %c0_9, %c0_10] : memref<27x264x64xf32, #tpu.memory_space<vmem>>, vector<1x216x64xf32>
    %18 = vector.shape_cast %17 : vector<1x216x64xf32> to vector<216x64xf32>
    %19 = arith.mulf %16, %18 : vector<216x64xf32>
    %20 = arith.addf %15, %19 : vector<216x64xf32>
    %c37_i32 = arith.constant 37 : i32
    %21 = tpu.dynamic_rotate %5 by %c37_i32 dim 0 : vector<216x64xf32>, i32 -> vector<216x64xf32>
    %c3 = arith.constant 3 : index
    %c0_11 = arith.constant 0 : index
    %c0_12 = arith.constant 0 : index
    %22 = vector.load %arg3[%c3, %c0_11, %c0_12] : memref<27x264x64xf32, #tpu.memory_space<vmem>>, vector<1x216x64xf32>
    %23 = vector.shape_cast %22 : vector<1x216x64xf32> to vector<216x64xf32>
    %24 = arith.mulf %21, %23 : vector<216x64xf32>
    %25 = arith.addf %20, %24 : vector<216x64xf32>
    %c36_i32 = arith.constant 36 : i32
    %26 = tpu.dynamic_rotate %5 by %c36_i32 dim 0 : vector<216x64xf32>, i32 -> vector<216x64xf32>
    %c4 = arith.constant 4 : index
    %c0_13 = arith.constant 0 : index
    %c0_14 = arith.constant 0 : index
    %27 = vector.load %arg3[%c4, %c0_13, %c0_14] : memref<27x264x64xf32, #tpu.memory_space<vmem>>, vector<1x216x64xf32>
    %28 = vector.shape_cast %27 : vector<1x216x64xf32> to vector<216x64xf32>
    %29 = arith.mulf %26, %28 : vector<216x64xf32>
    %30 = arith.addf %25, %29 : vector<216x64xf32>
    %c35_i32 = arith.constant 35 : i32
    %31 = tpu.dynamic_rotate %5 by %c35_i32 dim 0 : vector<216x64xf32>, i32 -> vector<216x64xf32>
    %c5 = arith.constant 5 : index
    %c0_15 = arith.constant 0 : index
    %c0_16 = arith.constant 0 : index
    %32 = vector.load %arg3[%c5, %c0_15, %c0_16] : memref<27x264x64xf32, #tpu.memory_space<vmem>>, vector<1x216x64xf32>
    %33 = vector.shape_cast %32 : vector<1x216x64xf32> to vector<216x64xf32>
    %34 = arith.mulf %31, %33 : vector<216x64xf32>
    %35 = arith.addf %30, %34 : vector<216x64xf32>
    %c31_i32 = arith.constant 31 : i32
    %36 = tpu.dynamic_rotate %5 by %c31_i32 dim 0 : vector<216x64xf32>, i32 -> vector<216x64xf32>
    %c6 = arith.constant 6 : index
    %c0_17 = arith.constant 0 : index
    %c0_18 = arith.constant 0 : index
    %37 = vector.load %arg3[%c6, %c0_17, %c0_18] : memref<27x264x64xf32, #tpu.memory_space<vmem>>, vector<1x216x64xf32>
    %38 = vector.shape_cast %37 : vector<1x216x64xf32> to vector<216x64xf32>
    %39 = arith.mulf %36, %38 : vector<216x64xf32>
    %40 = arith.addf %35, %39 : vector<216x64xf32>
    %c30_i32 = arith.constant 30 : i32
    %41 = tpu.dynamic_rotate %5 by %c30_i32 dim 0 : vector<216x64xf32>, i32 -> vector<216x64xf32>
    %c7 = arith.constant 7 : index
    %c0_19 = arith.constant 0 : index
    %c0_20 = arith.constant 0 : index
    %42 = vector.load %arg3[%c7, %c0_19, %c0_20] : memref<27x264x64xf32, #tpu.memory_space<vmem>>, vector<1x216x64xf32>
    %43 = vector.shape_cast %42 : vector<1x216x64xf32> to vector<216x64xf32>
    %44 = arith.mulf %41, %43 : vector<216x64xf32>
    %45 = arith.addf %40, %44 : vector<216x64xf32>
    %c29_i32 = arith.constant 29 : i32
    %46 = tpu.dynamic_rotate %5 by %c29_i32 dim 0 : vector<216x64xf32>, i32 -> vector<216x64xf32>
    %c8 = arith.constant 8 : index
    %c0_21 = arith.constant 0 : index
    %c0_22 = arith.constant 0 : index
    %47 = vector.load %arg3[%c8, %c0_21, %c0_22] : memref<27x264x64xf32, #tpu.memory_space<vmem>>, vector<1x216x64xf32>
    %48 = vector.shape_cast %47 : vector<1x216x64xf32> to vector<216x64xf32>
    %49 = arith.mulf %46, %48 : vector<216x64xf32>
    %50 = arith.addf %45, %49 : vector<216x64xf32>
    %c7_i32 = arith.constant 7 : i32
    %51 = tpu.dynamic_rotate %5 by %c7_i32 dim 0 : vector<216x64xf32>, i32 -> vector<216x64xf32>
    %c9 = arith.constant 9 : index
    %c0_23 = arith.constant 0 : index
    %c0_24 = arith.constant 0 : index
    %52 = vector.load %arg3[%c9, %c0_23, %c0_24] : memref<27x264x64xf32, #tpu.memory_space<vmem>>, vector<1x216x64xf32>
    %53 = vector.shape_cast %52 : vector<1x216x64xf32> to vector<216x64xf32>
    %54 = arith.mulf %51, %53 : vector<216x64xf32>
    %55 = arith.addf %50, %54 : vector<216x64xf32>
    %c6_i32 = arith.constant 6 : i32
    %56 = tpu.dynamic_rotate %5 by %c6_i32 dim 0 : vector<216x64xf32>, i32 -> vector<216x64xf32>
    %c10 = arith.constant 10 : index
    %c0_25 = arith.constant 0 : index
    %c0_26 = arith.constant 0 : index
    %57 = vector.load %arg3[%c10, %c0_25, %c0_26] : memref<27x264x64xf32, #tpu.memory_space<vmem>>, vector<1x216x64xf32>
    %58 = vector.shape_cast %57 : vector<1x216x64xf32> to vector<216x64xf32>
    %59 = arith.mulf %56, %58 : vector<216x64xf32>
    %60 = arith.addf %55, %59 : vector<216x64xf32>
    %c5_i32 = arith.constant 5 : i32
    %61 = tpu.dynamic_rotate %5 by %c5_i32 dim 0 : vector<216x64xf32>, i32 -> vector<216x64xf32>
    %c11 = arith.constant 11 : index
    %c0_27 = arith.constant 0 : index
    %c0_28 = arith.constant 0 : index
    %62 = vector.load %arg3[%c11, %c0_27, %c0_28] : memref<27x264x64xf32, #tpu.memory_space<vmem>>, vector<1x216x64xf32>
    %63 = vector.shape_cast %62 : vector<1x216x64xf32> to vector<216x64xf32>
    %64 = arith.mulf %61, %63 : vector<216x64xf32>
    %65 = arith.addf %60, %64 : vector<216x64xf32>
    %c1_i32 = arith.constant 1 : i32
    %66 = tpu.dynamic_rotate %5 by %c1_i32 dim 0 : vector<216x64xf32>, i32 -> vector<216x64xf32>
    %c12 = arith.constant 12 : index
    %c0_29 = arith.constant 0 : index
    %c0_30 = arith.constant 0 : index
    %67 = vector.load %arg3[%c12, %c0_29, %c0_30] : memref<27x264x64xf32, #tpu.memory_space<vmem>>, vector<1x216x64xf32>
    %68 = vector.shape_cast %67 : vector<1x216x64xf32> to vector<216x64xf32>
    %69 = arith.mulf %66, %68 : vector<216x64xf32>
    %70 = arith.addf %65, %69 : vector<216x64xf32>
    %c13 = arith.constant 13 : index
    %c0_31 = arith.constant 0 : index
    %c0_32 = arith.constant 0 : index
    %71 = vector.load %arg3[%c13, %c0_31, %c0_32] : memref<27x264x64xf32, #tpu.memory_space<vmem>>, vector<1x216x64xf32>
    %72 = vector.shape_cast %71 : vector<1x216x64xf32> to vector<216x64xf32>
    %73 = arith.mulf %5, %72 : vector<216x64xf32>
    %74 = arith.addf %70, %73 : vector<216x64xf32>
    %c215_i32 = arith.constant 215 : i32
    %75 = tpu.dynamic_rotate %5 by %c215_i32 dim 0 : vector<216x64xf32>, i32 -> vector<216x64xf32>
    %c14 = arith.constant 14 : index
    %c0_33 = arith.constant 0 : index
    %c0_34 = arith.constant 0 : index
    %76 = vector.load %arg3[%c14, %c0_33, %c0_34] : memref<27x264x64xf32, #tpu.memory_space<vmem>>, vector<1x216x64xf32>
    %77 = vector.shape_cast %76 : vector<1x216x64xf32> to vector<216x64xf32>
    %78 = arith.mulf %75, %77 : vector<216x64xf32>
    %79 = arith.addf %74, %78 : vector<216x64xf32>
    %c211_i32 = arith.constant 211 : i32
    %80 = tpu.dynamic_rotate %5 by %c211_i32 dim 0 : vector<216x64xf32>, i32 -> vector<216x64xf32>
    %c15 = arith.constant 15 : index
    %c0_35 = arith.constant 0 : index
    %c0_36 = arith.constant 0 : index
    %81 = vector.load %arg3[%c15, %c0_35, %c0_36] : memref<27x264x64xf32, #tpu.memory_space<vmem>>, vector<1x216x64xf32>
    %82 = vector.shape_cast %81 : vector<1x216x64xf32> to vector<216x64xf32>
    %83 = arith.mulf %80, %82 : vector<216x64xf32>
    %84 = arith.addf %79, %83 : vector<216x64xf32>
    %c210_i32 = arith.constant 210 : i32
    %85 = tpu.dynamic_rotate %5 by %c210_i32 dim 0 : vector<216x64xf32>, i32 -> vector<216x64xf32>
    %c16 = arith.constant 16 : index
    %c0_37 = arith.constant 0 : index
    %c0_38 = arith.constant 0 : index
    %86 = vector.load %arg3[%c16, %c0_37, %c0_38] : memref<27x264x64xf32, #tpu.memory_space<vmem>>, vector<1x216x64xf32>
    %87 = vector.shape_cast %86 : vector<1x216x64xf32> to vector<216x64xf32>
    %88 = arith.mulf %85, %87 : vector<216x64xf32>
    %89 = arith.addf %84, %88 : vector<216x64xf32>
    %c209_i32 = arith.constant 209 : i32
    %90 = tpu.dynamic_rotate %5 by %c209_i32 dim 0 : vector<216x64xf32>, i32 -> vector<216x64xf32>
    %c17 = arith.constant 17 : index
    %c0_39 = arith.constant 0 : index
    %c0_40 = arith.constant 0 : index
    %91 = vector.load %arg3[%c17, %c0_39, %c0_40] : memref<27x264x64xf32, #tpu.memory_space<vmem>>, vector<1x216x64xf32>
    %92 = vector.shape_cast %91 : vector<1x216x64xf32> to vector<216x64xf32>
    %93 = arith.mulf %90, %92 : vector<216x64xf32>
    %94 = arith.addf %89, %93 : vector<216x64xf32>
    %c187_i32 = arith.constant 187 : i32
    %95 = tpu.dynamic_rotate %5 by %c187_i32 dim 0 : vector<216x64xf32>, i32 -> vector<216x64xf32>
    %c18 = arith.constant 18 : index
    %c0_41 = arith.constant 0 : index
    %c0_42 = arith.constant 0 : index
    %96 = vector.load %arg3[%c18, %c0_41, %c0_42] : memref<27x264x64xf32, #tpu.memory_space<vmem>>, vector<1x216x64xf32>
    %97 = vector.shape_cast %96 : vector<1x216x64xf32> to vector<216x64xf32>
    %98 = arith.mulf %95, %97 : vector<216x64xf32>
    %99 = arith.addf %94, %98 : vector<216x64xf32>
    %c186_i32 = arith.constant 186 : i32
    %100 = tpu.dynamic_rotate %5 by %c186_i32 dim 0 : vector<216x64xf32>, i32 -> vector<216x64xf32>
    %c19 = arith.constant 19 : index
    %c0_43 = arith.constant 0 : index
    %c0_44 = arith.constant 0 : index
    %101 = vector.load %arg3[%c19, %c0_43, %c0_44] : memref<27x264x64xf32, #tpu.memory_space<vmem>>, vector<1x216x64xf32>
    %102 = vector.shape_cast %101 : vector<1x216x64xf32> to vector<216x64xf32>
    %103 = arith.mulf %100, %102 : vector<216x64xf32>
    %104 = arith.addf %99, %103 : vector<216x64xf32>
    %c185_i32 = arith.constant 185 : i32
    %105 = tpu.dynamic_rotate %5 by %c185_i32 dim 0 : vector<216x64xf32>, i32 -> vector<216x64xf32>
    %c20 = arith.constant 20 : index
    %c0_45 = arith.constant 0 : index
    %c0_46 = arith.constant 0 : index
    %106 = vector.load %arg3[%c20, %c0_45, %c0_46] : memref<27x264x64xf32, #tpu.memory_space<vmem>>, vector<1x216x64xf32>
    %107 = vector.shape_cast %106 : vector<1x216x64xf32> to vector<216x64xf32>
    %108 = arith.mulf %105, %107 : vector<216x64xf32>
    %109 = arith.addf %104, %108 : vector<216x64xf32>
    %c181_i32 = arith.constant 181 : i32
    %110 = tpu.dynamic_rotate %5 by %c181_i32 dim 0 : vector<216x64xf32>, i32 -> vector<216x64xf32>
    %c21 = arith.constant 21 : index
    %c0_47 = arith.constant 0 : index
    %c0_48 = arith.constant 0 : index
    %111 = vector.load %arg3[%c21, %c0_47, %c0_48] : memref<27x264x64xf32, #tpu.memory_space<vmem>>, vector<1x216x64xf32>
    %112 = vector.shape_cast %111 : vector<1x216x64xf32> to vector<216x64xf32>
    %113 = arith.mulf %110, %112 : vector<216x64xf32>
    %114 = arith.addf %109, %113 : vector<216x64xf32>
    %c180_i32 = arith.constant 180 : i32
    %115 = tpu.dynamic_rotate %5 by %c180_i32 dim 0 : vector<216x64xf32>, i32 -> vector<216x64xf32>
    %c22 = arith.constant 22 : index
    %c0_49 = arith.constant 0 : index
    %c0_50 = arith.constant 0 : index
    %116 = vector.load %arg3[%c22, %c0_49, %c0_50] : memref<27x264x64xf32, #tpu.memory_space<vmem>>, vector<1x216x64xf32>
    %117 = vector.shape_cast %116 : vector<1x216x64xf32> to vector<216x64xf32>
    %118 = arith.mulf %115, %117 : vector<216x64xf32>
    %119 = arith.addf %114, %118 : vector<216x64xf32>
    %c179_i32 = arith.constant 179 : i32
    %120 = tpu.dynamic_rotate %5 by %c179_i32 dim 0 : vector<216x64xf32>, i32 -> vector<216x64xf32>
    %c23 = arith.constant 23 : index
    %c0_51 = arith.constant 0 : index
    %c0_52 = arith.constant 0 : index
    %121 = vector.load %arg3[%c23, %c0_51, %c0_52] : memref<27x264x64xf32, #tpu.memory_space<vmem>>, vector<1x216x64xf32>
    %122 = vector.shape_cast %121 : vector<1x216x64xf32> to vector<216x64xf32>
    %123 = arith.mulf %120, %122 : vector<216x64xf32>
    %124 = arith.addf %119, %123 : vector<216x64xf32>
    %c175_i32 = arith.constant 175 : i32
    %125 = tpu.dynamic_rotate %5 by %c175_i32 dim 0 : vector<216x64xf32>, i32 -> vector<216x64xf32>
    %c24 = arith.constant 24 : index
    %c0_53 = arith.constant 0 : index
    %c0_54 = arith.constant 0 : index
    %126 = vector.load %arg3[%c24, %c0_53, %c0_54] : memref<27x264x64xf32, #tpu.memory_space<vmem>>, vector<1x216x64xf32>
    %127 = vector.shape_cast %126 : vector<1x216x64xf32> to vector<216x64xf32>
    %128 = arith.mulf %125, %127 : vector<216x64xf32>
    %129 = arith.addf %124, %128 : vector<216x64xf32>
    %c174_i32 = arith.constant 174 : i32
    %130 = tpu.dynamic_rotate %5 by %c174_i32 dim 0 : vector<216x64xf32>, i32 -> vector<216x64xf32>
    %c25 = arith.constant 25 : index
    %c0_55 = arith.constant 0 : index
    %c0_56 = arith.constant 0 : index
    %131 = vector.load %arg3[%c25, %c0_55, %c0_56] : memref<27x264x64xf32, #tpu.memory_space<vmem>>, vector<1x216x64xf32>
    %132 = vector.shape_cast %131 : vector<1x216x64xf32> to vector<216x64xf32>
    %133 = arith.mulf %130, %132 : vector<216x64xf32>
    %134 = arith.addf %129, %133 : vector<216x64xf32>
    %c173_i32 = arith.constant 173 : i32
    %135 = tpu.dynamic_rotate %5 by %c173_i32 dim 0 : vector<216x64xf32>, i32 -> vector<216x64xf32>
    %c26 = arith.constant 26 : index
    %c0_57 = arith.constant 0 : index
    %c0_58 = arith.constant 0 : index
    %136 = vector.load %arg3[%c26, %c0_57, %c0_58] : memref<27x264x64xf32, #tpu.memory_space<vmem>>, vector<1x216x64xf32>
    %137 = vector.shape_cast %136 : vector<1x216x64xf32> to vector<216x64xf32>
    %138 = arith.mulf %135, %137 : vector<216x64xf32>
    %139 = arith.addf %134, %138 : vector<216x64xf32>
    %c0_59 = arith.constant 0 : index
    %c0_60 = arith.constant 0 : index
    %140 = vector.load %arg13[%c0_59, %c0_60] : memref<264x64xf32, #tpu.memory_space<vmem>>, vector<216x64xf32>
    tpu.vector_store %arg13[%c0_59, %c0_60], %139 {strides = array<i32>} : memref<264x64xf32, #tpu.memory_space<vmem>>, vector<216x64xf32>,
    %141 = vector.extract_strided_slice %4 {offsets = [216, 0], sizes = [32, 64], strides = [1, 1]} : vector<264x64xf32> to vector<32x64xf32>
    %c13_i32 = arith.constant 13 : i32
    %142 = tpu.dynamic_rotate %141 by %c13_i32 dim 0 : vector<32x64xf32>, i32 -> vector<32x64xf32>
    %c0_61 = arith.constant 0 : index
    %c216 = arith.constant 216 : index
    %c0_62 = arith.constant 0 : index
    %143 = vector.load %arg3[%c0_61, %c216, %c0_62] : memref<27x264x64xf32, #tpu.memory_space<vmem>>, vector<1x32x64xf32>
    %144 = vector.shape_cast %143 : vector<1x32x64xf32> to vector<32x64xf32>
    %145 = arith.mulf %142, %144 : vector<32x64xf32>
    %146 = arith.addf %141, %145 : vector<32x64xf32>
    %c12_i32 = arith.constant 12 : i32
    %147 = tpu.dynamic_rotate %141 by %c12_i32 dim 0 : vector<32x64xf32>, i32 -> vector<32x64xf32>
    %c1_63 = arith.constant 1 : index
    %c216_64 = arith.constant 216 : index
    %c0_65 = arith.constant 0 : index
    %148 = vector.load %arg3[%c1_63, %c216_64, %c0_65] : memref<27x264x64xf32, #tpu.memory_space<vmem>>, vector<1x32x64xf32>
    %149 = vector.shape_cast %148 : vector<1x32x64xf32> to vector<32x64xf32>
    %150 = arith.mulf %147, %149 : vector<32x64xf32>
    %151 = arith.addf %146, %150 : vector<32x64xf32>
    %c11_i32 = arith.constant 11 : i32
    %152 = tpu.dynamic_rotate %141 by %c11_i32 dim 0 : vector<32x64xf32>, i32 -> vector<32x64xf32>
    %c2_66 = arith.constant 2 : index
    %c216_67 = arith.constant 216 : index
    %c0_68 = arith.constant 0 : index
    %153 = vector.load %arg3[%c2_66, %c216_67, %c0_68] : memref<27x264x64xf32, #tpu.memory_space<vmem>>, vector<1x32x64xf32>
    %154 = vector.shape_cast %153 : vector<1x32x64xf32> to vector<32x64xf32>
    %155 = arith.mulf %152, %154 : vector<32x64xf32>
    %156 = arith.addf %151, %155 : vector<32x64xf32>
    %c10_i32 = arith.constant 10 : i32
    %157 = tpu.dynamic_rotate %141 by %c10_i32 dim 0 : vector<32x64xf32>, i32 -> vector<32x64xf32>
    %c3_69 = arith.constant 3 : index
    %c216_70 = arith.constant 216 : index
    %c0_71 = arith.constant 0 : index
    %158 = vector.load %arg3[%c3_69, %c216_70, %c0_71] : memref<27x264x64xf32, #tpu.memory_space<vmem>>, vector<1x32x64xf32>
    %159 = vector.shape_cast %158 : vector<1x32x64xf32> to vector<32x64xf32>
    %160 = arith.mulf %157, %159 : vector<32x64xf32>
    %161 = arith.addf %156, %160 : vector<32x64xf32>
    %c9_i32 = arith.constant 9 : i32
    %162 = tpu.dynamic_rotate %141 by %c9_i32 dim 0 : vector<32x64xf32>, i32 -> vector<32x64xf32>
    %c4_72 = arith.constant 4 : index
    %c216_73 = arith.constant 216 : index
    %c0_74 = arith.constant 0 : index
    %163 = vector.load %arg3[%c4_72, %c216_73, %c0_74] : memref<27x264x64xf32, #tpu.memory_space<vmem>>, vector<1x32x64xf32>
    %164 = vector.shape_cast %163 : vector<1x32x64xf32> to vector<32x64xf32>
    %165 = arith.mulf %162, %164 : vector<32x64xf32>
    %166 = arith.addf %161, %165 : vector<32x64xf32>
    %c8_i32 = arith.constant 8 : i32
    %167 = tpu.dynamic_rotate %141 by %c8_i32 dim 0 : vector<32x64xf32>, i32 -> vector<32x64xf32>
    %c5_75 = arith.constant 5 : index
    %c216_76 = arith.constant 216 : index
    %c0_77 = arith.constant 0 : index
    %168 = vector.load %arg3[%c5_75, %c216_76, %c0_77] : memref<27x264x64xf32, #tpu.memory_space<vmem>>, vector<1x32x64xf32>
    %169 = vector.shape_cast %168 : vector<1x32x64xf32> to vector<32x64xf32>
    %170 = arith.mulf %167, %169 : vector<32x64xf32>
    %171 = arith.addf %166, %170 : vector<32x64xf32>
    %c7_i32_78 = arith.constant 7 : i32
    %172 = tpu.dynamic_rotate %141 by %c7_i32_78 dim 0 : vector<32x64xf32>, i32 -> vector<32x64xf32>
    %c6_79 = arith.constant 6 : index
    %c216_80 = arith.constant 216 : index
    %c0_81 = arith.constant 0 : index
    %173 = vector.load %arg3[%c6_79, %c216_80, %c0_81] : memref<27x264x64xf32, #tpu.memory_space<vmem>>, vector<1x32x64xf32>
    %174 = vector.shape_cast %173 : vector<1x32x64xf32> to vector<32x64xf32>
    %175 = arith.mulf %172, %174 : vector<32x64xf32>
    %176 = arith.addf %171, %175 : vector<32x64xf32>
    %c6_i32_82 = arith.constant 6 : i32
    %177 = tpu.dynamic_rotate %141 by %c6_i32_82 dim 0 : vector<32x64xf32>, i32 -> vector<32x64xf32>
    %c7_83 = arith.constant 7 : index
    %c216_84 = arith.constant 216 : index
    %c0_85 = arith.constant 0 : index
    %178 = vector.load %arg3[%c7_83, %c216_84, %c0_85] : memref<27x264x64xf32, #tpu.memory_space<vmem>>, vector<1x32x64xf32>
    %179 = vector.shape_cast %178 : vector<1x32x64xf32> to vector<32x64xf32>
    %180 = arith.mulf %177, %179 : vector<32x64xf32>
    %181 = arith.addf %176, %180 : vector<32x64xf32>
    %c5_i32_86 = arith.constant 5 : i32
    %182 = tpu.dynamic_rotate %141 by %c5_i32_86 dim 0 : vector<32x64xf32>, i32 -> vector<32x64xf32>
    %c8_87 = arith.constant 8 : index
    %c216_88 = arith.constant 216 : index
    %c0_89 = arith.constant 0 : index
    %183 = vector.load %arg3[%c8_87, %c216_88, %c0_89] : memref<27x264x64xf32, #tpu.memory_space<vmem>>, vector<1x32x64xf32>
    %184 = vector.shape_cast %183 : vector<1x32x64xf32> to vector<32x64xf32>
    %185 = arith.mulf %182, %184 : vector<32x64xf32>
    %186 = arith.addf %181, %185 : vector<32x64xf32>
    %c4_i32 = arith.constant 4 : i32
    %187 = tpu.dynamic_rotate %141 by %c4_i32 dim 0 : vector<32x64xf32>, i32 -> vector<32x64xf32>
    %c9_90 = arith.constant 9 : index
    %c216_91 = arith.constant 216 : index
    %c0_92 = arith.constant 0 : index
    %188 = vector.load %arg3[%c9_90, %c216_91, %c0_92] : memref<27x264x64xf32, #tpu.memory_space<vmem>>, vector<1x32x64xf32>
    %189 = vector.shape_cast %188 : vector<1x32x64xf32> to vector<32x64xf32>
    %190 = arith.mulf %187, %189 : vector<32x64xf32>
    %191 = arith.addf %186, %190 : vector<32x64xf32>
    %c3_i32 = arith.constant 3 : i32
    %192 = tpu.dynamic_rotate %141 by %c3_i32 dim 0 : vector<32x64xf32>, i32 -> vector<32x64xf32>
    %c10_93 = arith.constant 10 : index
    %c216_94 = arith.constant 216 : index
    %c0_95 = arith.constant 0 : index
    %193 = vector.load %arg3[%c10_93, %c216_94, %c0_95] : memref<27x264x64xf32, #tpu.memory_space<vmem>>, vector<1x32x64xf32>
    %194 = vector.shape_cast %193 : vector<1x32x64xf32> to vector<32x64xf32>
    %195 = arith.mulf %192, %194 : vector<32x64xf32>
    %196 = arith.addf %191, %195 : vector<32x64xf32>
    %c2_i32 = arith.constant 2 : i32
    %197 = tpu.dynamic_rotate %141 by %c2_i32 dim 0 : vector<32x64xf32>, i32 -> vector<32x64xf32>
    %c11_96 = arith.constant 11 : index
    %c216_97 = arith.constant 216 : index
    %c0_98 = arith.constant 0 : index
    %198 = vector.load %arg3[%c11_96, %c216_97, %c0_98] : memref<27x264x64xf32, #tpu.memory_space<vmem>>, vector<1x32x64xf32>
    %199 = vector.shape_cast %198 : vector<1x32x64xf32> to vector<32x64xf32>
    %200 = arith.mulf %197, %199 : vector<32x64xf32>
    %201 = arith.addf %196, %200 : vector<32x64xf32>
    %c1_i32_99 = arith.constant 1 : i32
    %202 = tpu.dynamic_rotate %141 by %c1_i32_99 dim 0 : vector<32x64xf32>, i32 -> vector<32x64xf32>
    %c12_100 = arith.constant 12 : index
    %c216_101 = arith.constant 216 : index
    %c0_102 = arith.constant 0 : index
    %203 = vector.load %arg3[%c12_100, %c216_101, %c0_102] : memref<27x264x64xf32, #tpu.memory_space<vmem>>, vector<1x32x64xf32>
    %204 = vector.shape_cast %203 : vector<1x32x64xf32> to vector<32x64xf32>
    %205 = arith.mulf %202, %204 : vector<32x64xf32>
    %206 = arith.addf %201, %205 : vector<32x64xf32>
    %c13_103 = arith.constant 13 : index
    %c216_104 = arith.constant 216 : index
    %c0_105 = arith.constant 0 : index
    %207 = vector.load %arg3[%c13_103, %c216_104, %c0_105] : memref<27x264x64xf32, #tpu.memory_space<vmem>>, vector<1x32x64xf32>
    %208 = vector.shape_cast %207 : vector<1x32x64xf32> to vector<32x64xf32>
    %209 = arith.mulf %141, %208 : vector<32x64xf32>
    %210 = arith.addf %206, %209 : vector<32x64xf32>
    %c31_i32_106 = arith.constant 31 : i32
    %211 = tpu.dynamic_rotate %141 by %c31_i32_106 dim 0 : vector<32x64xf32>, i32 -> vector<32x64xf32>
    %c14_107 = arith.constant 14 : index
    %c216_108 = arith.constant 216 : index
    %c0_109 = arith.constant 0 : index
    %212 = vector.load %arg3[%c14_107, %c216_108, %c0_109] : memref<27x264x64xf32, #tpu.memory_space<vmem>>, vector<1x32x64xf32>
    %213 = vector.shape_cast %212 : vector<1x32x64xf32> to vector<32x64xf32>
    %214 = arith.mulf %211, %213 : vector<32x64xf32>
    %215 = arith.addf %210, %214 : vector<32x64xf32>
    %c30_i32_110 = arith.constant 30 : i32
    %216 = tpu.dynamic_rotate %141 by %c30_i32_110 dim 0 : vector<32x64xf32>, i32 -> vector<32x64xf32>
    %c15_111 = arith.constant 15 : index
    %c216_112 = arith.constant 216 : index
    %c0_113 = arith.constant 0 : index
    %217 = vector.load %arg3[%c15_111, %c216_112, %c0_113] : memref<27x264x64xf32, #tpu.memory_space<vmem>>, vector<1x32x64xf32>
    %218 = vector.shape_cast %217 : vector<1x32x64xf32> to vector<32x64xf32>
    %219 = arith.mulf %216, %218 : vector<32x64xf32>
    %220 = arith.addf %215, %219 : vector<32x64xf32>
    %c29_i32_114 = arith.constant 29 : i32
    %221 = tpu.dynamic_rotate %141 by %c29_i32_114 dim 0 : vector<32x64xf32>, i32 -> vector<32x64xf32>
    %c16_115 = arith.constant 16 : index
    %c216_116 = arith.constant 216 : index
    %c0_117 = arith.constant 0 : index
    %222 = vector.load %arg3[%c16_115, %c216_116, %c0_117] : memref<27x264x64xf32, #tpu.memory_space<vmem>>, vector<1x32x64xf32>
    %223 = vector.shape_cast %222 : vector<1x32x64xf32> to vector<32x64xf32>
    %224 = arith.mulf %221, %223 : vector<32x64xf32>
    %225 = arith.addf %220, %224 : vector<32x64xf32>
    %c28_i32 = arith.constant 28 : i32
    %226 = tpu.dynamic_rotate %141 by %c28_i32 dim 0 : vector<32x64xf32>, i32 -> vector<32x64xf32>
    %c17_118 = arith.constant 17 : index
    %c216_119 = arith.constant 216 : index
    %c0_120 = arith.constant 0 : index
    %227 = vector.load %arg3[%c17_118, %c216_119, %c0_120] : memref<27x264x64xf32, #tpu.memory_space<vmem>>, vector<1x32x64xf32>
    %228 = vector.shape_cast %227 : vector<1x32x64xf32> to vector<32x64xf32>
    %229 = arith.mulf %226, %228 : vector<32x64xf32>
    %230 = arith.addf %225, %229 : vector<32x64xf32>
    %c27_i32 = arith.constant 27 : i32
    %231 = tpu.dynamic_rotate %141 by %c27_i32 dim 0 : vector<32x64xf32>, i32 -> vector<32x64xf32>
    %c18_121 = arith.constant 18 : index
    %c216_122 = arith.constant 216 : index
    %c0_123 = arith.constant 0 : index
    %232 = vector.load %arg3[%c18_121, %c216_122, %c0_123] : memref<27x264x64xf32, #tpu.memory_space<vmem>>, vector<1x32x64xf32>
    %233 = vector.shape_cast %232 : vector<1x32x64xf32> to vector<32x64xf32>
    %234 = arith.mulf %231, %233 : vector<32x64xf32>
    %235 = arith.addf %230, %234 : vector<32x64xf32>
    %c26_i32 = arith.constant 26 : i32
    %236 = tpu.dynamic_rotate %141 by %c26_i32 dim 0 : vector<32x64xf32>, i32 -> vector<32x64xf32>
    %c19_124 = arith.constant 19 : index
    %c216_125 = arith.constant 216 : index
    %c0_126 = arith.constant 0 : index
    %237 = vector.load %arg3[%c19_124, %c216_125, %c0_126] : memref<27x264x64xf32, #tpu.memory_space<vmem>>, vector<1x32x64xf32>
    %238 = vector.shape_cast %237 : vector<1x32x64xf32> to vector<32x64xf32>
    %239 = arith.mulf %236, %238 : vector<32x64xf32>
    %240 = arith.addf %235, %239 : vector<32x64xf32>
    %c25_i32 = arith.constant 25 : i32
    %241 = tpu.dynamic_rotate %141 by %c25_i32 dim 0 : vector<32x64xf32>, i32 -> vector<32x64xf32>
    %c20_127 = arith.constant 20 : index
    %c216_128 = arith.constant 216 : index
    %c0_129 = arith.constant 0 : index
    %242 = vector.load %arg3[%c20_127, %c216_128, %c0_129] : memref<27x264x64xf32, #tpu.memory_space<vmem>>, vector<1x32x64xf32>
    %243 = vector.shape_cast %242 : vector<1x32x64xf32> to vector<32x64xf32>
    %244 = arith.mulf %241, %243 : vector<32x64xf32>
    %245 = arith.addf %240, %244 : vector<32x64xf32>
    %c24_i32 = arith.constant 24 : i32
    %246 = tpu.dynamic_rotate %141 by %c24_i32 dim 0 : vector<32x64xf32>, i32 -> vector<32x64xf32>
    %c21_130 = arith.constant 21 : index
    %c216_131 = arith.constant 216 : index
    %c0_132 = arith.constant 0 : index
    %247 = vector.load %arg3[%c21_130, %c216_131, %c0_132] : memref<27x264x64xf32, #tpu.memory_space<vmem>>, vector<1x32x64xf32>
    %248 = vector.shape_cast %247 : vector<1x32x64xf32> to vector<32x64xf32>
    %249 = arith.mulf %246, %248 : vector<32x64xf32>
    %250 = arith.addf %245, %249 : vector<32x64xf32>
    %c23_i32 = arith.constant 23 : i32
    %251 = tpu.dynamic_rotate %141 by %c23_i32 dim 0 : vector<32x64xf32>, i32 -> vector<32x64xf32>
    %c22_133 = arith.constant 22 : index
    %c216_134 = arith.constant 216 : index
    %c0_135 = arith.constant 0 : index
    %252 = vector.load %arg3[%c22_133, %c216_134, %c0_135] : memref<27x264x64xf32, #tpu.memory_space<vmem>>, vector<1x32x64xf32>
    %253 = vector.shape_cast %252 : vector<1x32x64xf32> to vector<32x64xf32>
    %254 = arith.mulf %251, %253 : vector<32x64xf32>
    %255 = arith.addf %250, %254 : vector<32x64xf32>
    %c22_i32 = arith.constant 22 : i32
    %256 = tpu.dynamic_rotate %141 by %c22_i32 dim 0 : vector<32x64xf32>, i32 -> vector<32x64xf32>
    %c23_136 = arith.constant 23 : index
    %c216_137 = arith.constant 216 : index
    %c0_138 = arith.constant 0 : index
    %257 = vector.load %arg3[%c23_136, %c216_137, %c0_138] : memref<27x264x64xf32, #tpu.memory_space<vmem>>, vector<1x32x64xf32>
    %258 = vector.shape_cast %257 : vector<1x32x64xf32> to vector<32x64xf32>
    %259 = arith.mulf %256, %258 : vector<32x64xf32>
    %260 = arith.addf %255, %259 : vector<32x64xf32>
    %c21_i32 = arith.constant 21 : i32
    %261 = tpu.dynamic_rotate %141 by %c21_i32 dim 0 : vector<32x64xf32>, i32 -> vector<32x64xf32>
    %c24_139 = arith.constant 24 : index
    %c216_140 = arith.constant 216 : index
    %c0_141 = arith.constant 0 : index
    %262 = vector.load %arg3[%c24_139, %c216_140, %c0_141] : memref<27x264x64xf32, #tpu.memory_space<vmem>>, vector<1x32x64xf32>
    %263 = vector.shape_cast %262 : vector<1x32x64xf32> to vector<32x64xf32>
    %264 = arith.mulf %261, %263 : vector<32x64xf32>
    %265 = arith.addf %260, %264 : vector<32x64xf32>
    %c20_i32 = arith.constant 20 : i32
    %266 = tpu.dynamic_rotate %141 by %c20_i32 dim 0 : vector<32x64xf32>, i32 -> vector<32x64xf32>
    %c25_142 = arith.constant 25 : index
    %c216_143 = arith.constant 216 : index
    %c0_144 = arith.constant 0 : index
    %267 = vector.load %arg3[%c25_142, %c216_143, %c0_144] : memref<27x264x64xf32, #tpu.memory_space<vmem>>, vector<1x32x64xf32>
    %268 = vector.shape_cast %267 : vector<1x32x64xf32> to vector<32x64xf32>
    %269 = arith.mulf %266, %268 : vector<32x64xf32>
    %270 = arith.addf %265, %269 : vector<32x64xf32>
    %c19_i32 = arith.constant 19 : i32
    %271 = tpu.dynamic_rotate %141 by %c19_i32 dim 0 : vector<32x64xf32>, i32 -> vector<32x64xf32>
    %c26_145 = arith.constant 26 : index
    %c216_146 = arith.constant 216 : index
    %c0_147 = arith.constant 0 : index
    %272 = vector.load %arg3[%c26_145, %c216_146, %c0_147] : memref<27x264x64xf32, #tpu.memory_space<vmem>>, vector<1x32x64xf32>
    %273 = vector.shape_cast %272 : vector<1x32x64xf32> to vector<32x64xf32>
    %274 = arith.mulf %271, %273 : vector<32x64xf32>
    %275 = arith.addf %270, %274 : vector<32x64xf32>
    %c216_148 = arith.constant 216 : index
    %c0_149 = arith.constant 0 : index
    %276 = vector.load %arg13[%c216_148, %c0_149] : memref<264x64xf32, #tpu.memory_space<vmem>>, vector<32x64xf32>
    tpu.vector_store %arg13[%c216_148, %c0_149], %275 {strides = array<i32>} : memref<264x64xf32, #tpu.memory_space<vmem>>, vector<32x64xf32>,
    %277 = vector.extract_strided_slice %4 {offsets = [248, 0], sizes = [8, 64], strides = [1, 1]} : vector<264x64xf32> to vector<8x64xf32>
    %c7_i32_150 = arith.constant 7 : i32
    %278 = tpu.dynamic_rotate %277 by %c7_i32_150 dim 0 : vector<8x64xf32>, i32 -> vector<8x64xf32>
    %c0_151 = arith.constant 0 : index
    %c248 = arith.constant 248 : index
    %c0_152 = arith.constant 0 : index
    %279 = vector.load %arg3[%c0_151, %c248, %c0_152] : memref<27x264x64xf32, #tpu.memory_space<vmem>>, vector<1x8x64xf32>
    %280 = vector.shape_cast %279 : vector<1x8x64xf32> to vector<8x64xf32>
    %281 = arith.mulf %278, %280 : vector<8x64xf32>
    %282 = arith.addf %277, %281 : vector<8x64xf32>
    %c6_i32_153 = arith.constant 6 : i32
    %283 = tpu.dynamic_rotate %277 by %c6_i32_153 dim 0 : vector<8x64xf32>, i32 -> vector<8x64xf32>
    %c1_154 = arith.constant 1 : index
    %c248_155 = arith.constant 248 : index
    %c0_156 = arith.constant 0 : index
    %284 = vector.load %arg3[%c1_154, %c248_155, %c0_156] : memref<27x264x64xf32, #tpu.memory_space<vmem>>, vector<1x8x64xf32>
    %285 = vector.shape_cast %284 : vector<1x8x64xf32> to vector<8x64xf32>
    %286 = arith.mulf %283, %285 : vector<8x64xf32>
    %287 = arith.addf %282, %286 : vector<8x64xf32>
    %c5_i32_157 = arith.constant 5 : i32
    %288 = tpu.dynamic_rotate %277 by %c5_i32_157 dim 0 : vector<8x64xf32>, i32 -> vector<8x64xf32>
    %c2_158 = arith.constant 2 : index
    %c248_159 = arith.constant 248 : index
    %c0_160 = arith.constant 0 : index
    %289 = vector.load %arg3[%c2_158, %c248_159, %c0_160] : memref<27x264x64xf32, #tpu.memory_space<vmem>>, vector<1x8x64xf32>
    %290 = vector.shape_cast %289 : vector<1x8x64xf32> to vector<8x64xf32>
    %291 = arith.mulf %288, %290 : vector<8x64xf32>
    %292 = arith.addf %287, %291 : vector<8x64xf32>
    %c5_i32_161 = arith.constant 5 : i32
    %293 = tpu.dynamic_rotate %277 by %c5_i32_161 dim 0 : vector<8x64xf32>, i32 -> vector<8x64xf32>
    %c3_162 = arith.constant 3 : index
    %c248_163 = arith.constant 248 : index
    %c0_164 = arith.constant 0 : index
    %294 = vector.load %arg3[%c3_162, %c248_163, %c0_164] : memref<27x264x64xf32, #tpu.memory_space<vmem>>, vector<1x8x64xf32>
    %295 = vector.shape_cast %294 : vector<1x8x64xf32> to vector<8x64xf32>
    %296 = arith.mulf %293, %295 : vector<8x64xf32>
    %297 = arith.addf %292, %296 : vector<8x64xf32>
    %c4_i32_165 = arith.constant 4 : i32
    %298 = tpu.dynamic_rotate %277 by %c4_i32_165 dim 0 : vector<8x64xf32>, i32 -> vector<8x64xf32>
    %c4_166 = arith.constant 4 : index
    %c248_167 = arith.constant 248 : index
    %c0_168 = arith.constant 0 : index
    %299 = vector.load %arg3[%c4_166, %c248_167, %c0_168] : memref<27x264x64xf32, #tpu.memory_space<vmem>>, vector<1x8x64xf32>
    %300 = vector.shape_cast %299 : vector<1x8x64xf32> to vector<8x64xf32>
    %301 = arith.mulf %298, %300 : vector<8x64xf32>
    %302 = arith.addf %297, %301 : vector<8x64xf32>
    %c3_i32_169 = arith.constant 3 : i32
    %303 = tpu.dynamic_rotate %277 by %c3_i32_169 dim 0 : vector<8x64xf32>, i32 -> vector<8x64xf32>
    %c5_170 = arith.constant 5 : index
    %c248_171 = arith.constant 248 : index
    %c0_172 = arith.constant 0 : index
    %304 = vector.load %arg3[%c5_170, %c248_171, %c0_172] : memref<27x264x64xf32, #tpu.memory_space<vmem>>, vector<1x8x64xf32>
    %305 = vector.shape_cast %304 : vector<1x8x64xf32> to vector<8x64xf32>
    %306 = arith.mulf %303, %305 : vector<8x64xf32>
    %307 = arith.addf %302, %306 : vector<8x64xf32>
    %c3_i32_173 = arith.constant 3 : i32
    %308 = tpu.dynamic_rotate %277 by %c3_i32_173 dim 0 : vector<8x64xf32>, i32 -> vector<8x64xf32>
    %c6_174 = arith.constant 6 : index
    %c248_175 = arith.constant 248 : index
    %c0_176 = arith.constant 0 : index
    %309 = vector.load %arg3[%c6_174, %c248_175, %c0_176] : memref<27x264x64xf32, #tpu.memory_space<vmem>>, vector<1x8x64xf32>
    %310 = vector.shape_cast %309 : vector<1x8x64xf32> to vector<8x64xf32>
    %311 = arith.mulf %308, %310 : vector<8x64xf32>
    %312 = arith.addf %307, %311 : vector<8x64xf32>
    %c2_i32_177 = arith.constant 2 : i32
    %313 = tpu.dynamic_rotate %277 by %c2_i32_177 dim 0 : vector<8x64xf32>, i32 -> vector<8x64xf32>
    %c7_178 = arith.constant 7 : index
    %c248_179 = arith.constant 248 : index
    %c0_180 = arith.constant 0 : index
    %314 = vector.load %arg3[%c7_178, %c248_179, %c0_180] : memref<27x264x64xf32, #tpu.memory_space<vmem>>, vector<1x8x64xf32>
    %315 = vector.shape_cast %314 : vector<1x8x64xf32> to vector<8x64xf32>
    %316 = arith.mulf %313, %315 : vector<8x64xf32>
    %317 = arith.addf %312, %316 : vector<8x64xf32>
    %c1_i32_181 = arith.constant 1 : i32
    %318 = tpu.dynamic_rotate %277 by %c1_i32_181 dim 0 : vector<8x64xf32>, i32 -> vector<8x64xf32>
    %c8_182 = arith.constant 8 : index
    %c248_183 = arith.constant 248 : index
    %c0_184 = arith.constant 0 : index
    %319 = vector.load %arg3[%c8_182, %c248_183, %c0_184] : memref<27x264x64xf32, #tpu.memory_space<vmem>>, vector<1x8x64xf32>
    %320 = vector.shape_cast %319 : vector<1x8x64xf32> to vector<8x64xf32>
    %321 = arith.mulf %318, %320 : vector<8x64xf32>
    %322 = arith.addf %317, %321 : vector<8x64xf32>
    %c3_i32_185 = arith.constant 3 : i32
    %323 = tpu.dynamic_rotate %277 by %c3_i32_185 dim 0 : vector<8x64xf32>, i32 -> vector<8x64xf32>
    %c9_186 = arith.constant 9 : index
    %c248_187 = arith.constant 248 : index
    %c0_188 = arith.constant 0 : index
    %324 = vector.load %arg3[%c9_186, %c248_187, %c0_188] : memref<27x264x64xf32, #tpu.memory_space<vmem>>, vector<1x8x64xf32>
    %325 = vector.shape_cast %324 : vector<1x8x64xf32> to vector<8x64xf32>
    %326 = arith.mulf %323, %325 : vector<8x64xf32>
    %327 = arith.addf %322, %326 : vector<8x64xf32>
    %c2_i32_189 = arith.constant 2 : i32
    %328 = tpu.dynamic_rotate %277 by %c2_i32_189 dim 0 : vector<8x64xf32>, i32 -> vector<8x64xf32>
    %c10_190 = arith.constant 10 : index
    %c248_191 = arith.constant 248 : index
    %c0_192 = arith.constant 0 : index
    %329 = vector.load %arg3[%c10_190, %c248_191, %c0_192] : memref<27x264x64xf32, #tpu.memory_space<vmem>>, vector<1x8x64xf32>
    %330 = vector.shape_cast %329 : vector<1x8x64xf32> to vector<8x64xf32>
    %331 = arith.mulf %328, %330 : vector<8x64xf32>
    %332 = arith.addf %327, %331 : vector<8x64xf32>
    %c1_i32_193 = arith.constant 1 : i32
    %333 = tpu.dynamic_rotate %277 by %c1_i32_193 dim 0 : vector<8x64xf32>, i32 -> vector<8x64xf32>
    %c11_194 = arith.constant 11 : index
    %c248_195 = arith.constant 248 : index
    %c0_196 = arith.constant 0 : index
    %334 = vector.load %arg3[%c11_194, %c248_195, %c0_196] : memref<27x264x64xf32, #tpu.memory_space<vmem>>, vector<1x8x64xf32>
    %335 = vector.shape_cast %334 : vector<1x8x64xf32> to vector<8x64xf32>
    %336 = arith.mulf %333, %335 : vector<8x64xf32>
    %337 = arith.addf %332, %336 : vector<8x64xf32>
    %c1_i32_197 = arith.constant 1 : i32
    %338 = tpu.dynamic_rotate %277 by %c1_i32_197 dim 0 : vector<8x64xf32>, i32 -> vector<8x64xf32>
    %c12_198 = arith.constant 12 : index
    %c248_199 = arith.constant 248 : index
    %c0_200 = arith.constant 0 : index
    %339 = vector.load %arg3[%c12_198, %c248_199, %c0_200] : memref<27x264x64xf32, #tpu.memory_space<vmem>>, vector<1x8x64xf32>
    %340 = vector.shape_cast %339 : vector<1x8x64xf32> to vector<8x64xf32>
    %341 = arith.mulf %338, %340 : vector<8x64xf32>
    %342 = arith.addf %337, %341 : vector<8x64xf32>
    %c13_201 = arith.constant 13 : index
    %c248_202 = arith.constant 248 : index
    %c0_203 = arith.constant 0 : index
    %343 = vector.load %arg3[%c13_201, %c248_202, %c0_203] : memref<27x264x64xf32, #tpu.memory_space<vmem>>, vector<1x8x64xf32>
    %344 = vector.shape_cast %343 : vector<1x8x64xf32> to vector<8x64xf32>
    %345 = arith.mulf %277, %344 : vector<8x64xf32>
    %346 = arith.addf %342, %345 : vector<8x64xf32>
    %c7_i32_204 = arith.constant 7 : i32
    %347 = tpu.dynamic_rotate %277 by %c7_i32_204 dim 0 : vector<8x64xf32>, i32 -> vector<8x64xf32>
    %c14_205 = arith.constant 14 : index
    %c248_206 = arith.constant 248 : index
    %c0_207 = arith.constant 0 : index
    %348 = vector.load %arg3[%c14_205, %c248_206, %c0_207] : memref<27x264x64xf32, #tpu.memory_space<vmem>>, vector<1x8x64xf32>
    %349 = vector.shape_cast %348 : vector<1x8x64xf32> to vector<8x64xf32>
    %350 = arith.mulf %347, %349 : vector<8x64xf32>
    %351 = arith.addf %346, %350 : vector<8x64xf32>
    %c7_i32_208 = arith.constant 7 : i32
    %352 = tpu.dynamic_rotate %277 by %c7_i32_208 dim 0 : vector<8x64xf32>, i32 -> vector<8x64xf32>
    %c15_209 = arith.constant 15 : index
    %c248_210 = arith.constant 248 : index
    %c0_211 = arith.constant 0 : index
    %353 = vector.load %arg3[%c15_209, %c248_210, %c0_211] : memref<27x264x64xf32, #tpu.memory_space<vmem>>, vector<1x8x64xf32>
    %354 = vector.shape_cast %353 : vector<1x8x64xf32> to vector<8x64xf32>
    %355 = arith.mulf %352, %354 : vector<8x64xf32>
    %356 = arith.addf %351, %355 : vector<8x64xf32>
    %c6_i32_212 = arith.constant 6 : i32
    %357 = tpu.dynamic_rotate %277 by %c6_i32_212 dim 0 : vector<8x64xf32>, i32 -> vector<8x64xf32>
    %c16_213 = arith.constant 16 : index
    %c248_214 = arith.constant 248 : index
    %c0_215 = arith.constant 0 : index
    %358 = vector.load %arg3[%c16_213, %c248_214, %c0_215] : memref<27x264x64xf32, #tpu.memory_space<vmem>>, vector<1x8x64xf32>
    %359 = vector.shape_cast %358 : vector<1x8x64xf32> to vector<8x64xf32>
    %360 = arith.mulf %357, %359 : vector<8x64xf32>
    %361 = arith.addf %356, %360 : vector<8x64xf32>
    %c5_i32_216 = arith.constant 5 : i32
    %362 = tpu.dynamic_rotate %277 by %c5_i32_216 dim 0 : vector<8x64xf32>, i32 -> vector<8x64xf32>
    %c17_217 = arith.constant 17 : index
    %c248_218 = arith.constant 248 : index
    %c0_219 = arith.constant 0 : index
    %363 = vector.load %arg3[%c17_217, %c248_218, %c0_219] : memref<27x264x64xf32, #tpu.memory_space<vmem>>, vector<1x8x64xf32>
    %364 = vector.shape_cast %363 : vector<1x8x64xf32> to vector<8x64xf32>
    %365 = arith.mulf %362, %364 : vector<8x64xf32>
    %366 = arith.addf %361, %365 : vector<8x64xf32>
    %c7_i32_220 = arith.constant 7 : i32
    %367 = tpu.dynamic_rotate %277 by %c7_i32_220 dim 0 : vector<8x64xf32>, i32 -> vector<8x64xf32>
    %c18_221 = arith.constant 18 : index
    %c248_222 = arith.constant 248 : index
    %c0_223 = arith.constant 0 : index
    %368 = vector.load %arg3[%c18_221, %c248_222, %c0_223] : memref<27x264x64xf32, #tpu.memory_space<vmem>>, vector<1x8x64xf32>
    %369 = vector.shape_cast %368 : vector<1x8x64xf32> to vector<8x64xf32>
    %370 = arith.mulf %367, %369 : vector<8x64xf32>
    %371 = arith.addf %366, %370 : vector<8x64xf32>
    %c6_i32_224 = arith.constant 6 : i32
    %372 = tpu.dynamic_rotate %277 by %c6_i32_224 dim 0 : vector<8x64xf32>, i32 -> vector<8x64xf32>
    %c19_225 = arith.constant 19 : index
    %c248_226 = arith.constant 248 : index
    %c0_227 = arith.constant 0 : index
    %373 = vector.load %arg3[%c19_225, %c248_226, %c0_227] : memref<27x264x64xf32, #tpu.memory_space<vmem>>, vector<1x8x64xf32>
    %374 = vector.shape_cast %373 : vector<1x8x64xf32> to vector<8x64xf32>
    %375 = arith.mulf %372, %374 : vector<8x64xf32>
    %376 = arith.addf %371, %375 : vector<8x64xf32>
    %c5_i32_228 = arith.constant 5 : i32
    %377 = tpu.dynamic_rotate %277 by %c5_i32_228 dim 0 : vector<8x64xf32>, i32 -> vector<8x64xf32>
    %c20_229 = arith.constant 20 : index
    %c248_230 = arith.constant 248 : index
    %c0_231 = arith.constant 0 : index
    %378 = vector.load %arg3[%c20_229, %c248_230, %c0_231] : memref<27x264x64xf32, #tpu.memory_space<vmem>>, vector<1x8x64xf32>
    %379 = vector.shape_cast %378 : vector<1x8x64xf32> to vector<8x64xf32>
    %380 = arith.mulf %377, %379 : vector<8x64xf32>
    %381 = arith.addf %376, %380 : vector<8x64xf32>
    %c5_i32_232 = arith.constant 5 : i32
    %382 = tpu.dynamic_rotate %277 by %c5_i32_232 dim 0 : vector<8x64xf32>, i32 -> vector<8x64xf32>
    %c21_233 = arith.constant 21 : index
    %c248_234 = arith.constant 248 : index
    %c0_235 = arith.constant 0 : index
    %383 = vector.load %arg3[%c21_233, %c248_234, %c0_235] : memref<27x264x64xf32, #tpu.memory_space<vmem>>, vector<1x8x64xf32>
    %384 = vector.shape_cast %383 : vector<1x8x64xf32> to vector<8x64xf32>
    %385 = arith.mulf %382, %384 : vector<8x64xf32>
    %386 = arith.addf %381, %385 : vector<8x64xf32>
    %c4_i32_236 = arith.constant 4 : i32
    %387 = tpu.dynamic_rotate %277 by %c4_i32_236 dim 0 : vector<8x64xf32>, i32 -> vector<8x64xf32>
    %c22_237 = arith.constant 22 : index
    %c248_238 = arith.constant 248 : index
    %c0_239 = arith.constant 0 : index
    %388 = vector.load %arg3[%c22_237, %c248_238, %c0_239] : memref<27x264x64xf32, #tpu.memory_space<vmem>>, vector<1x8x64xf32>
    %389 = vector.shape_cast %388 : vector<1x8x64xf32> to vector<8x64xf32>
    %390 = arith.mulf %387, %389 : vector<8x64xf32>
    %391 = arith.addf %386, %390 : vector<8x64xf32>
    %c3_i32_240 = arith.constant 3 : i32
    %392 = tpu.dynamic_rotate %277 by %c3_i32_240 dim 0 : vector<8x64xf32>, i32 -> vector<8x64xf32>
    %c23_241 = arith.constant 23 : index
    %c248_242 = arith.constant 248 : index
    %c0_243 = arith.constant 0 : index
    %393 = vector.load %arg3[%c23_241, %c248_242, %c0_243] : memref<27x264x64xf32, #tpu.memory_space<vmem>>, vector<1x8x64xf32>
    %394 = vector.shape_cast %393 : vector<1x8x64xf32> to vector<8x64xf32>
    %395 = arith.mulf %392, %394 : vector<8x64xf32>
    %396 = arith.addf %391, %395 : vector<8x64xf32>
    %c3_i32_244 = arith.constant 3 : i32
    %397 = tpu.dynamic_rotate %277 by %c3_i32_244 dim 0 : vector<8x64xf32>, i32 -> vector<8x64xf32>
    %c24_245 = arith.constant 24 : index
    %c248_246 = arith.constant 248 : index
    %c0_247 = arith.constant 0 : index
    %398 = vector.load %arg3[%c24_245, %c248_246, %c0_247] : memref<27x264x64xf32, #tpu.memory_space<vmem>>, vector<1x8x64xf32>
    %399 = vector.shape_cast %398 : vector<1x8x64xf32> to vector<8x64xf32>
    %400 = arith.mulf %397, %399 : vector<8x64xf32>
    %401 = arith.addf %396, %400 : vector<8x64xf32>
    %c2_i32_248 = arith.constant 2 : i32
    %402 = tpu.dynamic_rotate %277 by %c2_i32_248 dim 0 : vector<8x64xf32>, i32 -> vector<8x64xf32>
    %c25_249 = arith.constant 25 : index
    %c248_250 = arith.constant 248 : index
    %c0_251 = arith.constant 0 : index
    %403 = vector.load %arg3[%c25_249, %c248_250, %c0_251] : memref<27x264x64xf32, #tpu.memory_space<vmem>>, vector<1x8x64xf32>
    %404 = vector.shape_cast %403 : vector<1x8x64xf32> to vector<8x64xf32>
    %405 = arith.mulf %402, %404 : vector<8x64xf32>
    %406 = arith.addf %401, %405 : vector<8x64xf32>
    %c1_i32_252 = arith.constant 1 : i32
    %407 = tpu.dynamic_rotate %277 by %c1_i32_252 dim 0 : vector<8x64xf32>, i32 -> vector<8x64xf32>
    %c26_253 = arith.constant 26 : index
    %c248_254 = arith.constant 248 : index
    %c0_255 = arith.constant 0 : index
    %408 = vector.load %arg3[%c26_253, %c248_254, %c0_255] : memref<27x264x64xf32, #tpu.memory_space<vmem>>, vector<1x8x64xf32>
    %409 = vector.shape_cast %408 : vector<1x8x64xf32> to vector<8x64xf32>
    %410 = arith.mulf %407, %409 : vector<8x64xf32>
    %411 = arith.addf %406, %410 : vector<8x64xf32>
    %c248_256 = arith.constant 248 : index
    %c0_257 = arith.constant 0 : index
    %412 = vector.load %arg13[%c248_256, %c0_257] : memref<264x64xf32, #tpu.memory_space<vmem>>, vector<8x64xf32>
    tpu.vector_store %arg13[%c248_256, %c0_257], %411 {strides = array<i32>} : memref<264x64xf32, #tpu.memory_space<vmem>>, vector<8x64xf32>,
    %413 = vector.extract_strided_slice %4 {offsets = [256, 0], sizes = [8, 64], strides = [1, 1]} : vector<264x64xf32> to vector<8x64xf32>
    %c13_258 = arith.constant 13 : index
    %c256 = arith.constant 256 : index
    %c0_259 = arith.constant 0 : index
    %414 = vector.load %arg3[%c13_258, %c256, %c0_259] : memref<27x264x64xf32, #tpu.memory_space<vmem>>, vector<1x8x64xf32>
    %415 = vector.shape_cast %414 : vector<1x8x64xf32> to vector<8x64xf32>
    %416 = arith.mulf %413, %415 : vector<8x64xf32>
    %417 = arith.addf %413, %416 : vector<8x64xf32>
    %c256_260 = arith.constant 256 : index
    %c0_261 = arith.constant 0 : index
    %418 = vector.load %arg13[%c256_260, %c0_261] : memref<264x64xf32, #tpu.memory_space<vmem>>, vector<8x64xf32>
    tpu.vector_store %arg13[%c256_260, %c0_261], %417 {strides = array<i32>} : memref<264x64xf32, #tpu.memory_space<vmem>>, vector<8x64xf32>,
    %c0_262 = arith.constant 0 : index
    %c0_263 = arith.constant 0 : index
    %419 = vector.load %arg13[%c0_262, %c0_263] : memref<264x64xf32, #tpu.memory_space<vmem>>, vector<264x64xf32>
    %cst_264 = arith.constant dense<0.000000e+00> : vector<264xf32>
    %420 = vector.multi_reduction <add>, %419, %cst_264 [1] : vector<264x64xf32> to vector<264xf32>
    %421 = vector.shape_cast %420 : vector<264xf32> to vector<264x1xf32>
    %cst_265 = arith.constant 6.400000e+01 : f32
    %422 = vector.broadcast %cst_265 : f32 to vector<264x1xf32>
    %423 = arith.divf %421, %422 : vector<264x1xf32>
    %424 = vector.broadcast %423 : vector<264x1xf32> to vector<264x64xf32>
    %425 = arith.subf %419, %424 : vector<264x64xf32>
    %426 = arith.mulf %425, %425 : vector<264x64xf32>
    %cst_266 = arith.constant dense<0.000000e+00> : vector<264xf32>
    %427 = vector.multi_reduction <add>, %426, %cst_266 [1] : vector<264x64xf32> to vector<264xf32>
    %428 = vector.shape_cast %427 : vector<264xf32> to vector<264x1xf32>
    %cst_267 = arith.constant 6.400000e+01 : f32
    %429 = vector.broadcast %cst_267 : f32 to vector<264x1xf32>
    %430 = arith.divf %428, %429 : vector<264x1xf32>
    %431 = vector.broadcast %423 : vector<264x1xf32> to vector<264x64xf32>
    %432 = arith.subf %419, %431 : vector<264x64xf32>
    %cst_268 = arith.constant 9.99999974E-6 : f32
    %433 = vector.broadcast %cst_268 : f32 to vector<264x1xf32>
    %434 = arith.addf %430, %433 : vector<264x1xf32>
    %435 = math.rsqrt %434 : vector<264x1xf32>
    %436 = vector.broadcast %435 : vector<264x1xf32> to vector<264x64xf32>
    %437 = arith.mulf %432, %436 : vector<264x64xf32>
    %c0_269 = arith.constant 0 : index
    %c0_270 = arith.constant 0 : index
    %438 = vector.load %arg5[%c0_269, %c0_270] : memref<1x64xf32, #tpu.memory_space<vmem>>, vector<1x64xf32>
    %439 = vector.broadcast %438 : vector<1x64xf32> to vector<264x64xf32>
    %440 = arith.mulf %437, %439 : vector<264x64xf32>
    %c0_271 = arith.constant 0 : index
    %c0_272 = arith.constant 0 : index
    %441 = vector.load %arg6[%c0_271, %c0_272] : memref<1x64xf32, #tpu.memory_space<vmem>>, vector<1x64xf32>
    %442 = vector.broadcast %441 : vector<1x64xf32> to vector<264x64xf32>
    %443 = arith.addf %440, %442 : vector<264x64xf32>
    %444 = arith.truncf %443 : vector<264x64xf32> to vector<264x64xbf16>
    %c0_273 = arith.constant 0 : index
    %c0_274 = arith.constant 0 : index
    %445 = vector.load %arg7[%c0_273, %c0_274] : memref<64x64xbf16, #tpu.memory_space<vmem>>, vector<64x64xbf16>
    %cst_275 = arith.constant dense<0.000000e+00> : vector<216x64xf32>
    %446 = tpu.matmul %2, %445, %cst_275 {dimension_numbers = #tpu.dot_dimension_numbers<[1], [0], [0], [1], [0, 0, 1, 1], [], []>} : vector<216x64xbf16>, vector<64x64xbf16>, vector<216x64xf32> -> vector<216x64xf32>
    %447 = arith.truncf %446 : vector<216x64xf32> to vector<216x64xbf16>
    %c0_276 = arith.constant 0 : index
    %c0_277 = arith.constant 0 : index
    %448 = vector.load %arg8[%c0_276, %c0_277] : memref<64x64xbf16, #tpu.memory_space<vmem>>, vector<64x64xbf16>
    %cst_278 = arith.constant dense<0.000000e+00> : vector<264x64xf32>
    %449 = tpu.matmul %444, %448, %cst_278 {dimension_numbers = #tpu.dot_dimension_numbers<[1], [0], [0], [1], [0, 0, 1, 1], [], []>} : vector<264x64xbf16>, vector<64x64xbf16>, vector<264x64xf32> -> vector<264x64xf32>
    %450 = arith.truncf %449 : vector<264x64xf32> to vector<264x64xbf16>
    %c0_279 = arith.constant 0 : index
    %c0_280 = arith.constant 0 : index
    %451 = vector.load %arg9[%c0_279, %c0_280] : memref<64x64xbf16, #tpu.memory_space<vmem>>, vector<64x64xbf16>
    %cst_281 = arith.constant dense<0.000000e+00> : vector<264x64xf32>
    %452 = tpu.matmul %444, %451, %cst_281 {dimension_numbers = #tpu.dot_dimension_numbers<[1], [0], [0], [1], [0, 0, 1, 1], [], []>} : vector<264x64xbf16>, vector<64x64xbf16>, vector<264x64xf32> -> vector<264x64xf32>
    %453 = arith.truncf %452 : vector<264x64xf32> to vector<264x64xbf16>
    %c0_282 = arith.constant 0 : index
    %c0_283 = arith.constant 0 : index
    %454 = vector.load %arg4[%c0_282, %c0_283] : memref<1x264xf32, #tpu.memory_space<vmem>>, vector<1x264xf32>
    %cst_284 = arith.constant 0.000000e+00 : f32
    %455 = vector.broadcast %cst_284 : f32 to vector<216x64xf32>
    %456 = vector.extract_strided_slice %447 {offsets = [0, 0], sizes = [216, 32], strides = [1, 1]} : vector<216x64xbf16> to vector<216x32xbf16>
    %457 = vector.extract_strided_slice %450 {offsets = [0, 0], sizes = [264, 32], strides = [1, 1]} : vector<264x64xbf16> to vector<264x32xbf16>
    %cst_285 = arith.constant dense<0.000000e+00> : vector<216x264xf32>
    %458 = tpu.matmul %456, %457, %cst_285 {dimension_numbers = #tpu.dot_dimension_numbers<[1], [1], [0], [0], [0, 0, 1, 0], [], []>} : vector<216x32xbf16>, vector<264x32xbf16>, vector<216x264xf32> -> vector<216x264xf32>
    %459 = vector.broadcast %454 : vector<1x264xf32> to vector<216x264xf32>
    %460 = arith.addf %458, %459 : vector<216x264xf32>
    %cst_286 = arith.constant dense<0xFF800000> : vector<216xf32>
    %461 = vector.multi_reduction <maximumf>, %460, %cst_286 [1] : vector<216x264xf32> to vector<216xf32>
    %462 = vector.shape_cast %461 : vector<216xf32> to vector<216x1xf32>
    %463 = vector.broadcast %462 : vector<216x1xf32> to vector<216x264xf32>
    %464 = arith.subf %460, %463 : vector<216x264xf32>
    %465 = math.exp %464 : vector<216x264xf32>
    %cst_287 = arith.constant dense<0.000000e+00> : vector<216xf32>
    %466 = vector.multi_reduction <add>, %465, %cst_287 [1] : vector<216x264xf32> to vector<216xf32>
    %467 = vector.shape_cast %466 : vector<216xf32> to vector<216x1xf32>
    %468 = arith.truncf %465 : vector<216x264xf32> to vector<216x264xbf16>
    %469 = vector.extract_strided_slice %453 {offsets = [0, 0], sizes = [264, 32], strides = [1, 1]} : vector<264x64xbf16> to vector<264x32xbf16>
    %cst_288 = arith.constant dense<0.000000e+00> : vector<216x32xf32>
    %470 = tpu.matmul %468, %469, %cst_288 {dimension_numbers = #tpu.dot_dimension_numbers<[1], [0], [0], [1], [0, 0, 1, 1], [], []>} : vector<216x264xbf16>, vector<264x32xbf16>, vector<216x32xf32> -> vector<216x32xf32>
    %471 = tpu.reciprocal %467 {approx = true} : vector<216x1xf32> -> vector<216x1xf32>
    %472 = vector.broadcast %471 : vector<216x1xf32> to vector<216x32xf32>
    %473 = arith.mulf %470, %472 : vector<216x32xf32>
    %474 = arith.truncf %473 : vector<216x32xf32> to vector<216x32xbf16>
    %c0_289 = arith.constant 0 : index
    %c0_290 = arith.constant 0 : index
    %475 = vector.load %arg10[%c0_289, %c0_290] : memref<64x64xbf16, #tpu.memory_space<vmem>>, vector<32x64xbf16>
    %cst_291 = arith.constant dense<0.000000e+00> : vector<216x64xf32>
    %476 = tpu.matmul %474, %475, %cst_291 {dimension_numbers = #tpu.dot_dimension_numbers<[1], [0], [0], [1], [0, 0, 1, 1], [], []>} : vector<216x32xbf16>, vector<32x64xbf16>, vector<216x64xf32> -> vector<216x64xf32>
    %477 = arith.addf %455, %476 : vector<216x64xf32>
    %478 = vector.extract_strided_slice %447 {offsets = [0, 32], sizes = [216, 32], strides = [1, 1]} : vector<216x64xbf16> to vector<216x32xbf16>
    %479 = vector.extract_strided_slice %450 {offsets = [0, 32], sizes = [264, 32], strides = [1, 1]} : vector<264x64xbf16> to vector<264x32xbf16>
    %cst_292 = arith.constant dense<0.000000e+00> : vector<216x264xf32>
    %480 = tpu.matmul %478, %479, %cst_292 {dimension_numbers = #tpu.dot_dimension_numbers<[1], [1], [0], [0], [0, 0, 1, 0], [], []>} : vector<216x32xbf16>, vector<264x32xbf16>, vector<216x264xf32> -> vector<216x264xf32>
    %481 = vector.broadcast %454 : vector<1x264xf32> to vector<216x264xf32>
    %482 = arith.addf %480, %481 : vector<216x264xf32>
    %cst_293 = arith.constant dense<0xFF800000> : vector<216xf32>
    %483 = vector.multi_reduction <maximumf>, %482, %cst_293 [1] : vector<216x264xf32> to vector<216xf32>
    %484 = vector.shape_cast %483 : vector<216xf32> to vector<216x1xf32>
    %485 = vector.broadcast %484 : vector<216x1xf32> to vector<216x264xf32>
    %486 = arith.subf %482, %485 : vector<216x264xf32>
    %487 = math.exp %486 : vector<216x264xf32>
    %cst_294 = arith.constant dense<0.000000e+00> : vector<216xf32>
    %488 = vector.multi_reduction <add>, %487, %cst_294 [1] : vector<216x264xf32> to vector<216xf32>
    %489 = vector.shape_cast %488 : vector<216xf32> to vector<216x1xf32>
    %490 = arith.truncf %487 : vector<216x264xf32> to vector<216x264xbf16>
    %491 = vector.extract_strided_slice %453 {offsets = [0, 32], sizes = [264, 32], strides = [1, 1]} : vector<264x64xbf16> to vector<264x32xbf16>
    %cst_295 = arith.constant dense<0.000000e+00> : vector<216x32xf32>
    %492 = tpu.matmul %490, %491, %cst_295 {dimension_numbers = #tpu.dot_dimension_numbers<[1], [0], [0], [1], [0, 0, 1, 1], [], []>} : vector<216x264xbf16>, vector<264x32xbf16>, vector<216x32xf32> -> vector<216x32xf32>
    %493 = tpu.reciprocal %489 {approx = true} : vector<216x1xf32> -> vector<216x1xf32>
    %494 = vector.broadcast %493 : vector<216x1xf32> to vector<216x32xf32>
    %495 = arith.mulf %492, %494 : vector<216x32xf32>
    %496 = arith.truncf %495 : vector<216x32xf32> to vector<216x32xbf16>
    %c32 = arith.constant 32 : index
    %c0_296 = arith.constant 0 : index
    %497 = vector.load %arg10[%c32, %c0_296] : memref<64x64xbf16, #tpu.memory_space<vmem>>, vector<32x64xbf16>
    %cst_297 = arith.constant dense<0.000000e+00> : vector<216x64xf32>
    %498 = tpu.matmul %496, %497, %cst_297 {dimension_numbers = #tpu.dot_dimension_numbers<[1], [0], [0], [1], [0, 0, 1, 1], [], []>} : vector<216x32xbf16>, vector<32x64xbf16>, vector<216x64xf32> -> vector<216x64xf32>
    %499 = arith.addf %477, %498 : vector<216x64xf32>
    %c0_298 = arith.constant 0 : index
    %c0_299 = arith.constant 0 : index
    %500 = vector.load %arg11[%c0_298, %c0_299] : memref<1x64xf32, #tpu.memory_space<vmem>>, vector<1x64xf32>
    %501 = vector.broadcast %500 : vector<1x64xf32> to vector<216x64xf32>
    %502 = arith.addf %499, %501 : vector<216x64xf32>
    %c0_300 = arith.constant 0 : index
    %c0_301 = arith.constant 0 : index
    %c0_302 = arith.constant 0 : index
    %503 = vector.load %arg12[%c0_300, %c0_301, %c0_302] : memref<1x216x64xf32, #tpu.memory_space<vmem>>, vector<1x216x64xf32>
    %504 = vector.shape_cast %503 : vector<1x216x64xf32> to vector<216x64xf32>
    %505 = vector.shape_cast %502 : vector<216x64xf32> to vector<1x216x64xf32>
    tpu.vector_store %arg12[%c0_300, %c0_301, %c0_302], %505 {strides = array<i32>} : memref<1x216x64xf32, #tpu.memory_space<vmem>>, vector<1x216x64xf32>,
    return
  }
  func.func @transform_0(%arg0: i32) -> (i32, i32, i32) {
    %c0_i32 = arith.constant 0 : i32
    %c0_i32_0 = arith.constant 0 : i32
    %c0_i32_1 = arith.constant 0 : i32
    return %arg0, %c0_i32, %c0_i32_0 : i32, i32, i32
  }
  func.func @transform_1(%arg0: i32) -> (i32, i32) {
    %c0_i32 = arith.constant 0 : i32
    %c0_i32_0 = arith.constant 0 : i32
    %c0_i32_1 = arith.constant 0 : i32
    return %c0_i32, %c0_i32_0 : i32, i32
  }
  func.func @transform_2(%arg0: i32) -> (i32, i32, i32) {
    %c0_i32 = arith.constant 0 : i32
    %c0_i32_0 = arith.constant 0 : i32
    %c0_i32_1 = arith.constant 0 : i32
    %c0_i32_2 = arith.constant 0 : i32
    return %c0_i32, %c0_i32_0, %c0_i32_1 : i32, i32, i32
  }
  func.func @transform_3(%arg0: i32) -> (i32, i32) {
    %c0_i32 = arith.constant 0 : i32
    %c0_i32_0 = arith.constant 0 : i32
    %c0_i32_1 = arith.constant 0 : i32
    return %c0_i32, %c0_i32_0 : i32, i32
  }
  func.func @transform_4(%arg0: i32) -> (i32, i32) {
    %c0_i32 = arith.constant 0 : i32
    %c0_i32_0 = arith.constant 0 : i32
    %c0_i32_1 = arith.constant 0 : i32
    return %c0_i32, %c0_i32_0 : i32, i32
  }
  func.func @transform_5(%arg0: i32) -> (i32, i32) {
    %c0_i32 = arith.constant 0 : i32
    %c0_i32_0 = arith.constant 0 : i32
    %c0_i32_1 = arith.constant 0 : i32
    return %c0_i32, %c0_i32_0 : i32, i32
  }
  func.func @transform_6(%arg0: i32) -> (i32, i32) {
    %c0_i32 = arith.constant 0 : i32
    %c0_i32_0 = arith.constant 0 : i32
    %c0_i32_1 = arith.constant 0 : i32
    return %c0_i32, %c0_i32_0 : i32, i32
  }
  func.func @transform_7(%arg0: i32) -> (i32, i32) {
    %c0_i32 = arith.constant 0 : i32
    %c0_i32_0 = arith.constant 0 : i32
    %c0_i32_1 = arith.constant 0 : i32
    return %c0_i32, %c0_i32_0 : i32, i32
  }
  func.func @transform_8(%arg0: i32) -> (i32, i32) {
    %c0_i32 = arith.constant 0 : i32
    %c0_i32_0 = arith.constant 0 : i32
    %c0_i32_1 = arith.constant 0 : i32
    return %c0_i32, %c0_i32_0 : i32, i32
  }
  func.func @transform_9(%arg0: i32) -> (i32, i32) {
    %c0_i32 = arith.constant 0 : i32
    %c0_i32_0 = arith.constant 0 : i32
    %c0_i32_1 = arith.constant 0 : i32
    return %c0_i32, %c0_i32_0 : i32, i32
  }
  func.func @transform_10(%arg0: i32) -> (i32, i32) {
    %c0_i32 = arith.constant 0 : i32
    %c0_i32_0 = arith.constant 0 : i32
    %c0_i32_1 = arith.constant 0 : i32
    return %c0_i32, %c0_i32_0 : i32, i32
  }
  func.func @transform_11(%arg0: i32) -> (i32, i32, i32) {
    %c0_i32 = arith.constant 0 : i32
    %c0_i32_0 = arith.constant 0 : i32
    %c0_i32_1 = arith.constant 0 : i32
    return %arg0, %c0_i32, %c0_i32_0 : i32, i32, i32
  }
}

</mosaic_0001>

<llo_original>
// kernel: tpu_custom_call.1
$region0: #{tpu_custom_call.1}
  #allocation0 [shape = 'u32[]', space=smem, size = 0x4, offset = 0x4, fixed_abs, tag = 'smem constant byte address 0x4 - core index']
  #allocation1 [shape = 'u32[144,128]{1,0:T(1,128)}', space=vmem, size = 0x12000, scoped, tag = 'internal scratch']
  #allocation2 [shape = 'f32[264,64]{1,0:T(8,128)}', space=vmem, size = 0x21000, scoped, tag = 'scratch operand']
  %s0 = inlined_call_operand.vmem [shape: f32[2,216,64], index: 0, kind: input, shape index: {}]
  %s1 = inlined_call_operand.vmem [shape: bf16[264,216], index: 1, kind: input, shape index: {}]
  %s2 = inlined_call_operand.vmem [shape: f32[27,264,64], index: 2, kind: input, shape index: {}]
  %s3 = inlined_call_operand.vmem [shape: f32[1,264], index: 3, kind: input, shape index: {}]
  %s4 = inlined_call_operand.vmem [shape: f32[1,64], index: 4, kind: input, shape index: {}]
  %s5 = inlined_call_operand.vmem [shape: f32[1,64], index: 5, kind: input, shape index: {}]
  %s6 = inlined_call_operand.vmem [shape: bf16[64,64], index: 6, kind: input, shape index: {}]
  %s7 = inlined_call_operand.vmem [shape: bf16[64,64], index: 7, kind: input, shape index: {}]
  %s8 = inlined_call_operand.vmem [shape: bf16[64,64], index: 8, kind: input, shape index: {}]
  %s9 = inlined_call_operand.vmem [shape: bf16[64,64], index: 9, kind: input, shape index: {}]
  %s10 = inlined_call_operand.vmem [shape: f32[1,64], index: 10, kind: input, shape index: {}]
  %s11 = inlined_call_operand.vmem [shape: f32[2,216,64], index: 11, kind: output, shape index: {}]
  %s12 = sld [smem:[#allocation0]]
  $region77: #{tpu_custom_call.1} parent=0
    _
  %s14 = ssub.s32 1, %s12
  %s15 = scalar_select 0, %s14, %s12
  loop: start=0, step=1, limit=4
  $region2: #{tpu_custom_call.1} parent=0 // loop_pre_header
    _
  $region3: #{tpu_custom_call.1} parent=0 // loop_header
    %s17 = sphi 0, %s21
    %p18 = scmp.ge.s32.totalorder %s17, 4
    %s27 = sphi 0, %s29
    %s30 = sphi 0, %s27
    %s31 = sphi 0, %s30
    %s47 = sphi 0, %s31
    %s51 = sphi 0, %s51
    %s53 = sphi 0, %s51
    %s54 = sphi 0, %s53
    %s68 = sphi 0, %s54
    %s72 = sphi 0, %s72
    %s74 = sphi 0, %s72
    %s75 = sphi 0, %s74
    %s89 = sphi 0, %s75
    %s93 = sphi 0, %s93
    %s95 = sphi 0, %s93
    %s96 = sphi 0, %s95
    %s110 = sphi 0, %s96
    %s114 = sphi 0, %s114
    %s116 = sphi 0, %s114
    %s117 = sphi 0, %s116
    %s131 = sphi 0, %s117
    %s135 = sphi 0, %s135
    %s137 = sphi 0, %s135
    %s138 = sphi 0, %s137
    %s152 = sphi 0, %s138
    %s156 = sphi 0, %s156
    %s158 = sphi 0, %s156
    %s159 = sphi 0, %s158
    %s173 = sphi 0, %s159
    %s177 = sphi 0, %s177
    %s179 = sphi 0, %s177
    %s180 = sphi 0, %s179
    %s194 = sphi 0, %s180
    %s198 = sphi 0, %s198
    %s200 = sphi 0, %s198
    %s201 = sphi 0, %s200
    %s215 = sphi 0, %s201
    %s219 = sphi 0, %s219
    %s221 = sphi 0, %s219
    %s222 = sphi 0, %s221
    %s236 = sphi 0, %s222
    %s240 = sphi 0, %s240
    %s242 = sphi 0, %s240
    %s243 = sphi 0, %s242
    %s257 = sphi 0, %s243
    %s263 = sphi 0, %s265
    %s266 = sphi 0, %s263
    %s267 = sphi 0, %s266
    %s283 = sphi 0, %s267
  $region4: #{tpu_custom_call.1} parent=0 // loop_header_branch
    %20 = sbr.rel (%p18) target = $region8
  $region5: #{tpu_custom_call.1} parent=0 // loop_body
    %s22 = ssub.s32 %s17, 1
    %s23 = ssub.s32 %s17, 2
    %s24 = sadd.s32 %s17, 1
    %s25 = ssub.s32 %s17, %s24
    %p26 = scmp.eq.s32.totalorder %s25, 0
    %s28 = sadd.s32 %s27, 1
    %s29 = scalar_select %p26, %s27, %s28
    %p32 = pneg %p26
    %p33 = scmp.eq.s32.totalorder %s17, 1
    %p34 = por %p32, %p33
    %p35 = scmp.ne.s32.totalorder %s27, %s30
    %p36 = scmp.eq.s32.totalorder %s17, 0
    %p37 = por %p35, %p36
    %p38 = scmp.ne.s32.totalorder %s27, %s30
    %p39 = scmp.eq.s32.totalorder %s22, 1
    %p40 = por %p38, %p39
    %p41 = scmp.ne.s32.totalorder %s30, %s31
    %p42 = scmp.eq.s32.totalorder %s22, 0
    %p43 = por %p41, %p42
    %p44 = scmp.ne.s32.totalorder %s30, %s31
    %p45 = scmp.eq.s32.totalorder %s23, 1
    %p46 = por %p44, %p45
    %p48 = scmp.ne.s32.totalorder %s31, %s47
    %p49 = scmp.eq.s32.totalorder %s23, 0
    %p50 = por %p48, %p49
    %s52 = sadd.s32 %s51, 1
    %p55 = scmp.eq.s32.totalorder %s17, 1
    %p56 = scmp.ne.s32.totalorder %s51, %s53
    %p57 = scmp.eq.s32.totalorder %s17, 0
    %p58 = por %p56, %p57
    %p59 = scmp.ne.s32.totalorder %s51, %s53
    %p60 = scmp.eq.s32.totalorder %s22, 1
    %p61 = por %p59, %p60
    %p62 = scmp.ne.s32.totalorder %s53, %s54
    %p63 = scmp.eq.s32.totalorder %s22, 0
    %p64 = por %p62, %p63
    %p65 = scmp.ne.s32.totalorder %s53, %s54
    %p66 = scmp.eq.s32.totalorder %s23, 1
    %p67 = por %p65, %p66
    %p69 = scmp.ne.s32.totalorder %s54, %s68
    %p70 = scmp.eq.s32.totalorder %s23, 0
    %p71 = por %p69, %p70
    %s73 = sadd.s32 %s72, 1
    %p76 = scmp.eq.s32.totalorder %s17, 1
    %p77 = scmp.ne.s32.totalorder %s72, %s74
    %p78 = scmp.eq.s32.totalorder %s17, 0
    %p79 = por %p77, %p78
    %p80 = scmp.ne.s32.totalorder %s72, %s74
    %p81 = scmp.eq.s32.totalorder %s22, 1
    %p82 = por %p80, %p81
    %p83 = scmp.ne.s32.totalorder %s74, %s75
    %p84 = scmp.eq.s32.totalorder %s22, 0
    %p85 = por %p83, %p84
    %p86 = scmp.ne.s32.totalorder %s74, %s75
    %p87 = scmp.eq.s32.totalorder %s23, 1
    %p88 = por %p86, %p87
    %p90 = scmp.ne.s32.totalorder %s75, %s89
    %p91 = scmp.eq.s32.totalorder %s23, 0
    %p92 = por %p90, %p91
    %s94 = sadd.s32 %s93, 1
    %p97 = scmp.eq.s32.totalorder %s17, 1
    %p98 = scmp.ne.s32.totalorder %s93, %s95
    %p99 = scmp.eq.s32.totalorder %s17, 0
    %p100 = por %p98, %p99
    %p101 = scmp.ne.s32.totalorder %s93, %s95
    %p102 = scmp.eq.s32.totalorder %s22, 1
    %p103 = por %p101, %p102
    %p104 = scmp.ne.s32.totalorder %s95, %s96
    %p105 = scmp.eq.s32.totalorder %s22, 0
    %p106 = por %p104, %p105
    %p107 = scmp.ne.s32.totalorder %s95, %s96
    %p108 = scmp.eq.s32.totalorder %s23, 1
    %p109 = por %p107, %p108
    %p111 = scmp.ne.s32.totalorder %s96, %s110
    %p112 = scmp.eq.s32.totalorder %s23, 0
    %p113 = por %p111, %p112
    %s115 = sadd.s32 %s114, 1
    %p118 = scmp.eq.s32.totalorder %s17, 1
    %p119 = scmp.ne.s32.totalorder %s114, %s116
    %p120 = scmp.eq.s32.totalorder %s17, 0
    %p121 = por %p119, %p120
    %p122 = scmp.ne.s32.totalorder %s114, %s116
    %p123 = scmp.eq.s32.totalorder %s22, 1
    %p124 = por %p122, %p123
    %p125 = scmp.ne.s32.totalorder %s116, %s117
    %p126 = scmp.eq.s32.totalorder %s22, 0
    %p127 = por %p125, %p126
    %p128 = scmp.ne.s32.totalorder %s116, %s117
    %p129 = scmp.eq.s32.totalorder %s23, 1
    %p130 = por %p128, %p129
    %p132 = scmp.ne.s32.totalorder %s117, %s131
    %p133 = scmp.eq.s32.totalorder %s23, 0
    %p134 = por %p132, %p133
    %s136 = sadd.s32 %s135, 1
    %p139 = scmp.eq.s32.totalorder %s17, 1
    %p140 = scmp.ne.s32.totalorder %s135, %s137
    %p141 = scmp.eq.s32.totalorder %s17, 0
    %p142 = por %p140, %p141
    %p143 = scmp.ne.s32.totalorder %s135, %s137
    %p144 = scmp.eq.s32.totalorder %s22, 1
    %p145 = por %p143, %p144
    %p146 = scmp.ne.s32.totalorder %s137, %s138
    %p147 = scmp.eq.s32.totalorder %s22, 0
    %p148 = por %p146, %p147
    %p149 = scmp.ne.s32.totalorder %s137, %s138
    %p150 = scmp.eq.s32.totalorder %s23, 1
    %p151 = por %p149, %p150
    %p153 = scmp.ne.s32.totalorder %s138, %s152
    %p154 = scmp.eq.s32.totalorder %s23, 0
    %p155 = por %p153, %p154
    %s157 = sadd.s32 %s156, 1
    %p160 = scmp.eq.s32.totalorder %s17, 1
    %p161 = scmp.ne.s32.totalorder %s156, %s158
    %p162 = scmp.eq.s32.totalorder %s17, 0
    %p163 = por %p161, %p162
    %p164 = scmp.ne.s32.totalorder %s156, %s158
    %p165 = scmp.eq.s32.totalorder %s22, 1
    %p166 = por %p164, %p165
    %p167 = scmp.ne.s32.totalorder %s158, %s159
    %p168 = scmp.eq.s32.totalorder %s22, 0
    %p169 = por %p167, %p168
    %p170 = scmp.ne.s32.totalorder %s158, %s159
    %p171 = scmp.eq.s32.totalorder %s23, 1
    %p172 = por %p170, %p171
    %p174 = scmp.ne.s32.totalorder %s159, %s173
    %p175 = scmp.eq.s32.totalorder %s23, 0
    %p176 = por %p174, %p175
    %s178 = sadd.s32 %s177, 1
    %p181 = scmp.eq.s32.totalorder %s17, 1
    %p182 = scmp.ne.s32.totalorder %s177, %s179
    %p183 = scmp.eq.s32.totalorder %s17, 0
    %p184 = por %p182, %p183
    %p185 = scmp.ne.s32.totalorder %s177, %s179
    %p186 = scmp.eq.s32.totalorder %s22, 1
    %p187 = por %p185, %p186
    %p188 = scmp.ne.s32.totalorder %s179, %s180
    %p189 = scmp.eq.s32.totalorder %s22, 0
    %p190 = por %p188, %p189
    %p191 = scmp.ne.s32.totalorder %s179, %s180
    %p192 = scmp.eq.s32.totalorder %s23, 1
    %p193 = por %p191, %p192
    %p195 = scmp.ne.s32.totalorder %s180, %s194
    %p196 = scmp.eq.s32.totalorder %s23, 0
    %p197 = por %p195, %p196
    %s199 = sadd.s32 %s198, 1
    %p202 = scmp.eq.s32.totalorder %s17, 1
    %p203 = scmp.ne.s32.totalorder %s198, %s200
    %p204 = scmp.eq.s32.totalorder %s17, 0
    %p205 = por %p203, %p204
    %p206 = scmp.ne.s32.totalorder %s198, %s200
    %p207 = scmp.eq.s32.totalorder %s22, 1
    %p208 = por %p206, %p207
    %p209 = scmp.ne.s32.totalorder %s200, %s201
    %p210 = scmp.eq.s32.totalorder %s22, 0
    %p211 = por %p209, %p210
    %p212 = scmp.ne.s32.totalorder %s200, %s201
    %p213 = scmp.eq.s32.totalorder %s23, 1
    %p214 = por %p212, %p213
    %p216 = scmp.ne.s32.totalorder %s201, %s215
    %p217 = scmp.eq.s32.totalorder %s23, 0
    %p218 = por %p216, %p217
    %s220 = sadd.s32 %s219, 1
    %p223 = scmp.eq.s32.totalorder %s17, 1
    %p224 = scmp.ne.s32.totalorder %s219, %s221
    %p225 = scmp.eq.s32.totalorder %s17, 0
    %p226 = por %p224, %p225
    %p227 = scmp.ne.s32.totalorder %s219, %s221
    %p228 = scmp.eq.s32.totalorder %s22, 1
    %p229 = por %p227, %p228
    %p230 = scmp.ne.s32.totalorder %s221, %s222
    %p231 = scmp.eq.s32.totalorder %s22, 0
    %p232 = por %p230, %p231
    %p233 = scmp.ne.s32.totalorder %s221, %s222
    %p234 = scmp.eq.s32.totalorder %s23, 1
    %p235 = por %p233, %p234
    %p237 = scmp.ne.s32.totalorder %s222, %s236
    %p238 = scmp.eq.s32.totalorder %s23, 0
    %p239 = por %p237, %p238
    %s241 = sadd.s32 %s240, 1
    %p244 = scmp.eq.s32.totalorder %s17, 1
    %p245 = scmp.ne.s32.totalorder %s240, %s242
    %p246 = scmp.eq.s32.totalorder %s17, 0
    %p247 = por %p245, %p246
    %p248 = scmp.ne.s32.totalorder %s240, %s242
    %p249 = scmp.eq.s32.totalorder %s22, 1
    %p250 = por %p248, %p249
    %p251 = scmp.ne.s32.totalorder %s242, %s243
    %p252 = scmp.eq.s32.totalorder %s22, 0
    %p253 = por %p251, %p252
    %p254 = scmp.ne.s32.totalorder %s242, %s243
    %p255 = scmp.eq.s32.totalorder %s23, 1
    %p256 = por %p254, %p255
    %p258 = scmp.ne.s32.totalorder %s243, %s257
    %p259 = scmp.eq.s32.totalorder %s23, 0
    %p260 = por %p258, %p259
    %s261 = ssub.s32 %s17, %s24
    %p262 = scmp.eq.s32.totalorder %s261, 0
    %s264 = sadd.s32 %s263, 1
    %s265 = scalar_select %p262, %s263, %s264
    %p268 = pneg %p262
    %p269 = scmp.eq.s32.totalorder %s17, 1
    %p270 = por %p268, %p269
    %p271 = scmp.ne.s32.totalorder %s263, %s266
    %p272 = scmp.eq.s32.totalorder %s17, 0
    %p273 = por %p271, %p272
    %p274 = scmp.ne.s32.totalorder %s263, %s266
    %p275 = scmp.eq.s32.totalorder %s22, 1
    %p276 = por %p274, %p275
    %p277 = scmp.ne.s32.totalorder %s266, %s267
    %p278 = scmp.eq.s32.totalorder %s22, 0
    %p279 = por %p277, %p278
    %p280 = scmp.ne.s32.totalorder %s266, %s267
    %p281 = scmp.eq.s32.totalorder %s23, 1
    %p282 = por %p280, %p281
    %p284 = scmp.ne.s32.totalorder %s267, %s283
    %p285 = scmp.eq.s32.totalorder %s23, 0
    %p286 = por %p284, %p285
    %p287 = scmp.le.s32.totalorder 1, %s17
    %p288 = scmp.lt.s32.totalorder %s17, 3
    %p289 = pnand %p287, %p288
    %p290 = pneg %p289
    // Predicated region
    $region9: #{tpu_custom_call.1} parent=5 // pred_check
      _
    $region10: #{tpu_custom_call.1} parent=5 // pred_check_branch
      %292 = sbr.rel (%p289) target = $region12
    $region11: #{tpu_custom_call.1} parent=5 // pred_region
      %s293 = ssub.s32 %s17, 1
      // Predicated region
      $region13: #{tpu_custom_call.1} parent=11 // pred_check
        %p294 = pneg %p64
      $region14: #{tpu_custom_call.1} parent=11 // pred_check_branch
        %296 = sbr.rel (%p294) target = $region16
      $region15: #{tpu_custom_call.1} parent=11 // pred_region
        _
      $region16: #{tpu_custom_call.1} parent=11 // pred_fallthru
        _
      // Predicated region
      $region17: #{tpu_custom_call.1} parent=11 // pred_check
        %p297 = pneg %p85
      $region18: #{tpu_custom_call.1} parent=11 // pred_check_branch
        %299 = sbr.rel (%p297) target = $region20
      $region19: #{tpu_custom_call.1} parent=11 // pred_region
        _
      $region20: #{tpu_custom_call.1} parent=11 // pred_fallthru
        _
      // Predicated region
      $region21: #{tpu_custom_call.1} parent=11 // pred_check
        %p300 = pneg %p106
      $region22: #{tpu_custom_call.1} parent=11 // pred_check_branch
        %302 = sbr.rel (%p300) target = $region24
      $region23: #{tpu_custom_call.1} parent=11 // pred_region
        _
      $region24: #{tpu_custom_call.1} parent=11 // pred_fallthru
        _
      // Predicated region
      $region25: #{tpu_custom_call.1} parent=11 // pred_check
        %p303 = pneg %p127
      $region26: #{tpu_custom_call.1} parent=11 // pred_check_branch
        %305 = sbr.rel (%p303) target = $region28
      $region27: #{tpu_custom_call.1} parent=11 // pred_region
        _
      $region28: #{tpu_custom_call.1} parent=11 // pred_fallthru
        _
      // Predicated region
      $region29: #{tpu_custom_call.1} parent=11 // pred_check
        %p306 = pneg %p148
      $region30: #{tpu_custom_call.1} parent=11 // pred_check_branch
        %308 = sbr.rel (%p306) target = $region32
      $region31: #{tpu_custom_call.1} parent=11 // pred_region
        _
      $region32: #{tpu_custom_call.1} parent=11 // pred_fallthru
        _
      // Predicated region
      $region33: #{tpu_custom_call.1} parent=11 // pred_check
        %p309 = pneg %p169
      $region34: #{tpu_custom_call.1} parent=11 // pred_check_branch
        %311 = sbr.rel (%p309) target = $region36
      $region35: #{tpu_custom_call.1} parent=11 // pred_region
        _
      $region36: #{tpu_custom_call.1} parent=11 // pred_fallthru
        _
      // Predicated region
      $region37: #{tpu_custom_call.1} parent=11 // pred_check
        %p312 = pneg %p190
      $region38: #{tpu_custom_call.1} parent=11 // pred_check_branch
        %314 = sbr.rel (%p312) target = $region40
      $region39: #{tpu_custom_call.1} parent=11 // pred_region
        _
      $region40: #{tpu_custom_call.1} parent=11 // pred_fallthru
        _
      // Predicated region
      $region41: #{tpu_custom_call.1} parent=11 // pred_check
        %p315 = pneg %p211
      $region42: #{tpu_custom_call.1} parent=11 // pred_check_branch
        %317 = sbr.rel (%p315) target = $region44
      $region43: #{tpu_custom_call.1} parent=11 // pred_region
        _
      $region44: #{tpu_custom_call.1} parent=11 // pred_fallthru
        _
      // Predicated region
      $region45: #{tpu_custom_call.1} parent=11 // pred_check
        %p318 = pneg %p232
      $region46: #{tpu_custom_call.1} parent=11 // pred_check_branch
        %320 = sbr.rel (%p318) target = $region48
      $region47: #{tpu_custom_call.1} parent=11 // pred_region
        _
      $region48: #{tpu_custom_call.1} parent=11 // pred_fallthru
        _
      // Predicated region
      $region49: #{tpu_custom_call.1} parent=11 // pred_check
        %p321 = pneg %p253
      $region50: #{tpu_custom_call.1} parent=11 // pred_check_branch
        %323 = sbr.rel (%p321) target = $region52
      $region51: #{tpu_custom_call.1} parent=11 // pred_region
        _
      $region52: #{tpu_custom_call.1} parent=11 // pred_fallthru
        _
    $region12: #{tpu_custom_call.1} parent=5 // pred_fallthru
      _
    %p324 = scmp.lt.s32.totalorder %s17, 2
    // Predicated region
    $region53: #{tpu_custom_call.1} parent=5 // pred_check
      %p325 = pneg %p324
    $region54: #{tpu_custom_call.1} parent=5 // pred_check_branch
      %327 = sbr.rel (%p325) target = $region56
    $region55: #{tpu_custom_call.1} parent=5 // pred_region
      // Predicated region
      $region57: #{tpu_custom_call.1} parent=55 // pred_check
        %p328 = pneg %p37
      $region58: #{tpu_custom_call.1} parent=55 // pred_check_branch
        %330 = sbr.rel (%p328) target = $region60
      $region59: #{tpu_custom_call.1} parent=55 // pred_region
        %p331 = scmp.lt.s32.totalorder %s17, 1
        %s332 = scalar_select %p331, %s17, 1
        %s333 = smul.addr %s332, 27
        %s334 = smul.addr %s333, 8
        %s335 = scalar_lea.vmem %s0, %s334
      $region60: #{tpu_custom_call.1} parent=55 // pred_fallthru
        _
    $region56: #{tpu_custom_call.1} parent=5 // pred_fallthru
      _
    %p336 = scmp.le.s32.totalorder 1, %s17
    %p337 = scmp.lt.s32.totalorder %s17, 3
    %p338 = pnand %p336, %p337
    %p339 = pneg %p338
    // Predicated region
    $region61: #{tpu_custom_call.1} parent=5 // pred_check
      _
    $region62: #{tpu_custom_call.1} parent=5 // pred_check_branch
      %341 = sbr.rel (%p338) target = $region64
    $region63: #{tpu_custom_call.1} parent=5 // pred_region
      %s342 = ssub.s32 %s17, 1
      %p343 = scmp.lt.s32.totalorder %s22, 1
      %s344 = scalar_select %p343, %s22, 1
      %s345 = smul.addr %s344, 27
      %s346 = smul.addr %s345, 8
      %s347 = scalar_lea.vmem %s0, %s346
      %p348 = pneg %p43
      %p349 = pneg %p40
      %p350 = pneg %p64
      %p351 = pneg %p61
      %p352 = pneg %p85
      %p353 = pneg %p82
      %p354 = pneg %p106
      %p355 = pneg %p103
      %p356 = pneg %p127
      %p357 = pneg %p124
      %p358 = pneg %p148
      %p359 = pneg %p145
      %p360 = pneg %p169
      %p361 = pneg %p166
      %p362 = pneg %p190
      %p363 = pneg %p187
      %p364 = pneg %p211
      %p365 = pneg %p208
      %p366 = pneg %p232
      %p367 = pneg %p229
      %p368 = pneg %p253
      %p369 = pneg %p250
      %p370 = pneg %p279
      %p371 = pneg %p276
      %p372 = scmp.lt.s32.totalorder %s22, 1
      %s373 = scalar_select %p372, %s22, 1
      %s374 = smul.addr %s373, 27
      %s375 = smul.addr %s374, 8
      %s376 = scalar_lea.vmem %s11, %s375
      %p377 = scmp.lt.s32.totalorder %s22, 1
      %s378 = scalar_select %p377, %s22, 1
      %s379 = smul.addr %s378, 27
      %s380 = smul.addr %s379, 8
      %s381 = scalar_lea.vmem %s0, %s380
      %p382 = scmp.lt.s32.totalorder %s22, 1
      %s383 = scalar_select %p382, %s22, 1
      %s384 = smul.addr %s383, 27
      %s385 = smul.addr %s384, 8
      %s386 = scalar_lea.vmem %s11, %s385
      %v388 = vld [vmem:[%s381] sm:$0xff]
      %v389 = vld [vmem:[%s381 + $0x8] sm:$0xff]
      %v390 = vld [vmem:[%s381 + $0x10] sm:$0xff]
      %v391 = vld [vmem:[%s381 + $0x18] sm:$0xff]
      %v392 = vld [vmem:[%s381 + $0x20] sm:$0xff]
      %v393 = vld [vmem:[%s381 + $0x28] sm:$0xff]
      %v394 = vld [vmem:[%s381 + $0x30] sm:$0xff]
      %v395 = vld [vmem:[%s381 + $0x38] sm:$0xff]
      %v396 = vld [vmem:[%s381 + $0x40] sm:$0xff]
      %v397 = vld [vmem:[%s381 + $0x48] sm:$0xff]
      %v398 = vld [vmem:[%s381 + $0x50] sm:$0xff]
      %v399 = vld [vmem:[%s381 + $0x58] sm:$0xff]
      %v400 = vld [vmem:[%s381 + $0x60] sm:$0xff]
      %v401 = vld [vmem:[%s381 + $0x68] sm:$0xff]
      %v402 = vld [vmem:[%s381 + $0x70] sm:$0xff]
      %v403 = vld [vmem:[%s381 + $0x78] sm:$0xff]
      %v404 = vld [vmem:[%s381 + $0x80] sm:$0xff]
      %v405 = vld [vmem:[%s381 + $0x88] sm:$0xff]
      %v406 = vld [vmem:[%s381 + $0x90] sm:$0xff]
      %v407 = vld [vmem:[%s381 + $0x98] sm:$0xff]
      %v408 = vld [vmem:[%s381 + $0xa0] sm:$0xff]
      %v409 = vld [vmem:[%s381 + $0xa8] sm:$0xff]
      %v410 = vld [vmem:[%s381 + $0xb0] sm:$0xff]
      %v411 = vld [vmem:[%s381 + $0xb8] sm:$0xff]
      %v412 = vld [vmem:[%s381 + $0xc0] sm:$0xff]
      %v413 = vld [vmem:[%s381 + $0xc8] sm:$0xff]
      %v414 = vld [vmem:[%s381 + $0xd0] sm:$0xff]
      %v415 = vpack.c.bf16 %v389, %v388
      %v416 = vpack.c.bf16 %v391, %v390
      %v417 = vpack.c.bf16 %v393, %v392
      %v418 = vpack.c.bf16 %v395, %v394
      %v419 = vpack.c.bf16 %v397, %v396
      %v420 = vpack.c.bf16 %v399, %v398
      %v421 = vpack.c.bf16 %v401, %v400
      %v422 = vpack.c.bf16 %v403, %v402
      %v423 = vpack.c.bf16 %v405, %v404
      %v424 = vpack.c.bf16 %v407, %v406
      %v425 = vpack.c.bf16 %v409, %v408
      %v426 = vpack.c.bf16 %v411, %v410
      %v427 = vpack.c.bf16 %v413, %v412
      %v428 = vpack.c.bf16 %v414, %v414
      %v429 = vld [vmem:[%s1] sm:$0xff]
      %v430 = vld [vmem:[%s1 + $0x8] sm:$0xff]
      %v431 = vld [vmem:[%s1 + $0x10] sm:$0xff]
      %v432 = vld [vmem:[%s1 + $0x18] sm:$0xff]
      %v433 = vld [vmem:[%s1 + $0x20] sm:$0xff]
      %v434 = vld [vmem:[%s1 + $0x28] sm:$0xff]
      %v435 = vld [vmem:[%s1 + $0x30] sm:$0xff]
      %v436 = vld [vmem:[%s1 + $0x38] sm:$0xff]
      %v437 = vld [vmem:[%s1 + $0x40] sm:$0xff]
      %v438 = vld [vmem:[%s1 + $0x48] sm:$0xff]
      %v439 = vld [vmem:[%s1 + $0x50] sm:$0xff]
      %v440 = vld [vmem:[%s1 + $0x58] sm:$0xff]
      %v441 = vld [vmem:[%s1 + $0x60] sm:$0xff]
      %v442 = vld [vmem:[%s1 + $0x68] sm:$0xff]
      %v443 = vld [vmem:[%s1 + $0x70] sm:$0xff]
      %v444 = vld [vmem:[%s1 + $0x78] sm:$0xff]
      %v445 = vld [vmem:[%s1 + $0x80] sm:$0xff]
      %v446 = vld [vmem:[%s1 + $0x88] sm:$0xff]
      %v447 = vld [vmem:[%s1 + $0x90] sm:$0xff]
      %v448 = vld [vmem:[%s1 + $0x98] sm:$0xff]
      %v449 = vld [vmem:[%s1 + $0xa0] sm:$0xff]
      %v450 = vld [vmem:[%s1 + $0xa8] sm:$0xff]
      %v451 = vld [vmem:[%s1 + $0xb0] sm:$0xff]
      %v452 = vld [vmem:[%s1 + $0xb8] sm:$0xff]
      %v453 = vld [vmem:[%s1 + $0xc0] sm:$0xff]
      %v454 = vld [vmem:[%s1 + $0xc8] sm:$0xff]
      %v455 = vld [vmem:[%s1 + $0xd0] sm:$0xff]
      %v456 = vld [vmem:[%s1 + $0xd8] sm:$0xff]
      %v457 = vld [vmem:[%s1 + $0xe0] sm:$0xff]
      %v458 = vld [vmem:[%s1 + $0xe8] sm:$0xff]
      %v459 = vld [vmem:[%s1 + $0xf0] sm:$0xff]
      %v460 = vld [vmem:[%s1 + $0xf8] sm:$0xff]
      %v461 = vld [vmem:[%s1 + $0x100] sm:$0xff]
      %v495 = vunpack.c.l.b16 %v429
      %v496 = vunpack.c.h.b16 %v429
      %v497 = vunpack.c.l.b16 %v430
      %v498 = vunpack.c.h.b16 %v430
      %v499 = vunpack.c.l.b16 %v431
      %v500 = vunpack.c.h.b16 %v431
      %v501 = vunpack.c.l.b16 %v432
      %v502 = vunpack.c.h.b16 %v432
      %v503 = vunpack.c.l.b16 %v433
      %v504 = vunpack.c.h.b16 %v433
      %v505 = vunpack.c.l.b16 %v434
      %v506 = vunpack.c.h.b16 %v434
      %v507 = vunpack.c.l.b16 %v435
      %v508 = vunpack.c.h.b16 %v435
      %v509 = vunpack.c.l.b16 %v436
      %v510 = vunpack.c.h.b16 %v436
      %v511 = vunpack.c.l.b16 %v437
      %v512 = vunpack.c.h.b16 %v437
      %v513 = vunpack.c.l.b16 %v438
      %v514 = vunpack.c.h.b16 %v438
      %v515 = vunpack.c.l.b16 %v439
      %v516 = vunpack.c.h.b16 %v439
      %v517 = vunpack.c.l.b16 %v440
      %v518 = vunpack.c.h.b16 %v440
      %v519 = vunpack.c.l.b16 %v441
      %v520 = vunpack.c.h.b16 %v441
      %v521 = vunpack.c.l.b16 %v442
      %v522 = vunpack.c.h.b16 %v442
      %v523 = vunpack.c.l.b16 %v443
      %v524 = vunpack.c.h.b16 %v443
      %v525 = vunpack.c.l.b16 %v444
      %v526 = vunpack.c.h.b16 %v444
      %v527 = vunpack.c.l.b16 %v445
      %v528 = vunpack.c.h.b16 %v445
      %v529 = vunpack.c.l.b16 %v446
      %v530 = vunpack.c.h.b16 %v446
      %v531 = vunpack.c.l.b16 %v447
      %v532 = vunpack.c.h.b16 %v447
      %v533 = vunpack.c.l.b16 %v448
      %v534 = vunpack.c.h.b16 %v448
      %v535 = vunpack.c.l.b16 %v449
      %v536 = vunpack.c.h.b16 %v449
      %v537 = vunpack.c.l.b16 %v450
      %v538 = vunpack.c.h.b16 %v450
      %v539 = vunpack.c.l.b16 %v451
      %v540 = vunpack.c.h.b16 %v451
      %v541 = vunpack.c.l.b16 %v452
      %v542 = vunpack.c.h.b16 %v452
      %v543 = vunpack.c.l.b16 %v453
      %v544 = vunpack.c.h.b16 %v453
      %v545 = vunpack.c.l.b16 %v454
      %v546 = vunpack.c.h.b16 %v454
      %v547 = vunpack.c.l.b16 %v455
      %v548 = vunpack.c.h.b16 %v455
      %v549 = vunpack.c.l.b16 %v456
      %v550 = vunpack.c.h.b16 %v456
      %v551 = vunpack.c.l.b16 %v457
      %v552 = vunpack.c.h.b16 %v457
      %v553 = vunpack.c.l.b16 %v458
      %v554 = vunpack.c.h.b16 %v458
      %v555 = vunpack.c.l.b16 %v459
      %v556 = vunpack.c.h.b16 %v459
      %v557 = vunpack.c.l.b16 %v460
      %v558 = vunpack.c.h.b16 %v460
      %v559 = vunpack.c.l.b16 %v461
      %v560 = vunpack.c.h.b16 %v461
      %v561 = vpack.c.b16 %v497, %v495
      %v562 = vpack.c.b16 %v498, %v496
      %v563 = vpack.c.b16 %v501, %v499
      %v564 = vpack.c.b16 %v502, %v500
      %v565 = vpack.c.b16 %v505, %v503
      %v566 = vpack.c.b16 %v506, %v504
      %v567 = vpack.c.b16 %v509, %v507
      %v568 = vpack.c.b16 %v510, %v508
      %v569 = vpack.c.b16 %v513, %v511
      %v570 = vpack.c.b16 %v514, %v512
      %v571 = vpack.c.b16 %v517, %v515
      %v572 = vpack.c.b16 %v518, %v516
      %v573 = vpack.c.b16 %v521, %v519
      %v574 = vpack.c.b16 %v522, %v520
      %v575 = vpack.c.b16 %v525, %v523
      %v576 = vpack.c.b16 %v526, %v524
      %v577 = vpack.c.b16 %v529, %v527
      %v578 = vpack.c.b16 %v530, %v528
      %v579 = vpack.c.b16 %v533, %v531
      %v580 = vpack.c.b16 %v534, %v532
      %v581 = vpack.c.b16 %v537, %v535
      %v582 = vpack.c.b16 %v538, %v536
      %v583 = vpack.c.b16 %v541, %v539
      %v584 = vpack.c.b16 %v542, %v540
      %v585 = vpack.c.b16 %v545, %v543
      %v586 = vpack.c.b16 %v546, %v544
      %v587 = vpack.c.b16 %v549, %v547
      %v588 = vpack.c.b16 %v550, %v548
      %v589 = vpack.c.b16 %v553, %v551
      %v590 = vpack.c.b16 %v554, %v552
      %v591 = vpack.c.b16 %v557, %v555
      %v592 = vpack.c.b16 %v558, %v556
      %v593 = vpack.c.b16 %v559, %v559
      %v594 = vpack.c.b16 %v560, %v560
      %vm612 = vcmask 719872
      %v614 = vsel %vm612, %v562, 0
      %v617 = vsel %vm612, %v564, 0
      %v620 = vsel %vm612, %v566, 0
      %v623 = vsel %vm612, %v568, 0
      %v626 = vsel %vm612, %v570, 0
      %v629 = vsel %vm612, %v572, 0
      %v632 = vsel %vm612, %v574, 0
      %v635 = vsel %vm612, %v576, 0
      %v638 = vsel %vm612, %v578, 0
      %v641 = vsel %vm612, %v580, 0
      %v644 = vsel %vm612, %v582, 0
      %v647 = vsel %vm612, %v584, 0
      %v650 = vsel %vm612, %v586, 0
      %v653 = vsel %vm612, %v588, 0
      %v656 = vsel %vm612, %v590, 0
      %v659 = vsel %vm612, %v592, 0
      %v662 = vsel %vm612, %v594, 0
      %vm664 = vcmask 1043456
      %v666 = vsel %vm664, %v428, 0
      %668 = vmatprep.subr.bf16.mxu0 0
      %669 = vmatpush1.bf16.msra.mxu0 %v415
      %670 = vmatprep.subr.bf16.mxu0 0
      %671 = vmatpush1.bf16.msra.mxu0 %v416
      %672 = vmatprep.subr.bf16.mxu0 0
      %673 = vmatpush1.bf16.msra.mxu0 %v417
      %674 = vmatprep.subr.bf16.mxu0 0
      %675 = vmatpush1.bf16.msra.mxu0 %v418
      %676 = vmatprep.subr.bf16.mxu0 0
      %677 = vmatpush1.bf16.msra.mxu0 %v419
      %678 = vmatprep.subr.bf16.mxu0 0
      %679 = vmatpush1.bf16.msra.mxu0 %v420
      %680 = vmatprep.subr.bf16.mxu0 0
      %681 = vmatpush1.bf16.msra.mxu0 %v421
      %682 = vmatprep.subr.bf16.mxu0 0
      %683 = vmatpush1.bf16.msra.mxu0 %v422
      %684 = vmatprep.subr.bf16.mxu0 0
      %685 = vmatpush1.bf16.msra.mxu0 %v423
      %686 = vmatprep.subr.bf16.mxu0 0
      %687 = vmatpush1.bf16.msra.mxu0 %v424
      %688 = vmatprep.subr.bf16.mxu0 0
      %689 = vmatpush1.bf16.msra.mxu0 %v425
      %690 = vmatprep.subr.bf16.mxu0 0
      %691 = vmatpush1.bf16.msra.mxu0 %v426
      %692 = vmatprep.subr.bf16.mxu0 0
      %693 = vmatpush1.bf16.msra.mxu0 %v427
      %694 = vmatprep.subr.bf16.mxu0 0
      %695 = vmatpush1.bf16.msra.mxu0 %v666
      %696 = vmatprep.subr.bf16.mxu0 0
      %697 = vmatpush1.bf16.msra.mxu0 0
      %698 = vmatprep.subr.bf16.mxu0 0
      %699 = vmatpush1.bf16.msra.mxu0 0
      %700 = vmatprep.mubr.bf16.mxu0 %v614
      %701 = vmatmul.mubr.bf16.gmra.mrb[0].mxu0 %v561
      %v702 = vpop.f32.mrb[0].mxu0
      %v703 = vadd.f32 0.0, %v702
      %v704 = vpop.f32.mrb[0].mxu0
      %v705 = vpop.f32.mrb[0].mxu0
      %v706 = vadd.f32 0.0, %v705
      %v707 = vpop.f32.mrb[0].mxu0
      %708 = vmatprep.mubr.bf16.mxu0 %v617
      %709 = vmatmul.mubr.bf16.gmra.mrb[0].mxu0 %v563
      %v710 = vpop.f32.mrb[0].mxu0
      %v711 = vadd.f32 0.0, %v710
      %v712 = vpop.f32.mrb[0].mxu0
      %v713 = vpop.f32.mrb[0].mxu0
      %v714 = vadd.f32 0.0, %v713
      %v715 = vpop.f32.mrb[0].mxu0
      %716 = vmatprep.mubr.bf16.mxu0 %v620
      %717 = vmatmul.mubr.bf16.gmra.mrb[0].mxu0 %v565
      %v718 = vpop.f32.mrb[0].mxu0
      %v719 = vadd.f32 0.0, %v718
      %v720 = vpop.f32.mrb[0].mxu0
      %v721 = vpop.f32.mrb[0].mxu0
      %v722 = vadd.f32 0.0, %v721
      %v723 = vpop.f32.mrb[0].mxu0
      %724 = vmatprep.mubr.bf16.mxu0 %v623
      %725 = vmatmul.mubr.bf16.gmra.mrb[0].mxu0 %v567
      %v726 = vpop.f32.mrb[0].mxu0
      %v727 = vadd.f32 0.0, %v726
      %v728 = vpop.f32.mrb[0].mxu0
      %v729 = vpop.f32.mrb[0].mxu0
      %v730 = vadd.f32 0.0, %v729
      %v731 = vpop.f32.mrb[0].mxu0
      %732 = vmatprep.mubr.bf16.mxu0 %v626
      %733 = vmatmul.mubr.bf16.gmra.mrb[0].mxu0 %v569
      %v734 = vpop.f32.mrb[0].mxu0
      %v735 = vadd.f32 0.0, %v734
      %v736 = vpop.f32.mrb[0].mxu0
      %v737 = vpop.f32.mrb[0].mxu0
      %v738 = vadd.f32 0.0, %v737
      %v739 = vpop.f32.mrb[0].mxu0
      %740 = vmatprep.mubr.bf16.mxu0 %v629
      %741 = vmatmul.mubr.bf16.gmra.mrb[0].mxu0 %v571
      %v742 = vpop.f32.mrb[0].mxu0
      %v743 = vadd.f32 0.0, %v742
      %v744 = vpop.f32.mrb[0].mxu0
      %v745 = vpop.f32.mrb[0].mxu0
      %v746 = vadd.f32 0.0, %v745
      %v747 = vpop.f32.mrb[0].mxu0
      %748 = vmatprep.mubr.bf16.mxu0 %v632
      %749 = vmatmul.mubr.bf16.gmra.mrb[0].mxu0 %v573
      %v750 = vpop.f32.mrb[0].mxu0
      %v751 = vadd.f32 0.0, %v750
      %v752 = vpop.f32.mrb[0].mxu0
      %v753 = vpop.f32.mrb[0].mxu0
      %v754 = vadd.f32 0.0, %v753
      %v755 = vpop.f32.mrb[0].mxu0
      %756 = vmatprep.mubr.bf16.mxu0 %v635
      %757 = vmatmul.mubr.bf16.gmra.mrb[0].mxu0 %v575
      %v758 = vpop.f32.mrb[0].mxu0
      %v759 = vadd.f32 0.0, %v758
      %v760 = vpop.f32.mrb[0].mxu0
      %v761 = vpop.f32.mrb[0].mxu0
      %v762 = vadd.f32 0.0, %v761
      %v763 = vpop.f32.mrb[0].mxu0
      %764 = vmatprep.mubr.bf16.mxu0 %v638
      %765 = vmatmul.mubr.bf16.gmra.mrb[0].mxu0 %v577
      %v766 = vpop.f32.mrb[0].mxu0
      %v767 = vadd.f32 0.0, %v766
      %v768 = vpop.f32.mrb[0].mxu0
      %v769 = vpop.f32.mrb[0].mxu0
      %v770 = vadd.f32 0.0, %v769
      %v771 = vpop.f32.mrb[0].mxu0
      %772 = vmatprep.mubr.bf16.mxu0 %v641
      %773 = vmatmul.mubr.bf16.gmra.mrb[0].mxu0 %v579
      %v774 = vpop.f32.mrb[0].mxu0
      %v775 = vadd.f32 0.0, %v774
      %v776 = vpop.f32.mrb[0].mxu0
      %v777 = vpop.f32.mrb[0].mxu0
      %v778 = vadd.f32 0.0, %v777
      %v779 = vpop.f32.mrb[0].mxu0
      %780 = vmatprep.mubr.bf16.mxu0 %v644
      %781 = vmatmul.mubr.bf16.gmra.mrb[0].mxu0 %v581
      %v782 = vpop.f32.mrb[0].mxu0
      %v783 = vadd.f32 0.0, %v782
      %v784 = vpop.f32.mrb[0].mxu0
      %v785 = vpop.f32.mrb[0].mxu0
      %v786 = vadd.f32 0.0, %v785
      %v787 = vpop.f32.mrb[0].mxu0
      %788 = vmatprep.mubr.bf16.mxu0 %v647
      %789 = vmatmul.mubr.bf16.gmra.mrb[0].mxu0 %v583
      %v790 = vpop.f32.mrb[0].mxu0
      %v791 = vadd.f32 0.0, %v790
      %v792 = vpop.f32.mrb[0].mxu0
      %v793 = vpop.f32.mrb[0].mxu0
      %v794 = vadd.f32 0.0, %v793
      %v795 = vpop.f32.mrb[0].mxu0
      %796 = vmatprep.mubr.bf16.mxu0 %v650
      %797 = vmatmul.mubr.bf16.gmra.mrb[0].mxu0 %v585
      %v798 = vpop.f32.mrb[0].mxu0
      %v799 = vadd.f32 0.0, %v798
      %v800 = vpop.f32.mrb[0].mxu0
      %v801 = vpop.f32.mrb[0].mxu0
      %v802 = vadd.f32 0.0, %v801
      %v803 = vpop.f32.mrb[0].mxu0
      %804 = vmatprep.mubr.bf16.mxu0 %v653
      %805 = vmatmul.mubr.bf16.gmra.mrb[0].mxu0 %v587
      %v806 = vpop.f32.mrb[0].mxu0
      %v807 = vadd.f32 0.0, %v806
      %v808 = vpop.f32.mrb[0].mxu0
      %v809 = vpop.f32.mrb[0].mxu0
      %v810 = vadd.f32 0.0, %v809
      %v811 = vpop.f32.mrb[0].mxu0
      %812 = vmatprep.mubr.bf16.mxu0 %v656
      %813 = vmatmul.mubr.bf16.gmra.mrb[0].mxu0 %v589
      %v814 = vpop.f32.mrb[0].mxu0
      %v815 = vadd.f32 0.0, %v814
      %v816 = vpop.f32.mrb[0].mxu0
      %v817 = vpop.f32.mrb[0].mxu0
      %v818 = vadd.f32 0.0, %v817
      %v819 = vpop.f32.mrb[0].mxu0
      %820 = vmatprep.mubr.bf16.mxu0 %v659
      %821 = vmatmul.mubr.bf16.gmra.mrb[0].mxu0 %v591
      %v822 = vpop.f32.mrb[0].mxu0
      %v823 = vadd.f32 0.0, %v822
      %v824 = vpop.f32.mrb[0].mxu0
      %v825 = vpop.f32.mrb[0].mxu0
      %v826 = vadd.f32 0.0, %v825
      %v827 = vpop.f32.mrb[0].mxu0
      %828 = vmatprep.mubr.bf16.mxu0 %v662
      %829 = vmatmul.mubr.bf16.gmra.mrb[0].mxu0 %v593
      %v830 = vpop.f32.mrb[0].mxu0
      %v831 = vadd.f32 0.0, %v830
      %v832 = vpop.f32.mrb[0].mxu0
      %v833 = vpop.f32.mrb[0].mxu0
      %v834 = vpop.f32.mrb[0].mxu0
      %835 = vdwg.mxu0
      %v836 = vrot.slane %v703, 5
      %v837 = vrot.slane %v706, 5
      %v838 = vrot.slane %v711, 5
      %v839 = vrot.slane %v714, 5
      %v840 = vrot.slane %v719, 5
      %v841 = vrot.slane %v722, 5
      %v842 = vrot.slane %v727, 5
      %v843 = vrot.slane %v730, 5
      %v844 = vrot.slane %v735, 5
      %v845 = vrot.slane %v738, 5
      %v846 = vrot.slane %v743, 5
      %v847 = vrot.slane %v746, 5
      %v848 = vrot.slane %v751, 5
      %v849 = vrot.slane %v754, 5
      %v850 = vrot.slane %v759, 5
      %v851 = vrot.slane %v762, 5
      %v852 = vrot.slane %v767, 5
      %v853 = vrot.slane %v770, 5
      %v854 = vrot.slane %v775, 5
      %v855 = vrot.slane %v778, 5
      %v856 = vrot.slane %v783, 5
      %v857 = vrot.slane %v786, 5
      %v858 = vrot.slane %v791, 5
      %v859 = vrot.slane %v794, 5
      %v860 = vrot.slane %v799, 5
      %v861 = vrot.slane %v802, 5
      %v862 = vrot.slane %v807, 5
      %v863 = vlaneseq
      %v864 = vshrl.u32 %v863, 7
      %vm865 = vcmp.lt.s32.totalorder %v864, 3
      %v866 = vsel %vm865, %v861, %v862
      %v867 = vsel %vm865, %v860, %v861
      %v868 = vsel %vm865, %v859, %v860
      %v869 = vsel %vm865, %v858, %v859
      %v870 = vsel %vm865, %v857, %v858
      %v871 = vsel %vm865, %v856, %v857
      %v872 = vsel %vm865, %v855, %v856
      %v873 = vsel %vm865, %v854, %v855
      %v874 = vsel %vm865, %v853, %v854
      %v875 = vsel %vm865, %v852, %v853
      %v876 = vsel %vm865, %v851, %v852
      %v877 = vsel %vm865, %v850, %v851
      %v878 = vsel %vm865, %v849, %v850
      %v879 = vsel %vm865, %v848, %v849
      %v880 = vsel %vm865, %v847, %v848
      %v881 = vsel %vm865, %v846, %v847
      %v882 = vsel %vm865, %v845, %v846
      %v883 = vsel %vm865, %v844, %v845
      %v884 = vsel %vm865, %v843, %v844
      %v885 = vsel %vm865, %v842, %v843
      %v886 = vsel %vm865, %v841, %v842
      %v887 = vsel %vm865, %v840, %v841
      %v888 = vsel %vm865, %v839, %v840
      %v889 = vsel %vm865, %v838, %v839
      %v890 = vsel %vm865, %v837, %v838
      %v891 = vsel %vm865, %v836, %v837
      %v892 = vsel %vm865, %v862, %v836
      %v893 = vld [vmem:[%s2] sm:$0xff]
      %v894 = vld [vmem:[%s2 + $0x8] sm:$0xff]
      %v895 = vld [vmem:[%s2 + $0x10] sm:$0xff]
      %v896 = vld [vmem:[%s2 + $0x18] sm:$0xff]
      %v897 = vld [vmem:[%s2 + $0x20] sm:$0xff]
      %v898 = vld [vmem:[%s2 + $0x28] sm:$0xff]
      %v899 = vld [vmem:[%s2 + $0x30] sm:$0xff]
      %v900 = vld [vmem:[%s2 + $0x38] sm:$0xff]
      %v901 = vld [vmem:[%s2 + $0x40] sm:$0xff]
      %v902 = vld [vmem:[%s2 + $0x48] sm:$0xff]
      %v903 = vld [vmem:[%s2 + $0x50] sm:$0xff]
      %v904 = vld [vmem:[%s2 + $0x58] sm:$0xff]
      %v905 = vld [vmem:[%s2 + $0x60] sm:$0xff]
      %v906 = vld [vmem:[%s2 + $0x68] sm:$0xff]
      %v907 = vld [vmem:[%s2 + $0x70] sm:$0xff]
      %v908 = vld [vmem:[%s2 + $0x78] sm:$0xff]
      %v909 = vld [vmem:[%s2 + $0x80] sm:$0xff]
      %v910 = vld [vmem:[%s2 + $0x88] sm:$0xff]
      %v911 = vld [vmem:[%s2 + $0x90] sm:$0xff]
      %v912 = vld [vmem:[%s2 + $0x98] sm:$0xff]
      %v913 = vld [vmem:[%s2 + $0xa0] sm:$0xff]
      %v914 = vld [vmem:[%s2 + $0xa8] sm:$0xff]
      %v915 = vld [vmem:[%s2 + $0xb0] sm:$0xff]
      %v916 = vld [vmem:[%s2 + $0xb8] sm:$0xff]
      %v917 = vld [vmem:[%s2 + $0xc0] sm:$0xff]
      %v918 = vld [vmem:[%s2 + $0xc8] sm:$0xff]
      %v919 = vld [vmem:[%s2 + $0xd0] sm:$0xff]
      %v920 = vmul.f32 %v870, %v893
      %v921 = vmul.f32 %v869, %v894
      %v922 = vmul.f32 %v868, %v895
      %v923 = vmul.f32 %v867, %v896
      %v924 = vmul.f32 %v866, %v897
      %v925 = vmul.f32 %v892, %v898
      %v926 = vmul.f32 %v891, %v899
      %v927 = vmul.f32 %v890, %v900
      %v928 = vmul.f32 %v889, %v901
      %v929 = vmul.f32 %v888, %v902
      %v930 = vmul.f32 %v887, %v903
      %v931 = vmul.f32 %v886, %v904
      %v932 = vmul.f32 %v885, %v905
      %v933 = vmul.f32 %v884, %v906
      %v934 = vmul.f32 %v883, %v907
      %v935 = vmul.f32 %v882, %v908
      %v936 = vmul.f32 %v881, %v909
      %v937 = vmul.f32 %v880, %v910
      %v938 = vmul.f32 %v879, %v911
      %v939 = vmul.f32 %v878, %v912
      %v940 = vmul.f32 %v877, %v913
      %v941 = vmul.f32 %v876, %v914
      %v942 = vmul.f32 %v875, %v915
      %v943 = vmul.f32 %v874, %v916
      %v944 = vmul.f32 %v873, %v917
      %v945 = vmul.f32 %v872, %v918
      %v946 = vmul.f32 %v871, %v919
      %v947 = vadd.f32 %v703, %v920
      %v948 = vadd.f32 %v706, %v921
      %v949 = vadd.f32 %v711, %v922
      %v950 = vadd.f32 %v714, %v923
      %v951 = vadd.f32 %v719, %v924
      %v952 = vadd.f32 %v722, %v925
      %v953 = vadd.f32 %v727, %v926
      %v954 = vadd.f32 %v730, %v927
      %v955 = vadd.f32 %v735, %v928
      %v956 = vadd.f32 %v738, %v929
      %v957 = vadd.f32 %v743, %v930
      %v958 = vadd.f32 %v746, %v931
      %v959 = vadd.f32 %v751, %v932
      %v960 = vadd.f32 %v754, %v933
      %v961 = vadd.f32 %v759, %v934
      %v962 = vadd.f32 %v762, %v935
      %v963 = vadd.f32 %v767, %v936
      %v964 = vadd.f32 %v770, %v937
      %v965 = vadd.f32 %v775, %v938
      %v966 = vadd.f32 %v778, %v939
      %v967 = vadd.f32 %v783, %v940
      %v968 = vadd.f32 %v786, %v941
      %v969 = vadd.f32 %v791, %v942
      %v970 = vadd.f32 %v794, %v943
      %v971 = vadd.f32 %v799, %v944
      %v972 = vadd.f32 %v802, %v945
      %v973 = vadd.f32 %v807, %v946
      %v974 = vrot.slane %v703, 6
      %v975 = vrot.slane %v706, 6
      %v976 = vrot.slane %v711, 6
      %v977 = vrot.slane %v714, 6
      %v978 = vrot.slane %v719, 6
      %v979 = vrot.slane %v722, 6
      %v980 = vrot.slane %v727, 6
      %v981 = vrot.slane %v730, 6
      %v982 = vrot.slane %v735, 6
      %v983 = vrot.slane %v738, 6
      %v984 = vrot.slane %v743, 6
      %v985 = vrot.slane %v746, 6
      %v986 = vrot.slane %v751, 6
      %v987 = vrot.slane %v754, 6
      %v988 = vrot.slane %v759, 6
      %v989 = vrot.slane %v762, 6
      %v990 = vrot.slane %v767, 6
      %v991 = vrot.slane %v770, 6
      %v992 = vrot.slane %v775, 6
      %v993 = vrot.slane %v778, 6
      %v994 = vrot.slane %v783, 6
      %v995 = vrot.slane %v786, 6
      %v996 = vrot.slane %v791, 6
      %v997 = vrot.slane %v794, 6
      %v998 = vrot.slane %v799, 6
      %v999 = vrot.slane %v802, 6
      %v1000 = vrot.slane %v807, 6
      %vm1001 = vcmp.lt.s32.totalorder %v864, 2
      %v1002 = vsel %vm1001, %v999, %v1000
      %v1003 = vsel %vm1001, %v998, %v999
      %v1004 = vsel %vm1001, %v997, %v998
      %v1005 = vsel %vm1001, %v996, %v997
      %v1006 = vsel %vm1001, %v995, %v996
      %v1007 = vsel %vm1001, %v994, %v995
      %v1008 = vsel %vm1001, %v993, %v994
      %v1009 = vsel %vm1001, %v992, %v993
      %v1010 = vsel %vm1001, %v991, %v992
      %v1011 = vsel %vm1001, %v990, %v991
      %v1012 = vsel %vm1001, %v989, %v990
      %v1013 = vsel %vm1001, %v988, %v989
      %v1014 = vsel %vm1001, %v987, %v988
      %v1015 = vsel %vm1001, %v986, %v987
      %v1016 = vsel %vm1001, %v985, %v986
      %v1017 = vsel %vm1001, %v984, %v985
      %v1018 = vsel %vm1001, %v983, %v984
      %v1019 = vsel %vm1001, %v982, %v983
      %v1020 = vsel %vm1001, %v981, %v982
      %v1021 = vsel %vm1001, %v980, %v981
      %v1022 = vsel %vm1001, %v979, %v980
      %v1023 = vsel %vm1001, %v978, %v979
      %v1024 = vsel %vm1001, %v977, %v978
      %v1025 = vsel %vm1001, %v976, %v977
      %v1026 = vsel %vm1001, %v975, %v976
      %v1027 = vsel %vm1001, %v974, %v975
      %v1028 = vsel %vm1001, %v1000, %v974
      %s1029 = scalar_lea.vmem %s2, 264
      %v1030 = vld [vmem:[%s1029] sm:$0xff]
      %v1031 = vld [vmem:[%s1029 + $0x8] sm:$0xff]
      %v1032 = vld [vmem:[%s1029 + $0x10] sm:$0xff]
      %v1033 = vld [vmem:[%s1029 + $0x18] sm:$0xff]
      %v1034 = vld [vmem:[%s1029 + $0x20] sm:$0xff]
      %v1035 = vld [vmem:[%s1029 + $0x28] sm:$0xff]
      %v1036 = vld [vmem:[%s1029 + $0x30] sm:$0xff]
      %v1037 = vld [vmem:[%s1029 + $0x38] sm:$0xff]
      %v1038 = vld [vmem:[%s1029 + $0x40] sm:$0xff]
      %v1039 = vld [vmem:[%s1029 + $0x48] sm:$0xff]
      %v1040 = vld [vmem:[%s1029 + $0x50] sm:$0xff]
      %v1041 = vld [vmem:[%s1029 + $0x58] sm:$0xff]
      %v1042 = vld [vmem:[%s1029 + $0x60] sm:$0xff]
      %v1043 = vld [vmem:[%s1029 + $0x68] sm:$0xff]
      %v1044 = vld [vmem:[%s1029 + $0x70] sm:$0xff]
      %v1045 = vld [vmem:[%s1029 + $0x78] sm:$0xff]
      %v1046 = vld [vmem:[%s1029 + $0x80] sm:$0xff]
      %v1047 = vld [vmem:[%s1029 + $0x88] sm:$0xff]
      %v1048 = vld [vmem:[%s1029 + $0x90] sm:$0xff]
      %v1049 = vld [vmem:[%s1029 + $0x98] sm:$0xff]
      %v1050 = vld [vmem:[%s1029 + $0xa0] sm:$0xff]
      %v1051 = vld [vmem:[%s1029 + $0xa8] sm:$0xff]
      %v1052 = vld [vmem:[%s1029 + $0xb0] sm:$0xff]
      %v1053 = vld [vmem:[%s1029 + $0xb8] sm:$0xff]
      %v1054 = vld [vmem:[%s1029 + $0xc0] sm:$0xff]
      %v1055 = vld [vmem:[%s1029 + $0xc8] sm:$0xff]
      %v1056 = vld [vmem:[%s1029 + $0xd0] sm:$0xff]
      %v1057 = vmul.f32 %v1006, %v1030
      %v1058 = vmul.f32 %v1005, %v1031
      %v1059 = vmul.f32 %v1004, %v1032
      %v1060 = vmul.f32 %v1003, %v1033
      %v1061 = vmul.f32 %v1002, %v1034
      %v1062 = vmul.f32 %v1028, %v1035
      %v1063 = vmul.f32 %v1027, %v1036
      %v1064 = vmul.f32 %v1026, %v1037
      %v1065 = vmul.f32 %v1025, %v1038
      %v1066 = vmul.f32 %v1024, %v1039
      %v1067 = vmul.f32 %v1023, %v1040
      %v1068 = vmul.f32 %v1022, %v1041
      %v1069 = vmul.f32 %v1021, %v1042
      %v1070 = vmul.f32 %v1020, %v1043
      %v1071 = vmul.f32 %v1019, %v1044
      %v1072 = vmul.f32 %v1018, %v1045
      %v1073 = vmul.f32 %v1017, %v1046
      %v1074 = vmul.f32 %v1016, %v1047
      %v1075 = vmul.f32 %v1015, %v1048
      %v1076 = vmul.f32 %v1014, %v1049
      %v1077 = vmul.f32 %v1013, %v1050
      %v1078 = vmul.f32 %v1012, %v1051
      %v1079 = vmul.f32 %v1011, %v1052
      %v1080 = vmul.f32 %v1010, %v1053
      %v1081 = vmul.f32 %v1009, %v1054
      %v1082 = vmul.f32 %v1008, %v1055
      %v1083 = vmul.f32 %v1007, %v1056
      %v1084 = vadd.f32 %v947, %v1057
      %v1085 = vadd.f32 %v948, %v1058
      %v1086 = vadd.f32 %v949, %v1059
      %v1087 = vadd.f32 %v950, %v1060
      %v1088 = vadd.f32 %v951, %v1061
      %v1089 = vadd.f32 %v952, %v1062
      %v1090 = vadd.f32 %v953, %v1063
      %v1091 = vadd.f32 %v954, %v1064
      %v1092 = vadd.f32 %v955, %v1065
      %v1093 = vadd.f32 %v956, %v1066
      %v1094 = vadd.f32 %v957, %v1067
      %v1095 = vadd.f32 %v958, %v1068
      %v1096 = vadd.f32 %v959, %v1069
      %v1097 = vadd.f32 %v960, %v1070
      %v1098 = vadd.f32 %v961, %v1071
      %v1099 = vadd.f32 %v962, %v1072
      %v1100 = vadd.f32 %v963, %v1073
      %v1101 = vadd.f32 %v964, %v1074
      %v1102 = vadd.f32 %v965, %v1075
      %v1103 = vadd.f32 %v966, %v1076
      %v1104 = vadd.f32 %v967, %v1077
      %v1105 = vadd.f32 %v968, %v1078
      %v1106 = vadd.f32 %v969, %v1079
      %v1107 = vadd.f32 %v970, %v1080
      %v1108 = vadd.f32 %v971, %v1081
      %v1109 = vadd.f32 %v972, %v1082
      %v1110 = vadd.f32 %v973, %v1083
      %v1111 = vrot.slane %v703, 7
      %v1112 = vrot.slane %v706, 7
      %v1113 = vrot.slane %v711, 7
      %v1114 = vrot.slane %v714, 7
      %v1115 = vrot.slane %v719, 7
      %v1116 = vrot.slane %v722, 7
      %v1117 = vrot.slane %v727, 7
      %v1118 = vrot.slane %v730, 7
      %v1119 = vrot.slane %v735, 7
      %v1120 = vrot.slane %v738, 7
      %v1121 = vrot.slane %v743, 7
      %v1122 = vrot.slane %v746, 7
      %v1123 = vrot.slane %v751, 7
      %v1124 = vrot.slane %v754, 7
      %v1125 = vrot.slane %v759, 7
      %v1126 = vrot.slane %v762, 7
      %v1127 = vrot.slane %v767, 7
      %v1128 = vrot.slane %v770, 7
      %v1129 = vrot.slane %v775, 7
      %v1130 = vrot.slane %v778, 7
      %v1131 = vrot.slane %v783, 7
      %v1132 = vrot.slane %v786, 7
      %v1133 = vrot.slane %v791, 7
      %v1134 = vrot.slane %v794, 7
      %v1135 = vrot.slane %v799, 7
      %v1136 = vrot.slane %v802, 7
      %v1137 = vrot.slane %v807, 7
      %vm1138 = vcmp.lt.s32.totalorder %v864, 1
      %v1139 = vsel %vm1138, %v1136, %v1137
      %v1140 = vsel %vm1138, %v1135, %v1136
      %v1141 = vsel %vm1138, %v1134, %v1135
      %v1142 = vsel %vm1138, %v1133, %v1134
      %v1143 = vsel %vm1138, %v1132, %v1133
      %v1144 = vsel %vm1138, %v1131, %v1132
      %v1145 = vsel %vm1138, %v1130, %v1131
      %v1146 = vsel %vm1138, %v1129, %v1130
      %v1147 = vsel %vm1138, %v1128, %v1129
      %v1148 = vsel %vm1138, %v1127, %v1128
      %v1149 = vsel %vm1138, %v1126, %v1127
      %v1150 = vsel %vm1138, %v1125, %v1126
      %v1151 = vsel %vm1138, %v1124, %v1125
      %v1152 = vsel %vm1138, %v1123, %v1124
      %v1153 = vsel %vm1138, %v1122, %v1123
      %v1154 = vsel %vm1138, %v1121, %v1122
      %v1155 = vsel %vm1138, %v1120, %v1121
      %v1156 = vsel %vm1138, %v1119, %v1120
      %v1157 = vsel %vm1138, %v1118, %v1119
      %v1158 = vsel %vm1138, %v1117, %v1118
      %v1159 = vsel %vm1138, %v1116, %v1117
      %v1160 = vsel %vm1138, %v1115, %v1116
      %v1161 = vsel %vm1138, %v1114, %v1115
      %v1162 = vsel %vm1138, %v1113, %v1114
      %v1163 = vsel %vm1138, %v1112, %v1113
      %v1164 = vsel %vm1138, %v1111, %v1112
      %v1165 = vsel %vm1138, %v1137, %v1111
      %s1166 = scalar_lea.vmem %s2, 528
      %v1167 = vld [vmem:[%s1166] sm:$0xff]
      %v1168 = vld [vmem:[%s1166 + $0x8] sm:$0xff]
      %v1169 = vld [vmem:[%s1166 + $0x10] sm:$0xff]
      %v1170 = vld [vmem:[%s1166 + $0x18] sm:$0xff]
      %v1171 = vld [vmem:[%s1166 + $0x20] sm:$0xff]
      %v1172 = vld [vmem:[%s1166 + $0x28] sm:$0xff]
      %v1173 = vld [vmem:[%s1166 + $0x30] sm:$0xff]
      %v1174 = vld [vmem:[%s1166 + $0x38] sm:$0xff]
      %v1175 = vld [vmem:[%s1166 + $0x40] sm:$0xff]
      %v1176 = vld [vmem:[%s1166 + $0x48] sm:$0xff]
      %v1177 = vld [vmem:[%s1166 + $0x50] sm:$0xff]
      %v1178 = vld [vmem:[%s1166 + $0x58] sm:$0xff]
      %v1179 = vld [vmem:[%s1166 + $0x60] sm:$0xff]
      %v1180 = vld [vmem:[%s1166 + $0x68] sm:$0xff]
      %v1181 = vld [vmem:[%s1166 + $0x70] sm:$0xff]
      %v1182 = vld [vmem:[%s1166 + $0x78] sm:$0xff]
      %v1183 = vld [vmem:[%s1166 + $0x80] sm:$0xff]
      %v1184 = vld [vmem:[%s1166 + $0x88] sm:$0xff]
      %v1185 = vld [vmem:[%s1166 + $0x90] sm:$0xff]
      %v1186 = vld [vmem:[%s1166 + $0x98] sm:$0xff]
      %v1187 = vld [vmem:[%s1166 + $0xa0] sm:$0xff]
      %v1188 = vld [vmem:[%s1166 + $0xa8] sm:$0xff]
      %v1189 = vld [vmem:[%s1166 + $0xb0] sm:$0xff]
      %v1190 = vld [vmem:[%s1166 + $0xb8] sm:$0xff]
      %v1191 = vld [vmem:[%s1166 + $0xc0] sm:$0xff]
      %v1192 = vld [vmem:[%s1166 + $0xc8] sm:$0xff]
      %v1193 = vld [vmem:[%s1166 + $0xd0] sm:$0xff]
      %v1194 = vmul.f32 %v1143, %v1167
      %v1195 = vmul.f32 %v1142, %v1168
      %v1196 = vmul.f32 %v1141, %v1169
      %v1197 = vmul.f32 %v1140, %v1170
      %v1198 = vmul.f32 %v1139, %v1171
      %v1199 = vmul.f32 %v1165, %v1172
      %v1200 = vmul.f32 %v1164, %v1173
      %v1201 = vmul.f32 %v1163, %v1174
      %v1202 = vmul.f32 %v1162, %v1175
      %v1203 = vmul.f32 %v1161, %v1176
      %v1204 = vmul.f32 %v1160, %v1177
      %v1205 = vmul.f32 %v1159, %v1178
      %v1206 = vmul.f32 %v1158, %v1179
      %v1207 = vmul.f32 %v1157, %v1180
      %v1208 = vmul.f32 %v1156, %v1181
      %v1209 = vmul.f32 %v1155, %v1182
      %v1210 = vmul.f32 %v1154, %v1183
      %v1211 = vmul.f32 %v1153, %v1184
      %v1212 = vmul.f32 %v1152, %v1185
      %v1213 = vmul.f32 %v1151, %v1186
      %v1214 = vmul.f32 %v1150, %v1187
      %v1215 = vmul.f32 %v1149, %v1188
      %v1216 = vmul.f32 %v1148, %v1189
      %v1217 = vmul.f32 %v1147, %v1190
      %v1218 = vmul.f32 %v1146, %v1191
      %v1219 = vmul.f32 %v1145, %v1192
      %v1220 = vmul.f32 %v1144, %v1193
      %v1221 = vadd.f32 %v1084, %v1194
      %v1222 = vadd.f32 %v1085, %v1195
      %v1223 = vadd.f32 %v1086, %v1196
      %v1224 = vadd.f32 %v1087, %v1197
      %v1225 = vadd.f32 %v1088, %v1198
      %v1226 = vadd.f32 %v1089, %v1199
      %v1227 = vadd.f32 %v1090, %v1200
      %v1228 = vadd.f32 %v1091, %v1201
      %v1229 = vadd.f32 %v1092, %v1202
      %v1230 = vadd.f32 %v1093, %v1203
      %v1231 = vadd.f32 %v1094, %v1204
      %v1232 = vadd.f32 %v1095, %v1205
      %v1233 = vadd.f32 %v1096, %v1206
      %v1234 = vadd.f32 %v1097, %v1207
      %v1235 = vadd.f32 %v1098, %v1208
      %v1236 = vadd.f32 %v1099, %v1209
      %v1237 = vadd.f32 %v1100, %v1210
      %v1238 = vadd.f32 %v1101, %v1211
      %v1239 = vadd.f32 %v1102, %v1212
      %v1240 = vadd.f32 %v1103, %v1213
      %v1241 = vadd.f32 %v1104, %v1214
      %v1242 = vadd.f32 %v1105, %v1215
      %v1243 = vadd.f32 %v1106, %v1216
      %v1244 = vadd.f32 %v1107, %v1217
      %v1245 = vadd.f32 %v1108, %v1218
      %v1246 = vadd.f32 %v1109, %v1219
      %v1247 = vadd.f32 %v1110, %v1220
      %v1248 = vrot.slane %v703, 3
      %v1249 = vrot.slane %v706, 3
      %v1250 = vrot.slane %v711, 3
      %v1251 = vrot.slane %v714, 3
      %v1252 = vrot.slane %v719, 3
      %v1253 = vrot.slane %v722, 3
      %v1254 = vrot.slane %v727, 3
      %v1255 = vrot.slane %v730, 3
      %v1256 = vrot.slane %v735, 3
      %v1257 = vrot.slane %v738, 3
      %v1258 = vrot.slane %v743, 3
      %v1259 = vrot.slane %v746, 3
      %v1260 = vrot.slane %v751, 3
      %v1261 = vrot.slane %v754, 3
      %v1262 = vrot.slane %v759, 3
      %v1263 = vrot.slane %v762, 3
      %v1264 = vrot.slane %v767, 3
      %v1265 = vrot.slane %v770, 3
      %v1266 = vrot.slane %v775, 3
      %v1267 = vrot.slane %v778, 3
      %v1268 = vrot.slane %v783, 3
      %v1269 = vrot.slane %v786, 3
      %v1270 = vrot.slane %v791, 3
      %v1271 = vrot.slane %v794, 3
      %v1272 = vrot.slane %v799, 3
      %v1273 = vrot.slane %v802, 3
      %v1274 = vrot.slane %v807, 3
      %vm1275 = vcmp.lt.s32.totalorder %v864, 5
      %v1276 = vsel %vm1275, %v1273, %v1274
      %v1277 = vsel %vm1275, %v1272, %v1273
      %v1278 = vsel %vm1275, %v1271, %v1272
      %v1279 = vsel %vm1275, %v1270, %v1271
      %v1280 = vsel %vm1275, %v1269, %v1270
      %v1281 = vsel %vm1275, %v1268, %v1269
      %v1282 = vsel %vm1275, %v1267, %v1268
      %v1283 = vsel %vm1275, %v1266, %v1267
      %v1284 = vsel %vm1275, %v1265, %v1266
      %v1285 = vsel %vm1275, %v1264, %v1265
      %v1286 = vsel %vm1275, %v1263, %v1264
      %v1287 = vsel %vm1275, %v1262, %v1263
      %v1288 = vsel %vm1275, %v1261, %v1262
      %v1289 = vsel %vm1275, %v1260, %v1261
      %v1290 = vsel %vm1275, %v1259, %v1260
      %v1291 = vsel %vm1275, %v1258, %v1259
      %v1292 = vsel %vm1275, %v1257, %v1258
      %v1293 = vsel %vm1275, %v1256, %v1257
      %v1294 = vsel %vm1275, %v1255, %v1256
      %v1295 = vsel %vm1275, %v1254, %v1255
      %v1296 = vsel %vm1275, %v1253, %v1254
      %v1297 = vsel %vm1275, %v1252, %v1253
      %v1298 = vsel %vm1275, %v1251, %v1252
      %v1299 = vsel %vm1275, %v1250, %v1251
      %v1300 = vsel %vm1275, %v1249, %v1250
      %v1301 = vsel %vm1275, %v1248, %v1249
      %v1302 = vsel %vm1275, %v1274, %v1248
      %s1303 = scalar_lea.vmem %s2, 792
      %v1304 = vld [vmem:[%s1303] sm:$0xff]
      %v1305 = vld [vmem:[%s1303 + $0x8] sm:$0xff]
      %v1306 = vld [vmem:[%s1303 + $0x10] sm:$0xff]
      %v1307 = vld [vmem:[%s1303 + $0x18] sm:$0xff]
      %v1308 = vld [vmem:[%s1303 + $0x20] sm:$0xff]
      %v1309 = vld [vmem:[%s1303 + $0x28] sm:$0xff]
      %v1310 = vld [vmem:[%s1303 + $0x30] sm:$0xff]
      %v1311 = vld [vmem:[%s1303 + $0x38] sm:$0xff]
      %v1312 = vld [vmem:[%s1303 + $0x40] sm:$0xff]
      %v1313 = vld [vmem:[%s1303 + $0x48] sm:$0xff]
      %v1314 = vld [vmem:[%s1303 + $0x50] sm:$0xff]
      %v1315 = vld [vmem:[%s1303 + $0x58] sm:$0xff]
      %v1316 = vld [vmem:[%s1303 + $0x60] sm:$0xff]
      %v1317 = vld [vmem:[%s1303 + $0x68] sm:$0xff]
      %v1318 = vld [vmem:[%s1303 + $0x70] sm:$0xff]
      %v1319 = vld [vmem:[%s1303 + $0x78] sm:$0xff]
      %v1320 = vld [vmem:[%s1303 + $0x80] sm:$0xff]
      %v1321 = vld [vmem:[%s1303 + $0x88] sm:$0xff]
      %v1322 = vld [vmem:[%s1303 + $0x90] sm:$0xff]
      %v1323 = vld [vmem:[%s1303 + $0x98] sm:$0xff]
      %v1324 = vld [vmem:[%s1303 + $0xa0] sm:$0xff]
      %v1325 = vld [vmem:[%s1303 + $0xa8] sm:$0xff]
      %v1326 = vld [vmem:[%s1303 + $0xb0] sm:$0xff]
      %v1327 = vld [vmem:[%s1303 + $0xb8] sm:$0xff]
      %v1328 = vld [vmem:[%s1303 + $0xc0] sm:$0xff]
      %v1329 = vld [vmem:[%s1303 + $0xc8] sm:$0xff]
      %v1330 = vld [vmem:[%s1303 + $0xd0] sm:$0xff]
      %v1331 = vmul.f32 %v1279, %v1304
      %v1332 = vmul.f32 %v1278, %v1305
      %v1333 = vmul.f32 %v1277, %v1306
      %v1334 = vmul.f32 %v1276, %v1307
      %v1335 = vmul.f32 %v1302, %v1308
      %v1336 = vmul.f32 %v1301, %v1309
      %v1337 = vmul.f32 %v1300, %v1310
      %v1338 = vmul.f32 %v1299, %v1311
      %v1339 = vmul.f32 %v1298, %v1312
      %v1340 = vmul.f32 %v1297, %v1313
      %v1341 = vmul.f32 %v1296, %v1314
      %v1342 = vmul.f32 %v1295, %v1315
      %v1343 = vmul.f32 %v1294, %v1316
      %v1344 = vmul.f32 %v1293, %v1317
      %v1345 = vmul.f32 %v1292, %v1318
      %v1346 = vmul.f32 %v1291, %v1319
      %v1347 = vmul.f32 %v1290, %v1320
      %v1348 = vmul.f32 %v1289, %v1321
      %v1349 = vmul.f32 %v1288, %v1322
      %v1350 = vmul.f32 %v1287, %v1323
      %v1351 = vmul.f32 %v1286, %v1324
      %v1352 = vmul.f32 %v1285, %v1325
      %v1353 = vmul.f32 %v1284, %v1326
      %v1354 = vmul.f32 %v1283, %v1327
      %v1355 = vmul.f32 %v1282, %v1328
      %v1356 = vmul.f32 %v1281, %v1329
      %v1357 = vmul.f32 %v1280, %v1330
      %v1358 = vadd.f32 %v1221, %v1331
      %v1359 = vadd.f32 %v1222, %v1332
      %v1360 = vadd.f32 %v1223, %v1333
      %v1361 = vadd.f32 %v1224, %v1334
      %v1362 = vadd.f32 %v1225, %v1335
      %v1363 = vadd.f32 %v1226, %v1336
      %v1364 = vadd.f32 %v1227, %v1337
      %v1365 = vadd.f32 %v1228, %v1338
      %v1366 = vadd.f32 %v1229, %v1339
      %v1367 = vadd.f32 %v1230, %v1340
      %v1368 = vadd.f32 %v1231, %v1341
      %v1369 = vadd.f32 %v1232, %v1342
      %v1370 = vadd.f32 %v1233, %v1343
      %v1371 = vadd.f32 %v1234, %v1344
      %v1372 = vadd.f32 %v1235, %v1345
      %v1373 = vadd.f32 %v1236, %v1346
      %v1374 = vadd.f32 %v1237, %v1347
      %v1375 = vadd.f32 %v1238, %v1348
      %v1376 = vadd.f32 %v1239, %v1349
      %v1377 = vadd.f32 %v1240, %v1350
      %v1378 = vadd.f32 %v1241, %v1351
      %v1379 = vadd.f32 %v1242, %v1352
      %v1380 = vadd.f32 %v1243, %v1353
      %v1381 = vadd.f32 %v1244, %v1354
      %v1382 = vadd.f32 %v1245, %v1355
      %v1383 = vadd.f32 %v1246, %v1356
      %v1384 = vadd.f32 %v1247, %v1357
      %v1385 = vrot.slane %v703, 4
      %v1386 = vrot.slane %v706, 4
      %v1387 = vrot.slane %v711, 4
      %v1388 = vrot.slane %v714, 4
      %v1389 = vrot.slane %v719, 4
      %v1390 = vrot.slane %v722, 4
      %v1391 = vrot.slane %v727, 4
      %v1392 = vrot.slane %v730, 4
      %v1393 = vrot.slane %v735, 4
      %v1394 = vrot.slane %v738, 4
      %v1395 = vrot.slane %v743, 4
      %v1396 = vrot.slane %v746, 4
      %v1397 = vrot.slane %v751, 4
      %v1398 = vrot.slane %v754, 4
      %v1399 = vrot.slane %v759, 4
      %v1400 = vrot.slane %v762, 4
      %v1401 = vrot.slane %v767, 4
      %v1402 = vrot.slane %v770, 4
      %v1403 = vrot.slane %v775, 4
      %v1404 = vrot.slane %v778, 4
      %v1405 = vrot.slane %v783, 4
      %v1406 = vrot.slane %v786, 4
      %v1407 = vrot.slane %v791, 4
      %v1408 = vrot.slane %v794, 4
      %v1409 = vrot.slane %v799, 4
      %v1410 = vrot.slane %v802, 4
      %v1411 = vrot.slane %v807, 4
      %vm1412 = vcmp.lt.s32.totalorder %v864, 4
      %v1413 = vsel %vm1412, %v1410, %v1411
      %v1414 = vsel %vm1412, %v1409, %v1410
      %v1415 = vsel %vm1412, %v1408, %v1409
      %v1416 = vsel %vm1412, %v1407, %v1408
      %v1417 = vsel %vm1412, %v1406, %v1407
      %v1418 = vsel %vm1412, %v1405, %v1406
      %v1419 = vsel %vm1412, %v1404, %v1405
      %v1420 = vsel %vm1412, %v1403, %v1404
      %v1421 = vsel %vm1412, %v1402, %v1403
      %v1422 = vsel %vm1412, %v1401, %v1402
      %v1423 = vsel %vm1412, %v1400, %v1401
      %v1424 = vsel %vm1412, %v1399, %v1400
      %v1425 = vsel %vm1412, %v1398, %v1399
      %v1426 = vsel %vm1412, %v1397, %v1398
      %v1427 = vsel %vm1412, %v1396, %v1397
      %v1428 = vsel %vm1412, %v1395, %v1396
      %v1429 = vsel %vm1412, %v1394, %v1395
      %v1430 = vsel %vm1412, %v1393, %v1394
      %v1431 = vsel %vm1412, %v1392, %v1393
      %v1432 = vsel %vm1412, %v1391, %v1392
      %v1433 = vsel %vm1412, %v1390, %v1391
      %v1434 = vsel %vm1412, %v1389, %v1390
      %v1435 = vsel %vm1412, %v1388, %v1389
      %v1436 = vsel %vm1412, %v1387, %v1388
      %v1437 = vsel %vm1412, %v1386, %v1387
      %v1438 = vsel %vm1412, %v1385, %v1386
      %v1439 = vsel %vm1412, %v1411, %v1385
      %s1440 = scalar_lea.vmem %s2, 1056
      %v1441 = vld [vmem:[%s1440] sm:$0xff]
      %v1442 = vld [vmem:[%s1440 + $0x8] sm:$0xff]
      %v1443 = vld [vmem:[%s1440 + $0x10] sm:$0xff]
      %v1444 = vld [vmem:[%s1440 + $0x18] sm:$0xff]
      %v1445 = vld [vmem:[%s1440 + $0x20] sm:$0xff]
      %v1446 = vld [vmem:[%s1440 + $0x28] sm:$0xff]
      %v1447 = vld [vmem:[%s1440 + $0x30] sm:$0xff]
      %v1448 = vld [vmem:[%s1440 + $0x38] sm:$0xff]
      %v1449 = vld [vmem:[%s1440 + $0x40] sm:$0xff]
      %v1450 = vld [vmem:[%s1440 + $0x48] sm:$0xff]
      %v1451 = vld [vmem:[%s1440 + $0x50] sm:$0xff]
      %v1452 = vld [vmem:[%s1440 + $0x58] sm:$0xff]
      %v1453 = vld [vmem:[%s1440 + $0x60] sm:$0xff]
      %v1454 = vld [vmem:[%s1440 + $0x68] sm:$0xff]
      %v1455 = vld [vmem:[%s1440 + $0x70] sm:$0xff]
      %v1456 = vld [vmem:[%s1440 + $0x78] sm:$0xff]
      %v1457 = vld [vmem:[%s1440 + $0x80] sm:$0xff]
      %v1458 = vld [vmem:[%s1440 + $0x88] sm:$0xff]
      %v1459 = vld [vmem:[%s1440 + $0x90] sm:$0xff]
      %v1460 = vld [vmem:[%s1440 + $0x98] sm:$0xff]
      %v1461 = vld [vmem:[%s1440 + $0xa0] sm:$0xff]
      %v1462 = vld [vmem:[%s1440 + $0xa8] sm:$0xff]
      %v1463 = vld [vmem:[%s1440 + $0xb0] sm:$0xff]
      %v1464 = vld [vmem:[%s1440 + $0xb8] sm:$0xff]
      %v1465 = vld [vmem:[%s1440 + $0xc0] sm:$0xff]
      %v1466 = vld [vmem:[%s1440 + $0xc8] sm:$0xff]
      %v1467 = vld [vmem:[%s1440 + $0xd0] sm:$0xff]
      %v1468 = vmul.f32 %v1416, %v1441
      %v1469 = vmul.f32 %v1415, %v1442
      %v1470 = vmul.f32 %v1414, %v1443
      %v1471 = vmul.f32 %v1413, %v1444
      %v1472 = vmul.f32 %v1439, %v1445
      %v1473 = vmul.f32 %v1438, %v1446
      %v1474 = vmul.f32 %v1437, %v1447
      %v1475 = vmul.f32 %v1436, %v1448
      %v1476 = vmul.f32 %v1435, %v1449
      %v1477 = vmul.f32 %v1434, %v1450
      %v1478 = vmul.f32 %v1433, %v1451
      %v1479 = vmul.f32 %v1432, %v1452
      %v1480 = vmul.f32 %v1431, %v1453
      %v1481 = vmul.f32 %v1430, %v1454
      %v1482 = vmul.f32 %v1429, %v1455
      %v1483 = vmul.f32 %v1428, %v1456
      %v1484 = vmul.f32 %v1427, %v1457
      %v1485 = vmul.f32 %v1426, %v1458
      %v1486 = vmul.f32 %v1425, %v1459
      %v1487 = vmul.f32 %v1424, %v1460
      %v1488 = vmul.f32 %v1423, %v1461
      %v1489 = vmul.f32 %v1422, %v1462
      %v1490 = vmul.f32 %v1421, %v1463
      %v1491 = vmul.f32 %v1420, %v1464
      %v1492 = vmul.f32 %v1419, %v1465
      %v1493 = vmul.f32 %v1418, %v1466
      %v1494 = vmul.f32 %v1417, %v1467
      %v1495 = vadd.f32 %v1358, %v1468
      %v1496 = vadd.f32 %v1359, %v1469
      %v1497 = vadd.f32 %v1360, %v1470
      %v1498 = vadd.f32 %v1361, %v1471
      %v1499 = vadd.f32 %v1362, %v1472
      %v1500 = vadd.f32 %v1363, %v1473
      %v1501 = vadd.f32 %v1364, %v1474
      %v1502 = vadd.f32 %v1365, %v1475
      %v1503 = vadd.f32 %v1366, %v1476
      %v1504 = vadd.f32 %v1367, %v1477
      %v1505 = vadd.f32 %v1368, %v1478
      %v1506 = vadd.f32 %v1369, %v1479
      %v1507 = vadd.f32 %v1370, %v1480
      %v1508 = vadd.f32 %v1371, %v1481
      %v1509 = vadd.f32 %v1372, %v1482
      %v1510 = vadd.f32 %v1373, %v1483
      %v1511 = vadd.f32 %v1374, %v1484
      %v1512 = vadd.f32 %v1375, %v1485
      %v1513 = vadd.f32 %v1376, %v1486
      %v1514 = vadd.f32 %v1377, %v1487
      %v1515 = vadd.f32 %v1378, %v1488
      %v1516 = vadd.f32 %v1379, %v1489
      %v1517 = vadd.f32 %v1380, %v1490
      %v1518 = vadd.f32 %v1381, %v1491
      %v1519 = vadd.f32 %v1382, %v1492
      %v1520 = vadd.f32 %v1383, %v1493
      %v1521 = vadd.f32 %v1384, %v1494
      %s1522 = scalar_lea.vmem %s2, 1320
      %v1523 = vld [vmem:[%s1522] sm:$0xff]
      %v1524 = vld [vmem:[%s1522 + $0x8] sm:$0xff]
      %v1525 = vld [vmem:[%s1522 + $0x10] sm:$0xff]
      %v1526 = vld [vmem:[%s1522 + $0x18] sm:$0xff]
      %v1527 = vld [vmem:[%s1522 + $0x20] sm:$0xff]
      %v1528 = vld [vmem:[%s1522 + $0x28] sm:$0xff]
      %v1529 = vld [vmem:[%s1522 + $0x30] sm:$0xff]
      %v1530 = vld [vmem:[%s1522 + $0x38] sm:$0xff]
      %v1531 = vld [vmem:[%s1522 + $0x40] sm:$0xff]
      %v1532 = vld [vmem:[%s1522 + $0x48] sm:$0xff]
      %v1533 = vld [vmem:[%s1522 + $0x50] sm:$0xff]
      %v1534 = vld [vmem:[%s1522 + $0x58] sm:$0xff]
      %v1535 = vld [vmem:[%s1522 + $0x60] sm:$0xff]
      %v1536 = vld [vmem:[%s1522 + $0x68] sm:$0xff]
      %v1537 = vld [vmem:[%s1522 + $0x70] sm:$0xff]
      %v1538 = vld [vmem:[%s1522 + $0x78] sm:$0xff]
      %v1539 = vld [vmem:[%s1522 + $0x80] sm:$0xff]
      %v1540 = vld [vmem:[%s1522 + $0x88] sm:$0xff]
      %v1541 = vld [vmem:[%s1522 + $0x90] sm:$0xff]
      %v1542 = vld [vmem:[%s1522 + $0x98] sm:$0xff]
      %v1543 = vld [vmem:[%s1522 + $0xa0] sm:$0xff]
      %v1544 = vld [vmem:[%s1522 + $0xa8] sm:$0xff]
      %v1545 = vld [vmem:[%s1522 + $0xb0] sm:$0xff]
      %v1546 = vld [vmem:[%s1522 + $0xb8] sm:$0xff]
      %v1547 = vld [vmem:[%s1522 + $0xc0] sm:$0xff]
      %v1548 = vld [vmem:[%s1522 + $0xc8] sm:$0xff]
      %v1549 = vld [vmem:[%s1522 + $0xd0] sm:$0xff]
      %v1550 = vmul.f32 %v869, %v1523
      %v1551 = vmul.f32 %v868, %v1524
      %v1552 = vmul.f32 %v867, %v1525
      %v1553 = vmul.f32 %v866, %v1526
      %v1554 = vmul.f32 %v892, %v1527
      %v1555 = vmul.f32 %v891, %v1528
      %v1556 = vmul.f32 %v890, %v1529
      %v1557 = vmul.f32 %v889, %v1530
      %v1558 = vmul.f32 %v888, %v1531
      %v1559 = vmul.f32 %v887, %v1532
      %v1560 = vmul.f32 %v886, %v1533
      %v1561 = vmul.f32 %v885, %v1534
      %v1562 = vmul.f32 %v884, %v1535
      %v1563 = vmul.f32 %v883, %v1536
      %v1564 = vmul.f32 %v882, %v1537
      %v1565 = vmul.f32 %v881, %v1538
      %v1566 = vmul.f32 %v880, %v1539
      %v1567 = vmul.f32 %v879, %v1540
      %v1568 = vmul.f32 %v878, %v1541
      %v1569 = vmul.f32 %v877, %v1542
      %v1570 = vmul.f32 %v876, %v1543
      %v1571 = vmul.f32 %v875, %v1544
      %v1572 = vmul.f32 %v874, %v1545
      %v1573 = vmul.f32 %v873, %v1546
      %v1574 = vmul.f32 %v872, %v1547
      %v1575 = vmul.f32 %v871, %v1548
      %v1576 = vmul.f32 %v870, %v1549
      %v1577 = vadd.f32 %v1495, %v1550
      %v1578 = vadd.f32 %v1496, %v1551
      %v1579 = vadd.f32 %v1497, %v1552
      %v1580 = vadd.f32 %v1498, %v1553
      %v1581 = vadd.f32 %v1499, %v1554
      %v1582 = vadd.f32 %v1500, %v1555
      %v1583 = vadd.f32 %v1501, %v1556
      %v1584 = vadd.f32 %v1502, %v1557
      %v1585 = vadd.f32 %v1503, %v1558
      %v1586 = vadd.f32 %v1504, %v1559
      %v1587 = vadd.f32 %v1505, %v1560
      %v1588 = vadd.f32 %v1506, %v1561
      %v1589 = vadd.f32 %v1507, %v1562
      %v1590 = vadd.f32 %v1508, %v1563
      %v1591 = vadd.f32 %v1509, %v1564
      %v1592 = vadd.f32 %v1510, %v1565
      %v1593 = vadd.f32 %v1511, %v1566
      %v1594 = vadd.f32 %v1512, %v1567
      %v1595 = vadd.f32 %v1513, %v1568
      %v1596 = vadd.f32 %v1514, %v1569
      %v1597 = vadd.f32 %v1515, %v1570
      %v1598 = vadd.f32 %v1516, %v1571
      %v1599 = vadd.f32 %v1517, %v1572
      %v1600 = vadd.f32 %v1518, %v1573
      %v1601 = vadd.f32 %v1519, %v1574
      %v1602 = vadd.f32 %v1520, %v1575
      %v1603 = vadd.f32 %v1521, %v1576
      %v1604 = vrot.slane %v703, 1
      %v1605 = vrot.slane %v706, 1
      %v1606 = vrot.slane %v711, 1
      %v1607 = vrot.slane %v714, 1
      %v1608 = vrot.slane %v719, 1
      %v1609 = vrot.slane %v722, 1
      %v1610 = vrot.slane %v727, 1
      %v1611 = vrot.slane %v730, 1
      %v1612 = vrot.slane %v735, 1
      %v1613 = vrot.slane %v738, 1
      %v1614 = vrot.slane %v743, 1
      %v1615 = vrot.slane %v746, 1
      %v1616 = vrot.slane %v751, 1
      %v1617 = vrot.slane %v754, 1
      %v1618 = vrot.slane %v759, 1
      %v1619 = vrot.slane %v762, 1
      %v1620 = vrot.slane %v767, 1
      %v1621 = vrot.slane %v770, 1
      %v1622 = vrot.slane %v775, 1
      %v1623 = vrot.slane %v778, 1
      %v1624 = vrot.slane %v783, 1
      %v1625 = vrot.slane %v786, 1
      %v1626 = vrot.slane %v791, 1
      %v1627 = vrot.slane %v794, 1
      %v1628 = vrot.slane %v799, 1
      %v1629 = vrot.slane %v802, 1
      %v1630 = vrot.slane %v807, 1
      %vm1631 = vcmp.lt.s32.totalorder %v864, 7
      %v1632 = vsel %vm1631, %v1629, %v1630
      %v1633 = vsel %vm1631, %v1628, %v1629
      %v1634 = vsel %vm1631, %v1627, %v1628
      %v1635 = vsel %vm1631, %v1626, %v1627
      %v1636 = vsel %vm1631, %v1625, %v1626
      %v1637 = vsel %vm1631, %v1624, %v1625
      %v1638 = vsel %vm1631, %v1623, %v1624
      %v1639 = vsel %vm1631, %v1622, %v1623
      %v1640 = vsel %vm1631, %v1621, %v1622
      %v1641 = vsel %vm1631, %v1620, %v1621
      %v1642 = vsel %vm1631, %v1619, %v1620
      %v1643 = vsel %vm1631, %v1618, %v1619
      %v1644 = vsel %vm1631, %v1617, %v1618
      %v1645 = vsel %vm1631, %v1616, %v1617
      %v1646 = vsel %vm1631, %v1615, %v1616
      %v1647 = vsel %vm1631, %v1614, %v1615
      %v1648 = vsel %vm1631, %v1613, %v1614
      %v1649 = vsel %vm1631, %v1612, %v1613
      %v1650 = vsel %vm1631, %v1611, %v1612
      %v1651 = vsel %vm1631, %v1610, %v1611
      %v1652 = vsel %vm1631, %v1609, %v1610
      %v1653 = vsel %vm1631, %v1608, %v1609
      %v1654 = vsel %vm1631, %v1607, %v1608
      %v1655 = vsel %vm1631, %v1606, %v1607
      %v1656 = vsel %vm1631, %v1605, %v1606
      %v1657 = vsel %vm1631, %v1604, %v1605
      %v1658 = vsel %vm1631, %v1630, %v1604
      %s1659 = scalar_lea.vmem %s2, 1584
      %v1660 = vld [vmem:[%s1659] sm:$0xff]
      %v1661 = vld [vmem:[%s1659 + $0x8] sm:$0xff]
      %v1662 = vld [vmem:[%s1659 + $0x10] sm:$0xff]
      %v1663 = vld [vmem:[%s1659 + $0x18] sm:$0xff]
      %v1664 = vld [vmem:[%s1659 + $0x20] sm:$0xff]
      %v1665 = vld [vmem:[%s1659 + $0x28] sm:$0xff]
      %v1666 = vld [vmem:[%s1659 + $0x30] sm:$0xff]
      %v1667 = vld [vmem:[%s1659 + $0x38] sm:$0xff]
      %v1668 = vld [vmem:[%s1659 + $0x40] sm:$0xff]
      %v1669 = vld [vmem:[%s1659 + $0x48] sm:$0xff]
      %v1670 = vld [vmem:[%s1659 + $0x50] sm:$0xff]
      %v1671 = vld [vmem:[%s1659 + $0x58] sm:$0xff]
      %v1672 = vld [vmem:[%s1659 + $0x60] sm:$0xff]
      %v1673 = vld [vmem:[%s1659 + $0x68] sm:$0xff]
      %v1674 = vld [vmem:[%s1659 + $0x70] sm:$0xff]
      %v1675 = vld [vmem:[%s1659 + $0x78] sm:$0xff]
      %v1676 = vld [vmem:[%s1659 + $0x80] sm:$0xff]
      %v1677 = vld [vmem:[%s1659 + $0x88] sm:$0xff]
      %v1678 = vld [vmem:[%s1659 + $0x90] sm:$0xff]
      %v1679 = vld [vmem:[%s1659 + $0x98] sm:$0xff]
      %v1680 = vld [vmem:[%s1659 + $0xa0] sm:$0xff]
      %v1681 = vld [vmem:[%s1659 + $0xa8] sm:$0xff]
      %v1682 = vld [vmem:[%s1659 + $0xb0] sm:$0xff]
      %v1683 = vld [vmem:[%s1659 + $0xb8] sm:$0xff]
      %v1684 = vld [vmem:[%s1659 + $0xc0] sm:$0xff]
      %v1685 = vld [vmem:[%s1659 + $0xc8] sm:$0xff]
      %v1686 = vld [vmem:[%s1659 + $0xd0] sm:$0xff]
      %v1687 = vmul.f32 %v1634, %v1660
      %v1688 = vmul.f32 %v1633, %v1661
      %v1689 = vmul.f32 %v1632, %v1662
      %v1690 = vmul.f32 %v1658, %v1663
      %v1691 = vmul.f32 %v1657, %v1664
      %v1692 = vmul.f32 %v1656, %v1665
      %v1693 = vmul.f32 %v1655, %v1666
      %v1694 = vmul.f32 %v1654, %v1667
      %v1695 = vmul.f32 %v1653, %v1668
      %v1696 = vmul.f32 %v1652, %v1669
      %v1697 = vmul.f32 %v1651, %v1670
      %v1698 = vmul.f32 %v1650, %v1671
      %v1699 = vmul.f32 %v1649, %v1672
      %v1700 = vmul.f32 %v1648, %v1673
      %v1701 = vmul.f32 %v1647, %v1674
      %v1702 = vmul.f32 %v1646, %v1675
      %v1703 = vmul.f32 %v1645, %v1676
      %v1704 = vmul.f32 %v1644, %v1677
      %v1705 = vmul.f32 %v1643, %v1678
      %v1706 = vmul.f32 %v1642, %v1679
      %v1707 = vmul.f32 %v1641, %v1680
      %v1708 = vmul.f32 %v1640, %v1681
      %v1709 = vmul.f32 %v1639, %v1682
      %v1710 = vmul.f32 %v1638, %v1683
      %v1711 = vmul.f32 %v1637, %v1684
      %v1712 = vmul.f32 %v1636, %v1685
      %v1713 = vmul.f32 %v1635, %v1686
      %v1714 = vadd.f32 %v1577, %v1687
      %v1715 = vadd.f32 %v1578, %v1688
      %v1716 = vadd.f32 %v1579, %v1689
      %v1717 = vadd.f32 %v1580, %v1690
      %v1718 = vadd.f32 %v1581, %v1691
      %v1719 = vadd.f32 %v1582, %v1692
      %v1720 = vadd.f32 %v1583, %v1693
      %v1721 = vadd.f32 %v1584, %v1694
      %v1722 = vadd.f32 %v1585, %v1695
      %v1723 = vadd.f32 %v1586, %v1696
      %v1724 = vadd.f32 %v1587, %v1697
      %v1725 = vadd.f32 %v1588, %v1698
      %v1726 = vadd.f32 %v1589, %v1699
      %v1727 = vadd.f32 %v1590, %v1700
      %v1728 = vadd.f32 %v1591, %v1701
      %v1729 = vadd.f32 %v1592, %v1702
      %v1730 = vadd.f32 %v1593, %v1703
      %v1731 = vadd.f32 %v1594, %v1704
      %v1732 = vadd.f32 %v1595, %v1705
      %v1733 = vadd.f32 %v1596, %v1706
      %v1734 = vadd.f32 %v1597, %v1707
      %v1735 = vadd.f32 %v1598, %v1708
      %v1736 = vadd.f32 %v1599, %v1709
      %v1737 = vadd.f32 %v1600, %v1710
      %v1738 = vadd.f32 %v1601, %v1711
      %v1739 = vadd.f32 %v1602, %v1712
      %v1740 = vadd.f32 %v1603, %v1713
      %v1741 = vrot.slane %v703, 2
      %v1742 = vrot.slane %v706, 2
      %v1743 = vrot.slane %v711, 2
      %v1744 = vrot.slane %v714, 2
      %v1745 = vrot.slane %v719, 2
      %v1746 = vrot.slane %v722, 2
      %v1747 = vrot.slane %v727, 2
      %v1748 = vrot.slane %v730, 2
      %v1749 = vrot.slane %v735, 2
      %v1750 = vrot.slane %v738, 2
      %v1751 = vrot.slane %v743, 2
      %v1752 = vrot.slane %v746, 2
      %v1753 = vrot.slane %v751, 2
      %v1754 = vrot.slane %v754, 2
      %v1755 = vrot.slane %v759, 2
      %v1756 = vrot.slane %v762, 2
      %v1757 = vrot.slane %v767, 2
      %v1758 = vrot.slane %v770, 2
      %v1759 = vrot.slane %v775, 2
      %v1760 = vrot.slane %v778, 2
      %v1761 = vrot.slane %v783, 2
      %v1762 = vrot.slane %v786, 2
      %v1763 = vrot.slane %v791, 2
      %v1764 = vrot.slane %v794, 2
      %v1765 = vrot.slane %v799, 2
      %v1766 = vrot.slane %v802, 2
      %v1767 = vrot.slane %v807, 2
      %vm1768 = vcmp.lt.s32.totalorder %v864, 6
      %v1769 = vsel %vm1768, %v1766, %v1767
      %v1770 = vsel %vm1768, %v1765, %v1766
      %v1771 = vsel %vm1768, %v1764, %v1765
      %v1772 = vsel %vm1768, %v1763, %v1764
      %v1773 = vsel %vm1768, %v1762, %v1763
      %v1774 = vsel %vm1768, %v1761, %v1762
      %v1775 = vsel %vm1768, %v1760, %v1761
      %v1776 = vsel %vm1768, %v1759, %v1760
      %v1777 = vsel %vm1768, %v1758, %v1759
      %v1778 = vsel %vm1768, %v1757, %v1758
      %v1779 = vsel %vm1768, %v1756, %v1757
      %v1780 = vsel %vm1768, %v1755, %v1756
      %v1781 = vsel %vm1768, %v1754, %v1755
      %v1782 = vsel %vm1768, %v1753, %v1754
      %v1783 = vsel %vm1768, %v1752, %v1753
      %v1784 = vsel %vm1768, %v1751, %v1752
      %v1785 = vsel %vm1768, %v1750, %v1751
      %v1786 = vsel %vm1768, %v1749, %v1750
      %v1787 = vsel %vm1768, %v1748, %v1749
      %v1788 = vsel %vm1768, %v1747, %v1748
      %v1789 = vsel %vm1768, %v1746, %v1747
      %v1790 = vsel %vm1768, %v1745, %v1746
      %v1791 = vsel %vm1768, %v1744, %v1745
      %v1792 = vsel %vm1768, %v1743, %v1744
      %v1793 = vsel %vm1768, %v1742, %v1743
      %v1794 = vsel %vm1768, %v1741, %v1742
      %v1795 = vsel %vm1768, %v1767, %v1741
      %s1796 = scalar_lea.vmem %s2, 1848
      %v1797 = vld [vmem:[%s1796] sm:$0xff]
      %v1798 = vld [vmem:[%s1796 + $0x8] sm:$0xff]
      %v1799 = vld [vmem:[%s1796 + $0x10] sm:$0xff]
      %v1800 = vld [vmem:[%s1796 + $0x18] sm:$0xff]
      %v1801 = vld [vmem:[%s1796 + $0x20] sm:$0xff]
      %v1802 = vld [vmem:[%s1796 + $0x28] sm:$0xff]
      %v1803 = vld [vmem:[%s1796 + $0x30] sm:$0xff]
      %v1804 = vld [vmem:[%s1796 + $0x38] sm:$0xff]
      %v1805 = vld [vmem:[%s1796 + $0x40] sm:$0xff]
      %v1806 = vld [vmem:[%s1796 + $0x48] sm:$0xff]
      %v1807 = vld [vmem:[%s1796 + $0x50] sm:$0xff]
      %v1808 = vld [vmem:[%s1796 + $0x58] sm:$0xff]
      %v1809 = vld [vmem:[%s1796 + $0x60] sm:$0xff]
      %v1810 = vld [vmem:[%s1796 + $0x68] sm:$0xff]
      %v1811 = vld [vmem:[%s1796 + $0x70] sm:$0xff]
      %v1812 = vld [vmem:[%s1796 + $0x78] sm:$0xff]
      %v1813 = vld [vmem:[%s1796 + $0x80] sm:$0xff]
      %v1814 = vld [vmem:[%s1796 + $0x88] sm:$0xff]
      %v1815 = vld [vmem:[%s1796 + $0x90] sm:$0xff]
      %v1816 = vld [vmem:[%s1796 + $0x98] sm:$0xff]
      %v1817 = vld [vmem:[%s1796 + $0xa0] sm:$0xff]
      %v1818 = vld [vmem:[%s1796 + $0xa8] sm:$0xff]
      %v1819 = vld [vmem:[%s1796 + $0xb0] sm:$0xff]
      %v1820 = vld [vmem:[%s1796 + $0xb8] sm:$0xff]
      %v1821 = vld [vmem:[%s1796 + $0xc0] sm:$0xff]
      %v1822 = vld [vmem:[%s1796 + $0xc8] sm:$0xff]
      %v1823 = vld [vmem:[%s1796 + $0xd0] sm:$0xff]
      %v1824 = vmul.f32 %v1771, %v1797
      %v1825 = vmul.f32 %v1770, %v1798
      %v1826 = vmul.f32 %v1769, %v1799
      %v1827 = vmul.f32 %v1795, %v1800
      %v1828 = vmul.f32 %v1794, %v1801
      %v1829 = vmul.f32 %v1793, %v1802
      %v1830 = vmul.f32 %v1792, %v1803
      %v1831 = vmul.f32 %v1791, %v1804
      %v1832 = vmul.f32 %v1790, %v1805
      %v1833 = vmul.f32 %v1789, %v1806
      %v1834 = vmul.f32 %v1788, %v1807
      %v1835 = vmul.f32 %v1787, %v1808
      %v1836 = vmul.f32 %v1786, %v1809
      %v1837 = vmul.f32 %v1785, %v1810
      %v1838 = vmul.f32 %v1784, %v1811
      %v1839 = vmul.f32 %v1783, %v1812
      %v1840 = vmul.f32 %v1782, %v1813
      %v1841 = vmul.f32 %v1781, %v1814
      %v1842 = vmul.f32 %v1780, %v1815
      %v1843 = vmul.f32 %v1779, %v1816
      %v1844 = vmul.f32 %v1778, %v1817
      %v1845 = vmul.f32 %v1777, %v1818
      %v1846 = vmul.f32 %v1776, %v1819
      %v1847 = vmul.f32 %v1775, %v1820
      %v1848 = vmul.f32 %v1774, %v1821
      %v1849 = vmul.f32 %v1773, %v1822
      %v1850 = vmul.f32 %v1772, %v1823
      %v1851 = vadd.f32 %v1714, %v1824
      %v1852 = vadd.f32 %v1715, %v1825
      %v1853 = vadd.f32 %v1716, %v1826
      %v1854 = vadd.f32 %v1717, %v1827
      %v1855 = vadd.f32 %v1718, %v1828
      %v1856 = vadd.f32 %v1719, %v1829
      %v1857 = vadd.f32 %v1720, %v1830
      %v1858 = vadd.f32 %v1721, %v1831
      %v1859 = vadd.f32 %v1722, %v1832
      %v1860 = vadd.f32 %v1723, %v1833
      %v1861 = vadd.f32 %v1724, %v1834
      %v1862 = vadd.f32 %v1725, %v1835
      %v1863 = vadd.f32 %v1726, %v1836
      %v1864 = vadd.f32 %v1727, %v1837
      %v1865 = vadd.f32 %v1728, %v1838
      %v1866 = vadd.f32 %v1729, %v1839
      %v1867 = vadd.f32 %v1730, %v1840
      %v1868 = vadd.f32 %v1731, %v1841
      %v1869 = vadd.f32 %v1732, %v1842
      %v1870 = vadd.f32 %v1733, %v1843
      %v1871 = vadd.f32 %v1734, %v1844
      %v1872 = vadd.f32 %v1735, %v1845
      %v1873 = vadd.f32 %v1736, %v1846
      %v1874 = vadd.f32 %v1737, %v1847
      %v1875 = vadd.f32 %v1738, %v1848
      %v1876 = vadd.f32 %v1739, %v1849
      %v1877 = vadd.f32 %v1740, %v1850
      %s1878 = scalar_lea.vmem %s2, 2112
      %v1879 = vld [vmem:[%s1878] sm:$0xff]
      %v1880 = vld [vmem:[%s1878 + $0x8] sm:$0xff]
      %v1881 = vld [vmem:[%s1878 + $0x10] sm:$0xff]
      %v1882 = vld [vmem:[%s1878 + $0x18] sm:$0xff]
      %v1883 = vld [vmem:[%s1878 + $0x20] sm:$0xff]
      %v1884 = vld [vmem:[%s1878 + $0x28] sm:$0xff]
      %v1885 = vld [vmem:[%s1878 + $0x30] sm:$0xff]
      %v1886 = vld [vmem:[%s1878 + $0x38] sm:$0xff]
      %v1887 = vld [vmem:[%s1878 + $0x40] sm:$0xff]
      %v1888 = vld [vmem:[%s1878 + $0x48] sm:$0xff]
      %v1889 = vld [vmem:[%s1878 + $0x50] sm:$0xff]
      %v1890 = vld [vmem:[%s1878 + $0x58] sm:$0xff]
      %v1891 = vld [vmem:[%s1878 + $0x60] sm:$0xff]
      %v1892 = vld [vmem:[%s1878 + $0x68] sm:$0xff]
      %v1893 = vld [vmem:[%s1878 + $0x70] sm:$0xff]
      %v1894 = vld [vmem:[%s1878 + $0x78] sm:$0xff]
      %v1895 = vld [vmem:[%s1878 + $0x80] sm:$0xff]
      %v1896 = vld [vmem:[%s1878 + $0x88] sm:$0xff]
      %v1897 = vld [vmem:[%s1878 + $0x90] sm:$0xff]
      %v1898 = vld [vmem:[%s1878 + $0x98] sm:$0xff]
      %v1899 = vld [vmem:[%s1878 + $0xa0] sm:$0xff]
      %v1900 = vld [vmem:[%s1878 + $0xa8] sm:$0xff]
      %v1901 = vld [vmem:[%s1878 + $0xb0] sm:$0xff]
      %v1902 = vld [vmem:[%s1878 + $0xb8] sm:$0xff]
      %v1903 = vld [vmem:[%s1878 + $0xc0] sm:$0xff]
      %v1904 = vld [vmem:[%s1878 + $0xc8] sm:$0xff]
      %v1905 = vld [vmem:[%s1878 + $0xd0] sm:$0xff]
      %v1906 = vmul.f32 %v1278, %v1879
      %v1907 = vmul.f32 %v1277, %v1880
      %v1908 = vmul.f32 %v1276, %v1881
      %v1909 = vmul.f32 %v1302, %v1882
      %v1910 = vmul.f32 %v1301, %v1883
      %v1911 = vmul.f32 %v1300, %v1884
      %v1912 = vmul.f32 %v1299, %v1885
      %v1913 = vmul.f32 %v1298, %v1886
      %v1914 = vmul.f32 %v1297, %v1887
      %v1915 = vmul.f32 %v1296, %v1888
      %v1916 = vmul.f32 %v1295, %v1889
      %v1917 = vmul.f32 %v1294, %v1890
      %v1918 = vmul.f32 %v1293, %v1891
      %v1919 = vmul.f32 %v1292, %v1892
      %v1920 = vmul.f32 %v1291, %v1893
      %v1921 = vmul.f32 %v1290, %v1894
      %v1922 = vmul.f32 %v1289, %v1895
      %v1923 = vmul.f32 %v1288, %v1896
      %v1924 = vmul.f32 %v1287, %v1897
      %v1925 = vmul.f32 %v1286, %v1898
      %v1926 = vmul.f32 %v1285, %v1899
      %v1927 = vmul.f32 %v1284, %v1900
      %v1928 = vmul.f32 %v1283, %v1901
      %v1929 = vmul.f32 %v1282, %v1902
      %v1930 = vmul.f32 %v1281, %v1903
      %v1931 = vmul.f32 %v1280, %v1904
      %v1932 = vmul.f32 %v1279, %v1905
      %v1933 = vadd.f32 %v1851, %v1906
      %v1934 = vadd.f32 %v1852, %v1907
      %v1935 = vadd.f32 %v1853, %v1908
      %v1936 = vadd.f32 %v1854, %v1909
      %v1937 = vadd.f32 %v1855, %v1910
      %v1938 = vadd.f32 %v1856, %v1911
      %v1939 = vadd.f32 %v1857, %v1912
      %v1940 = vadd.f32 %v1858, %v1913
      %v1941 = vadd.f32 %v1859, %v1914
      %v1942 = vadd.f32 %v1860, %v1915
      %v1943 = vadd.f32 %v1861, %v1916
      %v1944 = vadd.f32 %v1862, %v1917
      %v1945 = vadd.f32 %v1863, %v1918
      %v1946 = vadd.f32 %v1864, %v1919
      %v1947 = vadd.f32 %v1865, %v1920
      %v1948 = vadd.f32 %v1866, %v1921
      %v1949 = vadd.f32 %v1867, %v1922
      %v1950 = vadd.f32 %v1868, %v1923
      %v1951 = vadd.f32 %v1869, %v1924
      %v1952 = vadd.f32 %v1870, %v1925
      %v1953 = vadd.f32 %v1871, %v1926
      %v1954 = vadd.f32 %v1872, %v1927
      %v1955 = vadd.f32 %v1873, %v1928
      %v1956 = vadd.f32 %v1874, %v1929
      %v1957 = vadd.f32 %v1875, %v1930
      %v1958 = vadd.f32 %v1876, %v1931
      %v1959 = vadd.f32 %v1877, %v1932
      %s1960 = scalar_lea.vmem %s2, 2376
      %v1961 = vld [vmem:[%s1960] sm:$0xff]
      %v1962 = vld [vmem:[%s1960 + $0x8] sm:$0xff]
      %v1963 = vld [vmem:[%s1960 + $0x10] sm:$0xff]
      %v1964 = vld [vmem:[%s1960 + $0x18] sm:$0xff]
      %v1965 = vld [vmem:[%s1960 + $0x20] sm:$0xff]
      %v1966 = vld [vmem:[%s1960 + $0x28] sm:$0xff]
      %v1967 = vld [vmem:[%s1960 + $0x30] sm:$0xff]
      %v1968 = vld [vmem:[%s1960 + $0x38] sm:$0xff]
      %v1969 = vld [vmem:[%s1960 + $0x40] sm:$0xff]
      %v1970 = vld [vmem:[%s1960 + $0x48] sm:$0xff]
      %v1971 = vld [vmem:[%s1960 + $0x50] sm:$0xff]
      %v1972 = vld [vmem:[%s1960 + $0x58] sm:$0xff]
      %v1973 = vld [vmem:[%s1960 + $0x60] sm:$0xff]
      %v1974 = vld [vmem:[%s1960 + $0x68] sm:$0xff]
      %v1975 = vld [vmem:[%s1960 + $0x70] sm:$0xff]
      %v1976 = vld [vmem:[%s1960 + $0x78] sm:$0xff]
      %v1977 = vld [vmem:[%s1960 + $0x80] sm:$0xff]
      %v1978 = vld [vmem:[%s1960 + $0x88] sm:$0xff]
      %v1979 = vld [vmem:[%s1960 + $0x90] sm:$0xff]
      %v1980 = vld [vmem:[%s1960 + $0x98] sm:$0xff]
      %v1981 = vld [vmem:[%s1960 + $0xa0] sm:$0xff]
      %v1982 = vld [vmem:[%s1960 + $0xa8] sm:$0xff]
      %v1983 = vld [vmem:[%s1960 + $0xb0] sm:$0xff]
      %v1984 = vld [vmem:[%s1960 + $0xb8] sm:$0xff]
      %v1985 = vld [vmem:[%s1960 + $0xc0] sm:$0xff]
      %v1986 = vld [vmem:[%s1960 + $0xc8] sm:$0xff]
      %v1987 = vld [vmem:[%s1960 + $0xd0] sm:$0xff]
      %v1988 = vmul.f32 %v1658, %v1961
      %v1989 = vmul.f32 %v1657, %v1962
      %v1990 = vmul.f32 %v1656, %v1963
      %v1991 = vmul.f32 %v1655, %v1964
      %v1992 = vmul.f32 %v1654, %v1965
      %v1993 = vmul.f32 %v1653, %v1966
      %v1994 = vmul.f32 %v1652, %v1967
      %v1995 = vmul.f32 %v1651, %v1968
      %v1996 = vmul.f32 %v1650, %v1969
      %v1997 = vmul.f32 %v1649, %v1970
      %v1998 = vmul.f32 %v1648, %v1971
      %v1999 = vmul.f32 %v1647, %v1972
      %v2000 = vmul.f32 %v1646, %v1973
      %v2001 = vmul.f32 %v1645, %v1974
      %v2002 = vmul.f32 %v1644, %v1975
      %v2003 = vmul.f32 %v1643, %v1976
      %v2004 = vmul.f32 %v1642, %v1977
      %v2005 = vmul.f32 %v1641, %v1978
      %v2006 = vmul.f32 %v1640, %v1979
      %v2007 = vmul.f32 %v1639, %v1980
      %v2008 = vmul.f32 %v1638, %v1981
      %v2009 = vmul.f32 %v1637, %v1982
      %v2010 = vmul.f32 %v1636, %v1983
      %v2011 = vmul.f32 %v1635, %v1984
      %v2012 = vmul.f32 %v1634, %v1985
      %v2013 = vmul.f32 %v1633, %v1986
      %v2014 = vmul.f32 %v1632, %v1987
      %v2015 = vadd.f32 %v1933, %v1988
      %v2016 = vadd.f32 %v1934, %v1989
      %v2017 = vadd.f32 %v1935, %v1990
      %v2018 = vadd.f32 %v1936, %v1991
      %v2019 = vadd.f32 %v1937, %v1992
      %v2020 = vadd.f32 %v1938, %v1993
      %v2021 = vadd.f32 %v1939, %v1994
      %v2022 = vadd.f32 %v1940, %v1995
      %v2023 = vadd.f32 %v1941, %v1996
      %v2024 = vadd.f32 %v1942, %v1997
      %v2025 = vadd.f32 %v1943, %v1998
      %v2026 = vadd.f32 %v1944, %v1999
      %v2027 = vadd.f32 %v1945, %v2000
      %v2028 = vadd.f32 %v1946, %v2001
      %v2029 = vadd.f32 %v1947, %v2002
      %v2030 = vadd.f32 %v1948, %v2003
      %v2031 = vadd.f32 %v1949, %v2004
      %v2032 = vadd.f32 %v1950, %v2005
      %v2033 = vadd.f32 %v1951, %v2006
      %v2034 = vadd.f32 %v1952, %v2007
      %v2035 = vadd.f32 %v1953, %v2008
      %v2036 = vadd.f32 %v1954, %v2009
      %v2037 = vadd.f32 %v1955, %v2010
      %v2038 = vadd.f32 %v1956, %v2011
      %v2039 = vadd.f32 %v1957, %v2012
      %v2040 = vadd.f32 %v1958, %v2013
      %v2041 = vadd.f32 %v1959, %v2014
      %s2042 = scalar_lea.vmem %s2, 2640
      %v2043 = vld [vmem:[%s2042] sm:$0xff]
      %v2044 = vld [vmem:[%s2042 + $0x8] sm:$0xff]
      %v2045 = vld [vmem:[%s2042 + $0x10] sm:$0xff]
      %v2046 = vld [vmem:[%s2042 + $0x18] sm:$0xff]
      %v2047 = vld [vmem:[%s2042 + $0x20] sm:$0xff]
      %v2048 = vld [vmem:[%s2042 + $0x28] sm:$0xff]
      %v2049 = vld [vmem:[%s2042 + $0x30] sm:$0xff]
      %v2050 = vld [vmem:[%s2042 + $0x38] sm:$0xff]
      %v2051 = vld [vmem:[%s2042 + $0x40] sm:$0xff]
      %v2052 = vld [vmem:[%s2042 + $0x48] sm:$0xff]
      %v2053 = vld [vmem:[%s2042 + $0x50] sm:$0xff]
      %v2054 = vld [vmem:[%s2042 + $0x58] sm:$0xff]
      %v2055 = vld [vmem:[%s2042 + $0x60] sm:$0xff]
      %v2056 = vld [vmem:[%s2042 + $0x68] sm:$0xff]
      %v2057 = vld [vmem:[%s2042 + $0x70] sm:$0xff]
      %v2058 = vld [vmem:[%s2042 + $0x78] sm:$0xff]
      %v2059 = vld [vmem:[%s2042 + $0x80] sm:$0xff]
      %v2060 = vld [vmem:[%s2042 + $0x88] sm:$0xff]
      %v2061 = vld [vmem:[%s2042 + $0x90] sm:$0xff]
      %v2062 = vld [vmem:[%s2042 + $0x98] sm:$0xff]
      %v2063 = vld [vmem:[%s2042 + $0xa0] sm:$0xff]
      %v2064 = vld [vmem:[%s2042 + $0xa8] sm:$0xff]
      %v2065 = vld [vmem:[%s2042 + $0xb0] sm:$0xff]
      %v2066 = vld [vmem:[%s2042 + $0xb8] sm:$0xff]
      %v2067 = vld [vmem:[%s2042 + $0xc0] sm:$0xff]
      %v2068 = vld [vmem:[%s2042 + $0xc8] sm:$0xff]
      %v2069 = vld [vmem:[%s2042 + $0xd0] sm:$0xff]
      %v2070 = vmul.f32 %v1795, %v2043
      %v2071 = vmul.f32 %v1794, %v2044
      %v2072 = vmul.f32 %v1793, %v2045
      %v2073 = vmul.f32 %v1792, %v2046
      %v2074 = vmul.f32 %v1791, %v2047
      %v2075 = vmul.f32 %v1790, %v2048
      %v2076 = vmul.f32 %v1789, %v2049
      %v2077 = vmul.f32 %v1788, %v2050
      %v2078 = vmul.f32 %v1787, %v2051
      %v2079 = vmul.f32 %v1786, %v2052
      %v2080 = vmul.f32 %v1785, %v2053
      %v2081 = vmul.f32 %v1784, %v2054
      %v2082 = vmul.f32 %v1783, %v2055
      %v2083 = vmul.f32 %v1782, %v2056
      %v2084 = vmul.f32 %v1781, %v2057
      %v2085 = vmul.f32 %v1780, %v2058
      %v2086 = vmul.f32 %v1779, %v2059
      %v2087 = vmul.f32 %v1778, %v2060
      %v2088 = vmul.f32 %v1777, %v2061
      %v2089 = vmul.f32 %v1776, %v2062
      %v2090 = vmul.f32 %v1775, %v2063
      %v2091 = vmul.f32 %v1774, %v2064
      %v2092 = vmul.f32 %v1773, %v2065
      %v2093 = vmul.f32 %v1772, %v2066
      %v2094 = vmul.f32 %v1771, %v2067
      %v2095 = vmul.f32 %v1770, %v2068
      %v2096 = vmul.f32 %v1769, %v2069
      %v2097 = vadd.f32 %v2015, %v2070
      %v2098 = vadd.f32 %v2016, %v2071
      %v2099 = vadd.f32 %v2017, %v2072
      %v2100 = vadd.f32 %v2018, %v2073
      %v2101 = vadd.f32 %v2019, %v2074
      %v2102 = vadd.f32 %v2020, %v2075
      %v2103 = vadd.f32 %v2021, %v2076
      %v2104 = vadd.f32 %v2022, %v2077
      %v2105 = vadd.f32 %v2023, %v2078
      %v2106 = vadd.f32 %v2024, %v2079
      %v2107 = vadd.f32 %v2025, %v2080
      %v2108 = vadd.f32 %v2026, %v2081
      %v2109 = vadd.f32 %v2027, %v2082
      %v2110 = vadd.f32 %v2028, %v2083
      %v2111 = vadd.f32 %v2029, %v2084
      %v2112 = vadd.f32 %v2030, %v2085
      %v2113 = vadd.f32 %v2031, %v2086
      %v2114 = vadd.f32 %v2032, %v2087
      %v2115 = vadd.f32 %v2033, %v2088
      %v2116 = vadd.f32 %v2034, %v2089
      %v2117 = vadd.f32 %v2035, %v2090
      %v2118 = vadd.f32 %v2036, %v2091
      %v2119 = vadd.f32 %v2037, %v2092
      %v2120 = vadd.f32 %v2038, %v2093
      %v2121 = vadd.f32 %v2039, %v2094
      %v2122 = vadd.f32 %v2040, %v2095
      %v2123 = vadd.f32 %v2041, %v2096
      %s2124 = scalar_lea.vmem %s2, 2904
      %v2125 = vld [vmem:[%s2124] sm:$0xff]
      %v2126 = vld [vmem:[%s2124 + $0x8] sm:$0xff]
      %v2127 = vld [vmem:[%s2124 + $0x10] sm:$0xff]
      %v2128 = vld [vmem:[%s2124 + $0x18] sm:$0xff]
      %v2129 = vld [vmem:[%s2124 + $0x20] sm:$0xff]
      %v2130 = vld [vmem:[%s2124 + $0x28] sm:$0xff]
      %v2131 = vld [vmem:[%s2124 + $0x30] sm:$0xff]
      %v2132 = vld [vmem:[%s2124 + $0x38] sm:$0xff]
      %v2133 = vld [vmem:[%s2124 + $0x40] sm:$0xff]
      %v2134 = vld [vmem:[%s2124 + $0x48] sm:$0xff]
      %v2135 = vld [vmem:[%s2124 + $0x50] sm:$0xff]
      %v2136 = vld [vmem:[%s2124 + $0x58] sm:$0xff]
      %v2137 = vld [vmem:[%s2124 + $0x60] sm:$0xff]
      %v2138 = vld [vmem:[%s2124 + $0x68] sm:$0xff]
      %v2139 = vld [vmem:[%s2124 + $0x70] sm:$0xff]
      %v2140 = vld [vmem:[%s2124 + $0x78] sm:$0xff]
      %v2141 = vld [vmem:[%s2124 + $0x80] sm:$0xff]
      %v2142 = vld [vmem:[%s2124 + $0x88] sm:$0xff]
      %v2143 = vld [vmem:[%s2124 + $0x90] sm:$0xff]
      %v2144 = vld [vmem:[%s2124 + $0x98] sm:$0xff]
      %v2145 = vld [vmem:[%s2124 + $0xa0] sm:$0xff]
      %v2146 = vld [vmem:[%s2124 + $0xa8] sm:$0xff]
      %v2147 = vld [vmem:[%s2124 + $0xb0] sm:$0xff]
      %v2148 = vld [vmem:[%s2124 + $0xb8] sm:$0xff]
      %v2149 = vld [vmem:[%s2124 + $0xc0] sm:$0xff]
      %v2150 = vld [vmem:[%s2124 + $0xc8] sm:$0xff]
      %v2151 = vld [vmem:[%s2124 + $0xd0] sm:$0xff]
      %v2152 = vmul.f32 %v1302, %v2125
      %v2153 = vmul.f32 %v1301, %v2126
      %v2154 = vmul.f32 %v1300, %v2127
      %v2155 = vmul.f32 %v1299, %v2128
      %v2156 = vmul.f32 %v1298, %v2129
      %v2157 = vmul.f32 %v1297, %v2130
      %v2158 = vmul.f32 %v1296, %v2131
      %v2159 = vmul.f32 %v1295, %v2132
      %v2160 = vmul.f32 %v1294, %v2133
      %v2161 = vmul.f32 %v1293, %v2134
      %v2162 = vmul.f32 %v1292, %v2135
      %v2163 = vmul.f32 %v1291, %v2136
      %v2164 = vmul.f32 %v1290, %v2137
      %v2165 = vmul.f32 %v1289, %v2138
      %v2166 = vmul.f32 %v1288, %v2139
      %v2167 = vmul.f32 %v1287, %v2140
      %v2168 = vmul.f32 %v1286, %v2141
      %v2169 = vmul.f32 %v1285, %v2142
      %v2170 = vmul.f32 %v1284, %v2143
      %v2171 = vmul.f32 %v1283, %v2144
      %v2172 = vmul.f32 %v1282, %v2145
      %v2173 = vmul.f32 %v1281, %v2146
      %v2174 = vmul.f32 %v1280, %v2147
      %v2175 = vmul.f32 %v1279, %v2148
      %v2176 = vmul.f32 %v1278, %v2149
      %v2177 = vmul.f32 %v1277, %v2150
      %v2178 = vmul.f32 %v1276, %v2151
      %v2179 = vadd.f32 %v2097, %v2152
      %v2180 = vadd.f32 %v2098, %v2153
      %v2181 = vadd.f32 %v2099, %v2154
      %v2182 = vadd.f32 %v2100, %v2155
      %v2183 = vadd.f32 %v2101, %v2156
      %v2184 = vadd.f32 %v2102, %v2157
      %v2185 = vadd.f32 %v2103, %v2158
      %v2186 = vadd.f32 %v2104, %v2159
      %v2187 = vadd.f32 %v2105, %v2160
      %v2188 = vadd.f32 %v2106, %v2161
      %v2189 = vadd.f32 %v2107, %v2162
      %v2190 = vadd.f32 %v2108, %v2163
      %v2191 = vadd.f32 %v2109, %v2164
      %v2192 = vadd.f32 %v2110, %v2165
      %v2193 = vadd.f32 %v2111, %v2166
      %v2194 = vadd.f32 %v2112, %v2167
      %v2195 = vadd.f32 %v2113, %v2168
      %v2196 = vadd.f32 %v2114, %v2169
      %v2197 = vadd.f32 %v2115, %v2170
      %v2198 = vadd.f32 %v2116, %v2171
      %v2199 = vadd.f32 %v2117, %v2172
      %v2200 = vadd.f32 %v2118, %v2173
      %v2201 = vadd.f32 %v2119, %v2174
      %v2202 = vadd.f32 %v2120, %v2175
      %v2203 = vadd.f32 %v2121, %v2176
      %v2204 = vadd.f32 %v2122, %v2177
      %v2205 = vadd.f32 %v2123, %v2178
      %s2206 = scalar_lea.vmem %s2, 3168
      %v2207 = vld [vmem:[%s2206] sm:$0xff]
      %v2208 = vld [vmem:[%s2206 + $0x8] sm:$0xff]
      %v2209 = vld [vmem:[%s2206 + $0x10] sm:$0xff]
      %v2210 = vld [vmem:[%s2206 + $0x18] sm:$0xff]
      %v2211 = vld [vmem:[%s2206 + $0x20] sm:$0xff]
      %v2212 = vld [vmem:[%s2206 + $0x28] sm:$0xff]
      %v2213 = vld [vmem:[%s2206 + $0x30] sm:$0xff]
      %v2214 = vld [vmem:[%s2206 + $0x38] sm:$0xff]
      %v2215 = vld [vmem:[%s2206 + $0x40] sm:$0xff]
      %v2216 = vld [vmem:[%s2206 + $0x48] sm:$0xff]
      %v2217 = vld [vmem:[%s2206 + $0x50] sm:$0xff]
      %v2218 = vld [vmem:[%s2206 + $0x58] sm:$0xff]
      %v2219 = vld [vmem:[%s2206 + $0x60] sm:$0xff]
      %v2220 = vld [vmem:[%s2206 + $0x68] sm:$0xff]
      %v2221 = vld [vmem:[%s2206 + $0x70] sm:$0xff]
      %v2222 = vld [vmem:[%s2206 + $0x78] sm:$0xff]
      %v2223 = vld [vmem:[%s2206 + $0x80] sm:$0xff]
      %v2224 = vld [vmem:[%s2206 + $0x88] sm:$0xff]
      %v2225 = vld [vmem:[%s2206 + $0x90] sm:$0xff]
      %v2226 = vld [vmem:[%s2206 + $0x98] sm:$0xff]
      %v2227 = vld [vmem:[%s2206 + $0xa0] sm:$0xff]
      %v2228 = vld [vmem:[%s2206 + $0xa8] sm:$0xff]
      %v2229 = vld [vmem:[%s2206 + $0xb0] sm:$0xff]
      %v2230 = vld [vmem:[%s2206 + $0xb8] sm:$0xff]
      %v2231 = vld [vmem:[%s2206 + $0xc0] sm:$0xff]
      %v2232 = vld [vmem:[%s2206 + $0xc8] sm:$0xff]
      %v2233 = vld [vmem:[%s2206 + $0xd0] sm:$0xff]
      %v2234 = vmul.f32 %v1165, %v2207
      %v2235 = vmul.f32 %v1164, %v2208
      %v2236 = vmul.f32 %v1163, %v2209
      %v2237 = vmul.f32 %v1162, %v2210
      %v2238 = vmul.f32 %v1161, %v2211
      %v2239 = vmul.f32 %v1160, %v2212
      %v2240 = vmul.f32 %v1159, %v2213
      %v2241 = vmul.f32 %v1158, %v2214
      %v2242 = vmul.f32 %v1157, %v2215
      %v2243 = vmul.f32 %v1156, %v2216
      %v2244 = vmul.f32 %v1155, %v2217
      %v2245 = vmul.f32 %v1154, %v2218
      %v2246 = vmul.f32 %v1153, %v2219
      %v2247 = vmul.f32 %v1152, %v2220
      %v2248 = vmul.f32 %v1151, %v2221
      %v2249 = vmul.f32 %v1150, %v2222
      %v2250 = vmul.f32 %v1149, %v2223
      %v2251 = vmul.f32 %v1148, %v2224
      %v2252 = vmul.f32 %v1147, %v2225
      %v2253 = vmul.f32 %v1146, %v2226
      %v2254 = vmul.f32 %v1145, %v2227
      %v2255 = vmul.f32 %v1144, %v2228
      %v2256 = vmul.f32 %v1143, %v2229
      %v2257 = vmul.f32 %v1142, %v2230
      %v2258 = vmul.f32 %v1141, %v2231
      %v2259 = vmul.f32 %v1140, %v2232
      %v2260 = vmul.f32 %v1139, %v2233
      %v2261 = vadd.f32 %v2179, %v2234
      %v2262 = vadd.f32 %v2180, %v2235
      %v2263 = vadd.f32 %v2181, %v2236
      %v2264 = vadd.f32 %v2182, %v2237
      %v2265 = vadd.f32 %v2183, %v2238
      %v2266 = vadd.f32 %v2184, %v2239
      %v2267 = vadd.f32 %v2185, %v2240
      %v2268 = vadd.f32 %v2186, %v2241
      %v2269 = vadd.f32 %v2187, %v2242
      %v2270 = vadd.f32 %v2188, %v2243
      %v2271 = vadd.f32 %v2189, %v2244
      %v2272 = vadd.f32 %v2190, %v2245
      %v2273 = vadd.f32 %v2191, %v2246
      %v2274 = vadd.f32 %v2192, %v2247
      %v2275 = vadd.f32 %v2193, %v2248
      %v2276 = vadd.f32 %v2194, %v2249
      %v2277 = vadd.f32 %v2195, %v2250
      %v2278 = vadd.f32 %v2196, %v2251
      %v2279 = vadd.f32 %v2197, %v2252
      %v2280 = vadd.f32 %v2198, %v2253
      %v2281 = vadd.f32 %v2199, %v2254
      %v2282 = vadd.f32 %v2200, %v2255
      %v2283 = vadd.f32 %v2201, %v2256
      %v2284 = vadd.f32 %v2202, %v2257
      %v2285 = vadd.f32 %v2203, %v2258
      %v2286 = vadd.f32 %v2204, %v2259
      %v2287 = vadd.f32 %v2205, %v2260
      %s2288 = scalar_lea.vmem %s2, 3432
      %v2289 = vld [vmem:[%s2288] sm:$0xff]
      %v2290 = vld [vmem:[%s2288 + $0x8] sm:$0xff]
      %v2291 = vld [vmem:[%s2288 + $0x10] sm:$0xff]
      %v2292 = vld [vmem:[%s2288 + $0x18] sm:$0xff]
      %v2293 = vld [vmem:[%s2288 + $0x20] sm:$0xff]
      %v2294 = vld [vmem:[%s2288 + $0x28] sm:$0xff]
      %v2295 = vld [vmem:[%s2288 + $0x30] sm:$0xff]
      %v2296 = vld [vmem:[%s2288 + $0x38] sm:$0xff]
      %v2297 = vld [vmem:[%s2288 + $0x40] sm:$0xff]
      %v2298 = vld [vmem:[%s2288 + $0x48] sm:$0xff]
      %v2299 = vld [vmem:[%s2288 + $0x50] sm:$0xff]
      %v2300 = vld [vmem:[%s2288 + $0x58] sm:$0xff]
      %v2301 = vld [vmem:[%s2288 + $0x60] sm:$0xff]
      %v2302 = vld [vmem:[%s2288 + $0x68] sm:$0xff]
      %v2303 = vld [vmem:[%s2288 + $0x70] sm:$0xff]
      %v2304 = vld [vmem:[%s2288 + $0x78] sm:$0xff]
      %v2305 = vld [vmem:[%s2288 + $0x80] sm:$0xff]
      %v2306 = vld [vmem:[%s2288 + $0x88] sm:$0xff]
      %v2307 = vld [vmem:[%s2288 + $0x90] sm:$0xff]
      %v2308 = vld [vmem:[%s2288 + $0x98] sm:$0xff]
      %v2309 = vld [vmem:[%s2288 + $0xa0] sm:$0xff]
      %v2310 = vld [vmem:[%s2288 + $0xa8] sm:$0xff]
      %v2311 = vld [vmem:[%s2288 + $0xb0] sm:$0xff]
      %v2312 = vld [vmem:[%s2288 + $0xb8] sm:$0xff]
      %v2313 = vld [vmem:[%s2288 + $0xc0] sm:$0xff]
      %v2314 = vld [vmem:[%s2288 + $0xc8] sm:$0xff]
      %v2315 = vld [vmem:[%s2288 + $0xd0] sm:$0xff]
      %v2316 = vmul.f32 %v703, %v2289
      %v2317 = vmul.f32 %v706, %v2290
      %v2318 = vmul.f32 %v711, %v2291
      %v2319 = vmul.f32 %v714, %v2292
      %v2320 = vmul.f32 %v719, %v2293
      %v2321 = vmul.f32 %v722, %v2294
      %v2322 = vmul.f32 %v727, %v2295
      %v2323 = vmul.f32 %v730, %v2296
      %v2324 = vmul.f32 %v735, %v2297
      %v2325 = vmul.f32 %v738, %v2298
      %v2326 = vmul.f32 %v743, %v2299
      %v2327 = vmul.f32 %v746, %v2300
      %v2328 = vmul.f32 %v751, %v2301
      %v2329 = vmul.f32 %v754, %v2302
      %v2330 = vmul.f32 %v759, %v2303
      %v2331 = vmul.f32 %v762, %v2304
      %v2332 = vmul.f32 %v767, %v2305
      %v2333 = vmul.f32 %v770, %v2306
      %v2334 = vmul.f32 %v775, %v2307
      %v2335 = vmul.f32 %v778, %v2308
      %v2336 = vmul.f32 %v783, %v2309
      %v2337 = vmul.f32 %v786, %v2310
      %v2338 = vmul.f32 %v791, %v2311
      %v2339 = vmul.f32 %v794, %v2312
      %v2340 = vmul.f32 %v799, %v2313
      %v2341 = vmul.f32 %v802, %v2314
      %v2342 = vmul.f32 %v807, %v2315
      %v2343 = vadd.f32 %v2261, %v2316
      %v2344 = vadd.f32 %v2262, %v2317
      %v2345 = vadd.f32 %v2263, %v2318
      %v2346 = vadd.f32 %v2264, %v2319
      %v2347 = vadd.f32 %v2265, %v2320
      %v2348 = vadd.f32 %v2266, %v2321
      %v2349 = vadd.f32 %v2267, %v2322
      %v2350 = vadd.f32 %v2268, %v2323
      %v2351 = vadd.f32 %v2269, %v2324
      %v2352 = vadd.f32 %v2270, %v2325
      %v2353 = vadd.f32 %v2271, %v2326
      %v2354 = vadd.f32 %v2272, %v2327
      %v2355 = vadd.f32 %v2273, %v2328
      %v2356 = vadd.f32 %v2274, %v2329
      %v2357 = vadd.f32 %v2275, %v2330
      %v2358 = vadd.f32 %v2276, %v2331
      %v2359 = vadd.f32 %v2277, %v2332
      %v2360 = vadd.f32 %v2278, %v2333
      %v2361 = vadd.f32 %v2279, %v2334
      %v2362 = vadd.f32 %v2280, %v2335
      %v2363 = vadd.f32 %v2281, %v2336
      %v2364 = vadd.f32 %v2282, %v2337
      %v2365 = vadd.f32 %v2283, %v2338
      %v2366 = vadd.f32 %v2284, %v2339
      %v2367 = vadd.f32 %v2285, %v2340
      %v2368 = vadd.f32 %v2286, %v2341
      %v2369 = vadd.f32 %v2287, %v2342
      %s2370 = scalar_lea.vmem %s2, 3696
      %v2371 = vld [vmem:[%s2370] sm:$0xff]
      %v2372 = vld [vmem:[%s2370 + $0x8] sm:$0xff]
      %v2373 = vld [vmem:[%s2370 + $0x10] sm:$0xff]
      %v2374 = vld [vmem:[%s2370 + $0x18] sm:$0xff]
      %v2375 = vld [vmem:[%s2370 + $0x20] sm:$0xff]
      %v2376 = vld [vmem:[%s2370 + $0x28] sm:$0xff]
      %v2377 = vld [vmem:[%s2370 + $0x30] sm:$0xff]
      %v2378 = vld [vmem:[%s2370 + $0x38] sm:$0xff]
      %v2379 = vld [vmem:[%s2370 + $0x40] sm:$0xff]
      %v2380 = vld [vmem:[%s2370 + $0x48] sm:$0xff]
      %v2381 = vld [vmem:[%s2370 + $0x50] sm:$0xff]
      %v2382 = vld [vmem:[%s2370 + $0x58] sm:$0xff]
      %v2383 = vld [vmem:[%s2370 + $0x60] sm:$0xff]
      %v2384 = vld [vmem:[%s2370 + $0x68] sm:$0xff]
      %v2385 = vld [vmem:[%s2370 + $0x70] sm:$0xff]
      %v2386 = vld [vmem:[%s2370 + $0x78] sm:$0xff]
      %v2387 = vld [vmem:[%s2370 + $0x80] sm:$0xff]
      %v2388 = vld [vmem:[%s2370 + $0x88] sm:$0xff]
      %v2389 = vld [vmem:[%s2370 + $0x90] sm:$0xff]
      %v2390 = vld [vmem:[%s2370 + $0x98] sm:$0xff]
      %v2391 = vld [vmem:[%s2370 + $0xa0] sm:$0xff]
      %v2392 = vld [vmem:[%s2370 + $0xa8] sm:$0xff]
      %v2393 = vld [vmem:[%s2370 + $0xb0] sm:$0xff]
      %v2394 = vld [vmem:[%s2370 + $0xb8] sm:$0xff]
      %v2395 = vld [vmem:[%s2370 + $0xc0] sm:$0xff]
      %v2396 = vld [vmem:[%s2370 + $0xc8] sm:$0xff]
      %v2397 = vld [vmem:[%s2370 + $0xd0] sm:$0xff]
      %v2398 = vmul.f32 %v1657, %v2371
      %v2399 = vmul.f32 %v1656, %v2372
      %v2400 = vmul.f32 %v1655, %v2373
      %v2401 = vmul.f32 %v1654, %v2374
      %v2402 = vmul.f32 %v1653, %v2375
      %v2403 = vmul.f32 %v1652, %v2376
      %v2404 = vmul.f32 %v1651, %v2377
      %v2405 = vmul.f32 %v1650, %v2378
      %v2406 = vmul.f32 %v1649, %v2379
      %v2407 = vmul.f32 %v1648, %v2380
      %v2408 = vmul.f32 %v1647, %v2381
      %v2409 = vmul.f32 %v1646, %v2382
      %v2410 = vmul.f32 %v1645, %v2383
      %v2411 = vmul.f32 %v1644, %v2384
      %v2412 = vmul.f32 %v1643, %v2385
      %v2413 = vmul.f32 %v1642, %v2386
      %v2414 = vmul.f32 %v1641, %v2387
      %v2415 = vmul.f32 %v1640, %v2388
      %v2416 = vmul.f32 %v1639, %v2389
      %v2417 = vmul.f32 %v1638, %v2390
      %v2418 = vmul.f32 %v1637, %v2391
      %v2419 = vmul.f32 %v1636, %v2392
      %v2420 = vmul.f32 %v1635, %v2393
      %v2421 = vmul.f32 %v1634, %v2394
      %v2422 = vmul.f32 %v1633, %v2395
      %v2423 = vmul.f32 %v1632, %v2396
      %v2424 = vmul.f32 %v1658, %v2397
      %v2425 = vadd.f32 %v2343, %v2398
      %v2426 = vadd.f32 %v2344, %v2399
      %v2427 = vadd.f32 %v2345, %v2400
      %v2428 = vadd.f32 %v2346, %v2401
      %v2429 = vadd.f32 %v2347, %v2402
      %v2430 = vadd.f32 %v2348, %v2403
      %v2431 = vadd.f32 %v2349, %v2404
      %v2432 = vadd.f32 %v2350, %v2405
      %v2433 = vadd.f32 %v2351, %v2406
      %v2434 = vadd.f32 %v2352, %v2407
      %v2435 = vadd.f32 %v2353, %v2408
      %v2436 = vadd.f32 %v2354, %v2409
      %v2437 = vadd.f32 %v2355, %v2410
      %v2438 = vadd.f32 %v2356, %v2411
      %v2439 = vadd.f32 %v2357, %v2412
      %v2440 = vadd.f32 %v2358, %v2413
      %v2441 = vadd.f32 %v2359, %v2414
      %v2442 = vadd.f32 %v2360, %v2415
      %v2443 = vadd.f32 %v2361, %v2416
      %v2444 = vadd.f32 %v2362, %v2417
      %v2445 = vadd.f32 %v2363, %v2418
      %v2446 = vadd.f32 %v2364, %v2419
      %v2447 = vadd.f32 %v2365, %v2420
      %v2448 = vadd.f32 %v2366, %v2421
      %v2449 = vadd.f32 %v2367, %v2422
      %v2450 = vadd.f32 %v2368, %v2423
      %v2451 = vadd.f32 %v2369, %v2424
      %s2452 = scalar_lea.vmem %s2, 3960
      %v2453 = vld [vmem:[%s2452] sm:$0xff]
      %v2454 = vld [vmem:[%s2452 + $0x8] sm:$0xff]
      %v2455 = vld [vmem:[%s2452 + $0x10] sm:$0xff]
      %v2456 = vld [vmem:[%s2452 + $0x18] sm:$0xff]
      %v2457 = vld [vmem:[%s2452 + $0x20] sm:$0xff]
      %v2458 = vld [vmem:[%s2452 + $0x28] sm:$0xff]
      %v2459 = vld [vmem:[%s2452 + $0x30] sm:$0xff]
      %v2460 = vld [vmem:[%s2452 + $0x38] sm:$0xff]
      %v2461 = vld [vmem:[%s2452 + $0x40] sm:$0xff]
      %v2462 = vld [vmem:[%s2452 + $0x48] sm:$0xff]
      %v2463 = vld [vmem:[%s2452 + $0x50] sm:$0xff]
      %v2464 = vld [vmem:[%s2452 + $0x58] sm:$0xff]
      %v2465 = vld [vmem:[%s2452 + $0x60] sm:$0xff]
      %v2466 = vld [vmem:[%s2452 + $0x68] sm:$0xff]
      %v2467 = vld [vmem:[%s2452 + $0x70] sm:$0xff]
      %v2468 = vld [vmem:[%s2452 + $0x78] sm:$0xff]
      %v2469 = vld [vmem:[%s2452 + $0x80] sm:$0xff]
      %v2470 = vld [vmem:[%s2452 + $0x88] sm:$0xff]
      %v2471 = vld [vmem:[%s2452 + $0x90] sm:$0xff]
      %v2472 = vld [vmem:[%s2452 + $0x98] sm:$0xff]
      %v2473 = vld [vmem:[%s2452 + $0xa0] sm:$0xff]
      %v2474 = vld [vmem:[%s2452 + $0xa8] sm:$0xff]
      %v2475 = vld [vmem:[%s2452 + $0xb0] sm:$0xff]
      %v2476 = vld [vmem:[%s2452 + $0xb8] sm:$0xff]
      %v2477 = vld [vmem:[%s2452 + $0xc0] sm:$0xff]
      %v2478 = vld [vmem:[%s2452 + $0xc8] sm:$0xff]
      %v2479 = vld [vmem:[%s2452 + $0xd0] sm:$0xff]
      %v2480 = vmul.f32 %v891, %v2453
      %v2481 = vmul.f32 %v890, %v2454
      %v2482 = vmul.f32 %v889, %v2455
      %v2483 = vmul.f32 %v888, %v2456
      %v2484 = vmul.f32 %v887, %v2457
      %v2485 = vmul.f32 %v886, %v2458
      %v2486 = vmul.f32 %v885, %v2459
      %v2487 = vmul.f32 %v884, %v2460
      %v2488 = vmul.f32 %v883, %v2461
      %v2489 = vmul.f32 %v882, %v2462
      %v2490 = vmul.f32 %v881, %v2463
      %v2491 = vmul.f32 %v880, %v2464
      %v2492 = vmul.f32 %v879, %v2465
      %v2493 = vmul.f32 %v878, %v2466
      %v2494 = vmul.f32 %v877, %v2467
      %v2495 = vmul.f32 %v876, %v2468
      %v2496 = vmul.f32 %v875, %v2469
      %v2497 = vmul.f32 %v874, %v2470
      %v2498 = vmul.f32 %v873, %v2471
      %v2499 = vmul.f32 %v872, %v2472
      %v2500 = vmul.f32 %v871, %v2473
      %v2501 = vmul.f32 %v870, %v2474
      %v2502 = vmul.f32 %v869, %v2475
      %v2503 = vmul.f32 %v868, %v2476
      %v2504 = vmul.f32 %v867, %v2477
      %v2505 = vmul.f32 %v866, %v2478
      %v2506 = vmul.f32 %v892, %v2479
      %v2507 = vadd.f32 %v2425, %v2480
      %v2508 = vadd.f32 %v2426, %v2481
      %v2509 = vadd.f32 %v2427, %v2482
      %v2510 = vadd.f32 %v2428, %v2483
      %v2511 = vadd.f32 %v2429, %v2484
      %v2512 = vadd.f32 %v2430, %v2485
      %v2513 = vadd.f32 %v2431, %v2486
      %v2514 = vadd.f32 %v2432, %v2487
      %v2515 = vadd.f32 %v2433, %v2488
      %v2516 = vadd.f32 %v2434, %v2489
      %v2517 = vadd.f32 %v2435, %v2490
      %v2518 = vadd.f32 %v2436, %v2491
      %v2519 = vadd.f32 %v2437, %v2492
      %v2520 = vadd.f32 %v2438, %v2493
      %v2521 = vadd.f32 %v2439, %v2494
      %v2522 = vadd.f32 %v2440, %v2495
      %v2523 = vadd.f32 %v2441, %v2496
      %v2524 = vadd.f32 %v2442, %v2497
      %v2525 = vadd.f32 %v2443, %v2498
      %v2526 = vadd.f32 %v2444, %v2499
      %v2527 = vadd.f32 %v2445, %v2500
      %v2528 = vadd.f32 %v2446, %v2501
      %v2529 = vadd.f32 %v2447, %v2502
      %v2530 = vadd.f32 %v2448, %v2503
      %v2531 = vadd.f32 %v2449, %v2504
      %v2532 = vadd.f32 %v2450, %v2505
      %v2533 = vadd.f32 %v2451, %v2506
      %s2534 = scalar_lea.vmem %s2, 4224
      %v2535 = vld [vmem:[%s2534] sm:$0xff]
      %v2536 = vld [vmem:[%s2534 + $0x8] sm:$0xff]
      %v2537 = vld [vmem:[%s2534 + $0x10] sm:$0xff]
      %v2538 = vld [vmem:[%s2534 + $0x18] sm:$0xff]
      %v2539 = vld [vmem:[%s2534 + $0x20] sm:$0xff]
      %v2540 = vld [vmem:[%s2534 + $0x28] sm:$0xff]
      %v2541 = vld [vmem:[%s2534 + $0x30] sm:$0xff]
      %v2542 = vld [vmem:[%s2534 + $0x38] sm:$0xff]
      %v2543 = vld [vmem:[%s2534 + $0x40] sm:$0xff]
      %v2544 = vld [vmem:[%s2534 + $0x48] sm:$0xff]
      %v2545 = vld [vmem:[%s2534 + $0x50] sm:$0xff]
      %v2546 = vld [vmem:[%s2534 + $0x58] sm:$0xff]
      %v2547 = vld [vmem:[%s2534 + $0x60] sm:$0xff]
      %v2548 = vld [vmem:[%s2534 + $0x68] sm:$0xff]
      %v2549 = vld [vmem:[%s2534 + $0x70] sm:$0xff]
      %v2550 = vld [vmem:[%s2534 + $0x78] sm:$0xff]
      %v2551 = vld [vmem:[%s2534 + $0x80] sm:$0xff]
      %v2552 = vld [vmem:[%s2534 + $0x88] sm:$0xff]
      %v2553 = vld [vmem:[%s2534 + $0x90] sm:$0xff]
      %v2554 = vld [vmem:[%s2534 + $0x98] sm:$0xff]
      %v2555 = vld [vmem:[%s2534 + $0xa0] sm:$0xff]
      %v2556 = vld [vmem:[%s2534 + $0xa8] sm:$0xff]
      %v2557 = vld [vmem:[%s2534 + $0xb0] sm:$0xff]
      %v2558 = vld [vmem:[%s2534 + $0xb8] sm:$0xff]
      %v2559 = vld [vmem:[%s2534 + $0xc0] sm:$0xff]
      %v2560 = vld [vmem:[%s2534 + $0xc8] sm:$0xff]
      %v2561 = vld [vmem:[%s2534 + $0xd0] sm:$0xff]
      %v2562 = vmul.f32 %v1027, %v2535
      %v2563 = vmul.f32 %v1026, %v2536
      %v2564 = vmul.f32 %v1025, %v2537
      %v2565 = vmul.f32 %v1024, %v2538
      %v2566 = vmul.f32 %v1023, %v2539
      %v2567 = vmul.f32 %v1022, %v2540
      %v2568 = vmul.f32 %v1021, %v2541
      %v2569 = vmul.f32 %v1020, %v2542
      %v2570 = vmul.f32 %v1019, %v2543
      %v2571 = vmul.f32 %v1018, %v2544
      %v2572 = vmul.f32 %v1017, %v2545
      %v2573 = vmul.f32 %v1016, %v2546
      %v2574 = vmul.f32 %v1015, %v2547
      %v2575 = vmul.f32 %v1014, %v2548
      %v2576 = vmul.f32 %v1013, %v2549
      %v2577 = vmul.f32 %v1012, %v2550
      %v2578 = vmul.f32 %v1011, %v2551
      %v2579 = vmul.f32 %v1010, %v2552
      %v2580 = vmul.f32 %v1009, %v2553
      %v2581 = vmul.f32 %v1008, %v2554
      %v2582 = vmul.f32 %v1007, %v2555
      %v2583 = vmul.f32 %v1006, %v2556
      %v2584 = vmul.f32 %v1005, %v2557
      %v2585 = vmul.f32 %v1004, %v2558
      %v2586 = vmul.f32 %v1003, %v2559
      %v2587 = vmul.f32 %v1002, %v2560
      %v2588 = vmul.f32 %v1028, %v2561
      %v2589 = vadd.f32 %v2507, %v2562
      %v2590 = vadd.f32 %v2508, %v2563
      %v2591 = vadd.f32 %v2509, %v2564
      %v2592 = vadd.f32 %v2510, %v2565
      %v2593 = vadd.f32 %v2511, %v2566
      %v2594 = vadd.f32 %v2512, %v2567
      %v2595 = vadd.f32 %v2513, %v2568
      %v2596 = vadd.f32 %v2514, %v2569
      %v2597 = vadd.f32 %v2515, %v2570
      %v2598 = vadd.f32 %v2516, %v2571
      %v2599 = vadd.f32 %v2517, %v2572
      %v2600 = vadd.f32 %v2518, %v2573
      %v2601 = vadd.f32 %v2519, %v2574
      %v2602 = vadd.f32 %v2520, %v2575
      %v2603 = vadd.f32 %v2521, %v2576
      %v2604 = vadd.f32 %v2522, %v2577
      %v2605 = vadd.f32 %v2523, %v2578
      %v2606 = vadd.f32 %v2524, %v2579
      %v2607 = vadd.f32 %v2525, %v2580
      %v2608 = vadd.f32 %v2526, %v2581
      %v2609 = vadd.f32 %v2527, %v2582
      %v2610 = vadd.f32 %v2528, %v2583
      %v2611 = vadd.f32 %v2529, %v2584
      %v2612 = vadd.f32 %v2530, %v2585
      %v2613 = vadd.f32 %v2531, %v2586
      %v2614 = vadd.f32 %v2532, %v2587
      %v2615 = vadd.f32 %v2533, %v2588
      %s2616 = scalar_lea.vmem %s2, 4488
      %v2617 = vld [vmem:[%s2616] sm:$0xff]
      %v2618 = vld [vmem:[%s2616 + $0x8] sm:$0xff]
      %v2619 = vld [vmem:[%s2616 + $0x10] sm:$0xff]
      %v2620 = vld [vmem:[%s2616 + $0x18] sm:$0xff]
      %v2621 = vld [vmem:[%s2616 + $0x20] sm:$0xff]
      %v2622 = vld [vmem:[%s2616 + $0x28] sm:$0xff]
      %v2623 = vld [vmem:[%s2616 + $0x30] sm:$0xff]
      %v2624 = vld [vmem:[%s2616 + $0x38] sm:$0xff]
      %v2625 = vld [vmem:[%s2616 + $0x40] sm:$0xff]
      %v2626 = vld [vmem:[%s2616 + $0x48] sm:$0xff]
      %v2627 = vld [vmem:[%s2616 + $0x50] sm:$0xff]
      %v2628 = vld [vmem:[%s2616 + $0x58] sm:$0xff]
      %v2629 = vld [vmem:[%s2616 + $0x60] sm:$0xff]
      %v2630 = vld [vmem:[%s2616 + $0x68] sm:$0xff]
      %v2631 = vld [vmem:[%s2616 + $0x70] sm:$0xff]
      %v2632 = vld [vmem:[%s2616 + $0x78] sm:$0xff]
      %v2633 = vld [vmem:[%s2616 + $0x80] sm:$0xff]
      %v2634 = vld [vmem:[%s2616 + $0x88] sm:$0xff]
      %v2635 = vld [vmem:[%s2616 + $0x90] sm:$0xff]
      %v2636 = vld [vmem:[%s2616 + $0x98] sm:$0xff]
      %v2637 = vld [vmem:[%s2616 + $0xa0] sm:$0xff]
      %v2638 = vld [vmem:[%s2616 + $0xa8] sm:$0xff]
      %v2639 = vld [vmem:[%s2616 + $0xb0] sm:$0xff]
      %v2640 = vld [vmem:[%s2616 + $0xb8] sm:$0xff]
      %v2641 = vld [vmem:[%s2616 + $0xc0] sm:$0xff]
      %v2642 = vld [vmem:[%s2616 + $0xc8] sm:$0xff]
      %v2643 = vld [vmem:[%s2616 + $0xd0] sm:$0xff]
      %v2644 = vmul.f32 %v1164, %v2617
      %v2645 = vmul.f32 %v1163, %v2618
      %v2646 = vmul.f32 %v1162, %v2619
      %v2647 = vmul.f32 %v1161, %v2620
      %v2648 = vmul.f32 %v1160, %v2621
      %v2649 = vmul.f32 %v1159, %v2622
      %v2650 = vmul.f32 %v1158, %v2623
      %v2651 = vmul.f32 %v1157, %v2624
      %v2652 = vmul.f32 %v1156, %v2625
      %v2653 = vmul.f32 %v1155, %v2626
      %v2654 = vmul.f32 %v1154, %v2627
      %v2655 = vmul.f32 %v1153, %v2628
      %v2656 = vmul.f32 %v1152, %v2629
      %v2657 = vmul.f32 %v1151, %v2630
      %v2658 = vmul.f32 %v1150, %v2631
      %v2659 = vmul.f32 %v1149, %v2632
      %v2660 = vmul.f32 %v1148, %v2633
      %v2661 = vmul.f32 %v1147, %v2634
      %v2662 = vmul.f32 %v1146, %v2635
      %v2663 = vmul.f32 %v1145, %v2636
      %v2664 = vmul.f32 %v1144, %v2637
      %v2665 = vmul.f32 %v1143, %v2638
      %v2666 = vmul.f32 %v1142, %v2639
      %v2667 = vmul.f32 %v1141, %v2640
      %v2668 = vmul.f32 %v1140, %v2641
      %v2669 = vmul.f32 %v1139, %v2642
      %v2670 = vmul.f32 %v1165, %v2643
      %v2671 = vadd.f32 %v2589, %v2644
      %v2672 = vadd.f32 %v2590, %v2645
      %v2673 = vadd.f32 %v2591, %v2646
      %v2674 = vadd.f32 %v2592, %v2647
      %v2675 = vadd.f32 %v2593, %v2648
      %v2676 = vadd.f32 %v2594, %v2649
      %v2677 = vadd.f32 %v2595, %v2650
      %v2678 = vadd.f32 %v2596, %v2651
      %v2679 = vadd.f32 %v2597, %v2652
      %v2680 = vadd.f32 %v2598, %v2653
      %v2681 = vadd.f32 %v2599, %v2654
      %v2682 = vadd.f32 %v2600, %v2655
      %v2683 = vadd.f32 %v2601, %v2656
      %v2684 = vadd.f32 %v2602, %v2657
      %v2685 = vadd.f32 %v2603, %v2658
      %v2686 = vadd.f32 %v2604, %v2659
      %v2687 = vadd.f32 %v2605, %v2660
      %v2688 = vadd.f32 %v2606, %v2661
      %v2689 = vadd.f32 %v2607, %v2662
      %v2690 = vadd.f32 %v2608, %v2663
      %v2691 = vadd.f32 %v2609, %v2664
      %v2692 = vadd.f32 %v2610, %v2665
      %v2693 = vadd.f32 %v2611, %v2666
      %v2694 = vadd.f32 %v2612, %v2667
      %v2695 = vadd.f32 %v2613, %v2668
      %v2696 = vadd.f32 %v2614, %v2669
      %v2697 = vadd.f32 %v2615, %v2670
      %s2698 = scalar_lea.vmem %s2, 4752
      %v2699 = vld [vmem:[%s2698] sm:$0xff]
      %v2700 = vld [vmem:[%s2698 + $0x8] sm:$0xff]
      %v2701 = vld [vmem:[%s2698 + $0x10] sm:$0xff]
      %v2702 = vld [vmem:[%s2698 + $0x18] sm:$0xff]
      %v2703 = vld [vmem:[%s2698 + $0x20] sm:$0xff]
      %v2704 = vld [vmem:[%s2698 + $0x28] sm:$0xff]
      %v2705 = vld [vmem:[%s2698 + $0x30] sm:$0xff]
      %v2706 = vld [vmem:[%s2698 + $0x38] sm:$0xff]
      %v2707 = vld [vmem:[%s2698 + $0x40] sm:$0xff]
      %v2708 = vld [vmem:[%s2698 + $0x48] sm:$0xff]
      %v2709 = vld [vmem:[%s2698 + $0x50] sm:$0xff]
      %v2710 = vld [vmem:[%s2698 + $0x58] sm:$0xff]
      %v2711 = vld [vmem:[%s2698 + $0x60] sm:$0xff]
      %v2712 = vld [vmem:[%s2698 + $0x68] sm:$0xff]
      %v2713 = vld [vmem:[%s2698 + $0x70] sm:$0xff]
      %v2714 = vld [vmem:[%s2698 + $0x78] sm:$0xff]
      %v2715 = vld [vmem:[%s2698 + $0x80] sm:$0xff]
      %v2716 = vld [vmem:[%s2698 + $0x88] sm:$0xff]
      %v2717 = vld [vmem:[%s2698 + $0x90] sm:$0xff]
      %v2718 = vld [vmem:[%s2698 + $0x98] sm:$0xff]
      %v2719 = vld [vmem:[%s2698 + $0xa0] sm:$0xff]
      %v2720 = vld [vmem:[%s2698 + $0xa8] sm:$0xff]
      %v2721 = vld [vmem:[%s2698 + $0xb0] sm:$0xff]
      %v2722 = vld [vmem:[%s2698 + $0xb8] sm:$0xff]
      %v2723 = vld [vmem:[%s2698 + $0xc0] sm:$0xff]
      %v2724 = vld [vmem:[%s2698 + $0xc8] sm:$0xff]
      %v2725 = vld [vmem:[%s2698 + $0xd0] sm:$0xff]
      %v2726 = vmul.f32 %v888, %v2699
      %v2727 = vmul.f32 %v887, %v2700
      %v2728 = vmul.f32 %v886, %v2701
      %v2729 = vmul.f32 %v885, %v2702
      %v2730 = vmul.f32 %v884, %v2703
      %v2731 = vmul.f32 %v883, %v2704
      %v2732 = vmul.f32 %v882, %v2705
      %v2733 = vmul.f32 %v881, %v2706
      %v2734 = vmul.f32 %v880, %v2707
      %v2735 = vmul.f32 %v879, %v2708
      %v2736 = vmul.f32 %v878, %v2709
      %v2737 = vmul.f32 %v877, %v2710
      %v2738 = vmul.f32 %v876, %v2711
      %v2739 = vmul.f32 %v875, %v2712
      %v2740 = vmul.f32 %v874, %v2713
      %v2741 = vmul.f32 %v873, %v2714
      %v2742 = vmul.f32 %v872, %v2715
      %v2743 = vmul.f32 %v871, %v2716
      %v2744 = vmul.f32 %v870, %v2717
      %v2745 = vmul.f32 %v869, %v2718
      %v2746 = vmul.f32 %v868, %v2719
      %v2747 = vmul.f32 %v867, %v2720
      %v2748 = vmul.f32 %v866, %v2721
      %v2749 = vmul.f32 %v892, %v2722
      %v2750 = vmul.f32 %v891, %v2723
      %v2751 = vmul.f32 %v890, %v2724
      %v2752 = vmul.f32 %v889, %v2725
      %v2753 = vadd.f32 %v2671, %v2726
      %v2754 = vadd.f32 %v2672, %v2727
      %v2755 = vadd.f32 %v2673, %v2728
      %v2756 = vadd.f32 %v2674, %v2729
      %v2757 = vadd.f32 %v2675, %v2730
      %v2758 = vadd.f32 %v2676, %v2731
      %v2759 = vadd.f32 %v2677, %v2732
      %v2760 = vadd.f32 %v2678, %v2733
      %v2761 = vadd.f32 %v2679, %v2734
      %v2762 = vadd.f32 %v2680, %v2735
      %v2763 = vadd.f32 %v2681, %v2736
      %v2764 = vadd.f32 %v2682, %v2737
      %v2765 = vadd.f32 %v2683, %v2738
      %v2766 = vadd.f32 %v2684, %v2739
      %v2767 = vadd.f32 %v2685, %v2740
      %v2768 = vadd.f32 %v2686, %v2741
      %v2769 = vadd.f32 %v2687, %v2742
      %v2770 = vadd.f32 %v2688, %v2743
      %v2771 = vadd.f32 %v2689, %v2744
      %v2772 = vadd.f32 %v2690, %v2745
      %v2773 = vadd.f32 %v2691, %v2746
      %v2774 = vadd.f32 %v2692, %v2747
      %v2775 = vadd.f32 %v2693, %v2748
      %v2776 = vadd.f32 %v2694, %v2749
      %v2777 = vadd.f32 %v2695, %v2750
      %v2778 = vadd.f32 %v2696, %v2751
      %v2779 = vadd.f32 %v2697, %v2752
      %s2780 = scalar_lea.vmem %s2, 5016
      %v2781 = vld [vmem:[%s2780] sm:$0xff]
      %v2782 = vld [vmem:[%s2780 + $0x8] sm:$0xff]
      %v2783 = vld [vmem:[%s2780 + $0x10] sm:$0xff]
      %v2784 = vld [vmem:[%s2780 + $0x18] sm:$0xff]
      %v2785 = vld [vmem:[%s2780 + $0x20] sm:$0xff]
      %v2786 = vld [vmem:[%s2780 + $0x28] sm:$0xff]
      %v2787 = vld [vmem:[%s2780 + $0x30] sm:$0xff]
      %v2788 = vld [vmem:[%s2780 + $0x38] sm:$0xff]
      %v2789 = vld [vmem:[%s2780 + $0x40] sm:$0xff]
      %v2790 = vld [vmem:[%s2780 + $0x48] sm:$0xff]
      %v2791 = vld [vmem:[%s2780 + $0x50] sm:$0xff]
      %v2792 = vld [vmem:[%s2780 + $0x58] sm:$0xff]
      %v2793 = vld [vmem:[%s2780 + $0x60] sm:$0xff]
      %v2794 = vld [vmem:[%s2780 + $0x68] sm:$0xff]
      %v2795 = vld [vmem:[%s2780 + $0x70] sm:$0xff]
      %v2796 = vld [vmem:[%s2780 + $0x78] sm:$0xff]
      %v2797 = vld [vmem:[%s2780 + $0x80] sm:$0xff]
      %v2798 = vld [vmem:[%s2780 + $0x88] sm:$0xff]
      %v2799 = vld [vmem:[%s2780 + $0x90] sm:$0xff]
      %v2800 = vld [vmem:[%s2780 + $0x98] sm:$0xff]
      %v2801 = vld [vmem:[%s2780 + $0xa0] sm:$0xff]
      %v2802 = vld [vmem:[%s2780 + $0xa8] sm:$0xff]
      %v2803 = vld [vmem:[%s2780 + $0xb0] sm:$0xff]
      %v2804 = vld [vmem:[%s2780 + $0xb8] sm:$0xff]
      %v2805 = vld [vmem:[%s2780 + $0xc0] sm:$0xff]
      %v2806 = vld [vmem:[%s2780 + $0xc8] sm:$0xff]
      %v2807 = vld [vmem:[%s2780 + $0xd0] sm:$0xff]
      %v2808 = vmul.f32 %v1024, %v2781
      %v2809 = vmul.f32 %v1023, %v2782
      %v2810 = vmul.f32 %v1022, %v2783
      %v2811 = vmul.f32 %v1021, %v2784
      %v2812 = vmul.f32 %v1020, %v2785
      %v2813 = vmul.f32 %v1019, %v2786
      %v2814 = vmul.f32 %v1018, %v2787
      %v2815 = vmul.f32 %v1017, %v2788
      %v2816 = vmul.f32 %v1016, %v2789
      %v2817 = vmul.f32 %v1015, %v2790
      %v2818 = vmul.f32 %v1014, %v2791
      %v2819 = vmul.f32 %v1013, %v2792
      %v2820 = vmul.f32 %v1012, %v2793
      %v2821 = vmul.f32 %v1011, %v2794
      %v2822 = vmul.f32 %v1010, %v2795
      %v2823 = vmul.f32 %v1009, %v2796
      %v2824 = vmul.f32 %v1008, %v2797
      %v2825 = vmul.f32 %v1007, %v2798
      %v2826 = vmul.f32 %v1006, %v2799
      %v2827 = vmul.f32 %v1005, %v2800
      %v2828 = vmul.f32 %v1004, %v2801
      %v2829 = vmul.f32 %v1003, %v2802
      %v2830 = vmul.f32 %v1002, %v2803
      %v2831 = vmul.f32 %v1028, %v2804
      %v2832 = vmul.f32 %v1027, %v2805
      %v2833 = vmul.f32 %v1026, %v2806
      %v2834 = vmul.f32 %v1025, %v2807
      %v2835 = vadd.f32 %v2753, %v2808
      %v2836 = vadd.f32 %v2754, %v2809
      %v2837 = vadd.f32 %v2755, %v2810
      %v2838 = vadd.f32 %v2756, %v2811
      %v2839 = vadd.f32 %v2757, %v2812
      %v2840 = vadd.f32 %v2758, %v2813
      %v2841 = vadd.f32 %v2759, %v2814
      %v2842 = vadd.f32 %v2760, %v2815
      %v2843 = vadd.f32 %v2761, %v2816
      %v2844 = vadd.f32 %v2762, %v2817
      %v2845 = vadd.f32 %v2763, %v2818
      %v2846 = vadd.f32 %v2764, %v2819
      %v2847 = vadd.f32 %v2765, %v2820
      %v2848 = vadd.f32 %v2766, %v2821
      %v2849 = vadd.f32 %v2767, %v2822
      %v2850 = vadd.f32 %v2768, %v2823
      %v2851 = vadd.f32 %v2769, %v2824
      %v2852 = vadd.f32 %v2770, %v2825
      %v2853 = vadd.f32 %v2771, %v2826
      %v2854 = vadd.f32 %v2772, %v2827
      %v2855 = vadd.f32 %v2773, %v2828
      %v2856 = vadd.f32 %v2774, %v2829
      %v2857 = vadd.f32 %v2775, %v2830
      %v2858 = vadd.f32 %v2776, %v2831
      %v2859 = vadd.f32 %v2777, %v2832
      %v2860 = vadd.f32 %v2778, %v2833
      %v2861 = vadd.f32 %v2779, %v2834
      %s2862 = scalar_lea.vmem %s2, 5280
      %v2863 = vld [vmem:[%s2862] sm:$0xff]
      %v2864 = vld [vmem:[%s2862 + $0x8] sm:$0xff]
      %v2865 = vld [vmem:[%s2862 + $0x10] sm:$0xff]
      %v2866 = vld [vmem:[%s2862 + $0x18] sm:$0xff]
      %v2867 = vld [vmem:[%s2862 + $0x20] sm:$0xff]
      %v2868 = vld [vmem:[%s2862 + $0x28] sm:$0xff]
      %v2869 = vld [vmem:[%s2862 + $0x30] sm:$0xff]
      %v2870 = vld [vmem:[%s2862 + $0x38] sm:$0xff]
      %v2871 = vld [vmem:[%s2862 + $0x40] sm:$0xff]
      %v2872 = vld [vmem:[%s2862 + $0x48] sm:$0xff]
      %v2873 = vld [vmem:[%s2862 + $0x50] sm:$0xff]
      %v2874 = vld [vmem:[%s2862 + $0x58] sm:$0xff]
      %v2875 = vld [vmem:[%s2862 + $0x60] sm:$0xff]
      %v2876 = vld [vmem:[%s2862 + $0x68] sm:$0xff]
      %v2877 = vld [vmem:[%s2862 + $0x70] sm:$0xff]
      %v2878 = vld [vmem:[%s2862 + $0x78] sm:$0xff]
      %v2879 = vld [vmem:[%s2862 + $0x80] sm:$0xff]
      %v2880 = vld [vmem:[%s2862 + $0x88] sm:$0xff]
      %v2881 = vld [vmem:[%s2862 + $0x90] sm:$0xff]
      %v2882 = vld [vmem:[%s2862 + $0x98] sm:$0xff]
      %v2883 = vld [vmem:[%s2862 + $0xa0] sm:$0xff]
      %v2884 = vld [vmem:[%s2862 + $0xa8] sm:$0xff]
      %v2885 = vld [vmem:[%s2862 + $0xb0] sm:$0xff]
      %v2886 = vld [vmem:[%s2862 + $0xb8] sm:$0xff]
      %v2887 = vld [vmem:[%s2862 + $0xc0] sm:$0xff]
      %v2888 = vld [vmem:[%s2862 + $0xc8] sm:$0xff]
      %v2889 = vld [vmem:[%s2862 + $0xd0] sm:$0xff]
      %v2890 = vmul.f32 %v1161, %v2863
      %v2891 = vmul.f32 %v1160, %v2864
      %v2892 = vmul.f32 %v1159, %v2865
      %v2893 = vmul.f32 %v1158, %v2866
      %v2894 = vmul.f32 %v1157, %v2867
      %v2895 = vmul.f32 %v1156, %v2868
      %v2896 = vmul.f32 %v1155, %v2869
      %v2897 = vmul.f32 %v1154, %v2870
      %v2898 = vmul.f32 %v1153, %v2871
      %v2899 = vmul.f32 %v1152, %v2872
      %v2900 = vmul.f32 %v1151, %v2873
      %v2901 = vmul.f32 %v1150, %v2874
      %v2902 = vmul.f32 %v1149, %v2875
      %v2903 = vmul.f32 %v1148, %v2876
      %v2904 = vmul.f32 %v1147, %v2877
      %v2905 = vmul.f32 %v1146, %v2878
      %v2906 = vmul.f32 %v1145, %v2879
      %v2907 = vmul.f32 %v1144, %v2880
      %v2908 = vmul.f32 %v1143, %v2881
      %v2909 = vmul.f32 %v1142, %v2882
      %v2910 = vmul.f32 %v1141, %v2883
      %v2911 = vmul.f32 %v1140, %v2884
      %v2912 = vmul.f32 %v1139, %v2885
      %v2913 = vmul.f32 %v1165, %v2886
      %v2914 = vmul.f32 %v1164, %v2887
      %v2915 = vmul.f32 %v1163, %v2888
      %v2916 = vmul.f32 %v1162, %v2889
      %v2917 = vadd.f32 %v2835, %v2890
      %v2918 = vadd.f32 %v2836, %v2891
      %v2919 = vadd.f32 %v2837, %v2892
      %v2920 = vadd.f32 %v2838, %v2893
      %v2921 = vadd.f32 %v2839, %v2894
      %v2922 = vadd.f32 %v2840, %v2895
      %v2923 = vadd.f32 %v2841, %v2896
      %v2924 = vadd.f32 %v2842, %v2897
      %v2925 = vadd.f32 %v2843, %v2898
      %v2926 = vadd.f32 %v2844, %v2899
      %v2927 = vadd.f32 %v2845, %v2900
      %v2928 = vadd.f32 %v2846, %v2901
      %v2929 = vadd.f32 %v2847, %v2902
      %v2930 = vadd.f32 %v2848, %v2903
      %v2931 = vadd.f32 %v2849, %v2904
      %v2932 = vadd.f32 %v2850, %v2905
      %v2933 = vadd.f32 %v2851, %v2906
      %v2934 = vadd.f32 %v2852, %v2907
      %v2935 = vadd.f32 %v2853, %v2908
      %v2936 = vadd.f32 %v2854, %v2909
      %v2937 = vadd.f32 %v2855, %v2910
      %v2938 = vadd.f32 %v2856, %v2911
      %v2939 = vadd.f32 %v2857, %v2912
      %v2940 = vadd.f32 %v2858, %v2913
      %v2941 = vadd.f32 %v2859, %v2914
      %v2942 = vadd.f32 %v2860, %v2915
      %v2943 = vadd.f32 %v2861, %v2916
      %s2944 = scalar_lea.vmem %s2, 5544
      %v2945 = vld [vmem:[%s2944] sm:$0xff]
      %v2946 = vld [vmem:[%s2944 + $0x8] sm:$0xff]
      %v2947 = vld [vmem:[%s2944 + $0x10] sm:$0xff]
      %v2948 = vld [vmem:[%s2944 + $0x18] sm:$0xff]
      %v2949 = vld [vmem:[%s2944 + $0x20] sm:$0xff]
      %v2950 = vld [vmem:[%s2944 + $0x28] sm:$0xff]
      %v2951 = vld [vmem:[%s2944 + $0x30] sm:$0xff]
      %v2952 = vld [vmem:[%s2944 + $0x38] sm:$0xff]
      %v2953 = vld [vmem:[%s2944 + $0x40] sm:$0xff]
      %v2954 = vld [vmem:[%s2944 + $0x48] sm:$0xff]
      %v2955 = vld [vmem:[%s2944 + $0x50] sm:$0xff]
      %v2956 = vld [vmem:[%s2944 + $0x58] sm:$0xff]
      %v2957 = vld [vmem:[%s2944 + $0x60] sm:$0xff]
      %v2958 = vld [vmem:[%s2944 + $0x68] sm:$0xff]
      %v2959 = vld [vmem:[%s2944 + $0x70] sm:$0xff]
      %v2960 = vld [vmem:[%s2944 + $0x78] sm:$0xff]
      %v2961 = vld [vmem:[%s2944 + $0x80] sm:$0xff]
      %v2962 = vld [vmem:[%s2944 + $0x88] sm:$0xff]
      %v2963 = vld [vmem:[%s2944 + $0x90] sm:$0xff]
      %v2964 = vld [vmem:[%s2944 + $0x98] sm:$0xff]
      %v2965 = vld [vmem:[%s2944 + $0xa0] sm:$0xff]
      %v2966 = vld [vmem:[%s2944 + $0xa8] sm:$0xff]
      %v2967 = vld [vmem:[%s2944 + $0xb0] sm:$0xff]
      %v2968 = vld [vmem:[%s2944 + $0xb8] sm:$0xff]
      %v2969 = vld [vmem:[%s2944 + $0xc0] sm:$0xff]
      %v2970 = vld [vmem:[%s2944 + $0xc8] sm:$0xff]
      %v2971 = vld [vmem:[%s2944 + $0xd0] sm:$0xff]
      %v2972 = vmul.f32 %v1297, %v2945
      %v2973 = vmul.f32 %v1296, %v2946
      %v2974 = vmul.f32 %v1295, %v2947
      %v2975 = vmul.f32 %v1294, %v2948
      %v2976 = vmul.f32 %v1293, %v2949
      %v2977 = vmul.f32 %v1292, %v2950
      %v2978 = vmul.f32 %v1291, %v2951
      %v2979 = vmul.f32 %v1290, %v2952
      %v2980 = vmul.f32 %v1289, %v2953
      %v2981 = vmul.f32 %v1288, %v2954
      %v2982 = vmul.f32 %v1287, %v2955
      %v2983 = vmul.f32 %v1286, %v2956
      %v2984 = vmul.f32 %v1285, %v2957
      %v2985 = vmul.f32 %v1284, %v2958
      %v2986 = vmul.f32 %v1283, %v2959
      %v2987 = vmul.f32 %v1282, %v2960
      %v2988 = vmul.f32 %v1281, %v2961
      %v2989 = vmul.f32 %v1280, %v2962
      %v2990 = vmul.f32 %v1279, %v2963
      %v2991 = vmul.f32 %v1278, %v2964
      %v2992 = vmul.f32 %v1277, %v2965
      %v2993 = vmul.f32 %v1276, %v2966
      %v2994 = vmul.f32 %v1302, %v2967
      %v2995 = vmul.f32 %v1301, %v2968
      %v2996 = vmul.f32 %v1300, %v2969
      %v2997 = vmul.f32 %v1299, %v2970
      %v2998 = vmul.f32 %v1298, %v2971
      %v2999 = vadd.f32 %v2917, %v2972
      %v3000 = vadd.f32 %v2918, %v2973
      %v3001 = vadd.f32 %v2919, %v2974
      %v3002 = vadd.f32 %v2920, %v2975
      %v3003 = vadd.f32 %v2921, %v2976
      %v3004 = vadd.f32 %v2922, %v2977
      %v3005 = vadd.f32 %v2923, %v2978
      %v3006 = vadd.f32 %v2924, %v2979
      %v3007 = vadd.f32 %v2925, %v2980
      %v3008 = vadd.f32 %v2926, %v2981
      %v3009 = vadd.f32 %v2927, %v2982
      %v3010 = vadd.f32 %v2928, %v2983
      %v3011 = vadd.f32 %v2929, %v2984
      %v3012 = vadd.f32 %v2930, %v2985
      %v3013 = vadd.f32 %v2931, %v2986
      %v3014 = vadd.f32 %v2932, %v2987
      %v3015 = vadd.f32 %v2933, %v2988
      %v3016 = vadd.f32 %v2934, %v2989
      %v3017 = vadd.f32 %v2935, %v2990
      %v3018 = vadd.f32 %v2936, %v2991
      %v3019 = vadd.f32 %v2937, %v2992
      %v3020 = vadd.f32 %v2938, %v2993
      %v3021 = vadd.f32 %v2939, %v2994
      %v3022 = vadd.f32 %v2940, %v2995
      %v3023 = vadd.f32 %v2941, %v2996
      %v3024 = vadd.f32 %v2942, %v2997
      %v3025 = vadd.f32 %v2943, %v2998
      %s3026 = scalar_lea.vmem %s2, 5808
      %v3027 = vld [vmem:[%s3026] sm:$0xff]
      %v3028 = vld [vmem:[%s3026 + $0x8] sm:$0xff]
      %v3029 = vld [vmem:[%s3026 + $0x10] sm:$0xff]
      %v3030 = vld [vmem:[%s3026 + $0x18] sm:$0xff]
      %v3031 = vld [vmem:[%s3026 + $0x20] sm:$0xff]
      %v3032 = vld [vmem:[%s3026 + $0x28] sm:$0xff]
      %v3033 = vld [vmem:[%s3026 + $0x30] sm:$0xff]
      %v3034 = vld [vmem:[%s3026 + $0x38] sm:$0xff]
      %v3035 = vld [vmem:[%s3026 + $0x40] sm:$0xff]
      %v3036 = vld [vmem:[%s3026 + $0x48] sm:$0xff]
      %v3037 = vld [vmem:[%s3026 + $0x50] sm:$0xff]
      %v3038 = vld [vmem:[%s3026 + $0x58] sm:$0xff]
      %v3039 = vld [vmem:[%s3026 + $0x60] sm:$0xff]
      %v3040 = vld [vmem:[%s3026 + $0x68] sm:$0xff]
      %v3041 = vld [vmem:[%s3026 + $0x70] sm:$0xff]
      %v3042 = vld [vmem:[%s3026 + $0x78] sm:$0xff]
      %v3043 = vld [vmem:[%s3026 + $0x80] sm:$0xff]
      %v3044 = vld [vmem:[%s3026 + $0x88] sm:$0xff]
      %v3045 = vld [vmem:[%s3026 + $0x90] sm:$0xff]
      %v3046 = vld [vmem:[%s3026 + $0x98] sm:$0xff]
      %v3047 = vld [vmem:[%s3026 + $0xa0] sm:$0xff]
      %v3048 = vld [vmem:[%s3026 + $0xa8] sm:$0xff]
      %v3049 = vld [vmem:[%s3026 + $0xb0] sm:$0xff]
      %v3050 = vld [vmem:[%s3026 + $0xb8] sm:$0xff]
      %v3051 = vld [vmem:[%s3026 + $0xc0] sm:$0xff]
      %v3052 = vld [vmem:[%s3026 + $0xc8] sm:$0xff]
      %v3053 = vld [vmem:[%s3026 + $0xd0] sm:$0xff]
      %v3054 = vmul.f32 %v1434, %v3027
      %v3055 = vmul.f32 %v1433, %v3028
      %v3056 = vmul.f32 %v1432, %v3029
      %v3057 = vmul.f32 %v1431, %v3030
      %v3058 = vmul.f32 %v1430, %v3031
      %v3059 = vmul.f32 %v1429, %v3032
      %v3060 = vmul.f32 %v1428, %v3033
      %v3061 = vmul.f32 %v1427, %v3034
      %v3062 = vmul.f32 %v1426, %v3035
      %v3063 = vmul.f32 %v1425, %v3036
      %v3064 = vmul.f32 %v1424, %v3037
      %v3065 = vmul.f32 %v1423, %v3038
      %v3066 = vmul.f32 %v1422, %v3039
      %v3067 = vmul.f32 %v1421, %v3040
      %v3068 = vmul.f32 %v1420, %v3041
      %v3069 = vmul.f32 %v1419, %v3042
      %v3070 = vmul.f32 %v1418, %v3043
      %v3071 = vmul.f32 %v1417, %v3044
      %v3072 = vmul.f32 %v1416, %v3045
      %v3073 = vmul.f32 %v1415, %v3046
      %v3074 = vmul.f32 %v1414, %v3047
      %v3075 = vmul.f32 %v1413, %v3048
      %v3076 = vmul.f32 %v1439, %v3049
      %v3077 = vmul.f32 %v1438, %v3050
      %v3078 = vmul.f32 %v1437, %v3051
      %v3079 = vmul.f32 %v1436, %v3052
      %v3080 = vmul.f32 %v1435, %v3053
      %v3081 = vadd.f32 %v2999, %v3054
      %v3082 = vadd.f32 %v3000, %v3055
      %v3083 = vadd.f32 %v3001, %v3056
      %v3084 = vadd.f32 %v3002, %v3057
      %v3085 = vadd.f32 %v3003, %v3058
      %v3086 = vadd.f32 %v3004, %v3059
      %v3087 = vadd.f32 %v3005, %v3060
      %v3088 = vadd.f32 %v3006, %v3061
      %v3089 = vadd.f32 %v3007, %v3062
      %v3090 = vadd.f32 %v3008, %v3063
      %v3091 = vadd.f32 %v3009, %v3064
      %v3092 = vadd.f32 %v3010, %v3065
      %v3093 = vadd.f32 %v3011, %v3066
      %v3094 = vadd.f32 %v3012, %v3067
      %v3095 = vadd.f32 %v3013, %v3068
      %v3096 = vadd.f32 %v3014, %v3069
      %v3097 = vadd.f32 %v3015, %v3070
      %v3098 = vadd.f32 %v3016, %v3071
      %v3099 = vadd.f32 %v3017, %v3072
      %v3100 = vadd.f32 %v3018, %v3073
      %v3101 = vadd.f32 %v3019, %v3074
      %v3102 = vadd.f32 %v3020, %v3075
      %v3103 = vadd.f32 %v3021, %v3076
      %v3104 = vadd.f32 %v3022, %v3077
      %v3105 = vadd.f32 %v3023, %v3078
      %v3106 = vadd.f32 %v3024, %v3079
      %v3107 = vadd.f32 %v3025, %v3080
      %s3108 = scalar_lea.vmem %s2, 6072
      %v3109 = vld [vmem:[%s3108] sm:$0xff]
      %v3110 = vld [vmem:[%s3108 + $0x8] sm:$0xff]
      %v3111 = vld [vmem:[%s3108 + $0x10] sm:$0xff]
      %v3112 = vld [vmem:[%s3108 + $0x18] sm:$0xff]
      %v3113 = vld [vmem:[%s3108 + $0x20] sm:$0xff]
      %v3114 = vld [vmem:[%s3108 + $0x28] sm:$0xff]
      %v3115 = vld [vmem:[%s3108 + $0x30] sm:$0xff]
      %v3116 = vld [vmem:[%s3108 + $0x38] sm:$0xff]
      %v3117 = vld [vmem:[%s3108 + $0x40] sm:$0xff]
      %v3118 = vld [vmem:[%s3108 + $0x48] sm:$0xff]
      %v3119 = vld [vmem:[%s3108 + $0x50] sm:$0xff]
      %v3120 = vld [vmem:[%s3108 + $0x58] sm:$0xff]
      %v3121 = vld [vmem:[%s3108 + $0x60] sm:$0xff]
      %v3122 = vld [vmem:[%s3108 + $0x68] sm:$0xff]
      %v3123 = vld [vmem:[%s3108 + $0x70] sm:$0xff]
      %v3124 = vld [vmem:[%s3108 + $0x78] sm:$0xff]
      %v3125 = vld [vmem:[%s3108 + $0x80] sm:$0xff]
      %v3126 = vld [vmem:[%s3108 + $0x88] sm:$0xff]
      %v3127 = vld [vmem:[%s3108 + $0x90] sm:$0xff]
      %v3128 = vld [vmem:[%s3108 + $0x98] sm:$0xff]
      %v3129 = vld [vmem:[%s3108 + $0xa0] sm:$0xff]
      %v3130 = vld [vmem:[%s3108 + $0xa8] sm:$0xff]
      %v3131 = vld [vmem:[%s3108 + $0xb0] sm:$0xff]
      %v3132 = vld [vmem:[%s3108 + $0xb8] sm:$0xff]
      %v3133 = vld [vmem:[%s3108 + $0xc0] sm:$0xff]
      %v3134 = vld [vmem:[%s3108 + $0xc8] sm:$0xff]
      %v3135 = vld [vmem:[%s3108 + $0xd0] sm:$0xff]
      %v3136 = vmul.f32 %v887, %v3109
      %v3137 = vmul.f32 %v886, %v3110
      %v3138 = vmul.f32 %v885, %v3111
      %v3139 = vmul.f32 %v884, %v3112
      %v3140 = vmul.f32 %v883, %v3113
      %v3141 = vmul.f32 %v882, %v3114
      %v3142 = vmul.f32 %v881, %v3115
      %v3143 = vmul.f32 %v880, %v3116
      %v3144 = vmul.f32 %v879, %v3117
      %v3145 = vmul.f32 %v878, %v3118
      %v3146 = vmul.f32 %v877, %v3119
      %v3147 = vmul.f32 %v876, %v3120
      %v3148 = vmul.f32 %v875, %v3121
      %v3149 = vmul.f32 %v874, %v3122
      %v3150 = vmul.f32 %v873, %v3123
      %v3151 = vmul.f32 %v872, %v3124
      %v3152 = vmul.f32 %v871, %v3125
      %v3153 = vmul.f32 %v870, %v3126
      %v3154 = vmul.f32 %v869, %v3127
      %v3155 = vmul.f32 %v868, %v3128
      %v3156 = vmul.f32 %v867, %v3129
      %v3157 = vmul.f32 %v866, %v3130
      %v3158 = vmul.f32 %v892, %v3131
      %v3159 = vmul.f32 %v891, %v3132
      %v3160 = vmul.f32 %v890, %v3133
      %v3161 = vmul.f32 %v889, %v3134
      %v3162 = vmul.f32 %v888, %v3135
      %v3163 = vadd.f32 %v3081, %v3136
      %v3164 = vadd.f32 %v3082, %v3137
      %v3165 = vadd.f32 %v3083, %v3138
      %v3166 = vadd.f32 %v3084, %v3139
      %v3167 = vadd.f32 %v3085, %v3140
      %v3168 = vadd.f32 %v3086, %v3141
      %v3169 = vadd.f32 %v3087, %v3142
      %v3170 = vadd.f32 %v3088, %v3143
      %v3171 = vadd.f32 %v3089, %v3144
      %v3172 = vadd.f32 %v3090, %v3145
      %v3173 = vadd.f32 %v3091, %v3146
      %v3174 = vadd.f32 %v3092, %v3147
      %v3175 = vadd.f32 %v3093, %v3148
      %v3176 = vadd.f32 %v3094, %v3149
      %v3177 = vadd.f32 %v3095, %v3150
      %v3178 = vadd.f32 %v3096, %v3151
      %v3179 = vadd.f32 %v3097, %v3152
      %v3180 = vadd.f32 %v3098, %v3153
      %v3181 = vadd.f32 %v3099, %v3154
      %v3182 = vadd.f32 %v3100, %v3155
      %v3183 = vadd.f32 %v3101, %v3156
      %v3184 = vadd.f32 %v3102, %v3157
      %v3185 = vadd.f32 %v3103, %v3158
      %v3186 = vadd.f32 %v3104, %v3159
      %v3187 = vadd.f32 %v3105, %v3160
      %v3188 = vadd.f32 %v3106, %v3161
      %v3189 = vadd.f32 %v3107, %v3162
      %s3190 = scalar_lea.vmem %s2, 6336
      %v3191 = vld [vmem:[%s3190] sm:$0xff]
      %v3192 = vld [vmem:[%s3190 + $0x8] sm:$0xff]
      %v3193 = vld [vmem:[%s3190 + $0x10] sm:$0xff]
      %v3194 = vld [vmem:[%s3190 + $0x18] sm:$0xff]
      %v3195 = vld [vmem:[%s3190 + $0x20] sm:$0xff]
      %v3196 = vld [vmem:[%s3190 + $0x28] sm:$0xff]
      %v3197 = vld [vmem:[%s3190 + $0x30] sm:$0xff]
      %v3198 = vld [vmem:[%s3190 + $0x38] sm:$0xff]
      %v3199 = vld [vmem:[%s3190 + $0x40] sm:$0xff]
      %v3200 = vld [vmem:[%s3190 + $0x48] sm:$0xff]
      %v3201 = vld [vmem:[%s3190 + $0x50] sm:$0xff]
      %v3202 = vld [vmem:[%s3190 + $0x58] sm:$0xff]
      %v3203 = vld [vmem:[%s3190 + $0x60] sm:$0xff]
      %v3204 = vld [vmem:[%s3190 + $0x68] sm:$0xff]
      %v3205 = vld [vmem:[%s3190 + $0x70] sm:$0xff]
      %v3206 = vld [vmem:[%s3190 + $0x78] sm:$0xff]
      %v3207 = vld [vmem:[%s3190 + $0x80] sm:$0xff]
      %v3208 = vld [vmem:[%s3190 + $0x88] sm:$0xff]
      %v3209 = vld [vmem:[%s3190 + $0x90] sm:$0xff]
      %v3210 = vld [vmem:[%s3190 + $0x98] sm:$0xff]
      %v3211 = vld [vmem:[%s3190 + $0xa0] sm:$0xff]
      %v3212 = vld [vmem:[%s3190 + $0xa8] sm:$0xff]
      %v3213 = vld [vmem:[%s3190 + $0xb0] sm:$0xff]
      %v3214 = vld [vmem:[%s3190 + $0xb8] sm:$0xff]
      %v3215 = vld [vmem:[%s3190 + $0xc0] sm:$0xff]
      %v3216 = vld [vmem:[%s3190 + $0xc8] sm:$0xff]
      %v3217 = vld [vmem:[%s3190 + $0xd0] sm:$0xff]
      %v3218 = vmul.f32 %v1652, %v3191
      %v3219 = vmul.f32 %v1651, %v3192
      %v3220 = vmul.f32 %v1650, %v3193
      %v3221 = vmul.f32 %v1649, %v3194
      %v3222 = vmul.f32 %v1648, %v3195
      %v3223 = vmul.f32 %v1647, %v3196
      %v3224 = vmul.f32 %v1646, %v3197
      %v3225 = vmul.f32 %v1645, %v3198
      %v3226 = vmul.f32 %v1644, %v3199
      %v3227 = vmul.f32 %v1643, %v3200
      %v3228 = vmul.f32 %v1642, %v3201
      %v3229 = vmul.f32 %v1641, %v3202
      %v3230 = vmul.f32 %v1640, %v3203
      %v3231 = vmul.f32 %v1639, %v3204
      %v3232 = vmul.f32 %v1638, %v3205
      %v3233 = vmul.f32 %v1637, %v3206
      %v3234 = vmul.f32 %v1636, %v3207
      %v3235 = vmul.f32 %v1635, %v3208
      %v3236 = vmul.f32 %v1634, %v3209
      %v3237 = vmul.f32 %v1633, %v3210
      %v3238 = vmul.f32 %v1632, %v3211
      %v3239 = vmul.f32 %v1658, %v3212
      %v3240 = vmul.f32 %v1657, %v3213
      %v3241 = vmul.f32 %v1656, %v3214
      %v3242 = vmul.f32 %v1655, %v3215
      %v3243 = vmul.f32 %v1654, %v3216
      %v3244 = vmul.f32 %v1653, %v3217
      %v3245 = vadd.f32 %v3163, %v3218
      %v3246 = vadd.f32 %v3164, %v3219
      %v3247 = vadd.f32 %v3165, %v3220
      %v3248 = vadd.f32 %v3166, %v3221
      %v3249 = vadd.f32 %v3167, %v3222
      %v3250 = vadd.f32 %v3168, %v3223
      %v3251 = vadd.f32 %v3169, %v3224
      %v3252 = vadd.f32 %v3170, %v3225
      %v3253 = vadd.f32 %v3171, %v3226
      %v3254 = vadd.f32 %v3172, %v3227
      %v3255 = vadd.f32 %v3173, %v3228
      %v3256 = vadd.f32 %v3174, %v3229
      %v3257 = vadd.f32 %v3175, %v3230
      %v3258 = vadd.f32 %v3176, %v3231
      %v3259 = vadd.f32 %v3177, %v3232
      %v3260 = vadd.f32 %v3178, %v3233
      %v3261 = vadd.f32 %v3179, %v3234
      %v3262 = vadd.f32 %v3180, %v3235
      %v3263 = vadd.f32 %v3181, %v3236
      %v3264 = vadd.f32 %v3182, %v3237
      %v3265 = vadd.f32 %v3183, %v3238
      %v3266 = vadd.f32 %v3184, %v3239
      %v3267 = vadd.f32 %v3185, %v3240
      %v3268 = vadd.f32 %v3186, %v3241
      %v3269 = vadd.f32 %v3187, %v3242
      %v3270 = vadd.f32 %v3188, %v3243
      %v3271 = vadd.f32 %v3189, %v3244
      %s3272 = scalar_lea.vmem %s2, 6600
      %v3273 = vld [vmem:[%s3272] sm:$0xff]
      %v3274 = vld [vmem:[%s3272 + $0x8] sm:$0xff]
      %v3275 = vld [vmem:[%s3272 + $0x10] sm:$0xff]
      %v3276 = vld [vmem:[%s3272 + $0x18] sm:$0xff]
      %v3277 = vld [vmem:[%s3272 + $0x20] sm:$0xff]
      %v3278 = vld [vmem:[%s3272 + $0x28] sm:$0xff]
      %v3279 = vld [vmem:[%s3272 + $0x30] sm:$0xff]
      %v3280 = vld [vmem:[%s3272 + $0x38] sm:$0xff]
      %v3281 = vld [vmem:[%s3272 + $0x40] sm:$0xff]
      %v3282 = vld [vmem:[%s3272 + $0x48] sm:$0xff]
      %v3283 = vld [vmem:[%s3272 + $0x50] sm:$0xff]
      %v3284 = vld [vmem:[%s3272 + $0x58] sm:$0xff]
      %v3285 = vld [vmem:[%s3272 + $0x60] sm:$0xff]
      %v3286 = vld [vmem:[%s3272 + $0x68] sm:$0xff]
      %v3287 = vld [vmem:[%s3272 + $0x70] sm:$0xff]
      %v3288 = vld [vmem:[%s3272 + $0x78] sm:$0xff]
      %v3289 = vld [vmem:[%s3272 + $0x80] sm:$0xff]
      %v3290 = vld [vmem:[%s3272 + $0x88] sm:$0xff]
      %v3291 = vld [vmem:[%s3272 + $0x90] sm:$0xff]
      %v3292 = vld [vmem:[%s3272 + $0x98] sm:$0xff]
      %v3293 = vld [vmem:[%s3272 + $0xa0] sm:$0xff]
      %v3294 = vld [vmem:[%s3272 + $0xa8] sm:$0xff]
      %v3295 = vld [vmem:[%s3272 + $0xb0] sm:$0xff]
      %v3296 = vld [vmem:[%s3272 + $0xb8] sm:$0xff]
      %v3297 = vld [vmem:[%s3272 + $0xc0] sm:$0xff]
      %v3298 = vld [vmem:[%s3272 + $0xc8] sm:$0xff]
      %v3299 = vld [vmem:[%s3272 + $0xd0] sm:$0xff]
      %v3300 = vmul.f32 %v1789, %v3273
      %v3301 = vmul.f32 %v1788, %v3274
      %v3302 = vmul.f32 %v1787, %v3275
      %v3303 = vmul.f32 %v1786, %v3276
      %v3304 = vmul.f32 %v1785, %v3277
      %v3305 = vmul.f32 %v1784, %v3278
      %v3306 = vmul.f32 %v1783, %v3279
      %v3307 = vmul.f32 %v1782, %v3280
      %v3308 = vmul.f32 %v1781, %v3281
      %v3309 = vmul.f32 %v1780, %v3282
      %v3310 = vmul.f32 %v1779, %v3283
      %v3311 = vmul.f32 %v1778, %v3284
      %v3312 = vmul.f32 %v1777, %v3285
      %v3313 = vmul.f32 %v1776, %v3286
      %v3314 = vmul.f32 %v1775, %v3287
      %v3315 = vmul.f32 %v1774, %v3288
      %v3316 = vmul.f32 %v1773, %v3289
      %v3317 = vmul.f32 %v1772, %v3290
      %v3318 = vmul.f32 %v1771, %v3291
      %v3319 = vmul.f32 %v1770, %v3292
      %v3320 = vmul.f32 %v1769, %v3293
      %v3321 = vmul.f32 %v1795, %v3294
      %v3322 = vmul.f32 %v1794, %v3295
      %v3323 = vmul.f32 %v1793, %v3296
      %v3324 = vmul.f32 %v1792, %v3297
      %v3325 = vmul.f32 %v1791, %v3298
      %v3326 = vmul.f32 %v1790, %v3299
      %v3327 = vadd.f32 %v3245, %v3300
      %v3328 = vadd.f32 %v3246, %v3301
      %v3329 = vadd.f32 %v3247, %v3302
      %v3330 = vadd.f32 %v3248, %v3303
      %v3331 = vadd.f32 %v3249, %v3304
      %v3332 = vadd.f32 %v3250, %v3305
      %v3333 = vadd.f32 %v3251, %v3306
      %v3334 = vadd.f32 %v3252, %v3307
      %v3335 = vadd.f32 %v3253, %v3308
      %v3336 = vadd.f32 %v3254, %v3309
      %v3337 = vadd.f32 %v3255, %v3310
      %v3338 = vadd.f32 %v3256, %v3311
      %v3339 = vadd.f32 %v3257, %v3312
      %v3340 = vadd.f32 %v3258, %v3313
      %v3341 = vadd.f32 %v3259, %v3314
      %v3342 = vadd.f32 %v3260, %v3315
      %v3343 = vadd.f32 %v3261, %v3316
      %v3344 = vadd.f32 %v3262, %v3317
      %v3345 = vadd.f32 %v3263, %v3318
      %v3346 = vadd.f32 %v3264, %v3319
      %v3347 = vadd.f32 %v3265, %v3320
      %v3348 = vadd.f32 %v3266, %v3321
      %v3349 = vadd.f32 %v3267, %v3322
      %v3350 = vadd.f32 %v3268, %v3323
      %v3351 = vadd.f32 %v3269, %v3324
      %v3352 = vadd.f32 %v3270, %v3325
      %v3353 = vadd.f32 %v3271, %v3326
      %s3354 = scalar_lea.vmem %s2, 6864
      %v3355 = vld [vmem:[%s3354] sm:$0xff]
      %v3356 = vld [vmem:[%s3354 + $0x8] sm:$0xff]
      %v3357 = vld [vmem:[%s3354 + $0x10] sm:$0xff]
      %v3358 = vld [vmem:[%s3354 + $0x18] sm:$0xff]
      %v3359 = vld [vmem:[%s3354 + $0x20] sm:$0xff]
      %v3360 = vld [vmem:[%s3354 + $0x28] sm:$0xff]
      %v3361 = vld [vmem:[%s3354 + $0x30] sm:$0xff]
      %v3362 = vld [vmem:[%s3354 + $0x38] sm:$0xff]
      %v3363 = vld [vmem:[%s3354 + $0x40] sm:$0xff]
      %v3364 = vld [vmem:[%s3354 + $0x48] sm:$0xff]
      %v3365 = vld [vmem:[%s3354 + $0x50] sm:$0xff]
      %v3366 = vld [vmem:[%s3354 + $0x58] sm:$0xff]
      %v3367 = vld [vmem:[%s3354 + $0x60] sm:$0xff]
      %v3368 = vld [vmem:[%s3354 + $0x68] sm:$0xff]
      %v3369 = vld [vmem:[%s3354 + $0x70] sm:$0xff]
      %v3370 = vld [vmem:[%s3354 + $0x78] sm:$0xff]
      %v3371 = vld [vmem:[%s3354 + $0x80] sm:$0xff]
      %v3372 = vld [vmem:[%s3354 + $0x88] sm:$0xff]
      %v3373 = vld [vmem:[%s3354 + $0x90] sm:$0xff]
      %v3374 = vld [vmem:[%s3354 + $0x98] sm:$0xff]
      %v3375 = vld [vmem:[%s3354 + $0xa0] sm:$0xff]
      %v3376 = vld [vmem:[%s3354 + $0xa8] sm:$0xff]
      %v3377 = vld [vmem:[%s3354 + $0xb0] sm:$0xff]
      %v3378 = vld [vmem:[%s3354 + $0xb8] sm:$0xff]
      %v3379 = vld [vmem:[%s3354 + $0xc0] sm:$0xff]
      %v3380 = vld [vmem:[%s3354 + $0xc8] sm:$0xff]
      %v3381 = vld [vmem:[%s3354 + $0xd0] sm:$0xff]
      %v3382 = vmul.f32 %v1296, %v3355
      %v3383 = vmul.f32 %v1295, %v3356
      %v3384 = vmul.f32 %v1294, %v3357
      %v3385 = vmul.f32 %v1293, %v3358
      %v3386 = vmul.f32 %v1292, %v3359
      %v3387 = vmul.f32 %v1291, %v3360
      %v3388 = vmul.f32 %v1290, %v3361
      %v3389 = vmul.f32 %v1289, %v3362
      %v3390 = vmul.f32 %v1288, %v3363
      %v3391 = vmul.f32 %v1287, %v3364
      %v3392 = vmul.f32 %v1286, %v3365
      %v3393 = vmul.f32 %v1285, %v3366
      %v3394 = vmul.f32 %v1284, %v3367
      %v3395 = vmul.f32 %v1283, %v3368
      %v3396 = vmul.f32 %v1282, %v3369
      %v3397 = vmul.f32 %v1281, %v3370
      %v3398 = vmul.f32 %v1280, %v3371
      %v3399 = vmul.f32 %v1279, %v3372
      %v3400 = vmul.f32 %v1278, %v3373
      %v3401 = vmul.f32 %v1277, %v3374
      %v3402 = vmul.f32 %v1276, %v3375
      %v3403 = vmul.f32 %v1302, %v3376
      %v3404 = vmul.f32 %v1301, %v3377
      %v3405 = vmul.f32 %v1300, %v3378
      %v3406 = vmul.f32 %v1299, %v3379
      %v3407 = vmul.f32 %v1298, %v3380
      %v3408 = vmul.f32 %v1297, %v3381
      %v3409 = vadd.f32 %v3327, %v3382
      %v3410 = vadd.f32 %v3328, %v3383
      %v3411 = vadd.f32 %v3329, %v3384
      %v3412 = vadd.f32 %v3330, %v3385
      %v3413 = vadd.f32 %v3331, %v3386
      %v3414 = vadd.f32 %v3332, %v3387
      %v3415 = vadd.f32 %v3333, %v3388
      %v3416 = vadd.f32 %v3334, %v3389
      %v3417 = vadd.f32 %v3335, %v3390
      %v3418 = vadd.f32 %v3336, %v3391
      %v3419 = vadd.f32 %v3337, %v3392
      %v3420 = vadd.f32 %v3338, %v3393
      %v3421 = vadd.f32 %v3339, %v3394
      %v3422 = vadd.f32 %v3340, %v3395
      %v3423 = vadd.f32 %v3341, %v3396
      %v3424 = vadd.f32 %v3342, %v3397
      %v3425 = vadd.f32 %v3343, %v3398
      %v3426 = vadd.f32 %v3344, %v3399
      %v3427 = vadd.f32 %v3345, %v3400
      %v3428 = vadd.f32 %v3346, %v3401
      %v3429 = vadd.f32 %v3347, %v3402
      %v3430 = vadd.f32 %v3348, %v3403
      %v3431 = vadd.f32 %v3349, %v3404
      %v3432 = vadd.f32 %v3350, %v3405
      %v3433 = vadd.f32 %v3351, %v3406
      %v3434 = vadd.f32 %v3352, %v3407
      %v3435 = vadd.f32 %v3353, %v3408
      %vm3436 = vcmask 523264
      %3437 = vst.msk [vmem:[#allocation2] sm:$0xff] %vm3436, %v3409
      %3438 = vst.msk [vmem:[#allocation2 + $0x8] sm:$0xff] %vm3436, %v3410
      %3439 = vst.msk [vmem:[#allocation2 + $0x10] sm:$0xff] %vm3436, %v3411
      %3440 = vst.msk [vmem:[#allocation2 + $0x18] sm:$0xff] %vm3436, %v3412
      %3441 = vst.msk [vmem:[#allocation2 + $0x20] sm:$0xff] %vm3436, %v3413
      %3442 = vst.msk [vmem:[#allocation2 + $0x28] sm:$0xff] %vm3436, %v3414
      %3443 = vst.msk [vmem:[#allocation2 + $0x30] sm:$0xff] %vm3436, %v3415
      %3444 = vst.msk [vmem:[#allocation2 + $0x38] sm:$0xff] %vm3436, %v3416
      %3445 = vst.msk [vmem:[#allocation2 + $0x40] sm:$0xff] %vm3436, %v3417
      %3446 = vst.msk [vmem:[#allocation2 + $0x48] sm:$0xff] %vm3436, %v3418
      %3447 = vst.msk [vmem:[#allocation2 + $0x50] sm:$0xff] %vm3436, %v3419
      %3448 = vst.msk [vmem:[#allocation2 + $0x58] sm:$0xff] %vm3436, %v3420
      %3449 = vst.msk [vmem:[#allocation2 + $0x60] sm:$0xff] %vm3436, %v3421
      %3450 = vst.msk [vmem:[#allocation2 + $0x68] sm:$0xff] %vm3436, %v3422
      %3451 = vst.msk [vmem:[#allocation2 + $0x70] sm:$0xff] %vm3436, %v3423
      %3452 = vst.msk [vmem:[#allocation2 + $0x78] sm:$0xff] %vm3436, %v3424
      %3453 = vst.msk [vmem:[#allocation2 + $0x80] sm:$0xff] %vm3436, %v3425
      %3454 = vst.msk [vmem:[#allocation2 + $0x88] sm:$0xff] %vm3436, %v3426
      %3455 = vst.msk [vmem:[#allocation2 + $0x90] sm:$0xff] %vm3436, %v3427
      %3456 = vst.msk [vmem:[#allocation2 + $0x98] sm:$0xff] %vm3436, %v3428
      %3457 = vst.msk [vmem:[#allocation2 + $0xa0] sm:$0xff] %vm3436, %v3429
      %3458 = vst.msk [vmem:[#allocation2 + $0xa8] sm:$0xff] %vm3436, %v3430
      %3459 = vst.msk [vmem:[#allocation2 + $0xb0] sm:$0xff] %vm3436, %v3431
      %3460 = vst.msk [vmem:[#allocation2 + $0xb8] sm:$0xff] %vm3436, %v3432
      %3461 = vst.msk [vmem:[#allocation2 + $0xc0] sm:$0xff] %vm3436, %v3433
      %3462 = vst.msk [vmem:[#allocation2 + $0xc8] sm:$0xff] %vm3436, %v3434
      %3463 = vst.msk [vmem:[#allocation2 + $0xd0] sm:$0xff] %vm3436, %v3435
      %v3464 = vrot.slane %v810, 3
      %v3465 = vrot.slane %v815, 3
      %v3466 = vrot.slane %v818, 3
      %v3467 = vrot.slane %v823, 3
      %v3468 = vsel %vm1275, %v3466, %v3467
      %v3469 = vsel %vm1275, %v3465, %v3466
      %v3470 = vsel %vm1275, %v3464, %v3465
      %v3471 = vsel %vm1275, %v3467, %v3464
      %v3472 = vld [vmem:[%s2 + $0xd8] sm:$0xff]
      %v3473 = vld [vmem:[%s2 + $0xe0] sm:$0xff]
      %v3474 = vld [vmem:[%s2 + $0xe8] sm:$0xff]
      %v3475 = vld [vmem:[%s2 + $0xf0] sm:$0xff]
      %v3476 = vmul.f32 %v3468, %v3472
      %v3477 = vmul.f32 %v3471, %v3473
      %v3478 = vmul.f32 %v3470, %v3474
      %v3479 = vmul.f32 %v3469, %v3475
      %v3480 = vadd.f32 %v810, %v3476
      %v3481 = vadd.f32 %v815, %v3477
      %v3482 = vadd.f32 %v818, %v3478
      %v3483 = vadd.f32 %v823, %v3479
      %v3484 = vrot.slane %v810, 4
      %v3485 = vrot.slane %v815, 4
      %v3486 = vrot.slane %v818, 4
      %v3487 = vrot.slane %v823, 4
      %v3488 = vsel %vm1412, %v3486, %v3487
      %v3489 = vsel %vm1412, %v3485, %v3486
      %v3490 = vsel %vm1412, %v3484, %v3485
      %v3491 = vsel %vm1412, %v3487, %v3484
      %v3492 = vld [vmem:[%s1029 + $0xd8] sm:$0xff]
      %v3493 = vld [vmem:[%s1029 + $0xe0] sm:$0xff]
      %v3494 = vld [vmem:[%s1029 + $0xe8] sm:$0xff]
      %v3495 = vld [vmem:[%s1029 + $0xf0] sm:$0xff]
      %v3496 = vmul.f32 %v3488, %v3492
      %v3497 = vmul.f32 %v3491, %v3493
      %v3498 = vmul.f32 %v3490, %v3494
      %v3499 = vmul.f32 %v3489, %v3495
      %v3500 = vadd.f32 %v3480, %v3496
      %v3501 = vadd.f32 %v3481, %v3497
      %v3502 = vadd.f32 %v3482, %v3498
      %v3503 = vadd.f32 %v3483, %v3499
      %v3504 = vrot.slane %v810, 5
      %v3505 = vrot.slane %v815, 5
      %v3506 = vrot.slane %v818, 5
      %v3507 = vrot.slane %v823, 5
      %v3508 = vsel %vm865, %v3506, %v3507
      %v3509 = vsel %vm865, %v3505, %v3506
      %v3510 = vsel %vm865, %v3504, %v3505
      %v3511 = vsel %vm865, %v3507, %v3504
      %v3512 = vld [vmem:[%s1166 + $0xd8] sm:$0xff]
      %v3513 = vld [vmem:[%s1166 + $0xe0] sm:$0xff]
      %v3514 = vld [vmem:[%s1166 + $0xe8] sm:$0xff]
      %v3515 = vld [vmem:[%s1166 + $0xf0] sm:$0xff]
      %v3516 = vmul.f32 %v3508, %v3512
      %v3517 = vmul.f32 %v3511, %v3513
      %v3518 = vmul.f32 %v3510, %v3514
      %v3519 = vmul.f32 %v3509, %v3515
      %v3520 = vadd.f32 %v3500, %v3516
      %v3521 = vadd.f32 %v3501, %v3517
      %v3522 = vadd.f32 %v3502, %v3518
      %v3523 = vadd.f32 %v3503, %v3519
      %v3524 = vrot.slane %v810, 6
      %v3525 = vrot.slane %v815, 6
      %v3526 = vrot.slane %v818, 6
      %v3527 = vrot.slane %v823, 6
      %v3528 = vsel %vm1001, %v3526, %v3527
      %v3529 = vsel %vm1001, %v3525, %v3526
      %v3530 = vsel %vm1001, %v3524, %v3525
      %v3531 = vsel %vm1001, %v3527, %v3524
      %v3532 = vld [vmem:[%s1303 + $0xd8] sm:$0xff]
      %v3533 = vld [vmem:[%s1303 + $0xe0] sm:$0xff]
      %v3534 = vld [vmem:[%s1303 + $0xe8] sm:$0xff]
      %v3535 = vld [vmem:[%s1303 + $0xf0] sm:$0xff]
      %v3536 = vmul.f32 %v3528, %v3532
      %v3537 = vmul.f32 %v3531, %v3533
      %v3538 = vmul.f32 %v3530, %v3534
      %v3539 = vmul.f32 %v3529, %v3535
      %v3540 = vadd.f32 %v3520, %v3536
      %v3541 = vadd.f32 %v3521, %v3537
      %v3542 = vadd.f32 %v3522, %v3538
      %v3543 = vadd.f32 %v3523, %v3539
      %v3544 = vrot.slane %v810, 7
      %v3545 = vrot.slane %v815, 7
      %v3546 = vrot.slane %v818, 7
      %v3547 = vrot.slane %v823, 7
      %v3548 = vsel %vm1138, %v3546, %v3547
      %v3549 = vsel %vm1138, %v3545, %v3546
      %v3550 = vsel %vm1138, %v3544, %v3545
      %v3551 = vsel %vm1138, %v3547, %v3544
      %v3552 = vld [vmem:[%s1440 + $0xd8] sm:$0xff]
      %v3553 = vld [vmem:[%s1440 + $0xe0] sm:$0xff]
      %v3554 = vld [vmem:[%s1440 + $0xe8] sm:$0xff]
      %v3555 = vld [vmem:[%s1440 + $0xf0] sm:$0xff]
      %v3556 = vmul.f32 %v3548, %v3552
      %v3557 = vmul.f32 %v3551, %v3553
      %v3558 = vmul.f32 %v3550, %v3554
      %v3559 = vmul.f32 %v3549, %v3555
      %v3560 = vadd.f32 %v3540, %v3556
      %v3561 = vadd.f32 %v3541, %v3557
      %v3562 = vadd.f32 %v3542, %v3558
      %v3563 = vadd.f32 %v3543, %v3559
      %v3564 = vld [vmem:[%s1522 + $0xd8] sm:$0xff]
      %v3565 = vld [vmem:[%s1522 + $0xe0] sm:$0xff]
      %v3566 = vld [vmem:[%s1522 + $0xe8] sm:$0xff]
      %v3567 = vld [vmem:[%s1522 + $0xf0] sm:$0xff]
      %v3568 = vmul.f32 %v823, %v3564
      %v3569 = vmul.f32 %v810, %v3565
      %v3570 = vmul.f32 %v815, %v3566
      %v3571 = vmul.f32 %v818, %v3567
      %v3572 = vadd.f32 %v3560, %v3568
      %v3573 = vadd.f32 %v3561, %v3569
      %v3574 = vadd.f32 %v3562, %v3570
      %v3575 = vadd.f32 %v3563, %v3571
      %v3576 = vrot.slane %v810, 1
      %v3577 = vrot.slane %v815, 1
      %v3578 = vrot.slane %v818, 1
      %v3579 = vrot.slane %v823, 1
      %v3580 = vsel %vm1631, %v3578, %v3579
      %v3581 = vsel %vm1631, %v3577, %v3578
      %v3582 = vsel %vm1631, %v3576, %v3577
      %v3583 = vsel %vm1631, %v3579, %v3576
      %v3584 = vld [vmem:[%s1659 + $0xd8] sm:$0xff]
      %v3585 = vld [vmem:[%s1659 + $0xe0] sm:$0xff]
      %v3586 = vld [vmem:[%s1659 + $0xe8] sm:$0xff]
      %v3587 = vld [vmem:[%s1659 + $0xf0] sm:$0xff]
      %v3588 = vmul.f32 %v3583, %v3584
      %v3589 = vmul.f32 %v3582, %v3585
      %v3590 = vmul.f32 %v3581, %v3586
      %v3591 = vmul.f32 %v3580, %v3587
      %v3592 = vadd.f32 %v3572, %v3588
      %v3593 = vadd.f32 %v3573, %v3589
      %v3594 = vadd.f32 %v3574, %v3590
      %v3595 = vadd.f32 %v3575, %v3591
      %v3596 = vrot.slane %v810, 2
      %v3597 = vrot.slane %v815, 2
      %v3598 = vrot.slane %v818, 2
      %v3599 = vrot.slane %v823, 2
      %v3600 = vsel %vm1768, %v3598, %v3599
      %v3601 = vsel %vm1768, %v3597, %v3598
      %v3602 = vsel %vm1768, %v3596, %v3597
      %v3603 = vsel %vm1768, %v3599, %v3596
      %v3604 = vld [vmem:[%s1796 + $0xd8] sm:$0xff]
      %v3605 = vld [vmem:[%s1796 + $0xe0] sm:$0xff]
      %v3606 = vld [vmem:[%s1796 + $0xe8] sm:$0xff]
      %v3607 = vld [vmem:[%s1796 + $0xf0] sm:$0xff]
      %v3608 = vmul.f32 %v3603, %v3604
      %v3609 = vmul.f32 %v3602, %v3605
      %v3610 = vmul.f32 %v3601, %v3606
      %v3611 = vmul.f32 %v3600, %v3607
      %v3612 = vadd.f32 %v3592, %v3608
      %v3613 = vadd.f32 %v3593, %v3609
      %v3614 = vadd.f32 %v3594, %v3610
      %v3615 = vadd.f32 %v3595, %v3611
      %v3616 = vld [vmem:[%s1878 + $0xd8] sm:$0xff]
      %v3617 = vld [vmem:[%s1878 + $0xe0] sm:$0xff]
      %v3618 = vld [vmem:[%s1878 + $0xe8] sm:$0xff]
      %v3619 = vld [vmem:[%s1878 + $0xf0] sm:$0xff]
      %v3620 = vmul.f32 %v3471, %v3616
      %v3621 = vmul.f32 %v3470, %v3617
      %v3622 = vmul.f32 %v3469, %v3618
      %v3623 = vmul.f32 %v3468, %v3619
      %v3624 = vadd.f32 %v3612, %v3620
      %v3625 = vadd.f32 %v3613, %v3621
      %v3626 = vadd.f32 %v3614, %v3622
      %v3627 = vadd.f32 %v3615, %v3623
      %v3628 = vld [vmem:[%s1960 + $0xd8] sm:$0xff]
      %v3629 = vld [vmem:[%s1960 + $0xe0] sm:$0xff]
      %v3630 = vld [vmem:[%s1960 + $0xe8] sm:$0xff]
      %v3631 = vld [vmem:[%s1960 + $0xf0] sm:$0xff]
      %v3632 = vmul.f32 %v3491, %v3628
      %v3633 = vmul.f32 %v3490, %v3629
      %v3634 = vmul.f32 %v3489, %v3630
      %v3635 = vmul.f32 %v3488, %v3631
      %v3636 = vadd.f32 %v3624, %v3632
      %v3637 = vadd.f32 %v3625, %v3633
      %v3638 = vadd.f32 %v3626, %v3634
      %v3639 = vadd.f32 %v3627, %v3635
      %v3640 = vld [vmem:[%s2042 + $0xd8] sm:$0xff]
      %v3641 = vld [vmem:[%s2042 + $0xe0] sm:$0xff]
      %v3642 = vld [vmem:[%s2042 + $0xe8] sm:$0xff]
      %v3643 = vld [vmem:[%s2042 + $0xf0] sm:$0xff]
      %v3644 = vmul.f32 %v3511, %v3640
      %v3645 = vmul.f32 %v3510, %v3641
      %v3646 = vmul.f32 %v3509, %v3642
      %v3647 = vmul.f32 %v3508, %v3643
      %v3648 = vadd.f32 %v3636, %v3644
      %v3649 = vadd.f32 %v3637, %v3645
      %v3650 = vadd.f32 %v3638, %v3646
      %v3651 = vadd.f32 %v3639, %v3647
      %v3652 = vld [vmem:[%s2124 + $0xd8] sm:$0xff]
      %v3653 = vld [vmem:[%s2124 + $0xe0] sm:$0xff]
      %v3654 = vld [vmem:[%s2124 + $0xe8] sm:$0xff]
      %v3655 = vld [vmem:[%s2124 + $0xf0] sm:$0xff]
      %v3656 = vmul.f32 %v3531, %v3652
      %v3657 = vmul.f32 %v3530, %v3653
      %v3658 = vmul.f32 %v3529, %v3654
      %v3659 = vmul.f32 %v3528, %v3655
      %v3660 = vadd.f32 %v3648, %v3656
      %v3661 = vadd.f32 %v3649, %v3657
      %v3662 = vadd.f32 %v3650, %v3658
      %v3663 = vadd.f32 %v3651, %v3659
      %v3664 = vld [vmem:[%s2206 + $0xd8] sm:$0xff]
      %v3665 = vld [vmem:[%s2206 + $0xe0] sm:$0xff]
      %v3666 = vld [vmem:[%s2206 + $0xe8] sm:$0xff]
      %v3667 = vld [vmem:[%s2206 + $0xf0] sm:$0xff]
      %v3668 = vmul.f32 %v3551, %v3664
      %v3669 = vmul.f32 %v3550, %v3665
      %v3670 = vmul.f32 %v3549, %v3666
      %v3671 = vmul.f32 %v3548, %v3667
      %v3672 = vadd.f32 %v3660, %v3668
      %v3673 = vadd.f32 %v3661, %v3669
      %v3674 = vadd.f32 %v3662, %v3670
      %v3675 = vadd.f32 %v3663, %v3671
      %v3676 = vld [vmem:[%s2288 + $0xd8] sm:$0xff]
      %v3677 = vld [vmem:[%s2288 + $0xe0] sm:$0xff]
      %v3678 = vld [vmem:[%s2288 + $0xe8] sm:$0xff]
      %v3679 = vld [vmem:[%s2288 + $0xf0] sm:$0xff]
      %v3680 = vmul.f32 %v810, %v3676
      %v3681 = vmul.f32 %v815, %v3677
      %v3682 = vmul.f32 %v818, %v3678
      %v3683 = vmul.f32 %v823, %v3679
      %v3684 = vadd.f32 %v3672, %v3680
      %v3685 = vadd.f32 %v3673, %v3681
      %v3686 = vadd.f32 %v3674, %v3682
      %v3687 = vadd.f32 %v3675, %v3683
      %v3688 = vld [vmem:[%s2370 + $0xd8] sm:$0xff]
      %v3689 = vld [vmem:[%s2370 + $0xe0] sm:$0xff]
      %v3690 = vld [vmem:[%s2370 + $0xe8] sm:$0xff]
      %v3691 = vld [vmem:[%s2370 + $0xf0] sm:$0xff]
      %v3692 = vmul.f32 %v3582, %v3688
      %v3693 = vmul.f32 %v3581, %v3689
      %v3694 = vmul.f32 %v3580, %v3690
      %v3695 = vmul.f32 %v3583, %v3691
      %v3696 = vadd.f32 %v3684, %v3692
      %v3697 = vadd.f32 %v3685, %v3693
      %v3698 = vadd.f32 %v3686, %v3694
      %v3699 = vadd.f32 %v3687, %v3695
      %v3700 = vld [vmem:[%s2452 + $0xd8] sm:$0xff]
      %v3701 = vld [vmem:[%s2452 + $0xe0] sm:$0xff]
      %v3702 = vld [vmem:[%s2452 + $0xe8] sm:$0xff]
      %v3703 = vld [vmem:[%s2452 + $0xf0] sm:$0xff]
      %v3704 = vmul.f32 %v3602, %v3700
      %v3705 = vmul.f32 %v3601, %v3701
      %v3706 = vmul.f32 %v3600, %v3702
      %v3707 = vmul.f32 %v3603, %v3703
      %v3708 = vadd.f32 %v3696, %v3704
      %v3709 = vadd.f32 %v3697, %v3705
      %v3710 = vadd.f32 %v3698, %v3706
      %v3711 = vadd.f32 %v3699, %v3707
      %v3712 = vld [vmem:[%s2534 + $0xd8] sm:$0xff]
      %v3713 = vld [vmem:[%s2534 + $0xe0] sm:$0xff]
      %v3714 = vld [vmem:[%s2534 + $0xe8] sm:$0xff]
      %v3715 = vld [vmem:[%s2534 + $0xf0] sm:$0xff]
      %v3716 = vmul.f32 %v3470, %v3712
      %v3717 = vmul.f32 %v3469, %v3713
      %v3718 = vmul.f32 %v3468, %v3714
      %v3719 = vmul.f32 %v3471, %v3715
      %v3720 = vadd.f32 %v3708, %v3716
      %v3721 = vadd.f32 %v3709, %v3717
      %v3722 = vadd.f32 %v3710, %v3718
      %v3723 = vadd.f32 %v3711, %v3719
      %v3724 = vld [vmem:[%s2616 + $0xd8] sm:$0xff]
      %v3725 = vld [vmem:[%s2616 + $0xe0] sm:$0xff]
      %v3726 = vld [vmem:[%s2616 + $0xe8] sm:$0xff]
      %v3727 = vld [vmem:[%s2616 + $0xf0] sm:$0xff]
      %v3728 = vmul.f32 %v3490, %v3724
      %v3729 = vmul.f32 %v3489, %v3725
      %v3730 = vmul.f32 %v3488, %v3726
      %v3731 = vmul.f32 %v3491, %v3727
      %v3732 = vadd.f32 %v3720, %v3728
      %v3733 = vadd.f32 %v3721, %v3729
      %v3734 = vadd.f32 %v3722, %v3730
      %v3735 = vadd.f32 %v3723, %v3731
      %v3736 = vld [vmem:[%s2698 + $0xd8] sm:$0xff]
      %v3737 = vld [vmem:[%s2698 + $0xe0] sm:$0xff]
      %v3738 = vld [vmem:[%s2698 + $0xe8] sm:$0xff]
      %v3739 = vld [vmem:[%s2698 + $0xf0] sm:$0xff]
      %v3740 = vmul.f32 %v3510, %v3736
      %v3741 = vmul.f32 %v3509, %v3737
      %v3742 = vmul.f32 %v3508, %v3738
      %v3743 = vmul.f32 %v3511, %v3739
      %v3744 = vadd.f32 %v3732, %v3740
      %v3745 = vadd.f32 %v3733, %v3741
      %v3746 = vadd.f32 %v3734, %v3742
      %v3747 = vadd.f32 %v3735, %v3743
      %v3748 = vld [vmem:[%s2780 + $0xd8] sm:$0xff]
      %v3749 = vld [vmem:[%s2780 + $0xe0] sm:$0xff]
      %v3750 = vld [vmem:[%s2780 + $0xe8] sm:$0xff]
      %v3751 = vld [vmem:[%s2780 + $0xf0] sm:$0xff]
      %v3752 = vmul.f32 %v3530, %v3748
      %v3753 = vmul.f32 %v3529, %v3749
      %v3754 = vmul.f32 %v3528, %v3750
      %v3755 = vmul.f32 %v3531, %v3751
      %v3756 = vadd.f32 %v3744, %v3752
      %v3757 = vadd.f32 %v3745, %v3753
      %v3758 = vadd.f32 %v3746, %v3754
      %v3759 = vadd.f32 %v3747, %v3755
      %v3760 = vld [vmem:[%s2862 + $0xd8] sm:$0xff]
      %v3761 = vld [vmem:[%s2862 + $0xe0] sm:$0xff]
      %v3762 = vld [vmem:[%s2862 + $0xe8] sm:$0xff]
      %v3763 = vld [vmem:[%s2862 + $0xf0] sm:$0xff]
      %v3764 = vmul.f32 %v3550, %v3760
      %v3765 = vmul.f32 %v3549, %v3761
      %v3766 = vmul.f32 %v3548, %v3762
      %v3767 = vmul.f32 %v3551, %v3763
      %v3768 = vadd.f32 %v3756, %v3764
      %v3769 = vadd.f32 %v3757, %v3765
      %v3770 = vadd.f32 %v3758, %v3766
      %v3771 = vadd.f32 %v3759, %v3767
      %v3772 = vld [vmem:[%s2944 + $0xd8] sm:$0xff]
      %v3773 = vld [vmem:[%s2944 + $0xe0] sm:$0xff]
      %v3774 = vld [vmem:[%s2944 + $0xe8] sm:$0xff]
      %v3775 = vld [vmem:[%s2944 + $0xf0] sm:$0xff]
      %v3776 = vmul.f32 %v815, %v3772
      %v3777 = vmul.f32 %v818, %v3773
      %v3778 = vmul.f32 %v823, %v3774
      %v3779 = vmul.f32 %v810, %v3775
      %v3780 = vadd.f32 %v3768, %v3776
      %v3781 = vadd.f32 %v3769, %v3777
      %v3782 = vadd.f32 %v3770, %v3778
      %v3783 = vadd.f32 %v3771, %v3779
      %v3784 = vld [vmem:[%s3026 + $0xd8] sm:$0xff]
      %v3785 = vld [vmem:[%s3026 + $0xe0] sm:$0xff]
      %v3786 = vld [vmem:[%s3026 + $0xe8] sm:$0xff]
      %v3787 = vld [vmem:[%s3026 + $0xf0] sm:$0xff]
      %v3788 = vmul.f32 %v3581, %v3784
      %v3789 = vmul.f32 %v3580, %v3785
      %v3790 = vmul.f32 %v3583, %v3786
      %v3791 = vmul.f32 %v3582, %v3787
      %v3792 = vadd.f32 %v3780, %v3788
      %v3793 = vadd.f32 %v3781, %v3789
      %v3794 = vadd.f32 %v3782, %v3790
      %v3795 = vadd.f32 %v3783, %v3791
      %v3796 = vld [vmem:[%s3108 + $0xd8] sm:$0xff]
      %v3797 = vld [vmem:[%s3108 + $0xe0] sm:$0xff]
      %v3798 = vld [vmem:[%s3108 + $0xe8] sm:$0xff]
      %v3799 = vld [vmem:[%s3108 + $0xf0] sm:$0xff]
      %v3800 = vmul.f32 %v3601, %v3796
      %v3801 = vmul.f32 %v3600, %v3797
      %v3802 = vmul.f32 %v3603, %v3798
      %v3803 = vmul.f32 %v3602, %v3799
      %v3804 = vadd.f32 %v3792, %v3800
      %v3805 = vadd.f32 %v3793, %v3801
      %v3806 = vadd.f32 %v3794, %v3802
      %v3807 = vadd.f32 %v3795, %v3803
      %v3808 = vld [vmem:[%s3190 + $0xd8] sm:$0xff]
      %v3809 = vld [vmem:[%s3190 + $0xe0] sm:$0xff]
      %v3810 = vld [vmem:[%s3190 + $0xe8] sm:$0xff]
      %v3811 = vld [vmem:[%s3190 + $0xf0] sm:$0xff]
      %v3812 = vmul.f32 %v3469, %v3808
      %v3813 = vmul.f32 %v3468, %v3809
      %v3814 = vmul.f32 %v3471, %v3810
      %v3815 = vmul.f32 %v3470, %v3811
      %v3816 = vadd.f32 %v3804, %v3812
      %v3817 = vadd.f32 %v3805, %v3813
      %v3818 = vadd.f32 %v3806, %v3814
      %v3819 = vadd.f32 %v3807, %v3815
      %v3820 = vld [vmem:[%s3272 + $0xd8] sm:$0xff]
      %v3821 = vld [vmem:[%s3272 + $0xe0] sm:$0xff]
      %v3822 = vld [vmem:[%s3272 + $0xe8] sm:$0xff]
      %v3823 = vld [vmem:[%s3272 + $0xf0] sm:$0xff]
      %v3824 = vmul.f32 %v3489, %v3820
      %v3825 = vmul.f32 %v3488, %v3821
      %v3826 = vmul.f32 %v3491, %v3822
      %v3827 = vmul.f32 %v3490, %v3823
      %v3828 = vadd.f32 %v3816, %v3824
      %v3829 = vadd.f32 %v3817, %v3825
      %v3830 = vadd.f32 %v3818, %v3826
      %v3831 = vadd.f32 %v3819, %v3827
      %v3832 = vld [vmem:[%s3354 + $0xd8] sm:$0xff]
      %v3833 = vld [vmem:[%s3354 + $0xe0] sm:$0xff]
      %v3834 = vld [vmem:[%s3354 + $0xe8] sm:$0xff]
      %v3835 = vld [vmem:[%s3354 + $0xf0] sm:$0xff]
      %v3836 = vmul.f32 %v3509, %v3832
      %v3837 = vmul.f32 %v3508, %v3833
      %v3838 = vmul.f32 %v3511, %v3834
      %v3839 = vmul.f32 %v3510, %v3835
      %v3840 = vadd.f32 %v3828, %v3836
      %v3841 = vadd.f32 %v3829, %v3837
      %v3842 = vadd.f32 %v3830, %v3838
      %v3843 = vadd.f32 %v3831, %v3839
      %3844 = vst.msk [vmem:[#allocation2 + $0xd8] sm:$0xff] %vm3436, %v3840
      %3845 = vst.msk [vmem:[#allocation2 + $0xe0] sm:$0xff] %vm3436, %v3841
      %3846 = vst.msk [vmem:[#allocation2 + $0xe8] sm:$0xff] %vm3436, %v3842
      %3847 = vst.msk [vmem:[#allocation2 + $0xf0] sm:$0xff] %vm3436, %v3843
      %v3848 = vrot.slane %v826, 1
      %v3849 = vld [vmem:[%s2 + $0xf8] sm:$0xff]
      %v3850 = vmul.f32 %v3848, %v3849
      %v3851 = vadd.f32 %v826, %v3850
      %v3852 = vrot.slane %v826, 2
      %v3853 = vld [vmem:[%s1029 + $0xf8] sm:$0xff]
      %v3854 = vmul.f32 %v3852, %v3853
      %v3855 = vadd.f32 %v3851, %v3854
      %v3856 = vrot.slane %v826, 3
      %v3857 = vld [vmem:[%s1166 + $0xf8] sm:$0xff]
      %v3858 = vmul.f32 %v3856, %v3857
      %v3859 = vadd.f32 %v3855, %v3858
      %v3860 = vld [vmem:[%s1303 + $0xf8] sm:$0xff]
      %v3861 = vmul.f32 %v3856, %v3860
      %v3862 = vadd.f32 %v3859, %v3861
      %v3863 = vrot.slane %v826, 4
      %v3864 = vld [vmem:[%s1440 + $0xf8] sm:$0xff]
      %v3865 = vmul.f32 %v3863, %v3864
      %v3866 = vadd.f32 %v3862, %v3865
      %v3867 = vrot.slane %v826, 5
      %v3868 = vld [vmem:[%s1522 + $0xf8] sm:$0xff]
      %v3869 = vmul.f32 %v3867, %v3868
      %v3870 = vadd.f32 %v3866, %v3869
      %v3871 = vld [vmem:[%s1659 + $0xf8] sm:$0xff]
      %v3872 = vmul.f32 %v3867, %v3871
      %v3873 = vadd.f32 %v3870, %v3872
      %v3874 = vrot.slane %v826, 6
      %v3875 = vld [vmem:[%s1796 + $0xf8] sm:$0xff]
      %v3876 = vmul.f32 %v3874, %v3875
      %v3877 = vadd.f32 %v3873, %v3876
      %v3878 = vrot.slane %v826, 7
      %v3879 = vld [vmem:[%s1878 + $0xf8] sm:$0xff]
      %v3880 = vmul.f32 %v3878, %v3879
      %v3881 = vadd.f32 %v3877, %v3880
      %v3882 = vld [vmem:[%s1960 + $0xf8] sm:$0xff]
      %v3883 = vmul.f32 %v3867, %v3882
      %v3884 = vadd.f32 %v3881, %v3883
      %v3885 = vld [vmem:[%s2042 + $0xf8] sm:$0xff]
      %v3886 = vmul.f32 %v3874, %v3885
      %v3887 = vadd.f32 %v3884, %v3886
      %v3888 = vld [vmem:[%s2124 + $0xf8] sm:$0xff]
      %v3889 = vmul.f32 %v3878, %v3888
      %v3890 = vadd.f32 %v3887, %v3889
      %v3891 = vld [vmem:[%s2206 + $0xf8] sm:$0xff]
      %v3892 = vmul.f32 %v3878, %v3891
      %v3893 = vadd.f32 %v3890, %v3892
      %v3894 = vld [vmem:[%s2288 + $0xf8] sm:$0xff]
      %v3895 = vmul.f32 %v826, %v3894
      %v3896 = vadd.f32 %v3893, %v3895
      %v3897 = vld [vmem:[%s2370 + $0xf8] sm:$0xff]
      %v3898 = vmul.f32 %v3848, %v3897
      %v3899 = vadd.f32 %v3896, %v3898
      %v3900 = vld [vmem:[%s2452 + $0xf8] sm:$0xff]
      %v3901 = vmul.f32 %v3848, %v3900
      %v3902 = vadd.f32 %v3899, %v3901
      %v3903 = vld [vmem:[%s2534 + $0xf8] sm:$0xff]
      %v3904 = vmul.f32 %v3852, %v3903
      %v3905 = vadd.f32 %v3902, %v3904
      %v3906 = vld [vmem:[%s2616 + $0xf8] sm:$0xff]
      %v3907 = vmul.f32 %v3856, %v3906
      %v3908 = vadd.f32 %v3905, %v3907
      %v3909 = vld [vmem:[%s2698 + $0xf8] sm:$0xff]
      %v3910 = vmul.f32 %v3848, %v3909
      %v3911 = vadd.f32 %v3908, %v3910
      %v3912 = vld [vmem:[%s2780 + $0xf8] sm:$0xff]
      %v3913 = vmul.f32 %v3852, %v3912
      %v3914 = vadd.f32 %v3911, %v3913
      %v3915 = vld [vmem:[%s2862 + $0xf8] sm:$0xff]
      %v3916 = vmul.f32 %v3856, %v3915
      %v3917 = vadd.f32 %v3914, %v3916
      %v3918 = vld [vmem:[%s2944 + $0xf8] sm:$0xff]
      %v3919 = vmul.f32 %v3856, %v3918
      %v3920 = vadd.f32 %v3917, %v3919
      %v3921 = vld [vmem:[%s3026 + $0xf8] sm:$0xff]
      %v3922 = vmul.f32 %v3863, %v3921
      %v3923 = vadd.f32 %v3920, %v3922
      %v3924 = vld [vmem:[%s3108 + $0xf8] sm:$0xff]
      %v3925 = vmul.f32 %v3867, %v3924
      %v3926 = vadd.f32 %v3923, %v3925
      %v3927 = vld [vmem:[%s3190 + $0xf8] sm:$0xff]
      %v3928 = vmul.f32 %v3867, %v3927
      %v3929 = vadd.f32 %v3926, %v3928
      %v3930 = vld [vmem:[%s3272 + $0xf8] sm:$0xff]
      %v3931 = vmul.f32 %v3874, %v3930
      %v3932 = vadd.f32 %v3929, %v3931
      %v3933 = vld [vmem:[%s3354 + $0xf8] sm:$0xff]
      %v3934 = vmul.f32 %v3878, %v3933
      %v3935 = vadd.f32 %v3932, %v3934
      %3936 = vst.msk [vmem:[#allocation2 + $0xf8] sm:$0xff] %vm3436, %v3935
      %v3937 = vld [vmem:[%s2288 + $0x100] sm:$0xff]
      %v3938 = vmul.f32 %v831, %v3937
      %v3939 = vadd.f32 %v831, %v3938
      %3940 = vst.msk [vmem:[#allocation2 + $0x100] sm:$0xff] %vm3436, %v3939
      %v3941 = vld [vmem:[#allocation2] sm:$0xff]
      %v3942 = vld [vmem:[#allocation2 + $0x8] sm:$0xff]
      %v3943 = vld [vmem:[#allocation2 + $0x10] sm:$0xff]
      %v3944 = vld [vmem:[#allocation2 + $0x18] sm:$0xff]
      %v3945 = vld [vmem:[#allocation2 + $0x20] sm:$0xff]
      %v3946 = vld [vmem:[#allocation2 + $0x28] sm:$0xff]
      %v3947 = vld [vmem:[#allocation2 + $0x30] sm:$0xff]
      %v3948 = vld [vmem:[#allocation2 + $0x38] sm:$0xff]
      %v3949 = vld [vmem:[#allocation2 + $0x40] sm:$0xff]
      %v3950 = vld [vmem:[#allocation2 + $0x48] sm:$0xff]
      %v3951 = vld [vmem:[#allocation2 + $0x50] sm:$0xff]
      %v3952 = vld [vmem:[#allocation2 + $0x58] sm:$0xff]
      %v3953 = vld [vmem:[#allocation2 + $0x60] sm:$0xff]
      %v3954 = vld [vmem:[#allocation2 + $0x68] sm:$0xff]
      %v3955 = vld [vmem:[#allocation2 + $0x70] sm:$0xff]
      %v3956 = vld [vmem:[#allocation2 + $0x78] sm:$0xff]
      %v3957 = vld [vmem:[#allocation2 + $0x80] sm:$0xff]
      %v3958 = vld [vmem:[#allocation2 + $0x88] sm:$0xff]
      %v3959 = vld [vmem:[#allocation2 + $0x90] sm:$0xff]
      %v3960 = vld [vmem:[#allocation2 + $0x98] sm:$0xff]
      %v3961 = vld [vmem:[#allocation2 + $0xa0] sm:$0xff]
      %v3962 = vld [vmem:[#allocation2 + $0xa8] sm:$0xff]
      %v3963 = vld [vmem:[#allocation2 + $0xb0] sm:$0xff]
      %v3964 = vld [vmem:[#allocation2 + $0xb8] sm:$0xff]
      %v3965 = vld [vmem:[#allocation2 + $0xc0] sm:$0xff]
      %v3966 = vld [vmem:[#allocation2 + $0xc8] sm:$0xff]
      %v3967 = vld [vmem:[#allocation2 + $0xd0] sm:$0xff]
      %v3968 = vld [vmem:[#allocation2 + $0xd8] sm:$0xff]
      %v3969 = vld [vmem:[#allocation2 + $0xe0] sm:$0xff]
      %v3970 = vld [vmem:[#allocation2 + $0xe8] sm:$0xff]
      %v3971 = vld [vmem:[#allocation2 + $0xf0] sm:$0xff]
      %v3972 = vld [vmem:[#allocation2 + $0xf8] sm:$0xff]
      %v3973 = vld [vmem:[#allocation2 + $0x100] sm:$0xff]
      %v3974 = vsel %vm3436, %v3941, 0.0
      %3975 = vadd.xlane.f32.xlu0 %v3974
      %v3976 = vpop.xlane.xlu0 %3975
      %v3977 = vsel %vm3436, %v3942, 0.0
      %3978 = vadd.xlane.f32.xlu0 %v3977
      %v3979 = vpop.xlane.xlu0 %3978
      %v3980 = vsel %vm3436, %v3943, 0.0
      %3981 = vadd.xlane.f32.xlu0 %v3980
      %v3982 = vpop.xlane.xlu0 %3981
      %v3983 = vsel %vm3436, %v3944, 0.0
      %3984 = vadd.xlane.f32.xlu0 %v3983
      %v3985 = vpop.xlane.xlu0 %3984
      %v3986 = vsel %vm3436, %v3945, 0.0
      %3987 = vadd.xlane.f32.xlu0 %v3986
      %v3988 = vpop.xlane.xlu0 %3987
      %v3989 = vsel %vm3436, %v3946, 0.0
      %3990 = vadd.xlane.f32.xlu0 %v3989
      %v3991 = vpop.xlane.xlu0 %3990
      %v3992 = vsel %vm3436, %v3947, 0.0
      %3993 = vadd.xlane.f32.xlu0 %v3992
      %v3994 = vpop.xlane.xlu0 %3993
      %v3995 = vsel %vm3436, %v3948, 0.0
      %3996 = vadd.xlane.f32.xlu0 %v3995
      %v3997 = vpop.xlane.xlu0 %3996
      %v3998 = vsel %vm3436, %v3949, 0.0
      %3999 = vadd.xlane.f32.xlu0 %v3998
      %v4000 = vpop.xlane.xlu0 %3999
      %v4001 = vsel %vm3436, %v3950, 0.0
      %4002 = vadd.xlane.f32.xlu0 %v4001
      %v4003 = vpop.xlane.xlu0 %4002
      %v4004 = vsel %vm3436, %v3951, 0.0
      %4005 = vadd.xlane.f32.xlu0 %v4004
      %v4006 = vpop.xlane.xlu0 %4005
      %v4007 = vsel %vm3436, %v3952, 0.0
      %4008 = vadd.xlane.f32.xlu0 %v4007
      %v4009 = vpop.xlane.xlu0 %4008
      %v4010 = vsel %vm3436, %v3953, 0.0
      %4011 = vadd.xlane.f32.xlu0 %v4010
      %v4012 = vpop.xlane.xlu0 %4011
      %v4013 = vsel %vm3436, %v3954, 0.0
      %4014 = vadd.xlane.f32.xlu0 %v4013
      %v4015 = vpop.xlane.xlu0 %4014
      %v4016 = vsel %vm3436, %v3955, 0.0
      %4017 = vadd.xlane.f32.xlu0 %v4016
      %v4018 = vpop.xlane.xlu0 %4017
      %v4019 = vsel %vm3436, %v3956, 0.0
      %4020 = vadd.xlane.f32.xlu0 %v4019
      %v4021 = vpop.xlane.xlu0 %4020
      %v4022 = vsel %vm3436, %v3957, 0.0
      %4023 = vadd.xlane.f32.xlu0 %v4022
      %v4024 = vpop.xlane.xlu0 %4023
      %v4025 = vsel %vm3436, %v3958, 0.0
      %4026 = vadd.xlane.f32.xlu0 %v4025
      %v4027 = vpop.xlane.xlu0 %4026
      %v4028 = vsel %vm3436, %v3959, 0.0
      %4029 = vadd.xlane.f32.xlu0 %v4028
      %v4030 = vpop.xlane.xlu0 %4029
      %v4031 = vsel %vm3436, %v3960, 0.0
      %4032 = vadd.xlane.f32.xlu0 %v4031
      %v4033 = vpop.xlane.xlu0 %4032
      %v4034 = vsel %vm3436, %v3961, 0.0
      %4035 = vadd.xlane.f32.xlu0 %v4034
      %v4036 = vpop.xlane.xlu0 %4035
      %v4037 = vsel %vm3436, %v3962, 0.0
      %4038 = vadd.xlane.f32.xlu0 %v4037
      %v4039 = vpop.xlane.xlu0 %4038
      %v4040 = vsel %vm3436, %v3963, 0.0
      %4041 = vadd.xlane.f32.xlu0 %v4040
      %v4042 = vpop.xlane.xlu0 %4041
      %v4043 = vsel %vm3436, %v3964, 0.0
      %4044 = vadd.xlane.f32.xlu0 %v4043
      %v4045 = vpop.xlane.xlu0 %4044
      %v4046 = vsel %vm3436, %v3965, 0.0
      %4047 = vadd.xlane.f32.xlu0 %v4046
      %v4048 = vpop.xlane.xlu0 %4047
      %v4049 = vsel %vm3436, %v3966, 0.0
      %4050 = vadd.xlane.f32.xlu0 %v4049
      %v4051 = vpop.xlane.xlu0 %4050
      %v4052 = vsel %vm3436, %v3967, 0.0
      %4053 = vadd.xlane.f32.xlu0 %v4052
      %v4054 = vpop.xlane.xlu0 %4053
      %v4055 = vsel %vm3436, %v3968, 0.0
      %4056 = vadd.xlane.f32.xlu0 %v4055
      %v4057 = vpop.xlane.xlu0 %4056
      %v4058 = vsel %vm3436, %v3969, 0.0
      %4059 = vadd.xlane.f32.xlu0 %v4058
      %v4060 = vpop.xlane.xlu0 %4059
      %v4061 = vsel %vm3436, %v3970, 0.0
      %4062 = vadd.xlane.f32.xlu0 %v4061
      %v4063 = vpop.xlane.xlu0 %4062
      %v4064 = vsel %vm3436, %v3971, 0.0
      %4065 = vadd.xlane.f32.xlu0 %v4064
      %v4066 = vpop.xlane.xlu0 %4065
      %v4067 = vsel %vm3436, %v3972, 0.0
      %4068 = vadd.xlane.f32.xlu0 %v4067
      %v4069 = vpop.xlane.xlu0 %4068
      %v4070 = vsel %vm3436, %v3973, 0.0
      %4071 = vadd.xlane.f32.xlu0 %v4070
      %v4072 = vpop.xlane.xlu0 %4071
      %v4073 = vrcp.pop 64.0
      %v4074 = vmul.f32 %v3976, %v4073
      %v4075 = vmul.f32 %v3979, %v4073
      %v4076 = vmul.f32 %v3982, %v4073
      %v4077 = vmul.f32 %v3985, %v4073
      %v4078 = vmul.f32 %v3988, %v4073
      %v4079 = vmul.f32 %v3991, %v4073
      %v4080 = vmul.f32 %v3994, %v4073
      %v4081 = vmul.f32 %v3997, %v4073
      %v4082 = vmul.f32 %v4000, %v4073
      %v4083 = vmul.f32 %v4003, %v4073
      %v4084 = vmul.f32 %v4006, %v4073
      %v4085 = vmul.f32 %v4009, %v4073
      %v4086 = vmul.f32 %v4012, %v4073
      %v4087 = vmul.f32 %v4015, %v4073
      %v4088 = vmul.f32 %v4018, %v4073
      %v4089 = vmul.f32 %v4021, %v4073
      %v4090 = vmul.f32 %v4024, %v4073
      %v4091 = vmul.f32 %v4027, %v4073
      %v4092 = vmul.f32 %v4030, %v4073
      %v4093 = vmul.f32 %v4033, %v4073
      %v4094 = vmul.f32 %v4036, %v4073
      %v4095 = vmul.f32 %v4039, %v4073
      %v4096 = vmul.f32 %v4042, %v4073
      %v4097 = vmul.f32 %v4045, %v4073
      %v4098 = vmul.f32 %v4048, %v4073
      %v4099 = vmul.f32 %v4051, %v4073
      %v4100 = vmul.f32 %v4054, %v4073
      %v4101 = vmul.f32 %v4057, %v4073
      %v4102 = vmul.f32 %v4060, %v4073
      %v4103 = vmul.f32 %v4063, %v4073
      %v4104 = vmul.f32 %v4066, %v4073
      %v4105 = vmul.f32 %v4069, %v4073
      %v4106 = vmul.f32 %v4072, %v4073
      %v4107 = vsub.f32 %v3941, %v4074
      %v4108 = vsub.f32 %v3942, %v4075
      %v4109 = vsub.f32 %v3943, %v4076
      %v4110 = vsub.f32 %v3944, %v4077
      %v4111 = vsub.f32 %v3945, %v4078
      %v4112 = vsub.f32 %v3946, %v4079
      %v4113 = vsub.f32 %v3947, %v4080
      %v4114 = vsub.f32 %v3948, %v4081
      %v4115 = vsub.f32 %v3949, %v4082
      %v4116 = vsub.f32 %v3950, %v4083
      %v4117 = vsub.f32 %v3951, %v4084
      %v4118 = vsub.f32 %v3952, %v4085
      %v4119 = vsub.f32 %v3953, %v4086
      %v4120 = vsub.f32 %v3954, %v4087
      %v4121 = vsub.f32 %v3955, %v4088
      %v4122 = vsub.f32 %v3956, %v4089
      %v4123 = vsub.f32 %v3957, %v4090
      %v4124 = vsub.f32 %v3958, %v4091
      %v4125 = vsub.f32 %v3959, %v4092
      %v4126 = vsub.f32 %v3960, %v4093
      %v4127 = vsub.f32 %v3961, %v4094
      %v4128 = vsub.f32 %v3962, %v4095
      %v4129 = vsub.f32 %v3963, %v4096
      %v4130 = vsub.f32 %v3964, %v4097
      %v4131 = vsub.f32 %v3965, %v4098
      %v4132 = vsub.f32 %v3966, %v4099
      %v4133 = vsub.f32 %v3967, %v4100
      %v4134 = vsub.f32 %v3968, %v4101
      %v4135 = vsub.f32 %v3969, %v4102
      %v4136 = vsub.f32 %v3970, %v4103
      %v4137 = vsub.f32 %v3971, %v4104
      %v4138 = vsub.f32 %v3972, %v4105
      %v4139 = vsub.f32 %v3973, %v4106
      %v4140 = vmul.f32 %v4107, %v4107
      %v4141 = vmul.f32 %v4108, %v4108
      %v4142 = vmul.f32 %v4109, %v4109
      %v4143 = vmul.f32 %v4110, %v4110
      %v4144 = vmul.f32 %v4111, %v4111
      %v4145 = vmul.f32 %v4112, %v4112
      %v4146 = vmul.f32 %v4113, %v4113
      %v4147 = vmul.f32 %v4114, %v4114
      %v4148 = vmul.f32 %v4115, %v4115
      %v4149 = vmul.f32 %v4116, %v4116
      %v4150 = vmul.f32 %v4117, %v4117
      %v4151 = vmul.f32 %v4118, %v4118
      %v4152 = vmul.f32 %v4119, %v4119
      %v4153 = vmul.f32 %v4120, %v4120
      %v4154 = vmul.f32 %v4121, %v4121
      %v4155 = vmul.f32 %v4122, %v4122
      %v4156 = vmul.f32 %v4123, %v4123
      %v4157 = vmul.f32 %v4124, %v4124
      %v4158 = vmul.f32 %v4125, %v4125
      %v4159 = vmul.f32 %v4126, %v4126
      %v4160 = vmul.f32 %v4127, %v4127
      %v4161 = vmul.f32 %v4128, %v4128
      %v4162 = vmul.f32 %v4129, %v4129
      %v4163 = vmul.f32 %v4130, %v4130
      %v4164 = vmul.f32 %v4131, %v4131
      %v4165 = vmul.f32 %v4132, %v4132
      %v4166 = vmul.f32 %v4133, %v4133
      %v4167 = vmul.f32 %v4134, %v4134
      %v4168 = vmul.f32 %v4135, %v4135
      %v4169 = vmul.f32 %v4136, %v4136
      %v4170 = vmul.f32 %v4137, %v4137
      %v4171 = vmul.f32 %v4138, %v4138
      %v4172 = vmul.f32 %v4139, %v4139
      %v4173 = vsel %vm3436, %v4140, 0.0
      %4174 = vadd.xlane.f32.xlu0 %v4173
      %v4175 = vpop.xlane.xlu0 %4174
      %v4176 = vsel %vm3436, %v4141, 0.0
      %4177 = vadd.xlane.f32.xlu0 %v4176
      %v4178 = vpop.xlane.xlu0 %4177
      %v4179 = vsel %vm3436, %v4142, 0.0
      %4180 = vadd.xlane.f32.xlu0 %v4179
      %v4181 = vpop.xlane.xlu0 %4180
      %v4182 = vsel %vm3436, %v4143, 0.0
      %4183 = vadd.xlane.f32.xlu0 %v4182
      %v4184 = vpop.xlane.xlu0 %4183
      %v4185 = vsel %vm3436, %v4144, 0.0
      %4186 = vadd.xlane.f32.xlu0 %v4185
      %v4187 = vpop.xlane.xlu0 %4186
      %v4188 = vsel %vm3436, %v4145, 0.0
      %4189 = vadd.xlane.f32.xlu0 %v4188
      %v4190 = vpop.xlane.xlu0 %4189
      %v4191 = vsel %vm3436, %v4146, 0.0
      %4192 = vadd.xlane.f32.xlu0 %v4191
      %v4193 = vpop.xlane.xlu0 %4192
      %v4194 = vsel %vm3436, %v4147, 0.0
      %4195 = vadd.xlane.f32.xlu0 %v4194
      %v4196 = vpop.xlane.xlu0 %4195
      %v4197 = vsel %vm3436, %v4148, 0.0
      %4198 = vadd.xlane.f32.xlu0 %v4197
      %v4199 = vpop.xlane.xlu0 %4198
      %v4200 = vsel %vm3436, %v4149, 0.0
      %4201 = vadd.xlane.f32.xlu0 %v4200
      %v4202 = vpop.xlane.xlu0 %4201
      %v4203 = vsel %vm3436, %v4150, 0.0
      %4204 = vadd.xlane.f32.xlu0 %v4203
      %v4205 = vpop.xlane.xlu0 %4204
      %v4206 = vsel %vm3436, %v4151, 0.0
      %4207 = vadd.xlane.f32.xlu0 %v4206
      %v4208 = vpop.xlane.xlu0 %4207
      %v4209 = vsel %vm3436, %v4152, 0.0
      %4210 = vadd.xlane.f32.xlu0 %v4209
      %v4211 = vpop.xlane.xlu0 %4210
      %v4212 = vsel %vm3436, %v4153, 0.0
      %4213 = vadd.xlane.f32.xlu0 %v4212
      %v4214 = vpop.xlane.xlu0 %4213
      %v4215 = vsel %vm3436, %v4154, 0.0
      %4216 = vadd.xlane.f32.xlu0 %v4215
      %v4217 = vpop.xlane.xlu0 %4216
      %v4218 = vsel %vm3436, %v4155, 0.0
      %4219 = vadd.xlane.f32.xlu0 %v4218
      %v4220 = vpop.xlane.xlu0 %4219
      %v4221 = vsel %vm3436, %v4156, 0.0
      %4222 = vadd.xlane.f32.xlu0 %v4221
      %v4223 = vpop.xlane.xlu0 %4222
      %v4224 = vsel %vm3436, %v4157, 0.0
      %4225 = vadd.xlane.f32.xlu0 %v4224
      %v4226 = vpop.xlane.xlu0 %4225
      %v4227 = vsel %vm3436, %v4158, 0.0
      %4228 = vadd.xlane.f32.xlu0 %v4227
      %v4229 = vpop.xlane.xlu0 %4228
      %v4230 = vsel %vm3436, %v4159, 0.0
      %4231 = vadd.xlane.f32.xlu0 %v4230
      %v4232 = vpop.xlane.xlu0 %4231
      %v4233 = vsel %vm3436, %v4160, 0.0
      %4234 = vadd.xlane.f32.xlu0 %v4233
      %v4235 = vpop.xlane.xlu0 %4234
      %v4236 = vsel %vm3436, %v4161, 0.0
      %4237 = vadd.xlane.f32.xlu0 %v4236
      %v4238 = vpop.xlane.xlu0 %4237
      %v4239 = vsel %vm3436, %v4162, 0.0
      %4240 = vadd.xlane.f32.xlu0 %v4239
      %v4241 = vpop.xlane.xlu0 %4240
      %v4242 = vsel %vm3436, %v4163, 0.0
      %4243 = vadd.xlane.f32.xlu0 %v4242
      %v4244 = vpop.xlane.xlu0 %4243
      %v4245 = vsel %vm3436, %v4164, 0.0
      %4246 = vadd.xlane.f32.xlu0 %v4245
      %v4247 = vpop.xlane.xlu0 %4246
      %v4248 = vsel %vm3436, %v4165, 0.0
      %4249 = vadd.xlane.f32.xlu0 %v4248
      %v4250 = vpop.xlane.xlu0 %4249
      %v4251 = vsel %vm3436, %v4166, 0.0
      %4252 = vadd.xlane.f32.xlu0 %v4251
      %v4253 = vpop.xlane.xlu0 %4252
      %v4254 = vsel %vm3436, %v4167, 0.0
      %4255 = vadd.xlane.f32.xlu0 %v4254
      %v4256 = vpop.xlane.xlu0 %4255
      %v4257 = vsel %vm3436, %v4168, 0.0
      %4258 = vadd.xlane.f32.xlu0 %v4257
      %v4259 = vpop.xlane.xlu0 %4258
      %v4260 = vsel %vm3436, %v4169, 0.0
      %4261 = vadd.xlane.f32.xlu0 %v4260
      %v4262 = vpop.xlane.xlu0 %4261
      %v4263 = vsel %vm3436, %v4170, 0.0
      %4264 = vadd.xlane.f32.xlu0 %v4263
      %v4265 = vpop.xlane.xlu0 %4264
      %v4266 = vsel %vm3436, %v4171, 0.0
      %4267 = vadd.xlane.f32.xlu0 %v4266
      %v4268 = vpop.xlane.xlu0 %4267
      %v4269 = vsel %vm3436, %v4172, 0.0
      %4270 = vadd.xlane.f32.xlu0 %v4269
      %v4271 = vpop.xlane.xlu0 %4270
      %v4272 = vmul.f32 %v4175, %v4073
      %v4273 = vmul.f32 %v4178, %v4073
      %v4274 = vmul.f32 %v4181, %v4073
      %v4275 = vmul.f32 %v4184, %v4073
      %v4276 = vmul.f32 %v4187, %v4073
      %v4277 = vmul.f32 %v4190, %v4073
      %v4278 = vmul.f32 %v4193, %v4073
      %v4279 = vmul.f32 %v4196, %v4073
      %v4280 = vmul.f32 %v4199, %v4073
      %v4281 = vmul.f32 %v4202, %v4073
      %v4282 = vmul.f32 %v4205, %v4073
      %v4283 = vmul.f32 %v4208, %v4073
      %v4284 = vmul.f32 %v4211, %v4073
      %v4285 = vmul.f32 %v4214, %v4073
      %v4286 = vmul.f32 %v4217, %v4073
      %v4287 = vmul.f32 %v4220, %v4073
      %v4288 = vmul.f32 %v4223, %v4073
      %v4289 = vmul.f32 %v4226, %v4073
      %v4290 = vmul.f32 %v4229, %v4073
      %v4291 = vmul.f32 %v4232, %v4073
      %v4292 = vmul.f32 %v4235, %v4073
      %v4293 = vmul.f32 %v4238, %v4073
      %v4294 = vmul.f32 %v4241, %v4073
      %v4295 = vmul.f32 %v4244, %v4073
      %v4296 = vmul.f32 %v4247, %v4073
      %v4297 = vmul.f32 %v4250, %v4073
      %v4298 = vmul.f32 %v4253, %v4073
      %v4299 = vmul.f32 %v4256, %v4073
      %v4300 = vmul.f32 %v4259, %v4073
      %v4301 = vmul.f32 %v4262, %v4073
      %v4302 = vmul.f32 %v4265, %v4073
      %v4303 = vmul.f32 %v4268, %v4073
      %v4304 = vmul.f32 %v4271, %v4073
      %v4305 = vadd.f32 %v4272, 1e-05
      %v4306 = vadd.f32 %v4273, 1e-05
      %v4307 = vadd.f32 %v4274, 1e-05
      %v4308 = vadd.f32 %v4275, 1e-05
      %v4309 = vadd.f32 %v4276, 1e-05
      %v4310 = vadd.f32 %v4277, 1e-05
      %v4311 = vadd.f32 %v4278, 1e-05
      %v4312 = vadd.f32 %v4279, 1e-05
      %v4313 = vadd.f32 %v4280, 1e-05
      %v4314 = vadd.f32 %v4281, 1e-05
      %v4315 = vadd.f32 %v4282, 1e-05
      %v4316 = vadd.f32 %v4283, 1e-05
      %v4317 = vadd.f32 %v4284, 1e-05
      %v4318 = vadd.f32 %v4285, 1e-05
      %v4319 = vadd.f32 %v4286, 1e-05
      %v4320 = vadd.f32 %v4287, 1e-05
      %v4321 = vadd.f32 %v4288, 1e-05
      %v4322 = vadd.f32 %v4289, 1e-05
      %v4323 = vadd.f32 %v4290, 1e-05
      %v4324 = vadd.f32 %v4291, 1e-05
      %v4325 = vadd.f32 %v4292, 1e-05
      %v4326 = vadd.f32 %v4293, 1e-05
      %v4327 = vadd.f32 %v4294, 1e-05
      %v4328 = vadd.f32 %v4295, 1e-05
      %v4329 = vadd.f32 %v4296, 1e-05
      %v4330 = vadd.f32 %v4297, 1e-05
      %v4331 = vadd.f32 %v4298, 1e-05
      %v4332 = vadd.f32 %v4299, 1e-05
      %v4333 = vadd.f32 %v4300, 1e-05
      %v4334 = vadd.f32 %v4301, 1e-05
      %v4335 = vadd.f32 %v4302, 1e-05
      %v4336 = vadd.f32 %v4303, 1e-05
      %v4337 = vadd.f32 %v4304, 1e-05
      %v4338 = vrsqrt.pop %v4305
      %v4339 = vrsqrt.pop %v4306
      %v4340 = vrsqrt.pop %v4307
      %v4341 = vrsqrt.pop %v4308
      %v4342 = vrsqrt.pop %v4309
      %v4343 = vrsqrt.pop %v4310
      %v4344 = vrsqrt.pop %v4311
      %v4345 = vrsqrt.pop %v4312
      %v4346 = vrsqrt.pop %v4313
      %v4347 = vrsqrt.pop %v4314
      %v4348 = vrsqrt.pop %v4315
      %v4349 = vrsqrt.pop %v4316
      %v4350 = vrsqrt.pop %v4317
      %v4351 = vrsqrt.pop %v4318
      %v4352 = vrsqrt.pop %v4319
      %v4353 = vrsqrt.pop %v4320
      %v4354 = vrsqrt.pop %v4321
      %v4355 = vrsqrt.pop %v4322
      %v4356 = vrsqrt.pop %v4323
      %v4357 = vrsqrt.pop %v4324
      %v4358 = vrsqrt.pop %v4325
      %v4359 = vrsqrt.pop %v4326
      %v4360 = vrsqrt.pop %v4327
      %v4361 = vrsqrt.pop %v4328
      %v4362 = vrsqrt.pop %v4329
      %v4363 = vrsqrt.pop %v4330
      %v4364 = vrsqrt.pop %v4331
      %v4365 = vrsqrt.pop %v4332
      %v4366 = vrsqrt.pop %v4333
      %v4367 = vrsqrt.pop %v4334
      %v4368 = vrsqrt.pop %v4335
      %v4369 = vrsqrt.pop %v4336
      %v4370 = vrsqrt.pop %v4337
      %v4371 = vmul.f32 %v4107, %v4338
      %v4372 = vmul.f32 %v4108, %v4339
      %v4373 = vmul.f32 %v4109, %v4340
      %v4374 = vmul.f32 %v4110, %v4341
      %v4375 = vmul.f32 %v4111, %v4342
      %v4376 = vmul.f32 %v4112, %v4343
      %v4377 = vmul.f32 %v4113, %v4344
      %v4378 = vmul.f32 %v4114, %v4345
      %v4379 = vmul.f32 %v4115, %v4346
      %v4380 = vmul.f32 %v4116, %v4347
      %v4381 = vmul.f32 %v4117, %v4348
      %v4382 = vmul.f32 %v4118, %v4349
      %v4383 = vmul.f32 %v4119, %v4350
      %v4384 = vmul.f32 %v4120, %v4351
      %v4385 = vmul.f32 %v4121, %v4352
      %v4386 = vmul.f32 %v4122, %v4353
      %v4387 = vmul.f32 %v4123, %v4354
      %v4388 = vmul.f32 %v4124, %v4355
      %v4389 = vmul.f32 %v4125, %v4356
      %v4390 = vmul.f32 %v4126, %v4357
      %v4391 = vmul.f32 %v4127, %v4358
      %v4392 = vmul.f32 %v4128, %v4359
      %v4393 = vmul.f32 %v4129, %v4360
      %v4394 = vmul.f32 %v4130, %v4361
      %v4395 = vmul.f32 %v4131, %v4362
      %v4396 = vmul.f32 %v4132, %v4363
      %v4397 = vmul.f32 %v4133, %v4364
      %v4398 = vmul.f32 %v4134, %v4365
      %v4399 = vmul.f32 %v4135, %v4366
      %v4400 = vmul.f32 %v4136, %v4367
      %v4401 = vmul.f32 %v4137, %v4368
      %v4402 = vmul.f32 %v4138, %v4369
      %v4403 = vmul.f32 %v4139, %v4370
      %v4404 = vld [vmem:[%s4] sm:$0x1]
      %v4406 = vlaneseq
      %v4407 = vshrl.u32 %v4406, 7
      %v4408 = vsub.s32 0, %v4407
      %v4409 = vrot.slane %v4404, %v4408
      %v4411 = vmul.f32 %v4371, %v4409
      %v4412 = vmul.f32 %v4372, %v4409
      %v4413 = vmul.f32 %v4373, %v4409
      %v4414 = vmul.f32 %v4374, %v4409
      %v4415 = vmul.f32 %v4375, %v4409
      %v4416 = vmul.f32 %v4376, %v4409
      %v4417 = vmul.f32 %v4377, %v4409
      %v4418 = vmul.f32 %v4378, %v4409
      %v4419 = vmul.f32 %v4379, %v4409
      %v4420 = vmul.f32 %v4380, %v4409
      %v4421 = vmul.f32 %v4381, %v4409
      %v4422 = vmul.f32 %v4382, %v4409
      %v4423 = vmul.f32 %v4383, %v4409
      %v4424 = vmul.f32 %v4384, %v4409
      %v4425 = vmul.f32 %v4385, %v4409
      %v4426 = vmul.f32 %v4386, %v4409
      %v4427 = vmul.f32 %v4387, %v4409
      %v4428 = vmul.f32 %v4388, %v4409
      %v4429 = vmul.f32 %v4389, %v4409
      %v4430 = vmul.f32 %v4390, %v4409
      %v4431 = vmul.f32 %v4391, %v4409
      %v4432 = vmul.f32 %v4392, %v4409
      %v4433 = vmul.f32 %v4393, %v4409
      %v4434 = vmul.f32 %v4394, %v4409
      %v4435 = vmul.f32 %v4395, %v4409
      %v4436 = vmul.f32 %v4396, %v4409
      %v4437 = vmul.f32 %v4397, %v4409
      %v4438 = vmul.f32 %v4398, %v4409
      %v4439 = vmul.f32 %v4399, %v4409
      %v4440 = vmul.f32 %v4400, %v4409
      %v4441 = vmul.f32 %v4401, %v4409
      %v4442 = vmul.f32 %v4402, %v4409
      %v4443 = vmul.f32 %v4403, %v4409
      %v4444 = vld [vmem:[%s5] sm:$0x1]
      %v4446 = vlaneseq
      %v4447 = vshrl.u32 %v4446, 7
      %v4448 = vsub.s32 0, %v4447
      %v4449 = vrot.slane %v4444, %v4448
      %v4451 = vadd.f32 %v4411, %v4449
      %v4452 = vadd.f32 %v4412, %v4449
      %v4453 = vadd.f32 %v4413, %v4449
      %v4454 = vadd.f32 %v4414, %v4449
      %v4455 = vadd.f32 %v4415, %v4449
      %v4456 = vadd.f32 %v4416, %v4449
      %v4457 = vadd.f32 %v4417, %v4449
      %v4458 = vadd.f32 %v4418, %v4449
      %v4459 = vadd.f32 %v4419, %v4449
      %v4460 = vadd.f32 %v4420, %v4449
      %v4461 = vadd.f32 %v4421, %v4449
      %v4462 = vadd.f32 %v4422, %v4449
      %v4463 = vadd.f32 %v4423, %v4449
      %v4464 = vadd.f32 %v4424, %v4449
      %v4465 = vadd.f32 %v4425, %v4449
      %v4466 = vadd.f32 %v4426, %v4449
      %v4467 = vadd.f32 %v4427, %v4449
      %v4468 = vadd.f32 %v4428, %v4449
      %v4469 = vadd.f32 %v4429, %v4449
      %v4470 = vadd.f32 %v4430, %v4449
      %v4471 = vadd.f32 %v4431, %v4449
      %v4472 = vadd.f32 %v4432, %v4449
      %v4473 = vadd.f32 %v4433, %v4449
      %v4474 = vadd.f32 %v4434, %v4449
      %v4475 = vadd.f32 %v4435, %v4449
      %v4476 = vadd.f32 %v4436, %v4449
      %v4477 = vadd.f32 %v4437, %v4449
      %v4478 = vadd.f32 %v4438, %v4449
      %v4479 = vadd.f32 %v4439, %v4449
      %v4480 = vadd.f32 %v4440, %v4449
      %v4481 = vadd.f32 %v4441, %v4449
      %v4482 = vadd.f32 %v4442, %v4449
      %v4483 = vadd.f32 %v4443, %v4449
      %v4484 = vpack.c.bf16 %v4452, %v4451
      %v4485 = vpack.c.bf16 %v4454, %v4453
      %v4486 = vpack.c.bf16 %v4456, %v4455
      %v4487 = vpack.c.bf16 %v4458, %v4457
      %v4488 = vpack.c.bf16 %v4460, %v4459
      %v4489 = vpack.c.bf16 %v4462, %v4461
      %v4490 = vpack.c.bf16 %v4464, %v4463
      %v4491 = vpack.c.bf16 %v4466, %v4465
      %v4492 = vpack.c.bf16 %v4468, %v4467
      %v4493 = vpack.c.bf16 %v4470, %v4469
      %v4494 = vpack.c.bf16 %v4472, %v4471
      %v4495 = vpack.c.bf16 %v4474, %v4473
      %v4496 = vpack.c.bf16 %v4476, %v4475
      %v4497 = vpack.c.bf16 %v4478, %v4477
      %v4498 = vpack.c.bf16 %v4480, %v4479
      %v4499 = vpack.c.bf16 %v4482, %v4481
      %v4500 = vpack.c.bf16 %v4483, %v4483
      %v4501 = vld [vmem:[%s6] sm:$0xf]
      %v4502 = vld [vmem:[%s6 + $0x4] sm:$0xf]
      %v4503 = vld [vmem:[%s6 + $0x8] sm:$0xf]
      %v4504 = vld [vmem:[%s6 + $0xc] sm:$0xf]
      %v4505 = vld [vmem:[%s6 + $0x10] sm:$0xf]
      %v4506 = vld [vmem:[%s6 + $0x14] sm:$0xf]
      %v4507 = vld [vmem:[%s6 + $0x18] sm:$0xf]
      %v4508 = vld [vmem:[%s6 + $0x1c] sm:$0xf]
      %v4517 = vunpack.c.l.b16 %v4501
      %v4518 = vunpack.c.l.b16 %v4502
      %v4519 = vunpack.c.l.b16 %v4503
      %v4520 = vunpack.c.l.b16 %v4504
      %v4521 = vunpack.c.l.b16 %v4505
      %v4522 = vunpack.c.l.b16 %v4506
      %v4523 = vunpack.c.l.b16 %v4507
      %v4524 = vunpack.c.l.b16 %v4508
      %v4525 = vpack.c.b16 %v4518, %v4517
      %v4526 = vpack.c.b16 %v4520, %v4519
      %v4527 = vpack.c.b16 %v4522, %v4521
      %v4528 = vpack.c.b16 %v4524, %v4523
      %v4534 = vsel %vm3436, %v415, 0
      %v4537 = vsel %vm3436, %v416, 0
      %v4540 = vsel %vm3436, %v417, 0
      %v4543 = vsel %vm3436, %v418, 0
      %v4546 = vsel %vm3436, %v419, 0
      %v4549 = vsel %vm3436, %v420, 0
      %v4552 = vsel %vm3436, %v421, 0
      %v4555 = vsel %vm3436, %v422, 0
      %v4558 = vsel %vm3436, %v423, 0
      %v4561 = vsel %vm3436, %v424, 0
      %v4564 = vsel %vm3436, %v425, 0
      %v4567 = vsel %vm3436, %v426, 0
      %v4570 = vsel %vm3436, %v427, 0
      %v4572 = vsel %vm3436, %v428, 0
      %4574 = vmatprep.subr.bf16.mxu0 0
      %4575 = vmatpush1.bf16.msra.mxu0 %v4525
      %4576 = vmatprep.subr.bf16.mxu0 0
      %4577 = vmatpush1.bf16.msra.mxu0 %v4526
      %4578 = vmatprep.subr.bf16.mxu0 0
      %4579 = vmatpush1.bf16.msra.mxu0 %v4527
      %4580 = vmatprep.subr.bf16.mxu0 0
      %4581 = vmatpush1.bf16.msra.mxu0 %v4528
      %4582 = vmatprep.subr.bf16.mxu0 0
      %4583 = vmatpush1.bf16.msra.mxu0 0
      %4584 = vmatprep.subr.bf16.mxu0 0
      %4585 = vmatpush1.bf16.msra.mxu0 0
      %4586 = vmatprep.subr.bf16.mxu0 0
      %4587 = vmatpush1.bf16.msra.mxu0 0
      %4588 = vmatprep.subr.bf16.mxu0 0
      %4589 = vmatpush1.bf16.msra.mxu0 0
      %4590 = vmatprep.subr.bf16.mxu0 0
      %4591 = vmatpush1.bf16.msra.mxu0 0
      %4592 = vmatprep.subr.bf16.mxu0 0
      %4593 = vmatpush1.bf16.msra.mxu0 0
      %4594 = vmatprep.subr.bf16.mxu0 0
      %4595 = vmatpush1.bf16.msra.mxu0 0
      %4596 = vmatprep.subr.bf16.mxu0 0
      %4597 = vmatpush1.bf16.msra.mxu0 0
      %4598 = vmatprep.subr.bf16.mxu0 0
      %4599 = vmatpush1.bf16.msra.mxu0 0
      %4600 = vmatprep.subr.bf16.mxu0 0
      %4601 = vmatpush1.bf16.msra.mxu0 0
      %4602 = vmatprep.subr.bf16.mxu0 0
      %4603 = vmatpush1.bf16.msra.mxu0 0
      %4604 = vmatprep.subr.bf16.mxu0 0
      %4605 = vmatpush1.bf16.msra.mxu0 0
      %4606 = vmatprep.mubr.bf16.mxu0 0
      %4607 = vmatmul.mubr.bf16.gmra.mrb[0].mxu0 %v4534
      %v4608 = vpop.f32.mrb[0].mxu0
      %v4609 = vadd.f32 0.0, %v4608
      %v4610 = vpop.f32.mrb[0].mxu0
      %v4611 = vpop.f32.mrb[0].mxu0
      %v4612 = vadd.f32 0.0, %v4611
      %v4613 = vpop.f32.mrb[0].mxu0
      %4614 = vmatprep.mubr.bf16.mxu0 0
      %4615 = vmatmul.mubr.bf16.gmra.mrb[0].mxu0 %v4537
      %v4616 = vpop.f32.mrb[0].mxu0
      %v4617 = vadd.f32 0.0, %v4616
      %v4618 = vpop.f32.mrb[0].mxu0
      %v4619 = vpop.f32.mrb[0].mxu0
      %v4620 = vadd.f32 0.0, %v4619
      %v4621 = vpop.f32.mrb[0].mxu0
      %4622 = vmatprep.mubr.bf16.mxu0 0
      %4623 = vmatmul.mubr.bf16.gmra.mrb[0].mxu0 %v4540
      %v4624 = vpop.f32.mrb[0].mxu0
      %v4625 = vadd.f32 0.0, %v4624
      %v4626 = vpop.f32.mrb[0].mxu0
      %v4627 = vpop.f32.mrb[0].mxu0
      %v4628 = vadd.f32 0.0, %v4627
      %v4629 = vpop.f32.mrb[0].mxu0
      %4630 = vmatprep.mubr.bf16.mxu0 0
      %4631 = vmatmul.mubr.bf16.gmra.mrb[0].mxu0 %v4543
      %v4632 = vpop.f32.mrb[0].mxu0
      %v4633 = vadd.f32 0.0, %v4632
      %v4634 = vpop.f32.mrb[0].mxu0
      %v4635 = vpop.f32.mrb[0].mxu0
      %v4636 = vadd.f32 0.0, %v4635
      %v4637 = vpop.f32.mrb[0].mxu0
      %4638 = vmatprep.mubr.bf16.mxu0 0
      %4639 = vmatmul.mubr.bf16.gmra.mrb[0].mxu0 %v4546
      %v4640 = vpop.f32.mrb[0].mxu0
      %v4641 = vadd.f32 0.0, %v4640
      %v4642 = vpop.f32.mrb[0].mxu0
      %v4643 = vpop.f32.mrb[0].mxu0
      %v4644 = vadd.f32 0.0, %v4643
      %v4645 = vpop.f32.mrb[0].mxu0
      %4646 = vmatprep.mubr.bf16.mxu0 0
      %4647 = vmatmul.mubr.bf16.gmra.mrb[0].mxu0 %v4549
      %v4648 = vpop.f32.mrb[0].mxu0
      %v4649 = vadd.f32 0.0, %v4648
      %v4650 = vpop.f32.mrb[0].mxu0
      %v4651 = vpop.f32.mrb[0].mxu0
      %v4652 = vadd.f32 0.0, %v4651
      %v4653 = vpop.f32.mrb[0].mxu0
      %4654 = vmatprep.mubr.bf16.mxu0 0
      %4655 = vmatmul.mubr.bf16.gmra.mrb[0].mxu0 %v4552
      %v4656 = vpop.f32.mrb[0].mxu0
      %v4657 = vadd.f32 0.0, %v4656
      %v4658 = vpop.f32.mrb[0].mxu0
      %v4659 = vpop.f32.mrb[0].mxu0
      %v4660 = vadd.f32 0.0, %v4659
      %v4661 = vpop.f32.mrb[0].mxu0
      %4662 = vmatprep.mubr.bf16.mxu0 0
      %4663 = vmatmul.mubr.bf16.gmra.mrb[0].mxu0 %v4555
      %v4664 = vpop.f32.mrb[0].mxu0
      %v4665 = vadd.f32 0.0, %v4664
      %v4666 = vpop.f32.mrb[0].mxu0
      %v4667 = vpop.f32.mrb[0].mxu0
      %v4668 = vadd.f32 0.0, %v4667
      %v4669 = vpop.f32.mrb[0].mxu0
      %4670 = vmatprep.mubr.bf16.mxu0 0
      %4671 = vmatmul.mubr.bf16.gmra.mrb[0].mxu0 %v4558
      %v4672 = vpop.f32.mrb[0].mxu0
      %v4673 = vadd.f32 0.0, %v4672
      %v4674 = vpop.f32.mrb[0].mxu0
      %v4675 = vpop.f32.mrb[0].mxu0
      %v4676 = vadd.f32 0.0, %v4675
      %v4677 = vpop.f32.mrb[0].mxu0
      %4678 = vmatprep.mubr.bf16.mxu0 0
      %4679 = vmatmul.mubr.bf16.gmra.mrb[0].mxu0 %v4561
      %v4680 = vpop.f32.mrb[0].mxu0
      %v4681 = vadd.f32 0.0, %v4680
      %v4682 = vpop.f32.mrb[0].mxu0
      %v4683 = vpop.f32.mrb[0].mxu0
      %v4684 = vadd.f32 0.0, %v4683
      %v4685 = vpop.f32.mrb[0].mxu0
      %4686 = vmatprep.mubr.bf16.mxu0 0
      %4687 = vmatmul.mubr.bf16.gmra.mrb[0].mxu0 %v4564
      %v4688 = vpop.f32.mrb[0].mxu0
      %v4689 = vadd.f32 0.0, %v4688
      %v4690 = vpop.f32.mrb[0].mxu0
      %v4691 = vpop.f32.mrb[0].mxu0
      %v4692 = vadd.f32 0.0, %v4691
      %v4693 = vpop.f32.mrb[0].mxu0
      %4694 = vmatprep.mubr.bf16.mxu0 0
      %4695 = vmatmul.mubr.bf16.gmra.mrb[0].mxu0 %v4567
      %v4696 = vpop.f32.mrb[0].mxu0
      %v4697 = vadd.f32 0.0, %v4696
      %v4698 = vpop.f32.mrb[0].mxu0
      %v4699 = vpop.f32.mrb[0].mxu0
      %v4700 = vadd.f32 0.0, %v4699
      %v4701 = vpop.f32.mrb[0].mxu0
      %4702 = vmatprep.mubr.bf16.mxu0 0
      %4703 = vmatmul.mubr.bf16.gmra.mrb[0].mxu0 %v4570
      %v4704 = vpop.f32.mrb[0].mxu0
      %v4705 = vadd.f32 0.0, %v4704
      %v4706 = vpop.f32.mrb[0].mxu0
      %v4707 = vpop.f32.mrb[0].mxu0
      %v4708 = vadd.f32 0.0, %v4707
      %v4709 = vpop.f32.mrb[0].mxu0
      %4710 = vmatprep.mubr.bf16.mxu0 0
      %4711 = vmatmul.mubr.bf16.gmra.mrb[0].mxu0 %v4572
      %v4712 = vpop.f32.mrb[0].mxu0
      %v4713 = vadd.f32 0.0, %v4712
      %v4714 = vpop.f32.mrb[0].mxu0
      %v4715 = vpop.f32.mrb[0].mxu0
      %v4716 = vpop.f32.mrb[0].mxu0
      %4717 = vdwg.mxu0
      %v4718 = vpack.c.bf16 %v4612, %v4609
      %v4719 = vpack.c.bf16 %v4620, %v4617
      %v4720 = vpack.c.bf16 %v4628, %v4625
      %v4721 = vpack.c.bf16 %v4636, %v4633
      %v4722 = vpack.c.bf16 %v4644, %v4641
      %v4723 = vpack.c.bf16 %v4652, %v4649
      %v4724 = vpack.c.bf16 %v4660, %v4657
      %v4725 = vpack.c.bf16 %v4668, %v4665
      %v4726 = vpack.c.bf16 %v4676, %v4673
      %v4727 = vpack.c.bf16 %v4684, %v4681
      %v4728 = vpack.c.bf16 %v4692, %v4689
      %v4729 = vpack.c.bf16 %v4700, %v4697
      %v4730 = vpack.c.bf16 %v4708, %v4705
      %v4731 = vpack.c.bf16 %v4713, %v4713
      %v4732 = vld [vmem:[%s7] sm:$0xf]
      %v4733 = vld [vmem:[%s7 + $0x4] sm:$0xf]
      %v4734 = vld [vmem:[%s7 + $0x8] sm:$0xf]
      %v4735 = vld [vmem:[%s7 + $0xc] sm:$0xf]
      %v4736 = vld [vmem:[%s7 + $0x10] sm:$0xf]
      %v4737 = vld [vmem:[%s7 + $0x14] sm:$0xf]
      %v4738 = vld [vmem:[%s7 + $0x18] sm:$0xf]
      %v4739 = vld [vmem:[%s7 + $0x1c] sm:$0xf]
      %v4748 = vunpack.c.l.b16 %v4732
      %v4749 = vunpack.c.l.b16 %v4733
      %v4750 = vunpack.c.l.b16 %v4734
      %v4751 = vunpack.c.l.b16 %v4735
      %v4752 = vunpack.c.l.b16 %v4736
      %v4753 = vunpack.c.l.b16 %v4737
      %v4754 = vunpack.c.l.b16 %v4738
      %v4755 = vunpack.c.l.b16 %v4739
      %v4756 = vpack.c.b16 %v4749, %v4748
      %v4757 = vpack.c.b16 %v4751, %v4750
      %v4758 = vpack.c.b16 %v4753, %v4752
      %v4759 = vpack.c.b16 %v4755, %v4754
      %v4765 = vsel %vm3436, %v4484, 0
      %v4768 = vsel %vm3436, %v4485, 0
      %v4771 = vsel %vm3436, %v4486, 0
      %v4774 = vsel %vm3436, %v4487, 0
      %v4777 = vsel %vm3436, %v4488, 0
      %v4780 = vsel %vm3436, %v4489, 0
      %v4783 = vsel %vm3436, %v4490, 0
      %v4786 = vsel %vm3436, %v4491, 0
      %v4789 = vsel %vm3436, %v4492, 0
      %v4792 = vsel %vm3436, %v4493, 0
      %v4795 = vsel %vm3436, %v4494, 0
      %v4798 = vsel %vm3436, %v4495, 0
      %v4801 = vsel %vm3436, %v4496, 0
      %v4804 = vsel %vm3436, %v4497, 0
      %v4807 = vsel %vm3436, %v4498, 0
      %v4810 = vsel %vm3436, %v4499, 0
      %v4813 = vsel %vm3436, %v4500, 0
      %4815 = vmatprep.subr.bf16.mxu0 0
      %4816 = vmatpush1.bf16.msra.mxu0 %v4756
      %4817 = vmatprep.subr.bf16.mxu0 0
      %4818 = vmatpush1.bf16.msra.mxu0 %v4757
      %4819 = vmatprep.subr.bf16.mxu0 0
      %4820 = vmatpush1.bf16.msra.mxu0 %v4758
      %4821 = vmatprep.subr.bf16.mxu0 0
      %4822 = vmatpush1.bf16.msra.mxu0 %v4759
      %4823 = vmatprep.subr.bf16.mxu0 0
      %4824 = vmatpush1.bf16.msra.mxu0 0
      %4825 = vmatprep.subr.bf16.mxu0 0
      %4826 = vmatpush1.bf16.msra.mxu0 0
      %4827 = vmatprep.subr.bf16.mxu0 0
      %4828 = vmatpush1.bf16.msra.mxu0 0
      %4829 = vmatprep.subr.bf16.mxu0 0
      %4830 = vmatpush1.bf16.msra.mxu0 0
      %4831 = vmatprep.subr.bf16.mxu0 0
      %4832 = vmatpush1.bf16.msra.mxu0 0
      %4833 = vmatprep.subr.bf16.mxu0 0
      %4834 = vmatpush1.bf16.msra.mxu0 0
      %4835 = vmatprep.subr.bf16.mxu0 0
      %4836 = vmatpush1.bf16.msra.mxu0 0
      %4837 = vmatprep.subr.bf16.mxu0 0
      %4838 = vmatpush1.bf16.msra.mxu0 0
      %4839 = vmatprep.subr.bf16.mxu0 0
      %4840 = vmatpush1.bf16.msra.mxu0 0
      %4841 = vmatprep.subr.bf16.mxu0 0
      %4842 = vmatpush1.bf16.msra.mxu0 0
      %4843 = vmatprep.subr.bf16.mxu0 0
      %4844 = vmatpush1.bf16.msra.mxu0 0
      %4845 = vmatprep.subr.bf16.mxu0 0
      %4846 = vmatpush1.bf16.msra.mxu0 0
      %4847 = vmatprep.mubr.bf16.mxu0 0
      %4848 = vmatmul.mubr.bf16.gmra.mrb[0].mxu0 %v4765
      %v4849 = vpop.f32.mrb[0].mxu0
      %v4850 = vadd.f32 0.0, %v4849
      %v4851 = vpop.f32.mrb[0].mxu0
      %v4852 = vpop.f32.mrb[0].mxu0
      %v4853 = vadd.f32 0.0, %v4852
      %v4854 = vpop.f32.mrb[0].mxu0
      %4855 = vmatprep.mubr.bf16.mxu0 0
      %4856 = vmatmul.mubr.bf16.gmra.mrb[0].mxu0 %v4768
      %v4857 = vpop.f32.mrb[0].mxu0
      %v4858 = vadd.f32 0.0, %v4857
      %v4859 = vpop.f32.mrb[0].mxu0
      %v4860 = vpop.f32.mrb[0].mxu0
      %v4861 = vadd.f32 0.0, %v4860
      %v4862 = vpop.f32.mrb[0].mxu0
      %4863 = vmatprep.mubr.bf16.mxu0 0
      %4864 = vmatmul.mubr.bf16.gmra.mrb[0].mxu0 %v4771
      %v4865 = vpop.f32.mrb[0].mxu0
      %v4866 = vadd.f32 0.0, %v4865
      %v4867 = vpop.f32.mrb[0].mxu0
      %v4868 = vpop.f32.mrb[0].mxu0
      %v4869 = vadd.f32 0.0, %v4868
      %v4870 = vpop.f32.mrb[0].mxu0
      %4871 = vmatprep.mubr.bf16.mxu0 0
      %4872 = vmatmul.mubr.bf16.gmra.mrb[0].mxu0 %v4774
      %v4873 = vpop.f32.mrb[0].mxu0
      %v4874 = vadd.f32 0.0, %v4873
      %v4875 = vpop.f32.mrb[0].mxu0
      %v4876 = vpop.f32.mrb[0].mxu0
      %v4877 = vadd.f32 0.0, %v4876
      %v4878 = vpop.f32.mrb[0].mxu0
      %4879 = vmatprep.mubr.bf16.mxu0 0
      %4880 = vmatmul.mubr.bf16.gmra.mrb[0].mxu0 %v4777
      %v4881 = vpop.f32.mrb[0].mxu0
      %v4882 = vadd.f32 0.0, %v4881
      %v4883 = vpop.f32.mrb[0].mxu0
      %v4884 = vpop.f32.mrb[0].mxu0
      %v4885 = vadd.f32 0.0, %v4884
      %v4886 = vpop.f32.mrb[0].mxu0
      %4887 = vmatprep.mubr.bf16.mxu0 0
      %4888 = vmatmul.mubr.bf16.gmra.mrb[0].mxu0 %v4780
      %v4889 = vpop.f32.mrb[0].mxu0
      %v4890 = vadd.f32 0.0, %v4889
      %v4891 = vpop.f32.mrb[0].mxu0
      %v4892 = vpop.f32.mrb[0].mxu0
      %v4893 = vadd.f32 0.0, %v4892
      %v4894 = vpop.f32.mrb[0].mxu0
      %4895 = vmatprep.mubr.bf16.mxu0 0
      %4896 = vmatmul.mubr.bf16.gmra.mrb[0].mxu0 %v4783
      %v4897 = vpop.f32.mrb[0].mxu0
      %v4898 = vadd.f32 0.0, %v4897
      %v4899 = vpop.f32.mrb[0].mxu0
      %v4900 = vpop.f32.mrb[0].mxu0
      %v4901 = vadd.f32 0.0, %v4900
      %v4902 = vpop.f32.mrb[0].mxu0
      %4903 = vmatprep.mubr.bf16.mxu0 0
      %4904 = vmatmul.mubr.bf16.gmra.mrb[0].mxu0 %v4786
      %v4905 = vpop.f32.mrb[0].mxu0
      %v4906 = vadd.f32 0.0, %v4905
      %v4907 = vpop.f32.mrb[0].mxu0
      %v4908 = vpop.f32.mrb[0].mxu0
      %v4909 = vadd.f32 0.0, %v4908
      %v4910 = vpop.f32.mrb[0].mxu0
      %4911 = vmatprep.mubr.bf16.mxu0 0
      %4912 = vmatmul.mubr.bf16.gmra.mrb[0].mxu0 %v4789
      %v4913 = vpop.f32.mrb[0].mxu0
      %v4914 = vadd.f32 0.0, %v4913
      %v4915 = vpop.f32.mrb[0].mxu0
      %v4916 = vpop.f32.mrb[0].mxu0
      %v4917 = vadd.f32 0.0, %v4916
      %v4918 = vpop.f32.mrb[0].mxu0
      %4919 = vmatprep.mubr.bf16.mxu0 0
      %4920 = vmatmul.mubr.bf16.gmra.mrb[0].mxu0 %v4792
      %v4921 = vpop.f32.mrb[0].mxu0
      %v4922 = vadd.f32 0.0, %v4921
      %v4923 = vpop.f32.mrb[0].mxu0
      %v4924 = vpop.f32.mrb[0].mxu0
      %v4925 = vadd.f32 0.0, %v4924
      %v4926 = vpop.f32.mrb[0].mxu0
      %4927 = vmatprep.mubr.bf16.mxu0 0
      %4928 = vmatmul.mubr.bf16.gmra.mrb[0].mxu0 %v4795
      %v4929 = vpop.f32.mrb[0].mxu0
      %v4930 = vadd.f32 0.0, %v4929
      %v4931 = vpop.f32.mrb[0].mxu0
      %v4932 = vpop.f32.mrb[0].mxu0
      %v4933 = vadd.f32 0.0, %v4932
      %v4934 = vpop.f32.mrb[0].mxu0
      %4935 = vmatprep.mubr.bf16.mxu0 0
      %4936 = vmatmul.mubr.bf16.gmra.mrb[0].mxu0 %v4798
      %v4937 = vpop.f32.mrb[0].mxu0
      %v4938 = vadd.f32 0.0, %v4937
      %v4939 = vpop.f32.mrb[0].mxu0
      %v4940 = vpop.f32.mrb[0].mxu0
      %v4941 = vadd.f32 0.0, %v4940
      %v4942 = vpop.f32.mrb[0].mxu0
      %4943 = vmatprep.mubr.bf16.mxu0 0
      %4944 = vmatmul.mubr.bf16.gmra.mrb[0].mxu0 %v4801
      %v4945 = vpop.f32.mrb[0].mxu0
      %v4946 = vadd.f32 0.0, %v4945
      %v4947 = vpop.f32.mrb[0].mxu0
      %v4948 = vpop.f32.mrb[0].mxu0
      %v4949 = vadd.f32 0.0, %v4948
      %v4950 = vpop.f32.mrb[0].mxu0
      %4951 = vmatprep.mubr.bf16.mxu0 0
      %4952 = vmatmul.mubr.bf16.gmra.mrb[0].mxu0 %v4804
      %v4953 = vpop.f32.mrb[0].mxu0
      %v4954 = vadd.f32 0.0, %v4953
      %v4955 = vpop.f32.mrb[0].mxu0
      %v4956 = vpop.f32.mrb[0].mxu0
      %v4957 = vadd.f32 0.0, %v4956
      %v4958 = vpop.f32.mrb[0].mxu0
      %4959 = vmatprep.mubr.bf16.mxu0 0
      %4960 = vmatmul.mubr.bf16.gmra.mrb[0].mxu0 %v4807
      %v4961 = vpop.f32.mrb[0].mxu0
      %v4962 = vadd.f32 0.0, %v4961
      %v4963 = vpop.f32.mrb[0].mxu0
      %v4964 = vpop.f32.mrb[0].mxu0
      %v4965 = vadd.f32 0.0, %v4964
      %v4966 = vpop.f32.mrb[0].mxu0
      %4967 = vmatprep.mubr.bf16.mxu0 0
      %4968 = vmatmul.mubr.bf16.gmra.mrb[0].mxu0 %v4810
      %v4969 = vpop.f32.mrb[0].mxu0
      %v4970 = vadd.f32 0.0, %v4969
      %v4971 = vpop.f32.mrb[0].mxu0
      %v4972 = vpop.f32.mrb[0].mxu0
      %v4973 = vadd.f32 0.0, %v4972
      %v4974 = vpop.f32.mrb[0].mxu0
      %4975 = vmatprep.mubr.bf16.mxu0 0
      %4976 = vmatmul.mubr.bf16.gmra.mrb[0].mxu0 %v4813
      %v4977 = vpop.f32.mrb[0].mxu0
      %v4978 = vadd.f32 0.0, %v4977
      %v4979 = vpop.f32.mrb[0].mxu0
      %v4980 = vpop.f32.mrb[0].mxu0
      %v4981 = vpop.f32.mrb[0].mxu0
      %4982 = vdwg.mxu0
      %v4983 = vpack.c.bf16 %v4853, %v4850
      %v4984 = vpack.c.bf16 %v4861, %v4858
      %v4985 = vpack.c.bf16 %v4869, %v4866
      %v4986 = vpack.c.bf16 %v4877, %v4874
      %v4987 = vpack.c.bf16 %v4885, %v4882
      %v4988 = vpack.c.bf16 %v4893, %v4890
      %v4989 = vpack.c.bf16 %v4901, %v4898
      %v4990 = vpack.c.bf16 %v4909, %v4906
      %v4991 = vpack.c.bf16 %v4917, %v4914
      %v4992 = vpack.c.bf16 %v4925, %v4922
      %v4993 = vpack.c.bf16 %v4933, %v4930
      %v4994 = vpack.c.bf16 %v4941, %v4938
      %v4995 = vpack.c.bf16 %v4949, %v4946
      %v4996 = vpack.c.bf16 %v4957, %v4954
      %v4997 = vpack.c.bf16 %v4965, %v4962
      %v4998 = vpack.c.bf16 %v4973, %v4970
      %v4999 = vpack.c.bf16 %v4978, %v4978
      %v5000 = vld [vmem:[%s8] sm:$0xf]
      %v5001 = vld [vmem:[%s8 + $0x4] sm:$0xf]
      %v5002 = vld [vmem:[%s8 + $0x8] sm:$0xf]
      %v5003 = vld [vmem:[%s8 + $0xc] sm:$0xf]
      %v5004 = vld [vmem:[%s8 + $0x10] sm:$0xf]
      %v5005 = vld [vmem:[%s8 + $0x14] sm:$0xf]
      %v5006 = vld [vmem:[%s8 + $0x18] sm:$0xf]
      %v5007 = vld [vmem:[%s8 + $0x1c] sm:$0xf]
      %v5016 = vunpack.c.l.b16 %v5000
      %v5017 = vunpack.c.l.b16 %v5001
      %v5018 = vunpack.c.l.b16 %v5002
      %v5019 = vunpack.c.l.b16 %v5003
      %v5020 = vunpack.c.l.b16 %v5004
      %v5021 = vunpack.c.l.b16 %v5005
      %v5022 = vunpack.c.l.b16 %v5006
      %v5023 = vunpack.c.l.b16 %v5007
      %v5024 = vpack.c.b16 %v5017, %v5016
      %v5025 = vpack.c.b16 %v5019, %v5018
      %v5026 = vpack.c.b16 %v5021, %v5020
      %v5027 = vpack.c.b16 %v5023, %v5022
      %5032 = vmatprep.subr.bf16.mxu0 0
      %5033 = vmatpush1.bf16.msra.mxu0 %v5024
      %5034 = vmatprep.subr.bf16.mxu0 0
      %5035 = vmatpush1.bf16.msra.mxu0 %v5025
      %5036 = vmatprep.subr.bf16.mxu0 0
      %5037 = vmatpush1.bf16.msra.mxu0 %v5026
      %5038 = vmatprep.subr.bf16.mxu0 0
      %5039 = vmatpush1.bf16.msra.mxu0 %v5027
      %5040 = vmatprep.subr.bf16.mxu0 0
      %5041 = vmatpush1.bf16.msra.mxu0 0
      %5042 = vmatprep.subr.bf16.mxu0 0
      %5043 = vmatpush1.bf16.msra.mxu0 0
      %5044 = vmatprep.subr.bf16.mxu0 0
      %5045 = vmatpush1.bf16.msra.mxu0 0
      %5046 = vmatprep.subr.bf16.mxu0 0
      %5047 = vmatpush1.bf16.msra.mxu0 0
      %5048 = vmatprep.subr.bf16.mxu0 0
      %5049 = vmatpush1.bf16.msra.mxu0 0
      %5050 = vmatprep.subr.bf16.mxu0 0
      %5051 = vmatpush1.bf16.msra.mxu0 0
      %5052 = vmatprep.subr.bf16.mxu0 0
      %5053 = vmatpush1.bf16.msra.mxu0 0
      %5054 = vmatprep.subr.bf16.mxu0 0
      %5055 = vmatpush1.bf16.msra.mxu0 0
      %5056 = vmatprep.subr.bf16.mxu0 0
      %5057 = vmatpush1.bf16.msra.mxu0 0
      %5058 = vmatprep.subr.bf16.mxu0 0
      %5059 = vmatpush1.bf16.msra.mxu0 0
      %5060 = vmatprep.subr.bf16.mxu0 0
      %5061 = vmatpush1.bf16.msra.mxu0 0
      %5062 = vmatprep.subr.bf16.mxu0 0
      %5063 = vmatpush1.bf16.msra.mxu0 0
      %5064 = vmatprep.mubr.bf16.mxu0 0
      %5065 = vmatmul.mubr.bf16.gmra.mrb[0].mxu0 %v4765
      %v5066 = vpop.f32.mrb[0].mxu0
      %v5067 = vadd.f32 0.0, %v5066
      %v5068 = vpop.f32.mrb[0].mxu0
      %v5069 = vpop.f32.mrb[0].mxu0
      %v5070 = vadd.f32 0.0, %v5069
      %v5071 = vpop.f32.mrb[0].mxu0
      %5072 = vmatprep.mubr.bf16.mxu0 0
      %5073 = vmatmul.mubr.bf16.gmra.mrb[0].mxu0 %v4768
      %v5074 = vpop.f32.mrb[0].mxu0
      %v5075 = vadd.f32 0.0, %v5074
      %v5076 = vpop.f32.mrb[0].mxu0
      %v5077 = vpop.f32.mrb[0].mxu0
      %v5078 = vadd.f32 0.0, %v5077
      %v5079 = vpop.f32.mrb[0].mxu0
      %5080 = vmatprep.mubr.bf16.mxu0 0
      %5081 = vmatmul.mubr.bf16.gmra.mrb[0].mxu0 %v4771
      %v5082 = vpop.f32.mrb[0].mxu0
      %v5083 = vadd.f32 0.0, %v5082
      %v5084 = vpop.f32.mrb[0].mxu0
      %v5085 = vpop.f32.mrb[0].mxu0
      %v5086 = vadd.f32 0.0, %v5085
      %v5087 = vpop.f32.mrb[0].mxu0
      %5088 = vmatprep.mubr.bf16.mxu0 0
      %5089 = vmatmul.mubr.bf16.gmra.mrb[0].mxu0 %v4774
      %v5090 = vpop.f32.mrb[0].mxu0
      %v5091 = vadd.f32 0.0, %v5090
      %v5092 = vpop.f32.mrb[0].mxu0
      %v5093 = vpop.f32.mrb[0].mxu0
      %v5094 = vadd.f32 0.0, %v5093
      %v5095 = vpop.f32.mrb[0].mxu0
      %5096 = vmatprep.mubr.bf16.mxu0 0
      %5097 = vmatmul.mubr.bf16.gmra.mrb[0].mxu0 %v4777
      %v5098 = vpop.f32.mrb[0].mxu0
      %v5099 = vadd.f32 0.0, %v5098
      %v5100 = vpop.f32.mrb[0].mxu0
      %v5101 = vpop.f32.mrb[0].mxu0
      %v5102 = vadd.f32 0.0, %v5101
      %v5103 = vpop.f32.mrb[0].mxu0
      %5104 = vmatprep.mubr.bf16.mxu0 0
      %5105 = vmatmul.mubr.bf16.gmra.mrb[0].mxu0 %v4780
      %v5106 = vpop.f32.mrb[0].mxu0
      %v5107 = vadd.f32 0.0, %v5106
      %v5108 = vpop.f32.mrb[0].mxu0
      %v5109 = vpop.f32.mrb[0].mxu0
      %v5110 = vadd.f32 0.0, %v5109
      %v5111 = vpop.f32.mrb[0].mxu0
      %5112 = vmatprep.mubr.bf16.mxu0 0
      %5113 = vmatmul.mubr.bf16.gmra.mrb[0].mxu0 %v4783
      %v5114 = vpop.f32.mrb[0].mxu0
      %v5115 = vadd.f32 0.0, %v5114
      %v5116 = vpop.f32.mrb[0].mxu0
      %v5117 = vpop.f32.mrb[0].mxu0
      %v5118 = vadd.f32 0.0, %v5117
      %v5119 = vpop.f32.mrb[0].mxu0
      %5120 = vmatprep.mubr.bf16.mxu0 0
      %5121 = vmatmul.mubr.bf16.gmra.mrb[0].mxu0 %v4786
      %v5122 = vpop.f32.mrb[0].mxu0
      %v5123 = vadd.f32 0.0, %v5122
      %v5124 = vpop.f32.mrb[0].mxu0
      %v5125 = vpop.f32.mrb[0].mxu0
      %v5126 = vadd.f32 0.0, %v5125
      %v5127 = vpop.f32.mrb[0].mxu0
      %5128 = vmatprep.mubr.bf16.mxu0 0
      %5129 = vmatmul.mubr.bf16.gmra.mrb[0].mxu0 %v4789
      %v5130 = vpop.f32.mrb[0].mxu0
      %v5131 = vadd.f32 0.0, %v5130
      %v5132 = vpop.f32.mrb[0].mxu0
      %v5133 = vpop.f32.mrb[0].mxu0
      %v5134 = vadd.f32 0.0, %v5133
      %v5135 = vpop.f32.mrb[0].mxu0
      %5136 = vmatprep.mubr.bf16.mxu0 0
      %5137 = vmatmul.mubr.bf16.gmra.mrb[0].mxu0 %v4792
      %v5138 = vpop.f32.mrb[0].mxu0
      %v5139 = vadd.f32 0.0, %v5138
      %v5140 = vpop.f32.mrb[0].mxu0
      %v5141 = vpop.f32.mrb[0].mxu0
      %v5142 = vadd.f32 0.0, %v5141
      %v5143 = vpop.f32.mrb[0].mxu0
      %5144 = vmatprep.mubr.bf16.mxu0 0
      %5145 = vmatmul.mubr.bf16.gmra.mrb[0].mxu0 %v4795
      %v5146 = vpop.f32.mrb[0].mxu0
      %v5147 = vadd.f32 0.0, %v5146
      %v5148 = vpop.f32.mrb[0].mxu0
      %v5149 = vpop.f32.mrb[0].mxu0
      %v5150 = vadd.f32 0.0, %v5149
      %v5151 = vpop.f32.mrb[0].mxu0
      %5152 = vmatprep.mubr.bf16.mxu0 0
      %5153 = vmatmul.mubr.bf16.gmra.mrb[0].mxu0 %v4798
      %v5154 = vpop.f32.mrb[0].mxu0
      %v5155 = vadd.f32 0.0, %v5154
      %v5156 = vpop.f32.mrb[0].mxu0
      %v5157 = vpop.f32.mrb[0].mxu0
      %v5158 = vadd.f32 0.0, %v5157
      %v5159 = vpop.f32.mrb[0].mxu0
      %5160 = vmatprep.mubr.bf16.mxu0 0
      %5161 = vmatmul.mubr.bf16.gmra.mrb[0].mxu0 %v4801
      %v5162 = vpop.f32.mrb[0].mxu0
      %v5163 = vadd.f32 0.0, %v5162
      %v5164 = vpop.f32.mrb[0].mxu0
      %v5165 = vpop.f32.mrb[0].mxu0
      %v5166 = vadd.f32 0.0, %v5165
      %v5167 = vpop.f32.mrb[0].mxu0
      %5168 = vmatprep.mubr.bf16.mxu0 0
      %5169 = vmatmul.mubr.bf16.gmra.mrb[0].mxu0 %v4804
      %v5170 = vpop.f32.mrb[0].mxu0
      %v5171 = vadd.f32 0.0, %v5170
      %v5172 = vpop.f32.mrb[0].mxu0
      %v5173 = vpop.f32.mrb[0].mxu0
      %v5174 = vadd.f32 0.0, %v5173
      %v5175 = vpop.f32.mrb[0].mxu0
      %5176 = vmatprep.mubr.bf16.mxu0 0
      %5177 = vmatmul.mubr.bf16.gmra.mrb[0].mxu0 %v4807
      %v5178 = vpop.f32.mrb[0].mxu0
      %v5179 = vadd.f32 0.0, %v5178
      %v5180 = vpop.f32.mrb[0].mxu0
      %v5181 = vpop.f32.mrb[0].mxu0
      %v5182 = vadd.f32 0.0, %v5181
      %v5183 = vpop.f32.mrb[0].mxu0
      %5184 = vmatprep.mubr.bf16.mxu0 0
      %5185 = vmatmul.mubr.bf16.gmra.mrb[0].mxu0 %v4810
      %v5186 = vpop.f32.mrb[0].mxu0
      %v5187 = vadd.f32 0.0, %v5186
      %v5188 = vpop.f32.mrb[0].mxu0
      %v5189 = vpop.f32.mrb[0].mxu0
      %v5190 = vadd.f32 0.0, %v5189
      %v5191 = vpop.f32.mrb[0].mxu0
      %5192 = vmatprep.mubr.bf16.mxu0 0
      %5193 = vmatmul.mubr.bf16.gmra.mrb[0].mxu0 %v4813
      %v5194 = vpop.f32.mrb[0].mxu0
      %v5195 = vadd.f32 0.0, %v5194
      %v5196 = vpop.f32.mrb[0].mxu0
      %v5197 = vpop.f32.mrb[0].mxu0
      %v5198 = vpop.f32.mrb[0].mxu0
      %5199 = vdwg.mxu0
      %v5200 = vpack.c.bf16 %v5070, %v5067
      %v5201 = vpack.c.bf16 %v5078, %v5075
      %v5202 = vpack.c.bf16 %v5086, %v5083
      %v5203 = vpack.c.bf16 %v5094, %v5091
      %v5204 = vpack.c.bf16 %v5102, %v5099
      %v5205 = vpack.c.bf16 %v5110, %v5107
      %v5206 = vpack.c.bf16 %v5118, %v5115
      %v5207 = vpack.c.bf16 %v5126, %v5123
      %v5208 = vpack.c.bf16 %v5134, %v5131
      %v5209 = vpack.c.bf16 %v5142, %v5139
      %v5210 = vpack.c.bf16 %v5150, %v5147
      %v5211 = vpack.c.bf16 %v5158, %v5155
      %v5212 = vpack.c.bf16 %v5166, %v5163
      %v5213 = vpack.c.bf16 %v5174, %v5171
      %v5214 = vpack.c.bf16 %v5182, %v5179
      %v5215 = vpack.c.bf16 %v5190, %v5187
      %v5216 = vpack.c.bf16 %v5195, %v5195
      %v5217 = vld [vmem:[%s3] sm:$0x7]
      %v5219 = vlaneseq
      %v5220 = vshrl.u32 %v5219, 7
      %v5221 = vsub.s32 0, %v5220
      %v5222 = vrot.slane %v5217, %v5221
      %v5223 = vlaneseq
      %v5224 = vshrl.u32 %v5223, 7
      %v5225 = vsub.s32 1, %v5224
      %v5226 = vrot.slane %v5217, %v5225
      %v5227 = vlaneseq
      %v5228 = vshrl.u32 %v5227, 7
      %v5229 = vsub.s32 2, %v5228
      %v5230 = vrot.slane %v5217, %v5229
      %vm5234 = vcmask 261120
      %v5236 = vsel %vm5234, %v4718, 0
      %v5239 = vsel %vm5234, %v4719, 0
      %v5242 = vsel %vm5234, %v4720, 0
      %v5245 = vsel %vm5234, %v4721, 0
      %v5248 = vsel %vm5234, %v4722, 0
      %v5251 = vsel %vm5234, %v4723, 0
      %v5254 = vsel %vm5234, %v4724, 0
      %v5257 = vsel %vm5234, %v4725, 0
      %v5260 = vsel %vm5234, %v4726, 0
      %v5263 = vsel %vm5234, %v4727, 0
      %v5266 = vsel %vm5234, %v4728, 0
      %v5269 = vsel %vm5234, %v4729, 0
      %v5272 = vsel %vm5234, %v4730, 0
      %v5275 = vsel %vm5234, %v4731, 0
      %v5278 = vsel %vm5234, %v4983, 0
      %v5281 = vsel %vm5234, %v4984, 0
      %v5284 = vsel %vm5234, %v4985, 0
      %v5287 = vsel %vm5234, %v4986, 0
      %v5290 = vsel %vm5234, %v4987, 0
      %v5293 = vsel %vm5234, %v4988, 0
      %v5296 = vsel %vm5234, %v4989, 0
      %v5299 = vsel %vm5234, %v4990, 0
      %v5302 = vsel %vm5234, %v4991, 0
      %v5305 = vsel %vm5234, %v4992, 0
      %v5308 = vsel %vm5234, %v4993, 0
      %v5311 = vsel %vm5234, %v4994, 0
      %v5314 = vsel %vm5234, %v4995, 0
      %v5317 = vsel %vm5234, %v4996, 0
      %v5320 = vsel %vm5234, %v4997, 0
      %v5323 = vsel %vm5234, %v4998, 0
      %v5326 = vsel %vm5234, %v4999, 0
      %5328 = vmatprep.subr.bf16.mxu0 0
      %5329 = vmatpush1.bf16.xpose.msra.mxu0 %v5278
      %5330 = vmatprep.subr.bf16.mxu0 0
      %5331 = vmatpush1.bf16.xpose.msra.mxu0 %v5281
      %5332 = vmatprep.subr.bf16.mxu0 0
      %5333 = vmatpush1.bf16.xpose.msra.mxu0 %v5284
      %5334 = vmatprep.subr.bf16.mxu0 0
      %5335 = vmatpush1.bf16.xpose.msra.mxu0 %v5287
      %5336 = vmatprep.subr.bf16.mxu0 0
      %5337 = vmatpush1.bf16.xpose.msra.mxu0 %v5290
      %5338 = vmatprep.subr.bf16.mxu0 0
      %5339 = vmatpush1.bf16.xpose.msra.mxu0 %v5293
      %5340 = vmatprep.subr.bf16.mxu0 0
      %5341 = vmatpush1.bf16.xpose.msra.mxu0 %v5296
      %5342 = vmatprep.subr.bf16.mxu0 0
      %5343 = vmatpush1.bf16.xpose.msra.mxu0 %v5299
      %5344 = vmatprep.subr.bf16.mxu0 0
      %5345 = vmatpush1.bf16.xpose.msra.mxu0 %v5302
      %5346 = vmatprep.subr.bf16.mxu0 0
      %5347 = vmatpush1.bf16.xpose.msra.mxu0 %v5305
      %5348 = vmatprep.subr.bf16.mxu0 0
      %5349 = vmatpush1.bf16.xpose.msra.mxu0 %v5308
      %5350 = vmatprep.subr.bf16.mxu0 0
      %5351 = vmatpush1.bf16.xpose.msra.mxu0 %v5311
      %5352 = vmatprep.subr.bf16.mxu0 0
      %5353 = vmatpush1.bf16.xpose.msra.mxu0 %v5314
      %5354 = vmatprep.subr.bf16.mxu0 0
      %5355 = vmatpush1.bf16.xpose.msra.mxu0 %v5317
      %5356 = vmatprep.subr.bf16.mxu0 0
      %5357 = vmatpush1.bf16.xpose.msra.mxu0 %v5320
      %5358 = vmatprep.subr.bf16.mxu0 0
      %5359 = vmatpush1.bf16.xpose.msra.mxu0 %v5323
      %5360 = vmatprep.mubr.bf16.mxu0 0
      %5361 = vmatmul.mubr.bf16.gmra.mrb[0].mxu0 %v5236
      %v5362 = vpop.f32.mrb[0].mxu0
      %v5363 = vadd.f32 %v5222, %v5362
      %v5364 = vpop.f32.mrb[0].mxu0
      %v5365 = vadd.f32 %v5226, %v5364
      %v5366 = vpop.f32.mrb[0].mxu0
      %v5367 = vadd.f32 %v5222, %v5366
      %v5368 = vpop.f32.mrb[0].mxu0
      %v5369 = vadd.f32 %v5226, %v5368
      %5370 = vmatprep.mubr.bf16.mxu0 0
      %5371 = vmatmul.mubr.bf16.gmra.mrb[0].mxu0 %v5239
      %v5372 = vpop.f32.mrb[0].mxu0
      %v5373 = vadd.f32 %v5222, %v5372
      %v5374 = vpop.f32.mrb[0].mxu0
      %v5375 = vadd.f32 %v5226, %v5374
      %v5376 = vpop.f32.mrb[0].mxu0
      %v5377 = vadd.f32 %v5222, %v5376
      %v5378 = vpop.f32.mrb[0].mxu0
      %v5379 = vadd.f32 %v5226, %v5378
      %5380 = vmatprep.mubr.bf16.mxu0 0
      %5381 = vmatmul.mubr.bf16.gmra.mrb[0].mxu0 %v5242
      %v5382 = vpop.f32.mrb[0].mxu0
      %v5383 = vadd.f32 %v5222, %v5382
      %v5384 = vpop.f32.mrb[0].mxu0
      %v5385 = vadd.f32 %v5226, %v5384
      %v5386 = vpop.f32.mrb[0].mxu0
      %v5387 = vadd.f32 %v5222, %v5386
      %v5388 = vpop.f32.mrb[0].mxu0
      %v5389 = vadd.f32 %v5226, %v5388
      %5390 = vmatprep.mubr.bf16.mxu0 0
      %5391 = vmatmul.mubr.bf16.gmra.mrb[0].mxu0 %v5245
      %v5392 = vpop.f32.mrb[0].mxu0
      %v5393 = vadd.f32 %v5222, %v5392
      %v5394 = vpop.f32.mrb[0].mxu0
      %v5395 = vadd.f32 %v5226, %v5394
      %v5396 = vpop.f32.mrb[0].mxu0
      %v5397 = vadd.f32 %v5222, %v5396
      %v5398 = vpop.f32.mrb[0].mxu0
      %v5399 = vadd.f32 %v5226, %v5398
      %5400 = vmatprep.mubr.bf16.mxu0 0
      %5401 = vmatmul.mubr.bf16.gmra.mrb[0].mxu0 %v5248
      %v5402 = vpop.f32.mrb[0].mxu0
      %v5403 = vadd.f32 %v5222, %v5402
      %v5404 = vpop.f32.mrb[0].mxu0
      %v5405 = vadd.f32 %v5226, %v5404
      %v5406 = vpop.f32.mrb[0].mxu0
      %v5407 = vadd.f32 %v5222, %v5406
      %v5408 = vpop.f32.mrb[0].mxu0
      %v5409 = vadd.f32 %v5226, %v5408
      %5410 = vmatprep.mubr.bf16.mxu0 0
      %5411 = vmatmul.mubr.bf16.gmra.mrb[0].mxu0 %v5251
      %v5412 = vpop.f32.mrb[0].mxu0
      %v5413 = vadd.f32 %v5222, %v5412
      %v5414 = vpop.f32.mrb[0].mxu0
      %v5415 = vadd.f32 %v5226, %v5414
      %v5416 = vpop.f32.mrb[0].mxu0
      %v5417 = vadd.f32 %v5222, %v5416
      %v5418 = vpop.f32.mrb[0].mxu0
      %v5419 = vadd.f32 %v5226, %v5418
      %5420 = vmatprep.mubr.bf16.mxu0 0
      %5421 = vmatmul.mubr.bf16.gmra.mrb[0].mxu0 %v5254
      %v5422 = vpop.f32.mrb[0].mxu0
      %v5423 = vadd.f32 %v5222, %v5422
      %v5424 = vpop.f32.mrb[0].mxu0
      %v5425 = vadd.f32 %v5226, %v5424
      %v5426 = vpop.f32.mrb[0].mxu0
      %v5427 = vadd.f32 %v5222, %v5426
      %v5428 = vpop.f32.mrb[0].mxu0
      %v5429 = vadd.f32 %v5226, %v5428
      %5430 = vmatprep.mubr.bf16.mxu0 0
      %5431 = vmatmul.mubr.bf16.gmra.mrb[0].mxu0 %v5257
      %v5432 = vpop.f32.mrb[0].mxu0
      %v5433 = vadd.f32 %v5222, %v5432
      %v5434 = vpop.f32.mrb[0].mxu0
      %v5435 = vadd.f32 %v5226, %v5434
      %v5436 = vpop.f32.mrb[0].mxu0
      %v5437 = vadd.f32 %v5222, %v5436
      %v5438 = vpop.f32.mrb[0].mxu0
      %v5439 = vadd.f32 %v5226, %v5438
      %5440 = vmatprep.mubr.bf16.mxu0 0
      %5441 = vmatmul.mubr.bf16.gmra.mrb[0].mxu0 %v5260
      %v5442 = vpop.f32.mrb[0].mxu0
      %v5443 = vadd.f32 %v5222, %v5442
      %v5444 = vpop.f32.mrb[0].mxu0
      %v5445 = vadd.f32 %v5226, %v5444
      %v5446 = vpop.f32.mrb[0].mxu0
      %v5447 = vadd.f32 %v5222, %v5446
      %v5448 = vpop.f32.mrb[0].mxu0
      %v5449 = vadd.f32 %v5226, %v5448
      %5450 = vmatprep.mubr.bf16.mxu0 0
      %5451 = vmatmul.mubr.bf16.gmra.mrb[0].mxu0 %v5263
      %v5452 = vpop.f32.mrb[0].mxu0
      %v5453 = vadd.f32 %v5222, %v5452
      %v5454 = vpop.f32.mrb[0].mxu0
      %v5455 = vadd.f32 %v5226, %v5454
      %v5456 = vpop.f32.mrb[0].mxu0
      %v5457 = vadd.f32 %v5222, %v5456
      %v5458 = vpop.f32.mrb[0].mxu0
      %v5459 = vadd.f32 %v5226, %v5458
      %5460 = vmatprep.mubr.bf16.mxu0 0
      %5461 = vmatmul.mubr.bf16.gmra.mrb[0].mxu0 %v5266
      %v5462 = vpop.f32.mrb[0].mxu0
      %v5463 = vadd.f32 %v5222, %v5462
      %v5464 = vpop.f32.mrb[0].mxu0
      %v5465 = vadd.f32 %v5226, %v5464
      %v5466 = vpop.f32.mrb[0].mxu0
      %v5467 = vadd.f32 %v5222, %v5466
      %v5468 = vpop.f32.mrb[0].mxu0
      %v5469 = vadd.f32 %v5226, %v5468
      %5470 = vmatprep.mubr.bf16.mxu0 0
      %5471 = vmatmul.mubr.bf16.gmra.mrb[0].mxu0 %v5269
      %v5472 = vpop.f32.mrb[0].mxu0
      %v5473 = vadd.f32 %v5222, %v5472
      %v5474 = vpop.f32.mrb[0].mxu0
      %v5475 = vadd.f32 %v5226, %v5474
      %v5476 = vpop.f32.mrb[0].mxu0
      %v5477 = vadd.f32 %v5222, %v5476
      %v5478 = vpop.f32.mrb[0].mxu0
      %v5479 = vadd.f32 %v5226, %v5478
      %5480 = vmatprep.mubr.bf16.mxu0 0
      %5481 = vmatmul.mubr.bf16.gmra.mrb[0].mxu0 %v5272
      %v5482 = vpop.f32.mrb[0].mxu0
      %v5483 = vadd.f32 %v5222, %v5482
      %v5484 = vpop.f32.mrb[0].mxu0
      %v5485 = vadd.f32 %v5226, %v5484
      %v5486 = vpop.f32.mrb[0].mxu0
      %v5487 = vadd.f32 %v5222, %v5486
      %v5488 = vpop.f32.mrb[0].mxu0
      %v5489 = vadd.f32 %v5226, %v5488
      %5490 = vmatprep.mubr.bf16.mxu0 0
      %5491 = vmatmul.mubr.bf16.gmra.mrb[0].mxu0 %v5275
      %v5492 = vpop.f32.mrb[0].mxu0
      %v5493 = vadd.f32 %v5222, %v5492
      %v5494 = vpop.f32.mrb[0].mxu0
      %v5495 = vadd.f32 %v5226, %v5494
      %v5496 = vpop.f32.mrb[0].mxu0
      %v5497 = vpop.f32.mrb[0].mxu0
      %5498 = vdwg.mxu0
      %5499 = vmatprep.subr.bf16.mxu0 0
      %5500 = vmatpush1.bf16.xpose.msra.mxu0 %v5326
      %5501 = vmatprep.subr.bf16.mxu0 0
      %5502 = vmatpush1.bf16.xpose.msra.mxu0 0
      %5503 = vmatprep.subr.bf16.mxu0 0
      %5504 = vmatpush1.bf16.xpose.msra.mxu0 0
      %5505 = vmatprep.subr.bf16.mxu0 0
      %5506 = vmatpush1.bf16.xpose.msra.mxu0 0
      %5507 = vmatprep.subr.bf16.mxu0 0
      %5508 = vmatpush1.bf16.xpose.msra.mxu0 0
      %5509 = vmatprep.subr.bf16.mxu0 0
      %5510 = vmatpush1.bf16.xpose.msra.mxu0 0
      %5511 = vmatprep.subr.bf16.mxu0 0
      %5512 = vmatpush1.bf16.xpose.msra.mxu0 0
      %5513 = vmatprep.subr.bf16.mxu0 0
      %5514 = vmatpush1.bf16.xpose.msra.mxu0 0
      %5515 = vmatprep.subr.bf16.mxu0 0
      %5516 = vmatpush1.bf16.xpose.msra.mxu0 0
      %5517 = vmatprep.subr.bf16.mxu0 0
      %5518 = vmatpush1.bf16.xpose.msra.mxu0 0
      %5519 = vmatprep.subr.bf16.mxu0 0
      %5520 = vmatpush1.bf16.xpose.msra.mxu0 0
      %5521 = vmatprep.subr.bf16.mxu0 0
      %5522 = vmatpush1.bf16.xpose.msra.mxu0 0
      %5523 = vmatprep.subr.bf16.mxu0 0
      %5524 = vmatpush1.bf16.xpose.msra.mxu0 0
      %5525 = vmatprep.subr.bf16.mxu0 0
      %5526 = vmatpush1.bf16.xpose.msra.mxu0 0
      %5527 = vmatprep.subr.bf16.mxu0 0
      %5528 = vmatpush1.bf16.xpose.msra.mxu0 0
      %5529 = vmatprep.subr.bf16.mxu0 0
      %5530 = vmatpush1.bf16.xpose.msra.mxu0 0
      %5531 = vmatprep.mubr.bf16.mxu0 0
      %5532 = vmatmul.mubr.bf16.gmra.mrb[0].mxu0 %v5236
      %v5533 = vpop.f32.mrb[0].mxu0
      %v5534 = vadd.f32 %v5230, %v5533
      %v5535 = vpop.f32.mrb[0].mxu0
      %v5536 = vpop.f32.mrb[0].mxu0
      %v5537 = vadd.f32 %v5230, %v5536
      %v5538 = vpop.f32.mrb[0].mxu0
      %5539 = vmatprep.mubr.bf16.mxu0 0
      %5540 = vmatmul.mubr.bf16.gmra.mrb[0].mxu0 %v5239
      %v5541 = vpop.f32.mrb[0].mxu0
      %v5542 = vadd.f32 %v5230, %v5541
      %v5543 = vpop.f32.mrb[0].mxu0
      %v5544 = vpop.f32.mrb[0].mxu0
      %v5545 = vadd.f32 %v5230, %v5544
      %v5546 = vpop.f32.mrb[0].mxu0
      %5547 = vmatprep.mubr.bf16.mxu0 0
      %5548 = vmatmul.mubr.bf16.gmra.mrb[0].mxu0 %v5242
      %v5549 = vpop.f32.mrb[0].mxu0
      %v5550 = vadd.f32 %v5230, %v5549
      %v5551 = vpop.f32.mrb[0].mxu0
      %v5552 = vpop.f32.mrb[0].mxu0
      %v5553 = vadd.f32 %v5230, %v5552
      %v5554 = vpop.f32.mrb[0].mxu0
      %5555 = vmatprep.mubr.bf16.mxu0 0
      %5556 = vmatmul.mubr.bf16.gmra.mrb[0].mxu0 %v5245
      %v5557 = vpop.f32.mrb[0].mxu0
      %v5558 = vadd.f32 %v5230, %v5557
      %v5559 = vpop.f32.mrb[0].mxu0
      %v5560 = vpop.f32.mrb[0].mxu0
      %v5561 = vadd.f32 %v5230, %v5560
      %v5562 = vpop.f32.mrb[0].mxu0
      %5563 = vmatprep.mubr.bf16.mxu0 0
      %5564 = vmatmul.mubr.bf16.gmra.mrb[0].mxu0 %v5248
      %v5565 = vpop.f32.mrb[0].mxu0
      %v5566 = vadd.f32 %v5230, %v5565
      %v5567 = vpop.f32.mrb[0].mxu0
      %v5568 = vpop.f32.mrb[0].mxu0
      %v5569 = vadd.f32 %v5230, %v5568
      %v5570 = vpop.f32.mrb[0].mxu0
      %5571 = vmatprep.mubr.bf16.mxu0 0
      %5572 = vmatmul.mubr.bf16.gmra.mrb[0].mxu0 %v5251
      %v5573 = vpop.f32.mrb[0].mxu0
      %v5574 = vadd.f32 %v5230, %v5573
      %v5575 = vpop.f32.mrb[0].mxu0
      %v5576 = vpop.f32.mrb[0].mxu0
      %v5577 = vadd.f32 %v5230, %v5576
      %v5578 = vpop.f32.mrb[0].mxu0
      %5579 = vmatprep.mubr.bf16.mxu0 0
      %5580 = vmatmul.mubr.bf16.gmra.mrb[0].mxu0 %v5254
      %v5581 = vpop.f32.mrb[0].mxu0
      %v5582 = vadd.f32 %v5230, %v5581
      %v5583 = vpop.f32.mrb[0].mxu0
      %v5584 = vpop.f32.mrb[0].mxu0
      %v5585 = vadd.f32 %v5230, %v5584
      %v5586 = vpop.f32.mrb[0].mxu0
      %5587 = vmatprep.mubr.bf16.mxu0 0
      %5588 = vmatmul.mubr.bf16.gmra.mrb[0].mxu0 %v5257
      %v5589 = vpop.f32.mrb[0].mxu0
      %v5590 = vadd.f32 %v5230, %v5589
      %v5591 = vpop.f32.mrb[0].mxu0
      %v5592 = vpop.f32.mrb[0].mxu0
      %v5593 = vadd.f32 %v5230, %v5592
      %v5594 = vpop.f32.mrb[0].mxu0
      %5595 = vmatprep.mubr.bf16.mxu0 0
      %5596 = vmatmul.mubr.bf16.gmra.mrb[0].mxu0 %v5260
      %v5597 = vpop.f32.mrb[0].mxu0
      %v5598 = vadd.f32 %v5230, %v5597
      %v5599 = vpop.f32.mrb[0].mxu0
      %v5600 = vpop.f32.mrb[0].mxu0
      %v5601 = vadd.f32 %v5230, %v5600
      %v5602 = vpop.f32.mrb[0].mxu0
      %5603 = vmatprep.mubr.bf16.mxu0 0
      %5604 = vmatmul.mubr.bf16.gmra.mrb[0].mxu0 %v5263
      %v5605 = vpop.f32.mrb[0].mxu0
      %v5606 = vadd.f32 %v5230, %v5605
      %v5607 = vpop.f32.mrb[0].mxu0
      %v5608 = vpop.f32.mrb[0].mxu0
      %v5609 = vadd.f32 %v5230, %v5608
      %v5610 = vpop.f32.mrb[0].mxu0
      %5611 = vmatprep.mubr.bf16.mxu0 0
      %5612 = vmatmul.mubr.bf16.gmra.mrb[0].mxu0 %v5266
      %v5613 = vpop.f32.mrb[0].mxu0
      %v5614 = vadd.f32 %v5230, %v5613
      %v5615 = vpop.f32.mrb[0].mxu0
      %v5616 = vpop.f32.mrb[0].mxu0
      %v5617 = vadd.f32 %v5230, %v5616
      %v5618 = vpop.f32.mrb[0].mxu0
      %5619 = vmatprep.mubr.bf16.mxu0 0
      %5620 = vmatmul.mubr.bf16.gmra.mrb[0].mxu0 %v5269
      %v5621 = vpop.f32.mrb[0].mxu0
      %v5622 = vadd.f32 %v5230, %v5621
      %v5623 = vpop.f32.mrb[0].mxu0
      %v5624 = vpop.f32.mrb[0].mxu0
      %v5625 = vadd.f32 %v5230, %v5624
      %v5626 = vpop.f32.mrb[0].mxu0
      %5627 = vmatprep.mubr.bf16.mxu0 0
      %5628 = vmatmul.mubr.bf16.gmra.mrb[0].mxu0 %v5272
      %v5629 = vpop.f32.mrb[0].mxu0
      %v5630 = vadd.f32 %v5230, %v5629
      %v5631 = vpop.f32.mrb[0].mxu0
      %v5632 = vpop.f32.mrb[0].mxu0
      %v5633 = vadd.f32 %v5230, %v5632
      %v5634 = vpop.f32.mrb[0].mxu0
      %5635 = vmatprep.mubr.bf16.mxu0 0
      %5636 = vmatmul.mubr.bf16.gmra.mrb[0].mxu0 %v5275
      %v5637 = vpop.f32.mrb[0].mxu0
      %v5638 = vadd.f32 %v5230, %v5637
      %v5639 = vpop.f32.mrb[0].mxu0
      %v5640 = vpop.f32.mrb[0].mxu0
      %v5641 = vpop.f32.mrb[0].mxu0
      %5642 = vdwg.mxu0
      %v5643 = vmax.f32 %v5363, %v5365
      %vm5644 = vcmask 64512
      %v5645 = vsel %vm5644, %v5534, -inf
      %v5646 = vmax.f32 %v5643, %v5645
      %5647 = vmax.xlane.f32.xlu0 %v5646
      %v5648 = vpop.xlane.xlu0 %5647
      %v5649 = vmax.f32 %v5367, %v5369
      %v5650 = vsel %vm5644, %v5537, -inf
      %v5651 = vmax.f32 %v5649, %v5650
      %5652 = vmax.xlane.f32.xlu0 %v5651
      %v5653 = vpop.xlane.xlu0 %5652
      %v5654 = vmax.f32 %v5373, %v5375
      %v5655 = vsel %vm5644, %v5542, -inf
      %v5656 = vmax.f32 %v5654, %v5655
      %5657 = vmax.xlane.f32.xlu0 %v5656
      %v5658 = vpop.xlane.xlu0 %5657
      %v5659 = vmax.f32 %v5377, %v5379
      %v5660 = vsel %vm5644, %v5545, -inf
      %v5661 = vmax.f32 %v5659, %v5660
      %5662 = vmax.xlane.f32.xlu0 %v5661
      %v5663 = vpop.xlane.xlu0 %5662
      %v5664 = vmax.f32 %v5383, %v5385
      %v5665 = vsel %vm5644, %v5550, -inf
      %v5666 = vmax.f32 %v5664, %v5665
      %5667 = vmax.xlane.f32.xlu0 %v5666
      %v5668 = vpop.xlane.xlu0 %5667
      %v5669 = vmax.f32 %v5387, %v5389
      %v5670 = vsel %vm5644, %v5553, -inf
      %v5671 = vmax.f32 %v5669, %v5670
      %5672 = vmax.xlane.f32.xlu0 %v5671
      %v5673 = vpop.xlane.xlu0 %5672
      %v5674 = vmax.f32 %v5393, %v5395
      %v5675 = vsel %vm5644, %v5558, -inf
      %v5676 = vmax.f32 %v5674, %v5675
      %5677 = vmax.xlane.f32.xlu0 %v5676
      %v5678 = vpop.xlane.xlu0 %5677
      %v5679 = vmax.f32 %v5397, %v5399
      %v5680 = vsel %vm5644, %v5561, -inf
      %v5681 = vmax.f32 %v5679, %v5680
      %5682 = vmax.xlane.f32.xlu0 %v5681
      %v5683 = vpop.xlane.xlu0 %5682
      %v5684 = vmax.f32 %v5403, %v5405
      %v5685 = vsel %vm5644, %v5566, -inf
      %v5686 = vmax.f32 %v5684, %v5685
      %5687 = vmax.xlane.f32.xlu0 %v5686
      %v5688 = vpop.xlane.xlu0 %5687
      %v5689 = vmax.f32 %v5407, %v5409
      %v5690 = vsel %vm5644, %v5569, -inf
      %v5691 = vmax.f32 %v5689, %v5690
      %5692 = vmax.xlane.f32.xlu0 %v5691
      %v5693 = vpop.xlane.xlu0 %5692
      %v5694 = vmax.f32 %v5413, %v5415
      %v5695 = vsel %vm5644, %v5574, -inf
      %v5696 = vmax.f32 %v5694, %v5695
      %5697 = vmax.xlane.f32.xlu0 %v5696
      %v5698 = vpop.xlane.xlu0 %5697
      %v5699 = vmax.f32 %v5417, %v5419
      %v5700 = vsel %vm5644, %v5577, -inf
      %v5701 = vmax.f32 %v5699, %v5700
      %5702 = vmax.xlane.f32.xlu0 %v5701
      %v5703 = vpop.xlane.xlu0 %5702
      %v5704 = vmax.f32 %v5423, %v5425
      %v5705 = vsel %vm5644, %v5582, -inf
      %v5706 = vmax.f32 %v5704, %v5705
      %5707 = vmax.xlane.f32.xlu0 %v5706
      %v5708 = vpop.xlane.xlu0 %5707
      %v5709 = vmax.f32 %v5427, %v5429
      %v5710 = vsel %vm5644, %v5585, -inf
      %v5711 = vmax.f32 %v5709, %v5710
      %5712 = vmax.xlane.f32.xlu0 %v5711
      %v5713 = vpop.xlane.xlu0 %5712
      %v5714 = vmax.f32 %v5433, %v5435
      %v5715 = vsel %vm5644, %v5590, -inf
      %v5716 = vmax.f32 %v5714, %v5715
      %5717 = vmax.xlane.f32.xlu0 %v5716
      %v5718 = vpop.xlane.xlu0 %5717
      %v5719 = vmax.f32 %v5437, %v5439
      %v5720 = vsel %vm5644, %v5593, -inf
      %v5721 = vmax.f32 %v5719, %v5720
      %5722 = vmax.xlane.f32.xlu0 %v5721
      %v5723 = vpop.xlane.xlu0 %5722
      %v5724 = vmax.f32 %v5443, %v5445
      %v5725 = vsel %vm5644, %v5598, -inf
      %v5726 = vmax.f32 %v5724, %v5725
      %5727 = vmax.xlane.f32.xlu0 %v5726
      %v5728 = vpop.xlane.xlu0 %5727
      %v5729 = vmax.f32 %v5447, %v5449
      %v5730 = vsel %vm5644, %v5601, -inf
      %v5731 = vmax.f32 %v5729, %v5730
      %5732 = vmax.xlane.f32.xlu0 %v5731
      %v5733 = vpop.xlane.xlu0 %5732
      %v5734 = vmax.f32 %v5453, %v5455
      %v5735 = vsel %vm5644, %v5606, -inf
      %v5736 = vmax.f32 %v5734, %v5735
      %5737 = vmax.xlane.f32.xlu0 %v5736
      %v5738 = vpop.xlane.xlu0 %5737
      %v5739 = vmax.f32 %v5457, %v5459
      %v5740 = vsel %vm5644, %v5609, -inf
      %v5741 = vmax.f32 %v5739, %v5740
      %5742 = vmax.xlane.f32.xlu0 %v5741
      %v5743 = vpop.xlane.xlu0 %5742
      %v5744 = vmax.f32 %v5463, %v5465
      %v5745 = vsel %vm5644, %v5614, -inf
      %v5746 = vmax.f32 %v5744, %v5745
      %5747 = vmax.xlane.f32.xlu0 %v5746
      %v5748 = vpop.xlane.xlu0 %5747
      %v5749 = vmax.f32 %v5467, %v5469
      %v5750 = vsel %vm5644, %v5617, -inf
      %v5751 = vmax.f32 %v5749, %v5750
      %5752 = vmax.xlane.f32.xlu0 %v5751
      %v5753 = vpop.xlane.xlu0 %5752
      %v5754 = vmax.f32 %v5473, %v5475
      %v5755 = vsel %vm5644, %v5622, -inf
      %v5756 = vmax.f32 %v5754, %v5755
      %5757 = vmax.xlane.f32.xlu0 %v5756
      %v5758 = vpop.xlane.xlu0 %5757
      %v5759 = vmax.f32 %v5477, %v5479
      %v5760 = vsel %vm5644, %v5625, -inf
      %v5761 = vmax.f32 %v5759, %v5760
      %5762 = vmax.xlane.f32.xlu0 %v5761
      %v5763 = vpop.xlane.xlu0 %5762
      %v5764 = vmax.f32 %v5483, %v5485
      %v5765 = vsel %vm5644, %v5630, -inf
      %v5766 = vmax.f32 %v5764, %v5765
      %5767 = vmax.xlane.f32.xlu0 %v5766
      %v5768 = vpop.xlane.xlu0 %5767
      %v5769 = vmax.f32 %v5487, %v5489
      %v5770 = vsel %vm5644, %v5633, -inf
      %v5771 = vmax.f32 %v5769, %v5770
      %5772 = vmax.xlane.f32.xlu0 %v5771
      %v5773 = vpop.xlane.xlu0 %5772
      %v5774 = vmax.f32 %v5493, %v5495
      %v5775 = vsel %vm5644, %v5638, -inf
      %v5776 = vmax.f32 %v5774, %v5775
      %5777 = vmax.xlane.f32.xlu0 %v5776
      %v5778 = vpop.xlane.xlu0 %5777
      %v5779 = vsub.f32 %v5363, %v5648
      %v5780 = vsub.f32 %v5365, %v5648
      %v5781 = vsub.f32 %v5534, %v5648
      %v5782 = vsub.f32 %v5367, %v5653
      %v5783 = vsub.f32 %v5369, %v5653
      %v5784 = vsub.f32 %v5537, %v5653
      %v5785 = vsub.f32 %v5373, %v5658
      %v5786 = vsub.f32 %v5375, %v5658
      %v5787 = vsub.f32 %v5542, %v5658
      %v5788 = vsub.f32 %v5377, %v5663
      %v5789 = vsub.f32 %v5379, %v5663
      %v5790 = vsub.f32 %v5545, %v5663
      %v5791 = vsub.f32 %v5383, %v5668
      %v5792 = vsub.f32 %v5385, %v5668
      %v5793 = vsub.f32 %v5550, %v5668
      %v5794 = vsub.f32 %v5387, %v5673
      %v5795 = vsub.f32 %v5389, %v5673
      %v5796 = vsub.f32 %v5553, %v5673
      %v5797 = vsub.f32 %v5393, %v5678
      %v5798 = vsub.f32 %v5395, %v5678
      %v5799 = vsub.f32 %v5558, %v5678
      %v5800 = vsub.f32 %v5397, %v5683
      %v5801 = vsub.f32 %v5399, %v5683
      %v5802 = vsub.f32 %v5561, %v5683
      %v5803 = vsub.f32 %v5403, %v5688
      %v5804 = vsub.f32 %v5405, %v5688
      %v5805 = vsub.f32 %v5566, %v5688
      %v5806 = vsub.f32 %v5407, %v5693
      %v5807 = vsub.f32 %v5409, %v5693
      %v5808 = vsub.f32 %v5569, %v5693
      %v5809 = vsub.f32 %v5413, %v5698
      %v5810 = vsub.f32 %v5415, %v5698
      %v5811 = vsub.f32 %v5574, %v5698
      %v5812 = vsub.f32 %v5417, %v5703
      %v5813 = vsub.f32 %v5419, %v5703
      %v5814 = vsub.f32 %v5577, %v5703
      %v5815 = vsub.f32 %v5423, %v5708
      %v5816 = vsub.f32 %v5425, %v5708
      %v5817 = vsub.f32 %v5582, %v5708
      %v5818 = vsub.f32 %v5427, %v5713
      %v5819 = vsub.f32 %v5429, %v5713
      %v5820 = vsub.f32 %v5585, %v5713
      %v5821 = vsub.f32 %v5433, %v5718
      %v5822 = vsub.f32 %v5435, %v5718
      %v5823 = vsub.f32 %v5590, %v5718
      %v5824 = vsub.f32 %v5437, %v5723
      %v5825 = vsub.f32 %v5439, %v5723
      %v5826 = vsub.f32 %v5593, %v5723
      %v5827 = vsub.f32 %v5443, %v5728
      %v5828 = vsub.f32 %v5445, %v5728
      %v5829 = vsub.f32 %v5598, %v5728
      %v5830 = vsub.f32 %v5447, %v5733
      %v5831 = vsub.f32 %v5449, %v5733
      %v5832 = vsub.f32 %v5601, %v5733
      %v5833 = vsub.f32 %v5453, %v5738
      %v5834 = vsub.f32 %v5455, %v5738
      %v5835 = vsub.f32 %v5606, %v5738
      %v5836 = vsub.f32 %v5457, %v5743
      %v5837 = vsub.f32 %v5459, %v5743
      %v5838 = vsub.f32 %v5609, %v5743
      %v5839 = vsub.f32 %v5463, %v5748
      %v5840 = vsub.f32 %v5465, %v5748
      %v5841 = vsub.f32 %v5614, %v5748
      %v5842 = vsub.f32 %v5467, %v5753
      %v5843 = vsub.f32 %v5469, %v5753
      %v5844 = vsub.f32 %v5617, %v5753
      %v5845 = vsub.f32 %v5473, %v5758
      %v5846 = vsub.f32 %v5475, %v5758
      %v5847 = vsub.f32 %v5622, %v5758
      %v5848 = vsub.f32 %v5477, %v5763
      %v5849 = vsub.f32 %v5479, %v5763
      %v5850 = vsub.f32 %v5625, %v5763
      %v5851 = vsub.f32 %v5483, %v5768
      %v5852 = vsub.f32 %v5485, %v5768
      %v5853 = vsub.f32 %v5630, %v5768
      %v5854 = vsub.f32 %v5487, %v5773
      %v5855 = vsub.f32 %v5489, %v5773
      %v5856 = vsub.f32 %v5633, %v5773
      %v5857 = vsub.f32 %v5493, %v5778
      %v5858 = vsub.f32 %v5495, %v5778
      %v5859 = vsub.f32 %v5638, %v5778
      %v5860 = vmul.f32 %v5779, 1.442695
      %v5861 = vpow.pop %v5860
      %v5862 = vmul.f32 %v5780, 1.442695
      %v5863 = vpow.pop %v5862
      %v5864 = vmul.f32 %v5781, 1.442695
      %v5865 = vpow.pop %v5864
      %v5866 = vmul.f32 %v5782, 1.442695
      %v5867 = vpow.pop %v5866
      %v5868 = vmul.f32 %v5783, 1.442695
      %v5869 = vpow.pop %v5868
      %v5870 = vmul.f32 %v5784, 1.442695
      %v5871 = vpow.pop %v5870
      %v5872 = vmul.f32 %v5785, 1.442695
      %v5873 = vpow.pop %v5872
      %v5874 = vmul.f32 %v5786, 1.442695
      %v5875 = vpow.pop %v5874
      %v5876 = vmul.f32 %v5787, 1.442695
      %v5877 = vpow.pop %v5876
      %v5878 = vmul.f32 %v5788, 1.442695
      %v5879 = vpow.pop %v5878
      %v5880 = vmul.f32 %v5789, 1.442695
      %v5881 = vpow.pop %v5880
      %v5882 = vmul.f32 %v5790, 1.442695
      %v5883 = vpow.pop %v5882
      %v5884 = vmul.f32 %v5791, 1.442695
      %v5885 = vpow.pop %v5884
      %v5886 = vmul.f32 %v5792, 1.442695
      %v5887 = vpow.pop %v5886
      %v5888 = vmul.f32 %v5793, 1.442695
      %v5889 = vpow.pop %v5888
      %v5890 = vmul.f32 %v5794, 1.442695
      %v5891 = vpow.pop %v5890
      %v5892 = vmul.f32 %v5795, 1.442695
      %v5893 = vpow.pop %v5892
      %v5894 = vmul.f32 %v5796, 1.442695
      %v5895 = vpow.pop %v5894
      %v5896 = vmul.f32 %v5797, 1.442695
      %v5897 = vpow.pop %v5896
      %v5898 = vmul.f32 %v5798, 1.442695
      %v5899 = vpow.pop %v5898
      %v5900 = vmul.f32 %v5799, 1.442695
      %v5901 = vpow.pop %v5900
      %v5902 = vmul.f32 %v5800, 1.442695
      %v5903 = vpow.pop %v5902
      %v5904 = vmul.f32 %v5801, 1.442695
      %v5905 = vpow.pop %v5904
      %v5906 = vmul.f32 %v5802, 1.442695
      %v5907 = vpow.pop %v5906
      %v5908 = vmul.f32 %v5803, 1.442695
      %v5909 = vpow.pop %v5908
      %v5910 = vmul.f32 %v5804, 1.442695
      %v5911 = vpow.pop %v5910
      %v5912 = vmul.f32 %v5805, 1.442695
      %v5913 = vpow.pop %v5912
      %v5914 = vmul.f32 %v5806, 1.442695
      %v5915 = vpow.pop %v5914
      %v5916 = vmul.f32 %v5807, 1.442695
      %v5917 = vpow.pop %v5916
      %v5918 = vmul.f32 %v5808, 1.442695
      %v5919 = vpow.pop %v5918
      %v5920 = vmul.f32 %v5809, 1.442695
      %v5921 = vpow.pop %v5920
      %v5922 = vmul.f32 %v5810, 1.442695
      %v5923 = vpow.pop %v5922
      %v5924 = vmul.f32 %v5811, 1.442695
      %v5925 = vpow.pop %v5924
      %v5926 = vmul.f32 %v5812, 1.442695
      %v5927 = vpow.pop %v5926
      %v5928 = vmul.f32 %v5813, 1.442695
      %v5929 = vpow.pop %v5928
      %v5930 = vmul.f32 %v5814, 1.442695
      %v5931 = vpow.pop %v5930
      %v5932 = vmul.f32 %v5815, 1.442695
      %v5933 = vpow.pop %v5932
      %v5934 = vmul.f32 %v5816, 1.442695
      %v5935 = vpow.pop %v5934
      %v5936 = vmul.f32 %v5817, 1.442695
      %v5937 = vpow.pop %v5936
      %v5938 = vmul.f32 %v5818, 1.442695
      %v5939 = vpow.pop %v5938
      %v5940 = vmul.f32 %v5819, 1.442695
      %v5941 = vpow.pop %v5940
      %v5942 = vmul.f32 %v5820, 1.442695
      %v5943 = vpow.pop %v5942
      %v5944 = vmul.f32 %v5821, 1.442695
      %v5945 = vpow.pop %v5944
      %v5946 = vmul.f32 %v5822, 1.442695
      %v5947 = vpow.pop %v5946
      %v5948 = vmul.f32 %v5823, 1.442695
      %v5949 = vpow.pop %v5948
      %v5950 = vmul.f32 %v5824, 1.442695
      %v5951 = vpow.pop %v5950
      %v5952 = vmul.f32 %v5825, 1.442695
      %v5953 = vpow.pop %v5952
      %v5954 = vmul.f32 %v5826, 1.442695
      %v5955 = vpow.pop %v5954
      %v5956 = vmul.f32 %v5827, 1.442695
      %v5957 = vpow.pop %v5956
      %v5958 = vmul.f32 %v5828, 1.442695
      %v5959 = vpow.pop %v5958
      %v5960 = vmul.f32 %v5829, 1.442695
      %v5961 = vpow.pop %v5960
      %v5962 = vmul.f32 %v5830, 1.442695
      %v5963 = vpow.pop %v5962
      %v5964 = vmul.f32 %v5831, 1.442695
      %v5965 = vpow.pop %v5964
      %v5966 = vmul.f32 %v5832, 1.442695
      %v5967 = vpow.pop %v5966
      %v5968 = vmul.f32 %v5833, 1.442695
      %v5969 = vpow.pop %v5968
      %v5970 = vmul.f32 %v5834, 1.442695
      %v5971 = vpow.pop %v5970
      %v5972 = vmul.f32 %v5835, 1.442695
      %v5973 = vpow.pop %v5972
      %v5974 = vmul.f32 %v5836, 1.442695
      %v5975 = vpow.pop %v5974
      %v5976 = vmul.f32 %v5837, 1.442695
      %v5977 = vpow.pop %v5976
      %v5978 = vmul.f32 %v5838, 1.442695
      %v5979 = vpow.pop %v5978
      %v5980 = vmul.f32 %v5839, 1.442695
      %v5981 = vpow.pop %v5980
      %v5982 = vmul.f32 %v5840, 1.442695
      %v5983 = vpow.pop %v5982
      %v5984 = vmul.f32 %v5841, 1.442695
      %v5985 = vpow.pop %v5984
      %v5986 = vmul.f32 %v5842, 1.442695
      %v5987 = vpow.pop %v5986
      %v5988 = vmul.f32 %v5843, 1.442695
      %v5989 = vpow.pop %v5988
      %v5990 = vmul.f32 %v5844, 1.442695
      %v5991 = vpow.pop %v5990
      %v5992 = vmul.f32 %v5845, 1.442695
      %v5993 = vpow.pop %v5992
      %v5994 = vmul.f32 %v5846, 1.442695
      %v5995 = vpow.pop %v5994
      %v5996 = vmul.f32 %v5847, 1.442695
      %v5997 = vpow.pop %v5996
      %v5998 = vmul.f32 %v5848, 1.442695
      %v5999 = vpow.pop %v5998
      %v6000 = vmul.f32 %v5849, 1.442695
      %v6001 = vpow.pop %v6000
      %v6002 = vmul.f32 %v5850, 1.442695
      %v6003 = vpow.pop %v6002
      %v6004 = vmul.f32 %v5851, 1.442695
      %v6005 = vpow.pop %v6004
      %v6006 = vmul.f32 %v5852, 1.442695
      %v6007 = vpow.pop %v6006
      %v6008 = vmul.f32 %v5853, 1.442695
      %v6009 = vpow.pop %v6008
      %v6010 = vmul.f32 %v5854, 1.442695
      %v6011 = vpow.pop %v6010
      %v6012 = vmul.f32 %v5855, 1.442695
      %v6013 = vpow.pop %v6012
      %v6014 = vmul.f32 %v5856, 1.442695
      %v6015 = vpow.pop %v6014
      %v6016 = vmul.f32 %v5857, 1.442695
      %v6017 = vpow.pop %v6016
      %v6018 = vmul.f32 %v5858, 1.442695
      %v6019 = vpow.pop %v6018
      %v6020 = vmul.f32 %v5859, 1.442695
      %v6021 = vpow.pop %v6020
      %v6022 = vadd.f32 %v5861, %v5863
      %v6023 = vsel %vm5644, %v5865, 0.0
      %v6024 = vadd.f32 %v6022, %v6023
      %6025 = vadd.xlane.f32.xlu0 %v6024
      %v6026 = vpop.xlane.xlu0 %6025
      %v6027 = vadd.f32 %v5867, %v5869
      %v6028 = vsel %vm5644, %v5871, 0.0
      %v6029 = vadd.f32 %v6027, %v6028
      %6030 = vadd.xlane.f32.xlu0 %v6029
      %v6031 = vpop.xlane.xlu0 %6030
      %v6032 = vadd.f32 %v5873, %v5875
      %v6033 = vsel %vm5644, %v5877, 0.0
      %v6034 = vadd.f32 %v6032, %v6033
      %6035 = vadd.xlane.f32.xlu0 %v6034
      %v6036 = vpop.xlane.xlu0 %6035
      %v6037 = vadd.f32 %v5879, %v5881
      %v6038 = vsel %vm5644, %v5883, 0.0
      %v6039 = vadd.f32 %v6037, %v6038
      %6040 = vadd.xlane.f32.xlu0 %v6039
      %v6041 = vpop.xlane.xlu0 %6040
      %v6042 = vadd.f32 %v5885, %v5887
      %v6043 = vsel %vm5644, %v5889, 0.0
      %v6044 = vadd.f32 %v6042, %v6043
      %6045 = vadd.xlane.f32.xlu0 %v6044
      %v6046 = vpop.xlane.xlu0 %6045
      %v6047 = vadd.f32 %v5891, %v5893
      %v6048 = vsel %vm5644, %v5895, 0.0
      %v6049 = vadd.f32 %v6047, %v6048
      %6050 = vadd.xlane.f32.xlu0 %v6049
      %v6051 = vpop.xlane.xlu0 %6050
      %v6052 = vadd.f32 %v5897, %v5899
      %v6053 = vsel %vm5644, %v5901, 0.0
      %v6054 = vadd.f32 %v6052, %v6053
      %6055 = vadd.xlane.f32.xlu0 %v6054
      %v6056 = vpop.xlane.xlu0 %6055
      %v6057 = vadd.f32 %v5903, %v5905
      %v6058 = vsel %vm5644, %v5907, 0.0
      %v6059 = vadd.f32 %v6057, %v6058
      %6060 = vadd.xlane.f32.xlu0 %v6059
      %v6061 = vpop.xlane.xlu0 %6060
      %v6062 = vadd.f32 %v5909, %v5911
      %v6063 = vsel %vm5644, %v5913, 0.0
      %v6064 = vadd.f32 %v6062, %v6063
      %6065 = vadd.xlane.f32.xlu0 %v6064
      %v6066 = vpop.xlane.xlu0 %6065
      %v6067 = vadd.f32 %v5915, %v5917
      %v6068 = vsel %vm5644, %v5919, 0.0
      %v6069 = vadd.f32 %v6067, %v6068
      %6070 = vadd.xlane.f32.xlu0 %v6069
      %v6071 = vpop.xlane.xlu0 %6070
      %v6072 = vadd.f32 %v5921, %v5923
      %v6073 = vsel %vm5644, %v5925, 0.0
      %v6074 = vadd.f32 %v6072, %v6073
      %6075 = vadd.xlane.f32.xlu0 %v6074
      %v6076 = vpop.xlane.xlu0 %6075
      %v6077 = vadd.f32 %v5927, %v5929
      %v6078 = vsel %vm5644, %v5931, 0.0
      %v6079 = vadd.f32 %v6077, %v6078
      %6080 = vadd.xlane.f32.xlu0 %v6079
      %v6081 = vpop.xlane.xlu0 %6080
      %v6082 = vadd.f32 %v5933, %v5935
      %v6083 = vsel %vm5644, %v5937, 0.0
      %v6084 = vadd.f32 %v6082, %v6083
      %6085 = vadd.xlane.f32.xlu0 %v6084
      %v6086 = vpop.xlane.xlu0 %6085
      %v6087 = vadd.f32 %v5939, %v5941
      %v6088 = vsel %vm5644, %v5943, 0.0
      %v6089 = vadd.f32 %v6087, %v6088
      %6090 = vadd.xlane.f32.xlu0 %v6089
      %v6091 = vpop.xlane.xlu0 %6090
      %v6092 = vadd.f32 %v5945, %v5947
      %v6093 = vsel %vm5644, %v5949, 0.0
      %v6094 = vadd.f32 %v6092, %v6093
      %6095 = vadd.xlane.f32.xlu0 %v6094
      %v6096 = vpop.xlane.xlu0 %6095
      %v6097 = vadd.f32 %v5951, %v5953
      %v6098 = vsel %vm5644, %v5955, 0.0
      %v6099 = vadd.f32 %v6097, %v6098
      %6100 = vadd.xlane.f32.xlu0 %v6099
      %v6101 = vpop.xlane.xlu0 %6100
      %v6102 = vadd.f32 %v5957, %v5959
      %v6103 = vsel %vm5644, %v5961, 0.0
      %v6104 = vadd.f32 %v6102, %v6103
      %6105 = vadd.xlane.f32.xlu0 %v6104
      %v6106 = vpop.xlane.xlu0 %6105
      %v6107 = vadd.f32 %v5963, %v5965
      %v6108 = vsel %vm5644, %v5967, 0.0
      %v6109 = vadd.f32 %v6107, %v6108
      %6110 = vadd.xlane.f32.xlu0 %v6109
      %v6111 = vpop.xlane.xlu0 %6110
      %v6112 = vadd.f32 %v5969, %v5971
      %v6113 = vsel %vm5644, %v5973, 0.0
      %v6114 = vadd.f32 %v6112, %v6113
      %6115 = vadd.xlane.f32.xlu0 %v6114
      %v6116 = vpop.xlane.xlu0 %6115
      %v6117 = vadd.f32 %v5975, %v5977
      %v6118 = vsel %vm5644, %v5979, 0.0
      %v6119 = vadd.f32 %v6117, %v6118
      %6120 = vadd.xlane.f32.xlu0 %v6119
      %v6121 = vpop.xlane.xlu0 %6120
      %v6122 = vadd.f32 %v5981, %v5983
      %v6123 = vsel %vm5644, %v5985, 0.0
      %v6124 = vadd.f32 %v6122, %v6123
      %6125 = vadd.xlane.f32.xlu0 %v6124
      %v6126 = vpop.xlane.xlu0 %6125
      %v6127 = vadd.f32 %v5987, %v5989
      %v6128 = vsel %vm5644, %v5991, 0.0
      %v6129 = vadd.f32 %v6127, %v6128
      %6130 = vadd.xlane.f32.xlu0 %v6129
      %v6131 = vpop.xlane.xlu0 %6130
      %v6132 = vadd.f32 %v5993, %v5995
      %v6133 = vsel %vm5644, %v5997, 0.0
      %v6134 = vadd.f32 %v6132, %v6133
      %6135 = vadd.xlane.f32.xlu0 %v6134
      %v6136 = vpop.xlane.xlu0 %6135
      %v6137 = vadd.f32 %v5999, %v6001
      %v6138 = vsel %vm5644, %v6003, 0.0
      %v6139 = vadd.f32 %v6137, %v6138
      %6140 = vadd.xlane.f32.xlu0 %v6139
      %v6141 = vpop.xlane.xlu0 %6140
      %v6142 = vadd.f32 %v6005, %v6007
      %v6143 = vsel %vm5644, %v6009, 0.0
      %v6144 = vadd.f32 %v6142, %v6143
      %6145 = vadd.xlane.f32.xlu0 %v6144
      %v6146 = vpop.xlane.xlu0 %6145
      %v6147 = vadd.f32 %v6011, %v6013
      %v6148 = vsel %vm5644, %v6015, 0.0
      %v6149 = vadd.f32 %v6147, %v6148
      %6150 = vadd.xlane.f32.xlu0 %v6149
      %v6151 = vpop.xlane.xlu0 %6150
      %v6152 = vadd.f32 %v6017, %v6019
      %v6153 = vsel %vm5644, %v6021, 0.0
      %v6154 = vadd.f32 %v6152, %v6153
      %6155 = vadd.xlane.f32.xlu0 %v6154
      %v6156 = vpop.xlane.xlu0 %6155
      %v6157 = vpack.c.bf16 %v5867, %v5861
      %v6158 = vpack.c.bf16 %v5869, %v5863
      %v6159 = vpack.c.bf16 %v5871, %v5865
      %v6160 = vpack.c.bf16 %v5879, %v5873
      %v6161 = vpack.c.bf16 %v5881, %v5875
      %v6162 = vpack.c.bf16 %v5883, %v5877
      %v6163 = vpack.c.bf16 %v5891, %v5885
      %v6164 = vpack.c.bf16 %v5893, %v5887
      %v6165 = vpack.c.bf16 %v5895, %v5889
      %v6166 = vpack.c.bf16 %v5903, %v5897
      %v6167 = vpack.c.bf16 %v5905, %v5899
      %v6168 = vpack.c.bf16 %v5907, %v5901
      %v6169 = vpack.c.bf16 %v5915, %v5909
      %v6170 = vpack.c.bf16 %v5917, %v5911
      %v6171 = vpack.c.bf16 %v5919, %v5913
      %v6172 = vpack.c.bf16 %v5927, %v5921
      %v6173 = vpack.c.bf16 %v5929, %v5923
      %v6174 = vpack.c.bf16 %v5931, %v5925
      %v6175 = vpack.c.bf16 %v5939, %v5933
      %v6176 = vpack.c.bf16 %v5941, %v5935
      %v6177 = vpack.c.bf16 %v5943, %v5937
      %v6178 = vpack.c.bf16 %v5951, %v5945
      %v6179 = vpack.c.bf16 %v5953, %v5947
      %v6180 = vpack.c.bf16 %v5955, %v5949
      %v6181 = vpack.c.bf16 %v5963, %v5957
      %v6182 = vpack.c.bf16 %v5965, %v5959
      %v6183 = vpack.c.bf16 %v5967, %v5961
      %v6184 = vpack.c.bf16 %v5975, %v5969
      %v6185 = vpack.c.bf16 %v5977, %v5971
      %v6186 = vpack.c.bf16 %v5979, %v5973
      %v6187 = vpack.c.bf16 %v5987, %v5981
      %v6188 = vpack.c.bf16 %v5989, %v5983
      %v6189 = vpack.c.bf16 %v5991, %v5985
      %v6190 = vpack.c.bf16 %v5999, %v5993
      %v6191 = vpack.c.bf16 %v6001, %v5995
      %v6192 = vpack.c.bf16 %v6003, %v5997
      %v6193 = vpack.c.bf16 %v6011, %v6005
      %v6194 = vpack.c.bf16 %v6013, %v6007
      %v6195 = vpack.c.bf16 %v6015, %v6009
      %v6196 = vpack.c.bf16 %v6017, %v6017
      %v6197 = vpack.c.bf16 %v6019, %v6019
      %v6198 = vpack.c.bf16 %v6021, %v6021
      %v6200 = vsel %vm5644, %v6159, 0
      %v6203 = vsel %vm5644, %v6162, 0
      %v6206 = vsel %vm5644, %v6165, 0
      %v6209 = vsel %vm5644, %v6168, 0
      %v6212 = vsel %vm5644, %v6171, 0
      %v6215 = vsel %vm5644, %v6174, 0
      %v6218 = vsel %vm5644, %v6177, 0
      %v6221 = vsel %vm5644, %v6180, 0
      %v6224 = vsel %vm5644, %v6183, 0
      %v6227 = vsel %vm5644, %v6186, 0
      %v6230 = vsel %vm5644, %v6189, 0
      %v6233 = vsel %vm5644, %v6192, 0
      %v6236 = vsel %vm5644, %v6195, 0
      %v6239 = vsel %vm5644, %v6198, 0
      %v6242 = vsel %vm664, %v5216, 0
      %6244 = vmatprep.subr.bf16.mxu0 0
      %6245 = vmatpush1.bf16.msra.mxu0 %v5200
      %6246 = vmatprep.subr.bf16.mxu0 0
      %6247 = vmatpush1.bf16.msra.mxu0 %v5201
      %6248 = vmatprep.subr.bf16.mxu0 0
      %6249 = vmatpush1.bf16.msra.mxu0 %v5202
      %6250 = vmatprep.subr.bf16.mxu0 0
      %6251 = vmatpush1.bf16.msra.mxu0 %v5203
      %6252 = vmatprep.subr.bf16.mxu0 0
      %6253 = vmatpush1.bf16.msra.mxu0 %v5204
      %6254 = vmatprep.subr.bf16.mxu0 0
      %6255 = vmatpush1.bf16.msra.mxu0 %v5205
      %6256 = vmatprep.subr.bf16.mxu0 0
      %6257 = vmatpush1.bf16.msra.mxu0 %v5206
      %6258 = vmatprep.subr.bf16.mxu0 0
      %6259 = vmatpush1.bf16.msra.mxu0 %v5207
      %6260 = vmatprep.subr.bf16.mxu0 0
      %6261 = vmatpush1.bf16.msra.mxu0 %v5208
      %6262 = vmatprep.subr.bf16.mxu0 0
      %6263 = vmatpush1.bf16.msra.mxu0 %v5209
      %6264 = vmatprep.subr.bf16.mxu0 0
      %6265 = vmatpush1.bf16.msra.mxu0 %v5210
      %6266 = vmatprep.subr.bf16.mxu0 0
      %6267 = vmatpush1.bf16.msra.mxu0 %v5211
      %6268 = vmatprep.subr.bf16.mxu0 0
      %6269 = vmatpush1.bf16.msra.mxu0 %v5212
      %6270 = vmatprep.subr.bf16.mxu0 0
      %6271 = vmatpush1.bf16.msra.mxu0 %v5213
      %6272 = vmatprep.subr.bf16.mxu0 0
      %6273 = vmatpush1.bf16.msra.mxu0 %v5214
      %6274 = vmatprep.subr.bf16.mxu0 0
      %6275 = vmatpush1.bf16.msra.mxu0 %v5215
      %6276 = vmatprep.mubr.bf16.mxu0 %v6158
      %6277 = vmatmul.mubr.bf16.gmra.mrb[0].mxu0 %v6157
      %v6278 = vpop.f32.mrb[0].mxu0
      %v6279 = vadd.f32 0.0, %v6278
      %v6280 = vpop.f32.mrb[0].mxu0
      %v6281 = vpop.f32.mrb[0].mxu0
      %v6282 = vadd.f32 0.0, %v6281
      %v6283 = vpop.f32.mrb[0].mxu0
      %6284 = vmatprep.mubr.bf16.mxu0 %v6161
      %6285 = vmatmul.mubr.bf16.gmra.mrb[0].mxu0 %v6160
      %v6286 = vpop.f32.mrb[0].mxu0
      %v6287 = vadd.f32 0.0, %v6286
      %v6288 = vpop.f32.mrb[0].mxu0
      %v6289 = vpop.f32.mrb[0].mxu0
      %v6290 = vadd.f32 0.0, %v6289
      %v6291 = vpop.f32.mrb[0].mxu0
      %6292 = vmatprep.mubr.bf16.mxu0 %v6164
      %6293 = vmatmul.mubr.bf16.gmra.mrb[0].mxu0 %v6163
      %v6294 = vpop.f32.mrb[0].mxu0
      %v6295 = vadd.f32 0.0, %v6294
      %v6296 = vpop.f32.mrb[0].mxu0
      %v6297 = vpop.f32.mrb[0].mxu0
      %v6298 = vadd.f32 0.0, %v6297
      %v6299 = vpop.f32.mrb[0].mxu0
      %6300 = vmatprep.mubr.bf16.mxu0 %v6167
      %6301 = vmatmul.mubr.bf16.gmra.mrb[0].mxu0 %v6166
      %v6302 = vpop.f32.mrb[0].mxu0
      %v6303 = vadd.f32 0.0, %v6302
      %v6304 = vpop.f32.mrb[0].mxu0
      %v6305 = vpop.f32.mrb[0].mxu0
      %v6306 = vadd.f32 0.0, %v6305
      %v6307 = vpop.f32.mrb[0].mxu0
      %6308 = vmatprep.mubr.bf16.mxu0 %v6170
      %6309 = vmatmul.mubr.bf16.gmra.mrb[0].mxu0 %v6169
      %v6310 = vpop.f32.mrb[0].mxu0
      %v6311 = vadd.f32 0.0, %v6310
      %v6312 = vpop.f32.mrb[0].mxu0
      %v6313 = vpop.f32.mrb[0].mxu0
      %v6314 = vadd.f32 0.0, %v6313
      %v6315 = vpop.f32.mrb[0].mxu0
      %6316 = vmatprep.mubr.bf16.mxu0 %v6173
      %6317 = vmatmul.mubr.bf16.gmra.mrb[0].mxu0 %v6172
      %v6318 = vpop.f32.mrb[0].mxu0
      %v6319 = vadd.f32 0.0, %v6318
      %v6320 = vpop.f32.mrb[0].mxu0
      %v6321 = vpop.f32.mrb[0].mxu0
      %v6322 = vadd.f32 0.0, %v6321
      %v6323 = vpop.f32.mrb[0].mxu0
      %6324 = vmatprep.mubr.bf16.mxu0 %v6176
      %6325 = vmatmul.mubr.bf16.gmra.mrb[0].mxu0 %v6175
      %v6326 = vpop.f32.mrb[0].mxu0
      %v6327 = vadd.f32 0.0, %v6326
      %v6328 = vpop.f32.mrb[0].mxu0
      %v6329 = vpop.f32.mrb[0].mxu0
      %v6330 = vadd.f32 0.0, %v6329
      %v6331 = vpop.f32.mrb[0].mxu0
      %6332 = vmatprep.mubr.bf16.mxu0 %v6179
      %6333 = vmatmul.mubr.bf16.gmra.mrb[0].mxu0 %v6178
      %v6334 = vpop.f32.mrb[0].mxu0
      %v6335 = vadd.f32 0.0, %v6334
      %v6336 = vpop.f32.mrb[0].mxu0
      %v6337 = vpop.f32.mrb[0].mxu0
      %v6338 = vadd.f32 0.0, %v6337
      %v6339 = vpop.f32.mrb[0].mxu0
      %6340 = vmatprep.mubr.bf16.mxu0 %v6182
      %6341 = vmatmul.mubr.bf16.gmra.mrb[0].mxu0 %v6181
      %v6342 = vpop.f32.mrb[0].mxu0
      %v6343 = vadd.f32 0.0, %v6342
      %v6344 = vpop.f32.mrb[0].mxu0
      %v6345 = vpop.f32.mrb[0].mxu0
      %v6346 = vadd.f32 0.0, %v6345
      %v6347 = vpop.f32.mrb[0].mxu0
      %6348 = vmatprep.mubr.bf16.mxu0 %v6185
      %6349 = vmatmul.mubr.bf16.gmra.mrb[0].mxu0 %v6184
      %v6350 = vpop.f32.mrb[0].mxu0
      %v6351 = vadd.f32 0.0, %v6350
      %v6352 = vpop.f32.mrb[0].mxu0
      %v6353 = vpop.f32.mrb[0].mxu0
      %v6354 = vadd.f32 0.0, %v6353
      %v6355 = vpop.f32.mrb[0].mxu0
      %6356 = vmatprep.mubr.bf16.mxu0 %v6188
      %6357 = vmatmul.mubr.bf16.gmra.mrb[0].mxu0 %v6187
      %v6358 = vpop.f32.mrb[0].mxu0
      %v6359 = vadd.f32 0.0, %v6358
      %v6360 = vpop.f32.mrb[0].mxu0
      %v6361 = vpop.f32.mrb[0].mxu0
      %v6362 = vadd.f32 0.0, %v6361
      %v6363 = vpop.f32.mrb[0].mxu0
      %6364 = vmatprep.mubr.bf16.mxu0 %v6191
      %6365 = vmatmul.mubr.bf16.gmra.mrb[0].mxu0 %v6190
      %v6366 = vpop.f32.mrb[0].mxu0
      %v6367 = vadd.f32 0.0, %v6366
      %v6368 = vpop.f32.mrb[0].mxu0
      %v6369 = vpop.f32.mrb[0].mxu0
      %v6370 = vadd.f32 0.0, %v6369
      %v6371 = vpop.f32.mrb[0].mxu0
      %6372 = vmatprep.mubr.bf16.mxu0 %v6194
      %6373 = vmatmul.mubr.bf16.gmra.mrb[0].mxu0 %v6193
      %v6374 = vpop.f32.mrb[0].mxu0
      %v6375 = vadd.f32 0.0, %v6374
      %v6376 = vpop.f32.mrb[0].mxu0
      %v6377 = vpop.f32.mrb[0].mxu0
      %v6378 = vadd.f32 0.0, %v6377
      %v6379 = vpop.f32.mrb[0].mxu0
      %6380 = vmatprep.mubr.bf16.mxu0 %v6197
      %6381 = vmatmul.mubr.bf16.gmra.mrb[0].mxu0 %v6196
      %v6382 = vpop.f32.mrb[0].mxu0
      %v6383 = vadd.f32 0.0, %v6382
      %v6384 = vpop.f32.mrb[0].mxu0
      %v6385 = vpop.f32.mrb[0].mxu0
      %v6386 = vpop.f32.mrb[0].mxu0
      %6387 = vdwg.mxu0
      %6388 = vmatprep.subr.bf16.mxu0 0
      %6389 = vmatpush1.bf16.msra.mxu0 %v6242
      %6390 = vmatprep.subr.bf16.mxu0 0
      %6391 = vmatpush1.bf16.msra.mxu0 0
      %6392 = vmatprep.subr.bf16.mxu0 0
      %6393 = vmatpush1.bf16.msra.mxu0 0
      %6394 = vmatprep.subr.bf16.mxu0 0
      %6395 = vmatpush1.bf16.msra.mxu0 0
      %6396 = vmatprep.subr.bf16.mxu0 0
      %6397 = vmatpush1.bf16.msra.mxu0 0
      %6398 = vmatprep.subr.bf16.mxu0 0
      %6399 = vmatpush1.bf16.msra.mxu0 0
      %6400 = vmatprep.subr.bf16.mxu0 0
      %6401 = vmatpush1.bf16.msra.mxu0 0
      %6402 = vmatprep.subr.bf16.mxu0 0
      %6403 = vmatpush1.bf16.msra.mxu0 0
      %6404 = vmatprep.subr.bf16.mxu0 0
      %6405 = vmatpush1.bf16.msra.mxu0 0
      %6406 = vmatprep.subr.bf16.mxu0 0
      %6407 = vmatpush1.bf16.msra.mxu0 0
      %6408 = vmatprep.subr.bf16.mxu0 0
      %6409 = vmatpush1.bf16.msra.mxu0 0
      %6410 = vmatprep.subr.bf16.mxu0 0
      %6411 = vmatpush1.bf16.msra.mxu0 0
      %6412 = vmatprep.subr.bf16.mxu0 0
      %6413 = vmatpush1.bf16.msra.mxu0 0
      %6414 = vmatprep.subr.bf16.mxu0 0
      %6415 = vmatpush1.bf16.msra.mxu0 0
      %6416 = vmatprep.subr.bf16.mxu0 0
      %6417 = vmatpush1.bf16.msra.mxu0 0
      %6418 = vmatprep.subr.bf16.mxu0 0
      %6419 = vmatpush1.bf16.msra.mxu0 0
      %6420 = vmatprep.mubr.bf16.mxu0 0
      %6421 = vmatmul.mubr.bf16.gmra.mrb[0].mxu0 %v6200
      %v6422 = vpop.f32.mrb[0].mxu0
      %v6423 = vadd.f32 %v6279, %v6422
      %v6424 = vpop.f32.mrb[0].mxu0
      %v6425 = vpop.f32.mrb[0].mxu0
      %v6426 = vadd.f32 %v6282, %v6425
      %v6427 = vpop.f32.mrb[0].mxu0
      %6428 = vmatprep.mubr.bf16.mxu0 0
      %6429 = vmatmul.mubr.bf16.gmra.mrb[0].mxu0 %v6203
      %v6430 = vpop.f32.mrb[0].mxu0
      %v6431 = vadd.f32 %v6287, %v6430
      %v6432 = vpop.f32.mrb[0].mxu0
      %v6433 = vpop.f32.mrb[0].mxu0
      %v6434 = vadd.f32 %v6290, %v6433
      %v6435 = vpop.f32.mrb[0].mxu0
      %6436 = vmatprep.mubr.bf16.mxu0 0
      %6437 = vmatmul.mubr.bf16.gmra.mrb[0].mxu0 %v6206
      %v6438 = vpop.f32.mrb[0].mxu0
      %v6439 = vadd.f32 %v6295, %v6438
      %v6440 = vpop.f32.mrb[0].mxu0
      %v6441 = vpop.f32.mrb[0].mxu0
      %v6442 = vadd.f32 %v6298, %v6441
      %v6443 = vpop.f32.mrb[0].mxu0
      %6444 = vmatprep.mubr.bf16.mxu0 0
      %6445 = vmatmul.mubr.bf16.gmra.mrb[0].mxu0 %v6209
      %v6446 = vpop.f32.mrb[0].mxu0
      %v6447 = vadd.f32 %v6303, %v6446
      %v6448 = vpop.f32.mrb[0].mxu0
      %v6449 = vpop.f32.mrb[0].mxu0
      %v6450 = vadd.f32 %v6306, %v6449
      %v6451 = vpop.f32.mrb[0].mxu0
      %6452 = vmatprep.mubr.bf16.mxu0 0
      %6453 = vmatmul.mubr.bf16.gmra.mrb[0].mxu0 %v6212
      %v6454 = vpop.f32.mrb[0].mxu0
      %v6455 = vadd.f32 %v6311, %v6454
      %v6456 = vpop.f32.mrb[0].mxu0
      %v6457 = vpop.f32.mrb[0].mxu0
      %v6458 = vadd.f32 %v6314, %v6457
      %v6459 = vpop.f32.mrb[0].mxu0
      %6460 = vmatprep.mubr.bf16.mxu0 0
      %6461 = vmatmul.mubr.bf16.gmra.mrb[0].mxu0 %v6215
      %v6462 = vpop.f32.mrb[0].mxu0
      %v6463 = vadd.f32 %v6319, %v6462
      %v6464 = vpop.f32.mrb[0].mxu0
      %v6465 = vpop.f32.mrb[0].mxu0
      %v6466 = vadd.f32 %v6322, %v6465
      %v6467 = vpop.f32.mrb[0].mxu0
      %6468 = vmatprep.mubr.bf16.mxu0 0
      %6469 = vmatmul.mubr.bf16.gmra.mrb[0].mxu0 %v6218
      %v6470 = vpop.f32.mrb[0].mxu0
      %v6471 = vadd.f32 %v6327, %v6470
      %v6472 = vpop.f32.mrb[0].mxu0
      %v6473 = vpop.f32.mrb[0].mxu0
      %v6474 = vadd.f32 %v6330, %v6473
      %v6475 = vpop.f32.mrb[0].mxu0
      %6476 = vmatprep.mubr.bf16.mxu0 0
      %6477 = vmatmul.mubr.bf16.gmra.mrb[0].mxu0 %v6221
      %v6478 = vpop.f32.mrb[0].mxu0
      %v6479 = vadd.f32 %v6335, %v6478
      %v6480 = vpop.f32.mrb[0].mxu0
      %v6481 = vpop.f32.mrb[0].mxu0
      %v6482 = vadd.f32 %v6338, %v6481
      %v6483 = vpop.f32.mrb[0].mxu0
      %6484 = vmatprep.mubr.bf16.mxu0 0
      %6485 = vmatmul.mubr.bf16.gmra.mrb[0].mxu0 %v6224
      %v6486 = vpop.f32.mrb[0].mxu0
      %v6487 = vadd.f32 %v6343, %v6486
      %v6488 = vpop.f32.mrb[0].mxu0
      %v6489 = vpop.f32.mrb[0].mxu0
      %v6490 = vadd.f32 %v6346, %v6489
      %v6491 = vpop.f32.mrb[0].mxu0
      %6492 = vmatprep.mubr.bf16.mxu0 0
      %6493 = vmatmul.mubr.bf16.gmra.mrb[0].mxu0 %v6227
      %v6494 = vpop.f32.mrb[0].mxu0
      %v6495 = vadd.f32 %v6351, %v6494
      %v6496 = vpop.f32.mrb[0].mxu0
      %v6497 = vpop.f32.mrb[0].mxu0
      %v6498 = vadd.f32 %v6354, %v6497
      %v6499 = vpop.f32.mrb[0].mxu0
      %6500 = vmatprep.mubr.bf16.mxu0 0
      %6501 = vmatmul.mubr.bf16.gmra.mrb[0].mxu0 %v6230
      %v6502 = vpop.f32.mrb[0].mxu0
      %v6503 = vadd.f32 %v6359, %v6502
      %v6504 = vpop.f32.mrb[0].mxu0
      %v6505 = vpop.f32.mrb[0].mxu0
      %v6506 = vadd.f32 %v6362, %v6505
      %v6507 = vpop.f32.mrb[0].mxu0
      %6508 = vmatprep.mubr.bf16.mxu0 0
      %6509 = vmatmul.mubr.bf16.gmra.mrb[0].mxu0 %v6233
      %v6510 = vpop.f32.mrb[0].mxu0
      %v6511 = vadd.f32 %v6367, %v6510
      %v6512 = vpop.f32.mrb[0].mxu0
      %v6513 = vpop.f32.mrb[0].mxu0
      %v6514 = vadd.f32 %v6370, %v6513
      %v6515 = vpop.f32.mrb[0].mxu0
      %6516 = vmatprep.mubr.bf16.mxu0 0
      %6517 = vmatmul.mubr.bf16.gmra.mrb[0].mxu0 %v6236
      %v6518 = vpop.f32.mrb[0].mxu0
      %v6519 = vadd.f32 %v6375, %v6518
      %v6520 = vpop.f32.mrb[0].mxu0
      %v6521 = vpop.f32.mrb[0].mxu0
      %v6522 = vadd.f32 %v6378, %v6521
      %v6523 = vpop.f32.mrb[0].mxu0
      %6524 = vmatprep.mubr.bf16.mxu0 0
      %6525 = vmatmul.mubr.bf16.gmra.mrb[0].mxu0 %v6239
      %v6526 = vpop.f32.mrb[0].mxu0
      %v6527 = vadd.f32 %v6383, %v6526
      %v6528 = vpop.f32.mrb[0].mxu0
      %v6529 = vpop.f32.mrb[0].mxu0
      %v6530 = vpop.f32.mrb[0].mxu0
      %6531 = vdwg.mxu0
      %v6532 = vrcp.pop %v6026
      %v6533 = vrcp.pop %v6031
      %v6534 = vrcp.pop %v6036
      %v6535 = vrcp.pop %v6041
      %v6536 = vrcp.pop %v6046
      %v6537 = vrcp.pop %v6051
      %v6538 = vrcp.pop %v6056
      %v6539 = vrcp.pop %v6061
      %v6540 = vrcp.pop %v6066
      %v6541 = vrcp.pop %v6071
      %v6542 = vrcp.pop %v6076
      %v6543 = vrcp.pop %v6081
      %v6544 = vrcp.pop %v6086
      %v6545 = vrcp.pop %v6091
      %v6546 = vrcp.pop %v6096
      %v6547 = vrcp.pop %v6101
      %v6548 = vrcp.pop %v6106
      %v6549 = vrcp.pop %v6111
      %v6550 = vrcp.pop %v6116
      %v6551 = vrcp.pop %v6121
      %v6552 = vrcp.pop %v6126
      %v6553 = vrcp.pop %v6131
      %v6554 = vrcp.pop %v6136
      %v6555 = vrcp.pop %v6141
      %v6556 = vrcp.pop %v6146
      %v6557 = vrcp.pop %v6151
      %v6558 = vrcp.pop %v6156
      %v6559 = vmul.f32 %v6423, %v6532
      %v6560 = vmul.f32 %v6426, %v6533
      %v6561 = vmul.f32 %v6431, %v6534
      %v6562 = vmul.f32 %v6434, %v6535
      %v6563 = vmul.f32 %v6439, %v6536
      %v6564 = vmul.f32 %v6442, %v6537
      %v6565 = vmul.f32 %v6447, %v6538
      %v6566 = vmul.f32 %v6450, %v6539
      %v6567 = vmul.f32 %v6455, %v6540
      %v6568 = vmul.f32 %v6458, %v6541
      %v6569 = vmul.f32 %v6463, %v6542
      %v6570 = vmul.f32 %v6466, %v6543
      %v6571 = vmul.f32 %v6471, %v6544
      %v6572 = vmul.f32 %v6474, %v6545
      %v6573 = vmul.f32 %v6479, %v6546
      %v6574 = vmul.f32 %v6482, %v6547
      %v6575 = vmul.f32 %v6487, %v6548
      %v6576 = vmul.f32 %v6490, %v6549
      %v6577 = vmul.f32 %v6495, %v6550
      %v6578 = vmul.f32 %v6498, %v6551
      %v6579 = vmul.f32 %v6503, %v6552
      %v6580 = vmul.f32 %v6506, %v6553
      %v6581 = vmul.f32 %v6511, %v6554
      %v6582 = vmul.f32 %v6514, %v6555
      %v6583 = vmul.f32 %v6519, %v6556
      %v6584 = vmul.f32 %v6522, %v6557
      %v6585 = vmul.f32 %v6527, %v6558
      %v6586 = vpack.c.bf16 %v6560, %v6559
      %v6587 = vpack.c.bf16 %v6562, %v6561
      %v6588 = vpack.c.bf16 %v6564, %v6563
      %v6589 = vpack.c.bf16 %v6566, %v6565
      %v6590 = vpack.c.bf16 %v6568, %v6567
      %v6591 = vpack.c.bf16 %v6570, %v6569
      %v6592 = vpack.c.bf16 %v6572, %v6571
      %v6593 = vpack.c.bf16 %v6574, %v6573
      %v6594 = vpack.c.bf16 %v6576, %v6575
      %v6595 = vpack.c.bf16 %v6578, %v6577
      %v6596 = vpack.c.bf16 %v6580, %v6579
      %v6597 = vpack.c.bf16 %v6582, %v6581
      %v6598 = vpack.c.bf16 %v6584, %v6583
      %v6599 = vpack.c.bf16 %v6585, %v6585
      %v6600 = vld [vmem:[%s9] sm:$0xf]
      %v6601 = vld [vmem:[%s9 + $0x4] sm:$0xf]
      %v6602 = vld [vmem:[%s9 + $0x8] sm:$0xf]
      %v6603 = vld [vmem:[%s9 + $0xc] sm:$0xf]
      %6618 = vrot.lane.b32.xlu0 %v4718, 96
      %v6619 = vpop.permute.xlu0 %6618
      %6620 = vrot.lane.b32.xlu0 %v4719, 96
      %v6621 = vpop.permute.xlu0 %6620
      %6622 = vrot.lane.b32.xlu0 %v4720, 96
      %v6623 = vpop.permute.xlu0 %6622
      %6624 = vrot.lane.b32.xlu0 %v4721, 96
      %v6625 = vpop.permute.xlu0 %6624
      %6626 = vrot.lane.b32.xlu0 %v4722, 96
      %v6627 = vpop.permute.xlu0 %6626
      %6628 = vrot.lane.b32.xlu0 %v4723, 96
      %v6629 = vpop.permute.xlu0 %6628
      %6630 = vrot.lane.b32.xlu0 %v4724, 96
      %v6631 = vpop.permute.xlu0 %6630
      %6632 = vrot.lane.b32.xlu0 %v4725, 96
      %v6633 = vpop.permute.xlu0 %6632
      %6634 = vrot.lane.b32.xlu0 %v4726, 96
      %v6635 = vpop.permute.xlu0 %6634
      %6636 = vrot.lane.b32.xlu0 %v4727, 96
      %v6637 = vpop.permute.xlu0 %6636
      %6638 = vrot.lane.b32.xlu0 %v4728, 96
      %v6639 = vpop.permute.xlu0 %6638
      %6640 = vrot.lane.b32.xlu0 %v4729, 96
      %v6641 = vpop.permute.xlu0 %6640
      %6642 = vrot.lane.b32.xlu0 %v4730, 96
      %v6643 = vpop.permute.xlu0 %6642
      %6644 = vrot.lane.b32.xlu0 %v4731, 96
      %v6645 = vpop.permute.xlu0 %6644
      %6663 = vrot.lane.b32.xlu0 %v4983, 96
      %v6664 = vpop.permute.xlu0 %6663
      %6665 = vrot.lane.b32.xlu0 %v4984, 96
      %v6666 = vpop.permute.xlu0 %6665
      %6667 = vrot.lane.b32.xlu0 %v4985, 96
      %v6668 = vpop.permute.xlu0 %6667
      %6669 = vrot.lane.b32.xlu0 %v4986, 96
      %v6670 = vpop.permute.xlu0 %6669
      %6671 = vrot.lane.b32.xlu0 %v4987, 96
      %v6672 = vpop.permute.xlu0 %6671
      %6673 = vrot.lane.b32.xlu0 %v4988, 96
      %v6674 = vpop.permute.xlu0 %6673
      %6675 = vrot.lane.b32.xlu0 %v4989, 96
      %v6676 = vpop.permute.xlu0 %6675
      %6677 = vrot.lane.b32.xlu0 %v4990, 96
      %v6678 = vpop.permute.xlu0 %6677
      %6679 = vrot.lane.b32.xlu0 %v4991, 96
      %v6680 = vpop.permute.xlu0 %6679
      %6681 = vrot.lane.b32.xlu0 %v4992, 96
      %v6682 = vpop.permute.xlu0 %6681
      %6683 = vrot.lane.b32.xlu0 %v4993, 96
      %v6684 = vpop.permute.xlu0 %6683
      %6685 = vrot.lane.b32.xlu0 %v4994, 96
      %v6686 = vpop.permute.xlu0 %6685
      %6687 = vrot.lane.b32.xlu0 %v4995, 96
      %v6688 = vpop.permute.xlu0 %6687
      %6689 = vrot.lane.b32.xlu0 %v4996, 96
      %v6690 = vpop.permute.xlu0 %6689
      %6691 = vrot.lane.b32.xlu0 %v4997, 96
      %v6692 = vpop.permute.xlu0 %6691
      %6693 = vrot.lane.b32.xlu0 %v4998, 96
      %v6694 = vpop.permute.xlu0 %6693
      %6695 = vrot.lane.b32.xlu0 %v4999, 96
      %v6696 = vpop.permute.xlu0 %6695
      %v6698 = vsel %vm5234, %v6619, 0
      %v6701 = vsel %vm5234, %v6621, 0
      %v6704 = vsel %vm5234, %v6623, 0
      %v6707 = vsel %vm5234, %v6625, 0
      %v6710 = vsel %vm5234, %v6627, 0
      %v6713 = vsel %vm5234, %v6629, 0
      %v6716 = vsel %vm5234, %v6631, 0
      %v6719 = vsel %vm5234, %v6633, 0
      %v6722 = vsel %vm5234, %v6635, 0
      %v6725 = vsel %vm5234, %v6637, 0
      %v6728 = vsel %vm5234, %v6639, 0
      %v6731 = vsel %vm5234, %v6641, 0
      %v6734 = vsel %vm5234, %v6643, 0
      %v6737 = vsel %vm5234, %v6645, 0
      %v6740 = vsel %vm5234, %v6664, 0
      %v6743 = vsel %vm5234, %v6666, 0
      %v6746 = vsel %vm5234, %v6668, 0
      %v6749 = vsel %vm5234, %v6670, 0
      %v6752 = vsel %vm5234, %v6672, 0
      %v6755 = vsel %vm5234, %v6674, 0
      %v6758 = vsel %vm5234, %v6676, 0
      %v6761 = vsel %vm5234, %v6678, 0
      %v6764 = vsel %vm5234, %v6680, 0
      %v6767 = vsel %vm5234, %v6682, 0
      %v6770 = vsel %vm5234, %v6684, 0
      %v6773 = vsel %vm5234, %v6686, 0
      %v6776 = vsel %vm5234, %v6688, 0
      %v6779 = vsel %vm5234, %v6690, 0
      %v6782 = vsel %vm5234, %v6692, 0
      %v6785 = vsel %vm5234, %v6694, 0
      %v6788 = vsel %vm5234, %v6696, 0
      %6790 = vmatprep.subr.bf16.mxu0 0
      %6791 = vmatpush1.bf16.xpose.msra.mxu0 %v6740
      %6792 = vmatprep.subr.bf16.mxu0 0
      %6793 = vmatpush1.bf16.xpose.msra.mxu0 %v6743
      %6794 = vmatprep.subr.bf16.mxu0 0
      %6795 = vmatpush1.bf16.xpose.msra.mxu0 %v6746
      %6796 = vmatprep.subr.bf16.mxu0 0
      %6797 = vmatpush1.bf16.xpose.msra.mxu0 %v6749
      %6798 = vmatprep.subr.bf16.mxu0 0
      %6799 = vmatpush1.bf16.xpose.msra.mxu0 %v6752
      %6800 = vmatprep.subr.bf16.mxu0 0
      %6801 = vmatpush1.bf16.xpose.msra.mxu0 %v6755
      %6802 = vmatprep.subr.bf16.mxu0 0
      %6803 = vmatpush1.bf16.xpose.msra.mxu0 %v6758
      %6804 = vmatprep.subr.bf16.mxu0 0
      %6805 = vmatpush1.bf16.xpose.msra.mxu0 %v6761
      %6806 = vmatprep.subr.bf16.mxu0 0
      %6807 = vmatpush1.bf16.xpose.msra.mxu0 %v6764
      %6808 = vmatprep.subr.bf16.mxu0 0
      %6809 = vmatpush1.bf16.xpose.msra.mxu0 %v6767
      %6810 = vmatprep.subr.bf16.mxu0 0
      %6811 = vmatpush1.bf16.xpose.msra.mxu0 %v6770
      %6812 = vmatprep.subr.bf16.mxu0 0
      %6813 = vmatpush1.bf16.xpose.msra.mxu0 %v6773
      %6814 = vmatprep.subr.bf16.mxu0 0
      %6815 = vmatpush1.bf16.xpose.msra.mxu0 %v6776
      %6816 = vmatprep.subr.bf16.mxu0 0
      %6817 = vmatpush1.bf16.xpose.msra.mxu0 %v6779
      %6818 = vmatprep.subr.bf16.mxu0 0
      %6819 = vmatpush1.bf16.xpose.msra.mxu0 %v6782
      %6820 = vmatprep.subr.bf16.mxu0 0
      %6821 = vmatpush1.bf16.xpose.msra.mxu0 %v6785
      %6822 = vmatprep.mubr.bf16.mxu0 0
      %6823 = vmatmul.mubr.bf16.gmra.mrb[0].mxu0 %v6698
      %v6824 = vpop.f32.mrb[0].mxu0
      %v6825 = vadd.f32 %v5222, %v6824
      %v6826 = vpop.f32.mrb[0].mxu0
      %v6827 = vadd.f32 %v5226, %v6826
      %v6828 = vpop.f32.mrb[0].mxu0
      %v6829 = vadd.f32 %v5222, %v6828
      %v6830 = vpop.f32.mrb[0].mxu0
      %v6831 = vadd.f32 %v5226, %v6830
      %6832 = vmatprep.mubr.bf16.mxu0 0
      %6833 = vmatmul.mubr.bf16.gmra.mrb[0].mxu0 %v6701
      %v6834 = vpop.f32.mrb[0].mxu0
      %v6835 = vadd.f32 %v5222, %v6834
      %v6836 = vpop.f32.mrb[0].mxu0
      %v6837 = vadd.f32 %v5226, %v6836
      %v6838 = vpop.f32.mrb[0].mxu0
      %v6839 = vadd.f32 %v5222, %v6838
      %v6840 = vpop.f32.mrb[0].mxu0
      %v6841 = vadd.f32 %v5226, %v6840
      %6842 = vmatprep.mubr.bf16.mxu0 0
      %6843 = vmatmul.mubr.bf16.gmra.mrb[0].mxu0 %v6704
      %v6844 = vpop.f32.mrb[0].mxu0
      %v6845 = vadd.f32 %v5222, %v6844
      %v6846 = vpop.f32.mrb[0].mxu0
      %v6847 = vadd.f32 %v5226, %v6846
      %v6848 = vpop.f32.mrb[0].mxu0
      %v6849 = vadd.f32 %v5222, %v6848
      %v6850 = vpop.f32.mrb[0].mxu0
      %v6851 = vadd.f32 %v5226, %v6850
      %6852 = vmatprep.mubr.bf16.mxu0 0
      %6853 = vmatmul.mubr.bf16.gmra.mrb[0].mxu0 %v6707
      %v6854 = vpop.f32.mrb[0].mxu0
      %v6855 = vadd.f32 %v5222, %v6854
      %v6856 = vpop.f32.mrb[0].mxu0
      %v6857 = vadd.f32 %v5226, %v6856
      %v6858 = vpop.f32.mrb[0].mxu0
      %v6859 = vadd.f32 %v5222, %v6858
      %v6860 = vpop.f32.mrb[0].mxu0
      %v6861 = vadd.f32 %v5226, %v6860
      %6862 = vmatprep.mubr.bf16.mxu0 0
      %6863 = vmatmul.mubr.bf16.gmra.mrb[0].mxu0 %v6710
      %v6864 = vpop.f32.mrb[0].mxu0
      %v6865 = vadd.f32 %v5222, %v6864
      %v6866 = vpop.f32.mrb[0].mxu0
      %v6867 = vadd.f32 %v5226, %v6866
      %v6868 = vpop.f32.mrb[0].mxu0
      %v6869 = vadd.f32 %v5222, %v6868
      %v6870 = vpop.f32.mrb[0].mxu0
      %v6871 = vadd.f32 %v5226, %v6870
      %6872 = vmatprep.mubr.bf16.mxu0 0
      %6873 = vmatmul.mubr.bf16.gmra.mrb[0].mxu0 %v6713
      %v6874 = vpop.f32.mrb[0].mxu0
      %v6875 = vadd.f32 %v5222, %v6874
      %v6876 = vpop.f32.mrb[0].mxu0
      %v6877 = vadd.f32 %v5226, %v6876
      %v6878 = vpop.f32.mrb[0].mxu0
      %v6879 = vadd.f32 %v5222, %v6878
      %v6880 = vpop.f32.mrb[0].mxu0
      %v6881 = vadd.f32 %v5226, %v6880
      %6882 = vmatprep.mubr.bf16.mxu0 0
      %6883 = vmatmul.mubr.bf16.gmra.mrb[0].mxu0 %v6716
      %v6884 = vpop.f32.mrb[0].mxu0
      %v6885 = vadd.f32 %v5222, %v6884
      %v6886 = vpop.f32.mrb[0].mxu0
      %v6887 = vadd.f32 %v5226, %v6886
      %v6888 = vpop.f32.mrb[0].mxu0
      %v6889 = vadd.f32 %v5222, %v6888
      %v6890 = vpop.f32.mrb[0].mxu0
      %v6891 = vadd.f32 %v5226, %v6890
      %6892 = vmatprep.mubr.bf16.mxu0 0
      %6893 = vmatmul.mubr.bf16.gmra.mrb[0].mxu0 %v6719
      %v6894 = vpop.f32.mrb[0].mxu0
      %v6895 = vadd.f32 %v5222, %v6894
      %v6896 = vpop.f32.mrb[0].mxu0
      %v6897 = vadd.f32 %v5226, %v6896
      %v6898 = vpop.f32.mrb[0].mxu0
      %v6899 = vadd.f32 %v5222, %v6898
      %v6900 = vpop.f32.mrb[0].mxu0
      %v6901 = vadd.f32 %v5226, %v6900
      %6902 = vmatprep.mubr.bf16.mxu0 0
      %6903 = vmatmul.mubr.bf16.gmra.mrb[0].mxu0 %v6722
      %v6904 = vpop.f32.mrb[0].mxu0
      %v6905 = vadd.f32 %v5222, %v6904
      %v6906 = vpop.f32.mrb[0].mxu0
      %v6907 = vadd.f32 %v5226, %v6906
      %v6908 = vpop.f32.mrb[0].mxu0
      %v6909 = vadd.f32 %v5222, %v6908
      %v6910 = vpop.f32.mrb[0].mxu0
      %v6911 = vadd.f32 %v5226, %v6910
      %6912 = vmatprep.mubr.bf16.mxu0 0
      %6913 = vmatmul.mubr.bf16.gmra.mrb[0].mxu0 %v6725
      %v6914 = vpop.f32.mrb[0].mxu0
      %v6915 = vadd.f32 %v5222, %v6914
      %v6916 = vpop.f32.mrb[0].mxu0
      %v6917 = vadd.f32 %v5226, %v6916
      %v6918 = vpop.f32.mrb[0].mxu0
      %v6919 = vadd.f32 %v5222, %v6918
      %v6920 = vpop.f32.mrb[0].mxu0
      %v6921 = vadd.f32 %v5226, %v6920
      %6922 = vmatprep.mubr.bf16.mxu0 0
      %6923 = vmatmul.mubr.bf16.gmra.mrb[0].mxu0 %v6728
      %v6924 = vpop.f32.mrb[0].mxu0
      %v6925 = vadd.f32 %v5222, %v6924
      %v6926 = vpop.f32.mrb[0].mxu0
      %v6927 = vadd.f32 %v5226, %v6926
      %v6928 = vpop.f32.mrb[0].mxu0
      %v6929 = vadd.f32 %v5222, %v6928
      %v6930 = vpop.f32.mrb[0].mxu0
      %v6931 = vadd.f32 %v5226, %v6930
      %6932 = vmatprep.mubr.bf16.mxu0 0
      %6933 = vmatmul.mubr.bf16.gmra.mrb[0].mxu0 %v6731
      %v6934 = vpop.f32.mrb[0].mxu0
      %v6935 = vadd.f32 %v5222, %v6934
      %v6936 = vpop.f32.mrb[0].mxu0
      %v6937 = vadd.f32 %v5226, %v6936
      %v6938 = vpop.f32.mrb[0].mxu0
      %v6939 = vadd.f32 %v5222, %v6938
      %v6940 = vpop.f32.mrb[0].mxu0
      %v6941 = vadd.f32 %v5226, %v6940
      %6942 = vmatprep.mubr.bf16.mxu0 0
      %6943 = vmatmul.mubr.bf16.gmra.mrb[0].mxu0 %v6734
      %v6944 = vpop.f32.mrb[0].mxu0
      %v6945 = vadd.f32 %v5222, %v6944
      %v6946 = vpop.f32.mrb[0].mxu0
      %v6947 = vadd.f32 %v5226, %v6946
      %v6948 = vpop.f32.mrb[0].mxu0
      %v6949 = vadd.f32 %v5222, %v6948
      %v6950 = vpop.f32.mrb[0].mxu0
      %v6951 = vadd.f32 %v5226, %v6950
      %6952 = vmatprep.mubr.bf16.mxu0 0
      %6953 = vmatmul.mubr.bf16.gmra.mrb[0].mxu0 %v6737
      %v6954 = vpop.f32.mrb[0].mxu0
      %v6955 = vadd.f32 %v5222, %v6954
      %v6956 = vpop.f32.mrb[0].mxu0
      %v6957 = vadd.f32 %v5226, %v6956
      %v6958 = vpop.f32.mrb[0].mxu0
      %v6959 = vpop.f32.mrb[0].mxu0
      %6960 = vdwg.mxu0
      %6961 = vmatprep.subr.bf16.mxu0 0
      %6962 = vmatpush1.bf16.xpose.msra.mxu0 %v6788
      %6963 = vmatprep.subr.bf16.mxu0 0
      %6964 = vmatpush1.bf16.xpose.msra.mxu0 0
      %6965 = vmatprep.subr.bf16.mxu0 0
      %6966 = vmatpush1.bf16.xpose.msra.mxu0 0
      %6967 = vmatprep.subr.bf16.mxu0 0
      %6968 = vmatpush1.bf16.xpose.msra.mxu0 0
      %6969 = vmatprep.subr.bf16.mxu0 0
      %6970 = vmatpush1.bf16.xpose.msra.mxu0 0
      %6971 = vmatprep.subr.bf16.mxu0 0
      %6972 = vmatpush1.bf16.xpose.msra.mxu0 0
      %6973 = vmatprep.subr.bf16.mxu0 0
      %6974 = vmatpush1.bf16.xpose.msra.mxu0 0
      %6975 = vmatprep.subr.bf16.mxu0 0
      %6976 = vmatpush1.bf16.xpose.msra.mxu0 0
      %6977 = vmatprep.subr.bf16.mxu0 0
      %6978 = vmatpush1.bf16.xpose.msra.mxu0 0
      %6979 = vmatprep.subr.bf16.mxu0 0
      %6980 = vmatpush1.bf16.xpose.msra.mxu0 0
      %6981 = vmatprep.subr.bf16.mxu0 0
      %6982 = vmatpush1.bf16.xpose.msra.mxu0 0
      %6983 = vmatprep.subr.bf16.mxu0 0
      %6984 = vmatpush1.bf16.xpose.msra.mxu0 0
      %6985 = vmatprep.subr.bf16.mxu0 0
      %6986 = vmatpush1.bf16.xpose.msra.mxu0 0
      %6987 = vmatprep.subr.bf16.mxu0 0
      %6988 = vmatpush1.bf16.xpose.msra.mxu0 0
      %6989 = vmatprep.subr.bf16.mxu0 0
      %6990 = vmatpush1.bf16.xpose.msra.mxu0 0
      %6991 = vmatprep.subr.bf16.mxu0 0
      %6992 = vmatpush1.bf16.xpose.msra.mxu0 0
      %6993 = vmatprep.mubr.bf16.mxu0 0
      %6994 = vmatmul.mubr.bf16.gmra.mrb[0].mxu0 %v6698
      %v6995 = vpop.f32.mrb[0].mxu0
      %v6996 = vadd.f32 %v5230, %v6995
      %v6997 = vpop.f32.mrb[0].mxu0
      %v6998 = vpop.f32.mrb[0].mxu0
      %v6999 = vadd.f32 %v5230, %v6998
      %v7000 = vpop.f32.mrb[0].mxu0
      %7001 = vmatprep.mubr.bf16.mxu0 0
      %7002 = vmatmul.mubr.bf16.gmra.mrb[0].mxu0 %v6701
      %v7003 = vpop.f32.mrb[0].mxu0
      %v7004 = vadd.f32 %v5230, %v7003
      %v7005 = vpop.f32.mrb[0].mxu0
      %v7006 = vpop.f32.mrb[0].mxu0
      %v7007 = vadd.f32 %v5230, %v7006
      %v7008 = vpop.f32.mrb[0].mxu0
      %7009 = vmatprep.mubr.bf16.mxu0 0
      %7010 = vmatmul.mubr.bf16.gmra.mrb[0].mxu0 %v6704
      %v7011 = vpop.f32.mrb[0].mxu0
      %v7012 = vadd.f32 %v5230, %v7011
      %v7013 = vpop.f32.mrb[0].mxu0
      %v7014 = vpop.f32.mrb[0].mxu0
      %v7015 = vadd.f32 %v5230, %v7014
      %v7016 = vpop.f32.mrb[0].mxu0
      %7017 = vmatprep.mubr.bf16.mxu0 0
      %7018 = vmatmul.mubr.bf16.gmra.mrb[0].mxu0 %v6707
      %v7019 = vpop.f32.mrb[0].mxu0
      %v7020 = vadd.f32 %v5230, %v7019
      %v7021 = vpop.f32.mrb[0].mxu0
      %v7022 = vpop.f32.mrb[0].mxu0
      %v7023 = vadd.f32 %v5230, %v7022
      %v7024 = vpop.f32.mrb[0].mxu0
      %7025 = vmatprep.mubr.bf16.mxu0 0
      %7026 = vmatmul.mubr.bf16.gmra.mrb[0].mxu0 %v6710
      %v7027 = vpop.f32.mrb[0].mxu0
      %v7028 = vadd.f32 %v5230, %v7027
      %v7029 = vpop.f32.mrb[0].mxu0
      %v7030 = vpop.f32.mrb[0].mxu0
      %v7031 = vadd.f32 %v5230, %v7030
      %v7032 = vpop.f32.mrb[0].mxu0
      %7033 = vmatprep.mubr.bf16.mxu0 0
      %7034 = vmatmul.mubr.bf16.gmra.mrb[0].mxu0 %v6713
      %v7035 = vpop.f32.mrb[0].mxu0
      %v7036 = vadd.f32 %v5230, %v7035
      %v7037 = vpop.f32.mrb[0].mxu0
      %v7038 = vpop.f32.mrb[0].mxu0
      %v7039 = vadd.f32 %v5230, %v7038
      %v7040 = vpop.f32.mrb[0].mxu0
      %7041 = vmatprep.mubr.bf16.mxu0 0
      %7042 = vmatmul.mubr.bf16.gmra.mrb[0].mxu0 %v6716
      %v7043 = vpop.f32.mrb[0].mxu0
      %v7044 = vadd.f32 %v5230, %v7043
      %v7045 = vpop.f32.mrb[0].mxu0
      %v7046 = vpop.f32.mrb[0].mxu0
      %v7047 = vadd.f32 %v5230, %v7046
      %v7048 = vpop.f32.mrb[0].mxu0
      %7049 = vmatprep.mubr.bf16.mxu0 0
      %7050 = vmatmul.mubr.bf16.gmra.mrb[0].mxu0 %v6719
      %v7051 = vpop.f32.mrb[0].mxu0
      %v7052 = vadd.f32 %v5230, %v7051
      %v7053 = vpop.f32.mrb[0].mxu0
      %v7054 = vpop.f32.mrb[0].mxu0
      %v7055 = vadd.f32 %v5230, %v7054
      %v7056 = vpop.f32.mrb[0].mxu0
      %7057 = vmatprep.mubr.bf16.mxu0 0
      %7058 = vmatmul.mubr.bf16.gmra.mrb[0].mxu0 %v6722
      %v7059 = vpop.f32.mrb[0].mxu0
      %v7060 = vadd.f32 %v5230, %v7059
      %v7061 = vpop.f32.mrb[0].mxu0
      %v7062 = vpop.f32.mrb[0].mxu0
      %v7063 = vadd.f32 %v5230, %v7062
      %v7064 = vpop.f32.mrb[0].mxu0
      %7065 = vmatprep.mubr.bf16.mxu0 0
      %7066 = vmatmul.mubr.bf16.gmra.mrb[0].mxu0 %v6725
      %v7067 = vpop.f32.mrb[0].mxu0
      %v7068 = vadd.f32 %v5230, %v7067
      %v7069 = vpop.f32.mrb[0].mxu0
      %v7070 = vpop.f32.mrb[0].mxu0
      %v7071 = vadd.f32 %v5230, %v7070
      %v7072 = vpop.f32.mrb[0].mxu0
      %7073 = vmatprep.mubr.bf16.mxu0 0
      %7074 = vmatmul.mubr.bf16.gmra.mrb[0].mxu0 %v6728
      %v7075 = vpop.f32.mrb[0].mxu0
      %v7076 = vadd.f32 %v5230, %v7075
      %v7077 = vpop.f32.mrb[0].mxu0
      %v7078 = vpop.f32.mrb[0].mxu0
      %v7079 = vadd.f32 %v5230, %v7078
      %v7080 = vpop.f32.mrb[0].mxu0
      %7081 = vmatprep.mubr.bf16.mxu0 0
      %7082 = vmatmul.mubr.bf16.gmra.mrb[0].mxu0 %v6731
      %v7083 = vpop.f32.mrb[0].mxu0
      %v7084 = vadd.f32 %v5230, %v7083
      %v7085 = vpop.f32.mrb[0].mxu0
      %v7086 = vpop.f32.mrb[0].mxu0
      %v7087 = vadd.f32 %v5230, %v7086
      %v7088 = vpop.f32.mrb[0].mxu0
      %7089 = vmatprep.mubr.bf16.mxu0 0
      %7090 = vmatmul.mubr.bf16.gmra.mrb[0].mxu0 %v6734
      %v7091 = vpop.f32.mrb[0].mxu0
      %v7092 = vadd.f32 %v5230, %v7091
      %v7093 = vpop.f32.mrb[0].mxu0
      %v7094 = vpop.f32.mrb[0].mxu0
      %v7095 = vadd.f32 %v5230, %v7094
      %v7096 = vpop.f32.mrb[0].mxu0
      %7097 = vmatprep.mubr.bf16.mxu0 0
      %7098 = vmatmul.mubr.bf16.gmra.mrb[0].mxu0 %v6737
      %v7099 = vpop.f32.mrb[0].mxu0
      %v7100 = vadd.f32 %v5230, %v7099
      %v7101 = vpop.f32.mrb[0].mxu0
      %v7102 = vpop.f32.mrb[0].mxu0
      %v7103 = vpop.f32.mrb[0].mxu0
      %7104 = vdwg.mxu0
      %v7105 = vmax.f32 %v6825, %v6827
      %v7106 = vsel %vm5644, %v6996, -inf
      %v7107 = vmax.f32 %v7105, %v7106
      %7108 = vmax.xlane.f32.xlu0 %v7107
      %v7109 = vpop.xlane.xlu0 %7108
      %v7110 = vmax.f32 %v6829, %v6831
      %v7111 = vsel %vm5644, %v6999, -inf
      %v7112 = vmax.f32 %v7110, %v7111
      %7113 = vmax.xlane.f32.xlu0 %v7112
      %v7114 = vpop.xlane.xlu0 %7113
      %v7115 = vmax.f32 %v6835, %v6837
      %v7116 = vsel %vm5644, %v7004, -inf
      %v7117 = vmax.f32 %v7115, %v7116
      %7118 = vmax.xlane.f32.xlu0 %v7117
      %v7119 = vpop.xlane.xlu0 %7118
      %v7120 = vmax.f32 %v6839, %v6841
      %v7121 = vsel %vm5644, %v7007, -inf
      %v7122 = vmax.f32 %v7120, %v7121
      %7123 = vmax.xlane.f32.xlu0 %v7122
      %v7124 = vpop.xlane.xlu0 %7123
      %v7125 = vmax.f32 %v6845, %v6847
      %v7126 = vsel %vm5644, %v7012, -inf
      %v7127 = vmax.f32 %v7125, %v7126
      %7128 = vmax.xlane.f32.xlu0 %v7127
      %v7129 = vpop.xlane.xlu0 %7128
      %v7130 = vmax.f32 %v6849, %v6851
      %v7131 = vsel %vm5644, %v7015, -inf
      %v7132 = vmax.f32 %v7130, %v7131
      %7133 = vmax.xlane.f32.xlu0 %v7132
      %v7134 = vpop.xlane.xlu0 %7133
      %v7135 = vmax.f32 %v6855, %v6857
      %v7136 = vsel %vm5644, %v7020, -inf
      %v7137 = vmax.f32 %v7135, %v7136
      %7138 = vmax.xlane.f32.xlu0 %v7137
      %v7139 = vpop.xlane.xlu0 %7138
      %v7140 = vmax.f32 %v6859, %v6861
      %v7141 = vsel %vm5644, %v7023, -inf
      %v7142 = vmax.f32 %v7140, %v7141
      %7143 = vmax.xlane.f32.xlu0 %v7142
      %v7144 = vpop.xlane.xlu0 %7143
      %v7145 = vmax.f32 %v6865, %v6867
      %v7146 = vsel %vm5644, %v7028, -inf
      %v7147 = vmax.f32 %v7145, %v7146
      %7148 = vmax.xlane.f32.xlu0 %v7147
      %v7149 = vpop.xlane.xlu0 %7148
      %v7150 = vmax.f32 %v6869, %v6871
      %v7151 = vsel %vm5644, %v7031, -inf
      %v7152 = vmax.f32 %v7150, %v7151
      %7153 = vmax.xlane.f32.xlu0 %v7152
      %v7154 = vpop.xlane.xlu0 %7153
      %v7155 = vmax.f32 %v6875, %v6877
      %v7156 = vsel %vm5644, %v7036, -inf
      %v7157 = vmax.f32 %v7155, %v7156
      %7158 = vmax.xlane.f32.xlu0 %v7157
      %v7159 = vpop.xlane.xlu0 %7158
      %v7160 = vmax.f32 %v6879, %v6881
      %v7161 = vsel %vm5644, %v7039, -inf
      %v7162 = vmax.f32 %v7160, %v7161
      %7163 = vmax.xlane.f32.xlu0 %v7162
      %v7164 = vpop.xlane.xlu0 %7163
      %v7165 = vmax.f32 %v6885, %v6887
      %v7166 = vsel %vm5644, %v7044, -inf
      %v7167 = vmax.f32 %v7165, %v7166
      %7168 = vmax.xlane.f32.xlu0 %v7167
      %v7169 = vpop.xlane.xlu0 %7168
      %v7170 = vmax.f32 %v6889, %v6891
      %v7171 = vsel %vm5644, %v7047, -inf
      %v7172 = vmax.f32 %v7170, %v7171
      %7173 = vmax.xlane.f32.xlu0 %v7172
      %v7174 = vpop.xlane.xlu0 %7173
      %v7175 = vmax.f32 %v6895, %v6897
      %v7176 = vsel %vm5644, %v7052, -inf
      %v7177 = vmax.f32 %v7175, %v7176
      %7178 = vmax.xlane.f32.xlu0 %v7177
      %v7179 = vpop.xlane.xlu0 %7178
      %v7180 = vmax.f32 %v6899, %v6901
      %v7181 = vsel %vm5644, %v7055, -inf
      %v7182 = vmax.f32 %v7180, %v7181
      %7183 = vmax.xlane.f32.xlu0 %v7182
      %v7184 = vpop.xlane.xlu0 %7183
      %v7185 = vmax.f32 %v6905, %v6907
      %v7186 = vsel %vm5644, %v7060, -inf
      %v7187 = vmax.f32 %v7185, %v7186
      %7188 = vmax.xlane.f32.xlu0 %v7187
      %v7189 = vpop.xlane.xlu0 %7188
      %v7190 = vmax.f32 %v6909, %v6911
      %v7191 = vsel %vm5644, %v7063, -inf
      %v7192 = vmax.f32 %v7190, %v7191
      %7193 = vmax.xlane.f32.xlu0 %v7192
      %v7194 = vpop.xlane.xlu0 %7193
      %v7195 = vmax.f32 %v6915, %v6917
      %v7196 = vsel %vm5644, %v7068, -inf
      %v7197 = vmax.f32 %v7195, %v7196
      %7198 = vmax.xlane.f32.xlu0 %v7197
      %v7199 = vpop.xlane.xlu0 %7198
      %v7200 = vmax.f32 %v6919, %v6921
      %v7201 = vsel %vm5644, %v7071, -inf
      %v7202 = vmax.f32 %v7200, %v7201
      %7203 = vmax.xlane.f32.xlu0 %v7202
      %v7204 = vpop.xlane.xlu0 %7203
      %v7205 = vmax.f32 %v6925, %v6927
      %v7206 = vsel %vm5644, %v7076, -inf
      %v7207 = vmax.f32 %v7205, %v7206
      %7208 = vmax.xlane.f32.xlu0 %v7207
      %v7209 = vpop.xlane.xlu0 %7208
      %v7210 = vmax.f32 %v6929, %v6931
      %v7211 = vsel %vm5644, %v7079, -inf
      %v7212 = vmax.f32 %v7210, %v7211
      %7213 = vmax.xlane.f32.xlu0 %v7212
      %v7214 = vpop.xlane.xlu0 %7213
      %v7215 = vmax.f32 %v6935, %v6937
      %v7216 = vsel %vm5644, %v7084, -inf
      %v7217 = vmax.f32 %v7215, %v7216
      %7218 = vmax.xlane.f32.xlu0 %v7217
      %v7219 = vpop.xlane.xlu0 %7218
      %v7220 = vmax.f32 %v6939, %v6941
      %v7221 = vsel %vm5644, %v7087, -inf
      %v7222 = vmax.f32 %v7220, %v7221
      %7223 = vmax.xlane.f32.xlu0 %v7222
      %v7224 = vpop.xlane.xlu0 %7223
      %v7225 = vmax.f32 %v6945, %v6947
      %v7226 = vsel %vm5644, %v7092, -inf
      %v7227 = vmax.f32 %v7225, %v7226
      %7228 = vmax.xlane.f32.xlu0 %v7227
      %v7229 = vpop.xlane.xlu0 %7228
      %v7230 = vmax.f32 %v6949, %v6951
      %v7231 = vsel %vm5644, %v7095, -inf
      %v7232 = vmax.f32 %v7230, %v7231
      %7233 = vmax.xlane.f32.xlu0 %v7232
      %v7234 = vpop.xlane.xlu0 %7233
      %v7235 = vmax.f32 %v6955, %v6957
      %v7236 = vsel %vm5644, %v7100, -inf
      %v7237 = vmax.f32 %v7235, %v7236
      %7238 = vmax.xlane.f32.xlu0 %v7237
      %v7239 = vpop.xlane.xlu0 %7238
      %v7240 = vsub.f32 %v6825, %v7109
      %v7241 = vsub.f32 %v6827, %v7109
      %v7242 = vsub.f32 %v6996, %v7109
      %v7243 = vsub.f32 %v6829, %v7114
      %v7244 = vsub.f32 %v6831, %v7114
      %v7245 = vsub.f32 %v6999, %v7114
      %v7246 = vsub.f32 %v6835, %v7119
      %v7247 = vsub.f32 %v6837, %v7119
      %v7248 = vsub.f32 %v7004, %v7119
      %v7249 = vsub.f32 %v6839, %v7124
      %v7250 = vsub.f32 %v6841, %v7124
      %v7251 = vsub.f32 %v7007, %v7124
      %v7252 = vsub.f32 %v6845, %v7129
      %v7253 = vsub.f32 %v6847, %v7129
      %v7254 = vsub.f32 %v7012, %v7129
      %v7255 = vsub.f32 %v6849, %v7134
      %v7256 = vsub.f32 %v6851, %v7134
      %v7257 = vsub.f32 %v7015, %v7134
      %v7258 = vsub.f32 %v6855, %v7139
      %v7259 = vsub.f32 %v6857, %v7139
      %v7260 = vsub.f32 %v7020, %v7139
      %v7261 = vsub.f32 %v6859, %v7144
      %v7262 = vsub.f32 %v6861, %v7144
      %v7263 = vsub.f32 %v7023, %v7144
      %v7264 = vsub.f32 %v6865, %v7149
      %v7265 = vsub.f32 %v6867, %v7149
      %v7266 = vsub.f32 %v7028, %v7149
      %v7267 = vsub.f32 %v6869, %v7154
      %v7268 = vsub.f32 %v6871, %v7154
      %v7269 = vsub.f32 %v7031, %v7154
      %v7270 = vsub.f32 %v6875, %v7159
      %v7271 = vsub.f32 %v6877, %v7159
      %v7272 = vsub.f32 %v7036, %v7159
      %v7273 = vsub.f32 %v6879, %v7164
      %v7274 = vsub.f32 %v6881, %v7164
      %v7275 = vsub.f32 %v7039, %v7164
      %v7276 = vsub.f32 %v6885, %v7169
      %v7277 = vsub.f32 %v6887, %v7169
      %v7278 = vsub.f32 %v7044, %v7169
      %v7279 = vsub.f32 %v6889, %v7174
      %v7280 = vsub.f32 %v6891, %v7174
      %v7281 = vsub.f32 %v7047, %v7174
      %v7282 = vsub.f32 %v6895, %v7179
      %v7283 = vsub.f32 %v6897, %v7179
      %v7284 = vsub.f32 %v7052, %v7179
      %v7285 = vsub.f32 %v6899, %v7184
      %v7286 = vsub.f32 %v6901, %v7184
      %v7287 = vsub.f32 %v7055, %v7184
      %v7288 = vsub.f32 %v6905, %v7189
      %v7289 = vsub.f32 %v6907, %v7189
      %v7290 = vsub.f32 %v7060, %v7189
      %v7291 = vsub.f32 %v6909, %v7194
      %v7292 = vsub.f32 %v6911, %v7194
      %v7293 = vsub.f32 %v7063, %v7194
      %v7294 = vsub.f32 %v6915, %v7199
      %v7295 = vsub.f32 %v6917, %v7199
      %v7296 = vsub.f32 %v7068, %v7199
      %v7297 = vsub.f32 %v6919, %v7204
      %v7298 = vsub.f32 %v6921, %v7204
      %v7299 = vsub.f32 %v7071, %v7204
      %v7300 = vsub.f32 %v6925, %v7209
      %v7301 = vsub.f32 %v6927, %v7209
      %v7302 = vsub.f32 %v7076, %v7209
      %v7303 = vsub.f32 %v6929, %v7214
      %v7304 = vsub.f32 %v6931, %v7214
      %v7305 = vsub.f32 %v7079, %v7214
      %v7306 = vsub.f32 %v6935, %v7219
      %v7307 = vsub.f32 %v6937, %v7219
      %v7308 = vsub.f32 %v7084, %v7219
      %v7309 = vsub.f32 %v6939, %v7224
      %v7310 = vsub.f32 %v6941, %v7224
      %v7311 = vsub.f32 %v7087, %v7224
      %v7312 = vsub.f32 %v6945, %v7229
      %v7313 = vsub.f32 %v6947, %v7229
      %v7314 = vsub.f32 %v7092, %v7229
      %v7315 = vsub.f32 %v6949, %v7234
      %v7316 = vsub.f32 %v6951, %v7234
      %v7317 = vsub.f32 %v7095, %v7234
      %v7318 = vsub.f32 %v6955, %v7239
      %v7319 = vsub.f32 %v6957, %v7239
      %v7320 = vsub.f32 %v7100, %v7239
      %v7321 = vmul.f32 %v7240, 1.442695
      %v7322 = vpow.pop %v7321
      %v7323 = vmul.f32 %v7241, 1.442695
      %v7324 = vpow.pop %v7323
      %v7325 = vmul.f32 %v7242, 1.442695
      %v7326 = vpow.pop %v7325
      %v7327 = vmul.f32 %v7243, 1.442695
      %v7328 = vpow.pop %v7327
      %v7329 = vmul.f32 %v7244, 1.442695
      %v7330 = vpow.pop %v7329
      %v7331 = vmul.f32 %v7245, 1.442695
      %v7332 = vpow.pop %v7331
      %v7333 = vmul.f32 %v7246, 1.442695
      %v7334 = vpow.pop %v7333
      %v7335 = vmul.f32 %v7247, 1.442695
      %v7336 = vpow.pop %v7335
      %v7337 = vmul.f32 %v7248, 1.442695
      %v7338 = vpow.pop %v7337
      %v7339 = vmul.f32 %v7249, 1.442695
      %v7340 = vpow.pop %v7339
      %v7341 = vmul.f32 %v7250, 1.442695
      %v7342 = vpow.pop %v7341
      %v7343 = vmul.f32 %v7251, 1.442695
      %v7344 = vpow.pop %v7343
      %v7345 = vmul.f32 %v7252, 1.442695
      %v7346 = vpow.pop %v7345
      %v7347 = vmul.f32 %v7253, 1.442695
      %v7348 = vpow.pop %v7347
      %v7349 = vmul.f32 %v7254, 1.442695
      %v7350 = vpow.pop %v7349
      %v7351 = vmul.f32 %v7255, 1.442695
      %v7352 = vpow.pop %v7351
      %v7353 = vmul.f32 %v7256, 1.442695
      %v7354 = vpow.pop %v7353
      %v7355 = vmul.f32 %v7257, 1.442695
      %v7356 = vpow.pop %v7355
      %v7357 = vmul.f32 %v7258, 1.442695
      %v7358 = vpow.pop %v7357
      %v7359 = vmul.f32 %v7259, 1.442695
      %v7360 = vpow.pop %v7359
      %v7361 = vmul.f32 %v7260, 1.442695
      %v7362 = vpow.pop %v7361
      %v7363 = vmul.f32 %v7261, 1.442695
      %v7364 = vpow.pop %v7363
      %v7365 = vmul.f32 %v7262, 1.442695
      %v7366 = vpow.pop %v7365
      %v7367 = vmul.f32 %v7263, 1.442695
      %v7368 = vpow.pop %v7367
      %v7369 = vmul.f32 %v7264, 1.442695
      %v7370 = vpow.pop %v7369
      %v7371 = vmul.f32 %v7265, 1.442695
      %v7372 = vpow.pop %v7371
      %v7373 = vmul.f32 %v7266, 1.442695
      %v7374 = vpow.pop %v7373
      %v7375 = vmul.f32 %v7267, 1.442695
      %v7376 = vpow.pop %v7375
      %v7377 = vmul.f32 %v7268, 1.442695
      %v7378 = vpow.pop %v7377
      %v7379 = vmul.f32 %v7269, 1.442695
      %v7380 = vpow.pop %v7379
      %v7381 = vmul.f32 %v7270, 1.442695
      %v7382 = vpow.pop %v7381
      %v7383 = vmul.f32 %v7271, 1.442695
      %v7384 = vpow.pop %v7383
      %v7385 = vmul.f32 %v7272, 1.442695
      %v7386 = vpow.pop %v7385
      %v7387 = vmul.f32 %v7273, 1.442695
      %v7388 = vpow.pop %v7387
      %v7389 = vmul.f32 %v7274, 1.442695
      %v7390 = vpow.pop %v7389
      %v7391 = vmul.f32 %v7275, 1.442695
      %v7392 = vpow.pop %v7391
      %v7393 = vmul.f32 %v7276, 1.442695
      %v7394 = vpow.pop %v7393
      %v7395 = vmul.f32 %v7277, 1.442695
      %v7396 = vpow.pop %v7395
      %v7397 = vmul.f32 %v7278, 1.442695
      %v7398 = vpow.pop %v7397
      %v7399 = vmul.f32 %v7279, 1.442695
      %v7400 = vpow.pop %v7399
      %v7401 = vmul.f32 %v7280, 1.442695
      %v7402 = vpow.pop %v7401
      %v7403 = vmul.f32 %v7281, 1.442695
      %v7404 = vpow.pop %v7403
      %v7405 = vmul.f32 %v7282, 1.442695
      %v7406 = vpow.pop %v7405
      %v7407 = vmul.f32 %v7283, 1.442695
      %v7408 = vpow.pop %v7407
      %v7409 = vmul.f32 %v7284, 1.442695
      %v7410 = vpow.pop %v7409
      %v7411 = vmul.f32 %v7285, 1.442695
      %v7412 = vpow.pop %v7411
      %v7413 = vmul.f32 %v7286, 1.442695
      %v7414 = vpow.pop %v7413
      %v7415 = vmul.f32 %v7287, 1.442695
      %v7416 = vpow.pop %v7415
      %v7417 = vmul.f32 %v7288, 1.442695
      %v7418 = vpow.pop %v7417
      %v7419 = vmul.f32 %v7289, 1.442695
      %v7420 = vpow.pop %v7419
      %v7421 = vmul.f32 %v7290, 1.442695
      %v7422 = vpow.pop %v7421
      %v7423 = vmul.f32 %v7291, 1.442695
      %v7424 = vpow.pop %v7423
      %v7425 = vmul.f32 %v7292, 1.442695
      %v7426 = vpow.pop %v7425
      %v7427 = vmul.f32 %v7293, 1.442695
      %v7428 = vpow.pop %v7427
      %v7429 = vmul.f32 %v7294, 1.442695
      %v7430 = vpow.pop %v7429
      %v7431 = vmul.f32 %v7295, 1.442695
      %v7432 = vpow.pop %v7431
      %v7433 = vmul.f32 %v7296, 1.442695
      %v7434 = vpow.pop %v7433
      %v7435 = vmul.f32 %v7297, 1.442695
      %v7436 = vpow.pop %v7435
      %v7437 = vmul.f32 %v7298, 1.442695
      %v7438 = vpow.pop %v7437
      %v7439 = vmul.f32 %v7299, 1.442695
      %v7440 = vpow.pop %v7439
      %v7441 = vmul.f32 %v7300, 1.442695
      %v7442 = vpow.pop %v7441
      %v7443 = vmul.f32 %v7301, 1.442695
      %v7444 = vpow.pop %v7443
      %v7445 = vmul.f32 %v7302, 1.442695
      %v7446 = vpow.pop %v7445
      %v7447 = vmul.f32 %v7303, 1.442695
      %v7448 = vpow.pop %v7447
      %v7449 = vmul.f32 %v7304, 1.442695
      %v7450 = vpow.pop %v7449
      %v7451 = vmul.f32 %v7305, 1.442695
      %v7452 = vpow.pop %v7451
      %v7453 = vmul.f32 %v7306, 1.442695
      %v7454 = vpow.pop %v7453
      %v7455 = vmul.f32 %v7307, 1.442695
      %v7456 = vpow.pop %v7455
      %v7457 = vmul.f32 %v7308, 1.442695
      %v7458 = vpow.pop %v7457
      %v7459 = vmul.f32 %v7309, 1.442695
      %v7460 = vpow.pop %v7459
      %v7461 = vmul.f32 %v7310, 1.442695
      %v7462 = vpow.pop %v7461
      %v7463 = vmul.f32 %v7311, 1.442695
      %v7464 = vpow.pop %v7463
      %v7465 = vmul.f32 %v7312, 1.442695
      %v7466 = vpow.pop %v7465
      %v7467 = vmul.f32 %v7313, 1.442695
      %v7468 = vpow.pop %v7467
      %v7469 = vmul.f32 %v7314, 1.442695
      %v7470 = vpow.pop %v7469
      %v7471 = vmul.f32 %v7315, 1.442695
      %v7472 = vpow.pop %v7471
      %v7473 = vmul.f32 %v7316, 1.442695
      %v7474 = vpow.pop %v7473
      %v7475 = vmul.f32 %v7317, 1.442695
      %v7476 = vpow.pop %v7475
      %v7477 = vmul.f32 %v7318, 1.442695
      %v7478 = vpow.pop %v7477
      %v7479 = vmul.f32 %v7319, 1.442695
      %v7480 = vpow.pop %v7479
      %v7481 = vmul.f32 %v7320, 1.442695
      %v7482 = vpow.pop %v7481
      %v7483 = vadd.f32 %v7322, %v7324
      %v7484 = vsel %vm5644, %v7326, 0.0
      %v7485 = vadd.f32 %v7483, %v7484
      %7486 = vadd.xlane.f32.xlu0 %v7485
      %v7487 = vpop.xlane.xlu0 %7486
      %v7488 = vadd.f32 %v7328, %v7330
      %v7489 = vsel %vm5644, %v7332, 0.0
      %v7490 = vadd.f32 %v7488, %v7489
      %7491 = vadd.xlane.f32.xlu0 %v7490
      %v7492 = vpop.xlane.xlu0 %7491
      %v7493 = vadd.f32 %v7334, %v7336
      %v7494 = vsel %vm5644, %v7338, 0.0
      %v7495 = vadd.f32 %v7493, %v7494
      %7496 = vadd.xlane.f32.xlu0 %v7495
      %v7497 = vpop.xlane.xlu0 %7496
      %v7498 = vadd.f32 %v7340, %v7342
      %v7499 = vsel %vm5644, %v7344, 0.0
      %v7500 = vadd.f32 %v7498, %v7499
      %7501 = vadd.xlane.f32.xlu0 %v7500
      %v7502 = vpop.xlane.xlu0 %7501
      %v7503 = vadd.f32 %v7346, %v7348
      %v7504 = vsel %vm5644, %v7350, 0.0
      %v7505 = vadd.f32 %v7503, %v7504
      %7506 = vadd.xlane.f32.xlu0 %v7505
      %v7507 = vpop.xlane.xlu0 %7506
      %v7508 = vadd.f32 %v7352, %v7354
      %v7509 = vsel %vm5644, %v7356, 0.0
      %v7510 = vadd.f32 %v7508, %v7509
      %7511 = vadd.xlane.f32.xlu0 %v7510
      %v7512 = vpop.xlane.xlu0 %7511
      %v7513 = vadd.f32 %v7358, %v7360
      %v7514 = vsel %vm5644, %v7362, 0.0
      %v7515 = vadd.f32 %v7513, %v7514
      %7516 = vadd.xlane.f32.xlu0 %v7515
      %v7517 = vpop.xlane.xlu0 %7516
      %v7518 = vadd.f32 %v7364, %v7366
      %v7519 = vsel %vm5644, %v7368, 0.0
      %v7520 = vadd.f32 %v7518, %v7519
      %7521 = vadd.xlane.f32.xlu0 %v7520
      %v7522 = vpop.xlane.xlu0 %7521
      %v7523 = vadd.f32 %v7370, %v7372
      %v7524 = vsel %vm5644, %v7374, 0.0
      %v7525 = vadd.f32 %v7523, %v7524
      %7526 = vadd.xlane.f32.xlu0 %v7525
      %v7527 = vpop.xlane.xlu0 %7526
      %v7528 = vadd.f32 %v7376, %v7378
      %v7529 = vsel %vm5644, %v7380, 0.0
      %v7530 = vadd.f32 %v7528, %v7529
      %7531 = vadd.xlane.f32.xlu0 %v7530
      %v7532 = vpop.xlane.xlu0 %7531
      %v7533 = vadd.f32 %v7382, %v7384
      %v7534 = vsel %vm5644, %v7386, 0.0
      %v7535 = vadd.f32 %v7533, %v7534
      %7536 = vadd.xlane.f32.xlu0 %v7535
      %v7537 = vpop.xlane.xlu0 %7536
      %v7538 = vadd.f32 %v7388, %v7390
      %v7539 = vsel %vm5644, %v7392, 0.0
      %v7540 = vadd.f32 %v7538, %v7539
      %7541 = vadd.xlane.f32.xlu0 %v7540
      %v7542 = vpop.xlane.xlu0 %7541
      %v7543 = vadd.f32 %v7394, %v7396
      %v7544 = vsel %vm5644, %v7398, 0.0
      %v7545 = vadd.f32 %v7543, %v7544
      %7546 = vadd.xlane.f32.xlu0 %v7545
      %v7547 = vpop.xlane.xlu0 %7546
      %v7548 = vadd.f32 %v7400, %v7402
      %v7549 = vsel %vm5644, %v7404, 0.0
      %v7550 = vadd.f32 %v7548, %v7549
      %7551 = vadd.xlane.f32.xlu0 %v7550
      %v7552 = vpop.xlane.xlu0 %7551
      %v7553 = vadd.f32 %v7406, %v7408
      %v7554 = vsel %vm5644, %v7410, 0.0
      %v7555 = vadd.f32 %v7553, %v7554
      %7556 = vadd.xlane.f32.xlu0 %v7555
      %v7557 = vpop.xlane.xlu0 %7556
      %v7558 = vadd.f32 %v7412, %v7414
      %v7559 = vsel %vm5644, %v7416, 0.0
      %v7560 = vadd.f32 %v7558, %v7559
      %7561 = vadd.xlane.f32.xlu0 %v7560
      %v7562 = vpop.xlane.xlu0 %7561
      %v7563 = vadd.f32 %v7418, %v7420
      %v7564 = vsel %vm5644, %v7422, 0.0
      %v7565 = vadd.f32 %v7563, %v7564
      %7566 = vadd.xlane.f32.xlu0 %v7565
      %v7567 = vpop.xlane.xlu0 %7566
      %v7568 = vadd.f32 %v7424, %v7426
      %v7569 = vsel %vm5644, %v7428, 0.0
      %v7570 = vadd.f32 %v7568, %v7569
      %7571 = vadd.xlane.f32.xlu0 %v7570
      %v7572 = vpop.xlane.xlu0 %7571
      %v7573 = vadd.f32 %v7430, %v7432
      %v7574 = vsel %vm5644, %v7434, 0.0
      %v7575 = vadd.f32 %v7573, %v7574
      %7576 = vadd.xlane.f32.xlu0 %v7575
      %v7577 = vpop.xlane.xlu0 %7576
      %v7578 = vadd.f32 %v7436, %v7438
      %v7579 = vsel %vm5644, %v7440, 0.0
      %v7580 = vadd.f32 %v7578, %v7579
      %7581 = vadd.xlane.f32.xlu0 %v7580
      %v7582 = vpop.xlane.xlu0 %7581
      %v7583 = vadd.f32 %v7442, %v7444
      %v7584 = vsel %vm5644, %v7446, 0.0
      %v7585 = vadd.f32 %v7583, %v7584
      %7586 = vadd.xlane.f32.xlu0 %v7585
      %v7587 = vpop.xlane.xlu0 %7586
      %v7588 = vadd.f32 %v7448, %v7450
      %v7589 = vsel %vm5644, %v7452, 0.0
      %v7590 = vadd.f32 %v7588, %v7589
      %7591 = vadd.xlane.f32.xlu0 %v7590
      %v7592 = vpop.xlane.xlu0 %7591
      %v7593 = vadd.f32 %v7454, %v7456
      %v7594 = vsel %vm5644, %v7458, 0.0
      %v7595 = vadd.f32 %v7593, %v7594
      %7596 = vadd.xlane.f32.xlu0 %v7595
      %v7597 = vpop.xlane.xlu0 %7596
      %v7598 = vadd.f32 %v7460, %v7462
      %v7599 = vsel %vm5644, %v7464, 0.0
      %v7600 = vadd.f32 %v7598, %v7599
      %7601 = vadd.xlane.f32.xlu0 %v7600
      %v7602 = vpop.xlane.xlu0 %7601
      %v7603 = vadd.f32 %v7466, %v7468
      %v7604 = vsel %vm5644, %v7470, 0.0
      %v7605 = vadd.f32 %v7603, %v7604
      %7606 = vadd.xlane.f32.xlu0 %v7605
      %v7607 = vpop.xlane.xlu0 %7606
      %v7608 = vadd.f32 %v7472, %v7474
      %v7609 = vsel %vm5644, %v7476, 0.0
      %v7610 = vadd.f32 %v7608, %v7609
      %7611 = vadd.xlane.f32.xlu0 %v7610
      %v7612 = vpop.xlane.xlu0 %7611
      %v7613 = vadd.f32 %v7478, %v7480
      %v7614 = vsel %vm5644, %v7482, 0.0
      %v7615 = vadd.f32 %v7613, %v7614
      %7616 = vadd.xlane.f32.xlu0 %v7615
      %v7617 = vpop.xlane.xlu0 %7616
      %v7618 = vpack.c.bf16 %v7328, %v7322
      %v7619 = vpack.c.bf16 %v7330, %v7324
      %v7620 = vpack.c.bf16 %v7332, %v7326
      %v7621 = vpack.c.bf16 %v7340, %v7334
      %v7622 = vpack.c.bf16 %v7342, %v7336
      %v7623 = vpack.c.bf16 %v7344, %v7338
      %v7624 = vpack.c.bf16 %v7352, %v7346
      %v7625 = vpack.c.bf16 %v7354, %v7348
      %v7626 = vpack.c.bf16 %v7356, %v7350
      %v7627 = vpack.c.bf16 %v7364, %v7358
      %v7628 = vpack.c.bf16 %v7366, %v7360
      %v7629 = vpack.c.bf16 %v7368, %v7362
      %v7630 = vpack.c.bf16 %v7376, %v7370
      %v7631 = vpack.c.bf16 %v7378, %v7372
      %v7632 = vpack.c.bf16 %v7380, %v7374
      %v7633 = vpack.c.bf16 %v7388, %v7382
      %v7634 = vpack.c.bf16 %v7390, %v7384
      %v7635 = vpack.c.bf16 %v7392, %v7386
      %v7636 = vpack.c.bf16 %v7400, %v7394
      %v7637 = vpack.c.bf16 %v7402, %v7396
      %v7638 = vpack.c.bf16 %v7404, %v7398
      %v7639 = vpack.c.bf16 %v7412, %v7406
      %v7640 = vpack.c.bf16 %v7414, %v7408
      %v7641 = vpack.c.bf16 %v7416, %v7410
      %v7642 = vpack.c.bf16 %v7424, %v7418
      %v7643 = vpack.c.bf16 %v7426, %v7420
      %v7644 = vpack.c.bf16 %v7428, %v7422
      %v7645 = vpack.c.bf16 %v7436, %v7430
      %v7646 = vpack.c.bf16 %v7438, %v7432
      %v7647 = vpack.c.bf16 %v7440, %v7434
      %v7648 = vpack.c.bf16 %v7448, %v7442
      %v7649 = vpack.c.bf16 %v7450, %v7444
      %v7650 = vpack.c.bf16 %v7452, %v7446
      %v7651 = vpack.c.bf16 %v7460, %v7454
      %v7652 = vpack.c.bf16 %v7462, %v7456
      %v7653 = vpack.c.bf16 %v7464, %v7458
      %v7654 = vpack.c.bf16 %v7472, %v7466
      %v7655 = vpack.c.bf16 %v7474, %v7468
      %v7656 = vpack.c.bf16 %v7476, %v7470
      %v7657 = vpack.c.bf16 %v7478, %v7478
      %v7658 = vpack.c.bf16 %v7480, %v7480
      %v7659 = vpack.c.bf16 %v7482, %v7482
      %7677 = vrot.lane.b32.xlu0 %v5200, 96
      %v7678 = vpop.permute.xlu0 %7677
      %7679 = vrot.lane.b32.xlu0 %v5201, 96
      %v7680 = vpop.permute.xlu0 %7679
      %7681 = vrot.lane.b32.xlu0 %v5202, 96
      %v7682 = vpop.permute.xlu0 %7681
      %7683 = vrot.lane.b32.xlu0 %v5203, 96
      %v7684 = vpop.permute.xlu0 %7683
      %7685 = vrot.lane.b32.xlu0 %v5204, 96
      %v7686 = vpop.permute.xlu0 %7685
      %7687 = vrot.lane.b32.xlu0 %v5205, 96
      %v7688 = vpop.permute.xlu0 %7687
      %7689 = vrot.lane.b32.xlu0 %v5206, 96
      %v7690 = vpop.permute.xlu0 %7689
      %7691 = vrot.lane.b32.xlu0 %v5207, 96
      %v7692 = vpop.permute.xlu0 %7691
      %7693 = vrot.lane.b32.xlu0 %v5208, 96
      %v7694 = vpop.permute.xlu0 %7693
      %7695 = vrot.lane.b32.xlu0 %v5209, 96
      %v7696 = vpop.permute.xlu0 %7695
      %7697 = vrot.lane.b32.xlu0 %v5210, 96
      %v7698 = vpop.permute.xlu0 %7697
      %7699 = vrot.lane.b32.xlu0 %v5211, 96
      %v7700 = vpop.permute.xlu0 %7699
      %7701 = vrot.lane.b32.xlu0 %v5212, 96
      %v7702 = vpop.permute.xlu0 %7701
      %7703 = vrot.lane.b32.xlu0 %v5213, 96
      %v7704 = vpop.permute.xlu0 %7703
      %7705 = vrot.lane.b32.xlu0 %v5214, 96
      %v7706 = vpop.permute.xlu0 %7705
      %7707 = vrot.lane.b32.xlu0 %v5215, 96
      %v7708 = vpop.permute.xlu0 %7707
      %7709 = vrot.lane.b32.xlu0 %v5216, 96
      %v7710 = vpop.permute.xlu0 %7709
      %v7728 = vsel %vm5644, %v7620, 0
      %v7731 = vsel %vm5644, %v7623, 0
      %v7734 = vsel %vm5644, %v7626, 0
      %v7737 = vsel %vm5644, %v7629, 0
      %v7740 = vsel %vm5644, %v7632, 0
      %v7743 = vsel %vm5644, %v7635, 0
      %v7746 = vsel %vm5644, %v7638, 0
      %v7749 = vsel %vm5644, %v7641, 0
      %v7752 = vsel %vm5644, %v7644, 0
      %v7755 = vsel %vm5644, %v7647, 0
      %v7758 = vsel %vm5644, %v7650, 0
      %v7761 = vsel %vm5644, %v7653, 0
      %v7764 = vsel %vm5644, %v7656, 0
      %v7767 = vsel %vm5644, %v7659, 0
      %v7770 = vsel %vm664, %v7710, 0
      %7772 = vmatprep.subr.bf16.mxu0 0
      %7773 = vmatpush1.bf16.msra.mxu0 %v7678
      %7774 = vmatprep.subr.bf16.mxu0 0
      %7775 = vmatpush1.bf16.msra.mxu0 %v7680
      %7776 = vmatprep.subr.bf16.mxu0 0
      %7777 = vmatpush1.bf16.msra.mxu0 %v7682
      %7778 = vmatprep.subr.bf16.mxu0 0
      %7779 = vmatpush1.bf16.msra.mxu0 %v7684
      %7780 = vmatprep.subr.bf16.mxu0 0
      %7781 = vmatpush1.bf16.msra.mxu0 %v7686
      %7782 = vmatprep.subr.bf16.mxu0 0
      %7783 = vmatpush1.bf16.msra.mxu0 %v7688
      %7784 = vmatprep.subr.bf16.mxu0 0
      %7785 = vmatpush1.bf16.msra.mxu0 %v7690
      %7786 = vmatprep.subr.bf16.mxu0 0
      %7787 = vmatpush1.bf16.msra.mxu0 %v7692
      %7788 = vmatprep.subr.bf16.mxu0 0
      %7789 = vmatpush1.bf16.msra.mxu0 %v7694
      %7790 = vmatprep.subr.bf16.mxu0 0
      %7791 = vmatpush1.bf16.msra.mxu0 %v7696
      %7792 = vmatprep.subr.bf16.mxu0 0
      %7793 = vmatpush1.bf16.msra.mxu0 %v7698
      %7794 = vmatprep.subr.bf16.mxu0 0
      %7795 = vmatpush1.bf16.msra.mxu0 %v7700
      %7796 = vmatprep.subr.bf16.mxu0 0
      %7797 = vmatpush1.bf16.msra.mxu0 %v7702
      %7798 = vmatprep.subr.bf16.mxu0 0
      %7799 = vmatpush1.bf16.msra.mxu0 %v7704
      %7800 = vmatprep.subr.bf16.mxu0 0
      %7801 = vmatpush1.bf16.msra.mxu0 %v7706
      %7802 = vmatprep.subr.bf16.mxu0 0
      %7803 = vmatpush1.bf16.msra.mxu0 %v7708
      %7804 = vmatprep.mubr.bf16.mxu0 %v7619
      %7805 = vmatmul.mubr.bf16.gmra.mrb[0].mxu0 %v7618
      %v7806 = vpop.f32.mrb[0].mxu0
      %v7807 = vadd.f32 0.0, %v7806
      %v7808 = vpop.f32.mrb[0].mxu0
      %v7809 = vpop.f32.mrb[0].mxu0
      %v7810 = vadd.f32 0.0, %v7809
      %v7811 = vpop.f32.mrb[0].mxu0
      %7812 = vmatprep.mubr.bf16.mxu0 %v7622
      %7813 = vmatmul.mubr.bf16.gmra.mrb[0].mxu0 %v7621
      %v7814 = vpop.f32.mrb[0].mxu0
      %v7815 = vadd.f32 0.0, %v7814
      %v7816 = vpop.f32.mrb[0].mxu0
      %v7817 = vpop.f32.mrb[0].mxu0
      %v7818 = vadd.f32 0.0, %v7817
      %v7819 = vpop.f32.mrb[0].mxu0
      %7820 = vmatprep.mubr.bf16.mxu0 %v7625
      %7821 = vmatmul.mubr.bf16.gmra.mrb[0].mxu0 %v7624
      %v7822 = vpop.f32.mrb[0].mxu0
      %v7823 = vadd.f32 0.0, %v7822
      %v7824 = vpop.f32.mrb[0].mxu0
      %v7825 = vpop.f32.mrb[0].mxu0
      %v7826 = vadd.f32 0.0, %v7825
      %v7827 = vpop.f32.mrb[0].mxu0
      %7828 = vmatprep.mubr.bf16.mxu0 %v7628
      %7829 = vmatmul.mubr.bf16.gmra.mrb[0].mxu0 %v7627
      %v7830 = vpop.f32.mrb[0].mxu0
      %v7831 = vadd.f32 0.0, %v7830
      %v7832 = vpop.f32.mrb[0].mxu0
      %v7833 = vpop.f32.mrb[0].mxu0
      %v7834 = vadd.f32 0.0, %v7833
      %v7835 = vpop.f32.mrb[0].mxu0
      %7836 = vmatprep.mubr.bf16.mxu0 %v7631
      %7837 = vmatmul.mubr.bf16.gmra.mrb[0].mxu0 %v7630
      %v7838 = vpop.f32.mrb[0].mxu0
      %v7839 = vadd.f32 0.0, %v7838
      %v7840 = vpop.f32.mrb[0].mxu0
      %v7841 = vpop.f32.mrb[0].mxu0
      %v7842 = vadd.f32 0.0, %v7841
      %v7843 = vpop.f32.mrb[0].mxu0
      %7844 = vmatprep.mubr.bf16.mxu0 %v7634
      %7845 = vmatmul.mubr.bf16.gmra.mrb[0].mxu0 %v7633
      %v7846 = vpop.f32.mrb[0].mxu0
      %v7847 = vadd.f32 0.0, %v7846
      %v7848 = vpop.f32.mrb[0].mxu0
      %v7849 = vpop.f32.mrb[0].mxu0
      %v7850 = vadd.f32 0.0, %v7849
      %v7851 = vpop.f32.mrb[0].mxu0
      %7852 = vmatprep.mubr.bf16.mxu0 %v7637
      %7853 = vmatmul.mubr.bf16.gmra.mrb[0].mxu0 %v7636
      %v7854 = vpop.f32.mrb[0].mxu0
      %v7855 = vadd.f32 0.0, %v7854
      %v7856 = vpop.f32.mrb[0].mxu0
      %v7857 = vpop.f32.mrb[0].mxu0
      %v7858 = vadd.f32 0.0, %v7857
      %v7859 = vpop.f32.mrb[0].mxu0
      %7860 = vmatprep.mubr.bf16.mxu0 %v7640
      %7861 = vmatmul.mubr.bf16.gmra.mrb[0].mxu0 %v7639
      %v7862 = vpop.f32.mrb[0].mxu0
      %v7863 = vadd.f32 0.0, %v7862
      %v7864 = vpop.f32.mrb[0].mxu0
      %v7865 = vpop.f32.mrb[0].mxu0
      %v7866 = vadd.f32 0.0, %v7865
      %v7867 = vpop.f32.mrb[0].mxu0
      %7868 = vmatprep.mubr.bf16.mxu0 %v7643
      %7869 = vmatmul.mubr.bf16.gmra.mrb[0].mxu0 %v7642
      %v7870 = vpop.f32.mrb[0].mxu0
      %v7871 = vadd.f32 0.0, %v7870
      %v7872 = vpop.f32.mrb[0].mxu0
      %v7873 = vpop.f32.mrb[0].mxu0
      %v7874 = vadd.f32 0.0, %v7873
      %v7875 = vpop.f32.mrb[0].mxu0
      %7876 = vmatprep.mubr.bf16.mxu0 %v7646
      %7877 = vmatmul.mubr.bf16.gmra.mrb[0].mxu0 %v7645
      %v7878 = vpop.f32.mrb[0].mxu0
      %v7879 = vadd.f32 0.0, %v7878
      %v7880 = vpop.f32.mrb[0].mxu0
      %v7881 = vpop.f32.mrb[0].mxu0
      %v7882 = vadd.f32 0.0, %v7881
      %v7883 = vpop.f32.mrb[0].mxu0
      %7884 = vmatprep.mubr.bf16.mxu0 %v7649
      %7885 = vmatmul.mubr.bf16.gmra.mrb[0].mxu0 %v7648
      %v7886 = vpop.f32.mrb[0].mxu0
      %v7887 = vadd.f32 0.0, %v7886
      %v7888 = vpop.f32.mrb[0].mxu0
      %v7889 = vpop.f32.mrb[0].mxu0
      %v7890 = vadd.f32 0.0, %v7889
      %v7891 = vpop.f32.mrb[0].mxu0
      %7892 = vmatprep.mubr.bf16.mxu0 %v7652
      %7893 = vmatmul.mubr.bf16.gmra.mrb[0].mxu0 %v7651
      %v7894 = vpop.f32.mrb[0].mxu0
      %v7895 = vadd.f32 0.0, %v7894
      %v7896 = vpop.f32.mrb[0].mxu0
      %v7897 = vpop.f32.mrb[0].mxu0
      %v7898 = vadd.f32 0.0, %v7897
      %v7899 = vpop.f32.mrb[0].mxu0
      %7900 = vmatprep.mubr.bf16.mxu0 %v7655
      %7901 = vmatmul.mubr.bf16.gmra.mrb[0].mxu0 %v7654
      %v7902 = vpop.f32.mrb[0].mxu0
      %v7903 = vadd.f32 0.0, %v7902
      %v7904 = vpop.f32.mrb[0].mxu0
      %v7905 = vpop.f32.mrb[0].mxu0
      %v7906 = vadd.f32 0.0, %v7905
      %v7907 = vpop.f32.mrb[0].mxu0
      %7908 = vmatprep.mubr.bf16.mxu0 %v7658
      %7909 = vmatmul.mubr.bf16.gmra.mrb[0].mxu0 %v7657
      %v7910 = vpop.f32.mrb[0].mxu0
      %v7911 = vadd.f32 0.0, %v7910
      %v7912 = vpop.f32.mrb[0].mxu0
      %v7913 = vpop.f32.mrb[0].mxu0
      %v7914 = vpop.f32.mrb[0].mxu0
      %7915 = vdwg.mxu0
      %7916 = vmatprep.subr.bf16.mxu0 0
      %7917 = vmatpush1.bf16.msra.mxu0 %v7770
      %7918 = vmatprep.subr.bf16.mxu0 0
      %7919 = vmatpush1.bf16.msra.mxu0 0
      %7920 = vmatprep.subr.bf16.mxu0 0
      %7921 = vmatpush1.bf16.msra.mxu0 0
      %7922 = vmatprep.subr.bf16.mxu0 0
      %7923 = vmatpush1.bf16.msra.mxu0 0
      %7924 = vmatprep.subr.bf16.mxu0 0
      %7925 = vmatpush1.bf16.msra.mxu0 0
      %7926 = vmatprep.subr.bf16.mxu0 0
      %7927 = vmatpush1.bf16.msra.mxu0 0
      %7928 = vmatprep.subr.bf16.mxu0 0
      %7929 = vmatpush1.bf16.msra.mxu0 0
      %7930 = vmatprep.subr.bf16.mxu0 0
      %7931 = vmatpush1.bf16.msra.mxu0 0
      %7932 = vmatprep.subr.bf16.mxu0 0
      %7933 = vmatpush1.bf16.msra.mxu0 0
      %7934 = vmatprep.subr.bf16.mxu0 0
      %7935 = vmatpush1.bf16.msra.mxu0 0
      %7936 = vmatprep.subr.bf16.mxu0 0
      %7937 = vmatpush1.bf16.msra.mxu0 0
      %7938 = vmatprep.subr.bf16.mxu0 0
      %7939 = vmatpush1.bf16.msra.mxu0 0
      %7940 = vmatprep.subr.bf16.mxu0 0
      %7941 = vmatpush1.bf16.msra.mxu0 0
      %7942 = vmatprep.subr.bf16.mxu0 0
      %7943 = vmatpush1.bf16.msra.mxu0 0
      %7944 = vmatprep.subr.bf16.mxu0 0
      %7945 = vmatpush1.bf16.msra.mxu0 0
      %7946 = vmatprep.subr.bf16.mxu0 0
      %7947 = vmatpush1.bf16.msra.mxu0 0
      %7948 = vmatprep.mubr.bf16.mxu0 0
      %7949 = vmatmul.mubr.bf16.gmra.mrb[0].mxu0 %v7728
      %v7950 = vpop.f32.mrb[0].mxu0
      %v7951 = vadd.f32 %v7807, %v7950
      %v7952 = vpop.f32.mrb[0].mxu0
      %v7953 = vpop.f32.mrb[0].mxu0
      %v7954 = vadd.f32 %v7810, %v7953
      %v7955 = vpop.f32.mrb[0].mxu0
      %7956 = vmatprep.mubr.bf16.mxu0 0
      %7957 = vmatmul.mubr.bf16.gmra.mrb[0].mxu0 %v7731
      %v7958 = vpop.f32.mrb[0].mxu0
      %v7959 = vadd.f32 %v7815, %v7958
      %v7960 = vpop.f32.mrb[0].mxu0
      %v7961 = vpop.f32.mrb[0].mxu0
      %v7962 = vadd.f32 %v7818, %v7961
      %v7963 = vpop.f32.mrb[0].mxu0
      %7964 = vmatprep.mubr.bf16.mxu0 0
      %7965 = vmatmul.mubr.bf16.gmra.mrb[0].mxu0 %v7734
      %v7966 = vpop.f32.mrb[0].mxu0
      %v7967 = vadd.f32 %v7823, %v7966
      %v7968 = vpop.f32.mrb[0].mxu0
      %v7969 = vpop.f32.mrb[0].mxu0
      %v7970 = vadd.f32 %v7826, %v7969
      %v7971 = vpop.f32.mrb[0].mxu0
      %7972 = vmatprep.mubr.bf16.mxu0 0
      %7973 = vmatmul.mubr.bf16.gmra.mrb[0].mxu0 %v7737
      %v7974 = vpop.f32.mrb[0].mxu0
      %v7975 = vadd.f32 %v7831, %v7974
      %v7976 = vpop.f32.mrb[0].mxu0
      %v7977 = vpop.f32.mrb[0].mxu0
      %v7978 = vadd.f32 %v7834, %v7977
      %v7979 = vpop.f32.mrb[0].mxu0
      %7980 = vmatprep.mubr.bf16.mxu0 0
      %7981 = vmatmul.mubr.bf16.gmra.mrb[0].mxu0 %v7740
      %v7982 = vpop.f32.mrb[0].mxu0
      %v7983 = vadd.f32 %v7839, %v7982
      %v7984 = vpop.f32.mrb[0].mxu0
      %v7985 = vpop.f32.mrb[0].mxu0
      %v7986 = vadd.f32 %v7842, %v7985
      %v7987 = vpop.f32.mrb[0].mxu0
      %7988 = vmatprep.mubr.bf16.mxu0 0
      %7989 = vmatmul.mubr.bf16.gmra.mrb[0].mxu0 %v7743
      %v7990 = vpop.f32.mrb[0].mxu0
      %v7991 = vadd.f32 %v7847, %v7990
      %v7992 = vpop.f32.mrb[0].mxu0
      %v7993 = vpop.f32.mrb[0].mxu0
      %v7994 = vadd.f32 %v7850, %v7993
      %v7995 = vpop.f32.mrb[0].mxu0
      %7996 = vmatprep.mubr.bf16.mxu0 0
      %7997 = vmatmul.mubr.bf16.gmra.mrb[0].mxu0 %v7746
      %v7998 = vpop.f32.mrb[0].mxu0
      %v7999 = vadd.f32 %v7855, %v7998
      %v8000 = vpop.f32.mrb[0].mxu0
      %v8001 = vpop.f32.mrb[0].mxu0
      %v8002 = vadd.f32 %v7858, %v8001
      %v8003 = vpop.f32.mrb[0].mxu0
      %8004 = vmatprep.mubr.bf16.mxu0 0
      %8005 = vmatmul.mubr.bf16.gmra.mrb[0].mxu0 %v7749
      %v8006 = vpop.f32.mrb[0].mxu0
      %v8007 = vadd.f32 %v7863, %v8006
      %v8008 = vpop.f32.mrb[0].mxu0
      %v8009 = vpop.f32.mrb[0].mxu0
      %v8010 = vadd.f32 %v7866, %v8009
      %v8011 = vpop.f32.mrb[0].mxu0
      %8012 = vmatprep.mubr.bf16.mxu0 0
      %8013 = vmatmul.mubr.bf16.gmra.mrb[0].mxu0 %v7752
      %v8014 = vpop.f32.mrb[0].mxu0
      %v8015 = vadd.f32 %v7871, %v8014
      %v8016 = vpop.f32.mrb[0].mxu0
      %v8017 = vpop.f32.mrb[0].mxu0
      %v8018 = vadd.f32 %v7874, %v8017
      %v8019 = vpop.f32.mrb[0].mxu0
      %8020 = vmatprep.mubr.bf16.mxu0 0
      %8021 = vmatmul.mubr.bf16.gmra.mrb[0].mxu0 %v7755
      %v8022 = vpop.f32.mrb[0].mxu0
      %v8023 = vadd.f32 %v7879, %v8022
      %v8024 = vpop.f32.mrb[0].mxu0
      %v8025 = vpop.f32.mrb[0].mxu0
      %v8026 = vadd.f32 %v7882, %v8025
      %v8027 = vpop.f32.mrb[0].mxu0
      %8028 = vmatprep.mubr.bf16.mxu0 0
      %8029 = vmatmul.mubr.bf16.gmra.mrb[0].mxu0 %v7758
      %v8030 = vpop.f32.mrb[0].mxu0
      %v8031 = vadd.f32 %v7887, %v8030
      %v8032 = vpop.f32.mrb[0].mxu0
      %v8033 = vpop.f32.mrb[0].mxu0
      %v8034 = vadd.f32 %v7890, %v8033
      %v8035 = vpop.f32.mrb[0].mxu0
      %8036 = vmatprep.mubr.bf16.mxu0 0
      %8037 = vmatmul.mubr.bf16.gmra.mrb[0].mxu0 %v7761
      %v8038 = vpop.f32.mrb[0].mxu0
      %v8039 = vadd.f32 %v7895, %v8038
      %v8040 = vpop.f32.mrb[0].mxu0
      %v8041 = vpop.f32.mrb[0].mxu0
      %v8042 = vadd.f32 %v7898, %v8041
      %v8043 = vpop.f32.mrb[0].mxu0
      %8044 = vmatprep.mubr.bf16.mxu0 0
      %8045 = vmatmul.mubr.bf16.gmra.mrb[0].mxu0 %v7764
      %v8046 = vpop.f32.mrb[0].mxu0
      %v8047 = vadd.f32 %v7903, %v8046
      %v8048 = vpop.f32.mrb[0].mxu0
      %v8049 = vpop.f32.mrb[0].mxu0
      %v8050 = vadd.f32 %v7906, %v8049
      %v8051 = vpop.f32.mrb[0].mxu0
      %8052 = vmatprep.mubr.bf16.mxu0 0
      %8053 = vmatmul.mubr.bf16.gmra.mrb[0].mxu0 %v7767
      %v8054 = vpop.f32.mrb[0].mxu0
      %v8055 = vadd.f32 %v7911, %v8054
      %v8056 = vpop.f32.mrb[0].mxu0
      %v8057 = vpop.f32.mrb[0].mxu0
      %v8058 = vpop.f32.mrb[0].mxu0
      %8059 = vdwg.mxu0
      %v8060 = vrcp.pop %v7487
      %v8061 = vrcp.pop %v7492
      %v8062 = vrcp.pop %v7497
      %v8063 = vrcp.pop %v7502
      %v8064 = vrcp.pop %v7507
      %v8065 = vrcp.pop %v7512
      %v8066 = vrcp.pop %v7517
      %v8067 = vrcp.pop %v7522
      %v8068 = vrcp.pop %v7527
      %v8069 = vrcp.pop %v7532
      %v8070 = vrcp.pop %v7537
      %v8071 = vrcp.pop %v7542
      %v8072 = vrcp.pop %v7547
      %v8073 = vrcp.pop %v7552
      %v8074 = vrcp.pop %v7557
      %v8075 = vrcp.pop %v7562
      %v8076 = vrcp.pop %v7567
      %v8077 = vrcp.pop %v7572
      %v8078 = vrcp.pop %v7577
      %v8079 = vrcp.pop %v7582
      %v8080 = vrcp.pop %v7587
      %v8081 = vrcp.pop %v7592
      %v8082 = vrcp.pop %v7597
      %v8083 = vrcp.pop %v7602
      %v8084 = vrcp.pop %v7607
      %v8085 = vrcp.pop %v7612
      %v8086 = vrcp.pop %v7617
      %v8087 = vmul.f32 %v7951, %v8060
      %v8088 = vmul.f32 %v7954, %v8061
      %v8089 = vmul.f32 %v7959, %v8062
      %v8090 = vmul.f32 %v7962, %v8063
      %v8091 = vmul.f32 %v7967, %v8064
      %v8092 = vmul.f32 %v7970, %v8065
      %v8093 = vmul.f32 %v7975, %v8066
      %v8094 = vmul.f32 %v7978, %v8067
      %v8095 = vmul.f32 %v7983, %v8068
      %v8096 = vmul.f32 %v7986, %v8069
      %v8097 = vmul.f32 %v7991, %v8070
      %v8098 = vmul.f32 %v7994, %v8071
      %v8099 = vmul.f32 %v7999, %v8072
      %v8100 = vmul.f32 %v8002, %v8073
      %v8101 = vmul.f32 %v8007, %v8074
      %v8102 = vmul.f32 %v8010, %v8075
      %v8103 = vmul.f32 %v8015, %v8076
      %v8104 = vmul.f32 %v8018, %v8077
      %v8105 = vmul.f32 %v8023, %v8078
      %v8106 = vmul.f32 %v8026, %v8079
      %v8107 = vmul.f32 %v8031, %v8080
      %v8108 = vmul.f32 %v8034, %v8081
      %v8109 = vmul.f32 %v8039, %v8082
      %v8110 = vmul.f32 %v8042, %v8083
      %v8111 = vmul.f32 %v8047, %v8084
      %v8112 = vmul.f32 %v8050, %v8085
      %v8113 = vmul.f32 %v8055, %v8086
      %v8114 = vpack.c.bf16 %v8088, %v8087
      %v8115 = vpack.c.bf16 %v8090, %v8089
      %v8116 = vpack.c.bf16 %v8092, %v8091
      %v8117 = vpack.c.bf16 %v8094, %v8093
      %v8118 = vpack.c.bf16 %v8096, %v8095
      %v8119 = vpack.c.bf16 %v8098, %v8097
      %v8120 = vpack.c.bf16 %v8100, %v8099
      %v8121 = vpack.c.bf16 %v8102, %v8101
      %v8122 = vpack.c.bf16 %v8104, %v8103
      %v8123 = vpack.c.bf16 %v8106, %v8105
      %v8124 = vpack.c.bf16 %v8108, %v8107
      %v8125 = vpack.c.bf16 %v8110, %v8109
      %v8126 = vpack.c.bf16 %v8112, %v8111
      %v8127 = vpack.c.bf16 %v8113, %v8113
      %v8128 = vld [vmem:[%s9 + $0x10] sm:$0xf]
      %v8129 = vld [vmem:[%s9 + $0x14] sm:$0xf]
      %v8130 = vld [vmem:[%s9 + $0x18] sm:$0xf]
      %v8131 = vld [vmem:[%s9 + $0x1c] sm:$0xf]
      %v8136 = vunpack.c.l.b16 %v8128
      %v8137 = vunpack.c.l.b16 %v8129
      %v8138 = vunpack.c.l.b16 %v8130
      %v8139 = vunpack.c.l.b16 %v8131
      %v8140 = vpack.c.b16 %v8137, %v8136
      %v8141 = vpack.c.b16 %v8139, %v8138
      %v8145 = vsel %vm5234, %v8114, 0
      %v8148 = vsel %vm5234, %v8115, 0
      %v8151 = vsel %vm5234, %v8116, 0
      %v8154 = vsel %vm5234, %v8117, 0
      %v8157 = vsel %vm5234, %v8118, 0
      %v8160 = vsel %vm5234, %v8119, 0
      %v8163 = vsel %vm5234, %v8120, 0
      %v8166 = vsel %vm5234, %v8121, 0
      %v8169 = vsel %vm5234, %v8122, 0
      %v8172 = vsel %vm5234, %v8123, 0
      %v8175 = vsel %vm5234, %v8124, 0
      %v8178 = vsel %vm5234, %v8125, 0
      %v8181 = vsel %vm5234, %v8126, 0
      %v8184 = vsel %vm5234, %v8127, 0
      %8186 = vmatprep.subr.bf16.mxu0 0
      %8187 = vmatpush1.bf16.msra.mxu0 %v8140
      %8188 = vmatprep.subr.bf16.mxu0 0
      %8189 = vmatpush1.bf16.msra.mxu0 %v8141
      %8190 = vmatprep.subr.bf16.mxu0 0
      %8191 = vmatpush1.bf16.msra.mxu0 0
      %8192 = vmatprep.subr.bf16.mxu0 0
      %8193 = vmatpush1.bf16.msra.mxu0 0
      %8194 = vmatprep.subr.bf16.mxu0 0
      %8195 = vmatpush1.bf16.msra.mxu0 0
      %8196 = vmatprep.subr.bf16.mxu0 0
      %8197 = vmatpush1.bf16.msra.mxu0 0
      %8198 = vmatprep.subr.bf16.mxu0 0
      %8199 = vmatpush1.bf16.msra.mxu0 0
      %8200 = vmatprep.subr.bf16.mxu0 0
      %8201 = vmatpush1.bf16.msra.mxu0 0
      %8202 = vmatprep.subr.bf16.mxu0 0
      %8203 = vmatpush1.bf16.msra.mxu0 0
      %8204 = vmatprep.subr.bf16.mxu0 0
      %8205 = vmatpush1.bf16.msra.mxu0 0
      %8206 = vmatprep.subr.bf16.mxu0 0
      %8207 = vmatpush1.bf16.msra.mxu0 0
      %8208 = vmatprep.subr.bf16.mxu0 0
      %8209 = vmatpush1.bf16.msra.mxu0 0
      %8210 = vmatprep.subr.bf16.mxu0 0
      %8211 = vmatpush1.bf16.msra.mxu0 0
      %8212 = vmatprep.subr.bf16.mxu0 0
      %8213 = vmatpush1.bf16.msra.mxu0 0
      %8214 = vmatprep.subr.bf16.mxu0 0
      %8215 = vmatpush1.bf16.msra.mxu0 0
      %8216 = vmatprep.subr.bf16.mxu0 0
      %8217 = vmatpush1.bf16.msra.mxu0 0
      %8218 = vmatprep.mubr.bf16.mxu0 0
      %8219 = vmatmul.mubr.bf16.gmra.mrb[0].mxu0 %v8145
      %v8220 = vpop.f32.mrb[0].mxu0
      %v8221 = vadd.f32 0.0, %v8220
      %v8222 = vpop.f32.mrb[0].mxu0
      %v8223 = vpop.f32.mrb[0].mxu0
      %v8224 = vadd.f32 0.0, %v8223
      %v8225 = vpop.f32.mrb[0].mxu0
      %8226 = vmatprep.mubr.bf16.mxu0 0
      %8227 = vmatmul.mubr.bf16.gmra.mrb[0].mxu0 %v8148
      %v8228 = vpop.f32.mrb[0].mxu0
      %v8229 = vadd.f32 0.0, %v8228
      %v8230 = vpop.f32.mrb[0].mxu0
      %v8231 = vpop.f32.mrb[0].mxu0
      %v8232 = vadd.f32 0.0, %v8231
      %v8233 = vpop.f32.mrb[0].mxu0
      %8234 = vmatprep.mubr.bf16.mxu0 0
      %8235 = vmatmul.mubr.bf16.gmra.mrb[0].mxu0 %v8151
      %v8236 = vpop.f32.mrb[0].mxu0
      %v8237 = vadd.f32 0.0, %v8236
      %v8238 = vpop.f32.mrb[0].mxu0
      %v8239 = vpop.f32.mrb[0].mxu0
      %v8240 = vadd.f32 0.0, %v8239
      %v8241 = vpop.f32.mrb[0].mxu0
      %8242 = vmatprep.mubr.bf16.mxu0 0
      %8243 = vmatmul.mubr.bf16.gmra.mrb[0].mxu0 %v8154
      %v8244 = vpop.f32.mrb[0].mxu0
      %v8245 = vadd.f32 0.0, %v8244
      %v8246 = vpop.f32.mrb[0].mxu0
      %v8247 = vpop.f32.mrb[0].mxu0
      %v8248 = vadd.f32 0.0, %v8247
      %v8249 = vpop.f32.mrb[0].mxu0
      %8250 = vmatprep.mubr.bf16.mxu0 0
      %8251 = vmatmul.mubr.bf16.gmra.mrb[0].mxu0 %v8157
      %v8252 = vpop.f32.mrb[0].mxu0
      %v8253 = vadd.f32 0.0, %v8252
      %v8254 = vpop.f32.mrb[0].mxu0
      %v8255 = vpop.f32.mrb[0].mxu0
      %v8256 = vadd.f32 0.0, %v8255
      %v8257 = vpop.f32.mrb[0].mxu0
      %8258 = vmatprep.mubr.bf16.mxu0 0
      %8259 = vmatmul.mubr.bf16.gmra.mrb[0].mxu0 %v8160
      %v8260 = vpop.f32.mrb[0].mxu0
      %v8261 = vadd.f32 0.0, %v8260
      %v8262 = vpop.f32.mrb[0].mxu0
      %v8263 = vpop.f32.mrb[0].mxu0
      %v8264 = vadd.f32 0.0, %v8263
      %v8265 = vpop.f32.mrb[0].mxu0
      %8266 = vmatprep.mubr.bf16.mxu0 0
      %8267 = vmatmul.mubr.bf16.gmra.mrb[0].mxu0 %v8163
      %v8268 = vpop.f32.mrb[0].mxu0
      %v8269 = vadd.f32 0.0, %v8268
      %v8270 = vpop.f32.mrb[0].mxu0
      %v8271 = vpop.f32.mrb[0].mxu0
      %v8272 = vadd.f32 0.0, %v8271
      %v8273 = vpop.f32.mrb[0].mxu0
      %8274 = vmatprep.mubr.bf16.mxu0 0
      %8275 = vmatmul.mubr.bf16.gmra.mrb[0].mxu0 %v8166
      %v8276 = vpop.f32.mrb[0].mxu0
      %v8277 = vadd.f32 0.0, %v8276
      %v8278 = vpop.f32.mrb[0].mxu0
      %v8279 = vpop.f32.mrb[0].mxu0
      %v8280 = vadd.f32 0.0, %v8279
      %v8281 = vpop.f32.mrb[0].mxu0
      %8282 = vmatprep.mubr.bf16.mxu0 0
      %8283 = vmatmul.mubr.bf16.gmra.mrb[0].mxu0 %v8169
      %v8284 = vpop.f32.mrb[0].mxu0
      %v8285 = vadd.f32 0.0, %v8284
      %v8286 = vpop.f32.mrb[0].mxu0
      %v8287 = vpop.f32.mrb[0].mxu0
      %v8288 = vadd.f32 0.0, %v8287
      %v8289 = vpop.f32.mrb[0].mxu0
      %8290 = vmatprep.mubr.bf16.mxu0 0
      %8291 = vmatmul.mubr.bf16.gmra.mrb[0].mxu0 %v8172
      %v8292 = vpop.f32.mrb[0].mxu0
      %v8293 = vadd.f32 0.0, %v8292
      %v8294 = vpop.f32.mrb[0].mxu0
      %v8295 = vpop.f32.mrb[0].mxu0
      %v8296 = vadd.f32 0.0, %v8295
      %v8297 = vpop.f32.mrb[0].mxu0
      %8298 = vmatprep.mubr.bf16.mxu0 0
      %8299 = vmatmul.mubr.bf16.gmra.mrb[0].mxu0 %v8175
      %v8300 = vpop.f32.mrb[0].mxu0
      %v8301 = vadd.f32 0.0, %v8300
      %v8302 = vpop.f32.mrb[0].mxu0
      %v8303 = vpop.f32.mrb[0].mxu0
      %v8304 = vadd.f32 0.0, %v8303
      %v8305 = vpop.f32.mrb[0].mxu0
      %8306 = vmatprep.mubr.bf16.mxu0 0
      %8307 = vmatmul.mubr.bf16.gmra.mrb[0].mxu0 %v8178
      %v8308 = vpop.f32.mrb[0].mxu0
      %v8309 = vadd.f32 0.0, %v8308
      %v8310 = vpop.f32.mrb[0].mxu0
      %v8311 = vpop.f32.mrb[0].mxu0
      %v8312 = vadd.f32 0.0, %v8311
      %v8313 = vpop.f32.mrb[0].mxu0
      %8314 = vmatprep.mubr.bf16.mxu0 0
      %8315 = vmatmul.mubr.bf16.gmra.mrb[0].mxu0 %v8181
      %v8316 = vpop.f32.mrb[0].mxu0
      %v8317 = vadd.f32 0.0, %v8316
      %v8318 = vpop.f32.mrb[0].mxu0
      %v8319 = vpop.f32.mrb[0].mxu0
      %v8320 = vadd.f32 0.0, %v8319
      %v8321 = vpop.f32.mrb[0].mxu0
      %8322 = vmatprep.mubr.bf16.mxu0 0
      %8323 = vmatmul.mubr.bf16.gmra.mrb[0].mxu0 %v8184
      %v8324 = vpop.f32.mrb[0].mxu0
      %v8325 = vadd.f32 0.0, %v8324
      %v8326 = vpop.f32.mrb[0].mxu0
      %v8327 = vpop.f32.mrb[0].mxu0
      %v8328 = vpop.f32.mrb[0].mxu0
      %8329 = vdwg.mxu0
      %v8334 = vunpack.c.l.b16 %v6600
      %v8335 = vunpack.c.l.b16 %v6601
      %v8336 = vunpack.c.l.b16 %v6602
      %v8337 = vunpack.c.l.b16 %v6603
      %v8338 = vpack.c.b16 %v8335, %v8334
      %v8339 = vpack.c.b16 %v8337, %v8336
      %v8343 = vsel %vm5234, %v6586, 0
      %v8346 = vsel %vm5234, %v6587, 0
      %v8349 = vsel %vm5234, %v6588, 0
      %v8352 = vsel %vm5234, %v6589, 0
      %v8355 = vsel %vm5234, %v6590, 0
      %v8358 = vsel %vm5234, %v6591, 0
      %v8361 = vsel %vm5234, %v6592, 0
      %v8364 = vsel %vm5234, %v6593, 0
      %v8367 = vsel %vm5234, %v6594, 0
      %v8370 = vsel %vm5234, %v6595, 0
      %v8373 = vsel %vm5234, %v6596, 0
      %v8376 = vsel %vm5234, %v6597, 0
      %v8379 = vsel %vm5234, %v6598, 0
      %v8382 = vsel %vm5234, %v6599, 0
      %8384 = vmatprep.subr.bf16.mxu0 0
      %8385 = vmatpush1.bf16.msra.mxu0 %v8338
      %8386 = vmatprep.subr.bf16.mxu0 0
      %8387 = vmatpush1.bf16.msra.mxu0 %v8339
      %8388 = vmatprep.subr.bf16.mxu0 0
      %8389 = vmatpush1.bf16.msra.mxu0 0
      %8390 = vmatprep.subr.bf16.mxu0 0
      %8391 = vmatpush1.bf16.msra.mxu0 0
      %8392 = vmatprep.subr.bf16.mxu0 0
      %8393 = vmatpush1.bf16.msra.mxu0 0
      %8394 = vmatprep.subr.bf16.mxu0 0
      %8395 = vmatpush1.bf16.msra.mxu0 0
      %8396 = vmatprep.subr.bf16.mxu0 0
      %8397 = vmatpush1.bf16.msra.mxu0 0
      %8398 = vmatprep.subr.bf16.mxu0 0
      %8399 = vmatpush1.bf16.msra.mxu0 0
      %8400 = vmatprep.subr.bf16.mxu0 0
      %8401 = vmatpush1.bf16.msra.mxu0 0
      %8402 = vmatprep.subr.bf16.mxu0 0
      %8403 = vmatpush1.bf16.msra.mxu0 0
      %8404 = vmatprep.subr.bf16.mxu0 0
      %8405 = vmatpush1.bf16.msra.mxu0 0
      %8406 = vmatprep.subr.bf16.mxu0 0
      %8407 = vmatpush1.bf16.msra.mxu0 0
      %8408 = vmatprep.subr.bf16.mxu0 0
      %8409 = vmatpush1.bf16.msra.mxu0 0
      %8410 = vmatprep.subr.bf16.mxu0 0
      %8411 = vmatpush1.bf16.msra.mxu0 0
      %8412 = vmatprep.subr.bf16.mxu0 0
      %8413 = vmatpush1.bf16.msra.mxu0 0
      %8414 = vmatprep.subr.bf16.mxu0 0
      %8415 = vmatpush1.bf16.msra.mxu0 0
      %8416 = vmatprep.mubr.bf16.mxu0 0
      %8417 = vmatmul.mubr.bf16.gmra.mrb[0].mxu0 %v8343
      %v8418 = vpop.f32.mrb[0].mxu0
      %v8419 = vadd.f32 %v8221, %v8418
      %v8420 = vpop.f32.mrb[0].mxu0
      %v8421 = vpop.f32.mrb[0].mxu0
      %v8422 = vadd.f32 %v8224, %v8421
      %v8423 = vpop.f32.mrb[0].mxu0
      %8424 = vmatprep.mubr.bf16.mxu0 0
      %8425 = vmatmul.mubr.bf16.gmra.mrb[0].mxu0 %v8346
      %v8426 = vpop.f32.mrb[0].mxu0
      %v8427 = vadd.f32 %v8229, %v8426
      %v8428 = vpop.f32.mrb[0].mxu0
      %v8429 = vpop.f32.mrb[0].mxu0
      %v8430 = vadd.f32 %v8232, %v8429
      %v8431 = vpop.f32.mrb[0].mxu0
      %8432 = vmatprep.mubr.bf16.mxu0 0
      %8433 = vmatmul.mubr.bf16.gmra.mrb[0].mxu0 %v8349
      %v8434 = vpop.f32.mrb[0].mxu0
      %v8435 = vadd.f32 %v8237, %v8434
      %v8436 = vpop.f32.mrb[0].mxu0
      %v8437 = vpop.f32.mrb[0].mxu0
      %v8438 = vadd.f32 %v8240, %v8437
      %v8439 = vpop.f32.mrb[0].mxu0
      %8440 = vmatprep.mubr.bf16.mxu0 0
      %8441 = vmatmul.mubr.bf16.gmra.mrb[0].mxu0 %v8352
      %v8442 = vpop.f32.mrb[0].mxu0
      %v8443 = vadd.f32 %v8245, %v8442
      %v8444 = vpop.f32.mrb[0].mxu0
      %v8445 = vpop.f32.mrb[0].mxu0
      %v8446 = vadd.f32 %v8248, %v8445
      %v8447 = vpop.f32.mrb[0].mxu0
      %8448 = vmatprep.mubr.bf16.mxu0 0
      %8449 = vmatmul.mubr.bf16.gmra.mrb[0].mxu0 %v8355
      %v8450 = vpop.f32.mrb[0].mxu0
      %v8451 = vadd.f32 %v8253, %v8450
      %v8452 = vpop.f32.mrb[0].mxu0
      %v8453 = vpop.f32.mrb[0].mxu0
      %v8454 = vadd.f32 %v8256, %v8453
      %v8455 = vpop.f32.mrb[0].mxu0
      %8456 = vmatprep.mubr.bf16.mxu0 0
      %8457 = vmatmul.mubr.bf16.gmra.mrb[0].mxu0 %v8358
      %v8458 = vpop.f32.mrb[0].mxu0
      %v8459 = vadd.f32 %v8261, %v8458
      %v8460 = vpop.f32.mrb[0].mxu0
      %v8461 = vpop.f32.mrb[0].mxu0
      %v8462 = vadd.f32 %v8264, %v8461
      %v8463 = vpop.f32.mrb[0].mxu0
      %8464 = vmatprep.mubr.bf16.mxu0 0
      %8465 = vmatmul.mubr.bf16.gmra.mrb[0].mxu0 %v8361
      %v8466 = vpop.f32.mrb[0].mxu0
      %v8467 = vadd.f32 %v8269, %v8466
      %v8468 = vpop.f32.mrb[0].mxu0
      %v8469 = vpop.f32.mrb[0].mxu0
      %v8470 = vadd.f32 %v8272, %v8469
      %v8471 = vpop.f32.mrb[0].mxu0
      %8472 = vmatprep.mubr.bf16.mxu0 0
      %8473 = vmatmul.mubr.bf16.gmra.mrb[0].mxu0 %v8364
      %v8474 = vpop.f32.mrb[0].mxu0
      %v8475 = vadd.f32 %v8277, %v8474
      %v8476 = vpop.f32.mrb[0].mxu0
      %v8477 = vpop.f32.mrb[0].mxu0
      %v8478 = vadd.f32 %v8280, %v8477
      %v8479 = vpop.f32.mrb[0].mxu0
      %8480 = vmatprep.mubr.bf16.mxu0 0
      %8481 = vmatmul.mubr.bf16.gmra.mrb[0].mxu0 %v8367
      %v8482 = vpop.f32.mrb[0].mxu0
      %v8483 = vadd.f32 %v8285, %v8482
      %v8484 = vpop.f32.mrb[0].mxu0
      %v8485 = vpop.f32.mrb[0].mxu0
      %v8486 = vadd.f32 %v8288, %v8485
      %v8487 = vpop.f32.mrb[0].mxu0
      %8488 = vmatprep.mubr.bf16.mxu0 0
      %8489 = vmatmul.mubr.bf16.gmra.mrb[0].mxu0 %v8370
      %v8490 = vpop.f32.mrb[0].mxu0
      %v8491 = vadd.f32 %v8293, %v8490
      %v8492 = vpop.f32.mrb[0].mxu0
      %v8493 = vpop.f32.mrb[0].mxu0
      %v8494 = vadd.f32 %v8296, %v8493
      %v8495 = vpop.f32.mrb[0].mxu0
      %8496 = vmatprep.mubr.bf16.mxu0 0
      %8497 = vmatmul.mubr.bf16.gmra.mrb[0].mxu0 %v8373
      %v8498 = vpop.f32.mrb[0].mxu0
      %v8499 = vadd.f32 %v8301, %v8498
      %v8500 = vpop.f32.mrb[0].mxu0
      %v8501 = vpop.f32.mrb[0].mxu0
      %v8502 = vadd.f32 %v8304, %v8501
      %v8503 = vpop.f32.mrb[0].mxu0
      %8504 = vmatprep.mubr.bf16.mxu0 0
      %8505 = vmatmul.mubr.bf16.gmra.mrb[0].mxu0 %v8376
      %v8506 = vpop.f32.mrb[0].mxu0
      %v8507 = vadd.f32 %v8309, %v8506
      %v8508 = vpop.f32.mrb[0].mxu0
      %v8509 = vpop.f32.mrb[0].mxu0
      %v8510 = vadd.f32 %v8312, %v8509
      %v8511 = vpop.f32.mrb[0].mxu0
      %8512 = vmatprep.mubr.bf16.mxu0 0
      %8513 = vmatmul.mubr.bf16.gmra.mrb[0].mxu0 %v8379
      %v8514 = vpop.f32.mrb[0].mxu0
      %v8515 = vadd.f32 %v8317, %v8514
      %v8516 = vpop.f32.mrb[0].mxu0
      %v8517 = vpop.f32.mrb[0].mxu0
      %v8518 = vadd.f32 %v8320, %v8517
      %v8519 = vpop.f32.mrb[0].mxu0
      %8520 = vmatprep.mubr.bf16.mxu0 0
      %8521 = vmatmul.mubr.bf16.gmra.mrb[0].mxu0 %v8382
      %v8522 = vpop.f32.mrb[0].mxu0
      %v8523 = vadd.f32 %v8325, %v8522
      %v8524 = vpop.f32.mrb[0].mxu0
      %v8525 = vpop.f32.mrb[0].mxu0
      %v8526 = vpop.f32.mrb[0].mxu0
      %8527 = vdwg.mxu0
      %v8528 = vld [vmem:[%s10] sm:$0x1]
      %v8530 = vlaneseq
      %v8531 = vshrl.u32 %v8530, 7
      %v8532 = vsub.s32 0, %v8531
      %v8533 = vrot.slane %v8528, %v8532
      %v8535 = vadd.f32 %v8419, %v8533
      %v8536 = vadd.f32 %v8422, %v8533
      %v8537 = vadd.f32 %v8427, %v8533
      %v8538 = vadd.f32 %v8430, %v8533
      %v8539 = vadd.f32 %v8435, %v8533
      %v8540 = vadd.f32 %v8438, %v8533
      %v8541 = vadd.f32 %v8443, %v8533
      %v8542 = vadd.f32 %v8446, %v8533
      %v8543 = vadd.f32 %v8451, %v8533
      %v8544 = vadd.f32 %v8454, %v8533
      %v8545 = vadd.f32 %v8459, %v8533
      %v8546 = vadd.f32 %v8462, %v8533
      %v8547 = vadd.f32 %v8467, %v8533
      %v8548 = vadd.f32 %v8470, %v8533
      %v8549 = vadd.f32 %v8475, %v8533
      %v8550 = vadd.f32 %v8478, %v8533
      %v8551 = vadd.f32 %v8483, %v8533
      %v8552 = vadd.f32 %v8486, %v8533
      %v8553 = vadd.f32 %v8491, %v8533
      %v8554 = vadd.f32 %v8494, %v8533
      %v8555 = vadd.f32 %v8499, %v8533
      %v8556 = vadd.f32 %v8502, %v8533
      %v8557 = vadd.f32 %v8507, %v8533
      %v8558 = vadd.f32 %v8510, %v8533
      %v8559 = vadd.f32 %v8515, %v8533
      %v8560 = vadd.f32 %v8518, %v8533
      %v8561 = vadd.f32 %v8523, %v8533
      %8562 = vst.msk [vmem:[%s386] sm:$0xff] %vm3436, %v8535
      %8563 = vst.msk [vmem:[%s386 + $0x8] sm:$0xff] %vm3436, %v8536
      %8564 = vst.msk [vmem:[%s386 + $0x10] sm:$0xff] %vm3436, %v8537
      %8565 = vst.msk [vmem:[%s386 + $0x18] sm:$0xff] %vm3436, %v8538
      %8566 = vst.msk [vmem:[%s386 + $0x20] sm:$0xff] %vm3436, %v8539
      %8567 = vst.msk [vmem:[%s386 + $0x28] sm:$0xff] %vm3436, %v8540
      %8568 = vst.msk [vmem:[%s386 + $0x30] sm:$0xff] %vm3436, %v8541
      %8569 = vst.msk [vmem:[%s386 + $0x38] sm:$0xff] %vm3436, %v8542
      %8570 = vst.msk [vmem:[%s386 + $0x40] sm:$0xff] %vm3436, %v8543
      %8571 = vst.msk [vmem:[%s386 + $0x48] sm:$0xff] %vm3436, %v8544
      %8572 = vst.msk [vmem:[%s386 + $0x50] sm:$0xff] %vm3436, %v8545
      %8573 = vst.msk [vmem:[%s386 + $0x58] sm:$0xff] %vm3436, %v8546
      %8574 = vst.msk [vmem:[%s386 + $0x60] sm:$0xff] %vm3436, %v8547
      %8575 = vst.msk [vmem:[%s386 + $0x68] sm:$0xff] %vm3436, %v8548
      %8576 = vst.msk [vmem:[%s386 + $0x70] sm:$0xff] %vm3436, %v8549
      %8577 = vst.msk [vmem:[%s386 + $0x78] sm:$0xff] %vm3436, %v8550
      %8578 = vst.msk [vmem:[%s386 + $0x80] sm:$0xff] %vm3436, %v8551
      %8579 = vst.msk [vmem:[%s386 + $0x88] sm:$0xff] %vm3436, %v8552
      %8580 = vst.msk [vmem:[%s386 + $0x90] sm:$0xff] %vm3436, %v8553
      %8581 = vst.msk [vmem:[%s386 + $0x98] sm:$0xff] %vm3436, %v8554
      %8582 = vst.msk [vmem:[%s386 + $0xa0] sm:$0xff] %vm3436, %v8555
      %8583 = vst.msk [vmem:[%s386 + $0xa8] sm:$0xff] %vm3436, %v8556
      %8584 = vst.msk [vmem:[%s386 + $0xb0] sm:$0xff] %vm3436, %v8557
      %8585 = vst.msk [vmem:[%s386 + $0xb8] sm:$0xff] %vm3436, %v8558
      %8586 = vst.msk [vmem:[%s386 + $0xc0] sm:$0xff] %vm3436, %v8559
      %8587 = vst.msk [vmem:[%s386 + $0xc8] sm:$0xff] %vm3436, %v8560
      %8588 = vst.msk [vmem:[%s386 + $0xd0] sm:$0xff] %vm3436, %v8561
      %p8589 = scmp.lt.s32.totalorder %s22, 1
      %s8590 = scalar_select %p8589, %s22, 1
      %s8591 = smul.addr %s8590, 27
      %s8592 = smul.addr %s8591, 8
      %s8593 = scalar_lea.vmem %s11, %s8592
      // Predicated region
      $region65: #{tpu_custom_call.1} parent=63 // pred_check
        %p8594 = pneg %p276
      $region66: #{tpu_custom_call.1} parent=63 // pred_check_branch
        %8596 = sbr.rel (%p8594) target = $region68
      $region67: #{tpu_custom_call.1} parent=63 // pred_region
        _
      $region68: #{tpu_custom_call.1} parent=63 // pred_fallthru
        _
    $region64: #{tpu_custom_call.1} parent=5 // pred_fallthru
      _
    %p8597 = scmp.le.s32.totalorder 2, %s17
    // Predicated region
    $region69: #{tpu_custom_call.1} parent=5 // pred_check
      %p8598 = pneg %p8597
    $region70: #{tpu_custom_call.1} parent=5 // pred_check_branch
      %8600 = sbr.rel (%p8598) target = $region72
    $region71: #{tpu_custom_call.1} parent=5 // pred_region
      %s8601 = ssub.s32 %s17, 2
      // Predicated region
      $region73: #{tpu_custom_call.1} parent=71 // pred_check
        %p8602 = pneg %p282
      $region74: #{tpu_custom_call.1} parent=71 // pred_check_branch
        %8604 = sbr.rel (%p8602) target = $region76
      $region75: #{tpu_custom_call.1} parent=71 // pred_region
        %p8605 = scmp.lt.s32.totalorder %s23, 1
        %s8606 = scalar_select %p8605, %s23, 1
        %s8607 = smul.addr %s8606, 27
        %s8608 = smul.addr %s8607, 8
        %s8609 = scalar_lea.vmem %s11, %s8608
      $region76: #{tpu_custom_call.1} parent=71 // pred_fallthru
        _
    $region72: #{tpu_custom_call.1} parent=5 // pred_fallthru
      _
  $region6: #{tpu_custom_call.1} parent=0 // loop_footer
    %s21 = sadd.s32 1, %s17
  $region7: #{tpu_custom_call.1} parent=0 // loop_footer_branch
    %16 = sbr.rel target = $region3
  $region8: #{tpu_custom_call.1} parent=0 // loop_exit
    _

</llo_original>
